<compile_context>
chip_gen: v5e
topology: v5e:2x2
jax: 0.10.0
libtpu: 0.0.40
codegen_flags: <defaults>
</compile_context>

<pallas_src>
import math

import jax
import jax.numpy as jnp
from jax.experimental import pallas as pl
from jax.experimental.pallas import tpu as pltpu

# Tetris board / network dimensions
H, W = 20, 10                 # board rows, cols
HP_BLK = 24                   # padded rows reserved per batch element (22 used, /8 aligned)
C1, C2 = 32, 64               # conv channels
VEC_DIM = 7 * 4 + 2           # 30
GRID_FEATS = C2 * H * W       # 12800
FC1, FC2 = 128, 128
FCV = 64


# ---------------------------------------------------------------------------
# Kernel 1: fused conv1 + ReLU + conv2 + ReLU  (banded-matmul formulation)
# ---------------------------------------------------------------------------
def _banded_conv(xpad, m_ref, rows):
    """xpad: (rows+2, K) f32 zero-row-padded activation; m_ref: (3, K, N) bf16.
    Returns sum_kh xpad[kh:kh+rows] @ m_ref[kh]  as (rows, N) f32."""
    acc = jnp.dot(xpad[0:rows, :].astype(jnp.bfloat16), m_ref[0],
                  preferred_element_type=jnp.float32)
    for kh in (1, 2):
        acc = acc + jnp.dot(xpad[kh:kh + rows, :].astype(jnp.bfloat16), m_ref[kh],
                            preferred_element_type=jnp.float32)
    return acc


def _conv_kernel(board_ref, m1_ref, b1_ref, m2_ref, b2_ref, out_ref,
                 xp1_ref, xp2_ref):
    B = board_ref.shape[0]
    R = B * HP_BLK                                  # compute rows (valid rows are 1..20 per block)

    # stage 0: zero-row-padded conv1 input; rows=(b, padded h), lanes=w
    xp1_ref[...] = jnp.zeros_like(xp1_ref)
    for b in range(B):                              # B is small and static -> unrolled
        xp1_ref[b * HP_BLK + 2: b * HP_BLK + 2 + H, :] = board_ref[b]

    # conv1 + bias + ReLU           -> (R, W*C1) f32, lanes = (w, c1)
    a1 = jnp.maximum(_banded_conv(xp1_ref[...], m1_ref, R) + b1_ref[...], 0.0)

    # stage 1: zero-row-padded conv2 input (copy only the valid board rows)
    xp2_ref[...] = jnp.zeros_like(xp2_ref)
    for b in range(B):
        xp2_ref[b * HP_BLK + 2: b * HP_BLK + 2 + H, :] = (
            a1[b * HP_BLK + 1: b * HP_BLK + 1 + H, :])

    # conv2 + bias + ReLU           -> (R, W*C2) f32, lanes = (w, c2)
    a2 = jnp.maximum(_banded_conv(xp2_ref[...], m2_ref, R) + b2_ref[...], 0.0)

    # emit only the valid board rows, per batch: (B, H, W*C2) bf16
    for b in range(B):
        out_ref[b] = a2[b * HP_BLK + 1: b * HP_BLK + 1 + H, :].astype(out_ref.dtype)


def _vmem_spec():
    return pl.BlockSpec(memory_space=pltpu.MemorySpace.VMEM)


def _conv_stage(board, m1, b1, m2, b2):
    B = board.shape[0]
    return pl.pallas_call(
        _conv_kernel,
        out_shape=jax.ShapeDtypeStruct((B, H, W * C2), jnp.bfloat16),
        in_specs=[_vmem_spec() for _ in range(5)],
        out_specs=_vmem_spec(),
        scratch_shapes=[
            pltpu.VMEM((B * HP_BLK + 2, W), jnp.float32),        # padded conv1 input
            pltpu.VMEM((B * HP_BLK + 2, W * C1), jnp.float32),   # padded conv2 input
        ],
    )(board, m1, b1, m2, b2)


# ---------------------------------------------------------------------------
# Kernel 2: fused fc1_grid + fc1_vector + (concat) + fc2 + fc3
# ---------------------------------------------------------------------------
def _fc_tail_kernel(xg_ref, vec_ref, wg_ref, bg_ref, wv_ref, bv_ref,
                    w2g_ref, w2v_ref, b2_ref, w3_ref, b3_ref, o_ref):
    # fc1_grid + ReLU  (the weight-bandwidth-bound layer: bf16 weight, f32 accumulate)
    xg = jnp.dot(xg_ref[...], wg_ref[...], preferred_element_type=jnp.float32)
    xg = jnp.maximum(xg + bg_ref[...], 0.0)                          # (B, 128)

    # fc1_vector + ReLU
    xv = jnp.dot(vec_ref[...].astype(jnp.bfloat16), wv_ref[...],
                 preferred_element_type=jnp.float32)
    xv = jnp.maximum(xv + bv_ref[...], 0.0)                          # (B, 64)

    # fc2 + ReLU with the concat folded into a split weight:
    #   cat(xg, xv) @ W2 == xg @ W2[:128] + xv @ W2[128:]
    h = (jnp.dot(xg.astype(jnp.bfloat16), w2g_ref[...], preferred_element_type=jnp.float32)
         + jnp.dot(xv.astype(jnp.bfloat16), w2v_ref[...], preferred_element_type=jnp.float32))
    h = jnp.maximum(h + b2_ref[...], 0.0)                            # (B, 128)

    # fc3 (out_features=1): VPU multiply + lane reduction instead of an N=1 matmul
    out = jnp.sum(h * w3_ref[...], axis=-1, keepdims=True) + b3_ref[...]
    o_ref[...] = out.astype(o_ref.dtype)


def _fc_tail(x_flat, vec, p):
    B = x_flat.shape[0]
    args = (x_flat, vec,
            p["fc1_grid_w"], p["fc1_grid_b"],
            p["fc1_vec_w"], p["fc1_vec_b"],
            p["fc2_w_grid"], p["fc2_w_vec"], p["fc2_b"],
            p["fc3_w"], p["fc3_b"])
    return pl.pallas_call(
        _fc_tail_kernel,
        out_shape=jax.ShapeDtypeStruct((B, 1), jnp.float32),
        in_specs=[_vmem_spec() for _ in args],
        out_specs=_vmem_spec(),
    )(*args)


# ---------------------------------------------------------------------------
# Parameter preparation (matches the PyTorch init scheme; one-time layout work)
# ---------------------------------------------------------------------------
def _band_conv_weight(w_hwio):
    """(3,3,Cin,Cout) HWIO kernel -> (3, W*Cin, W*Cout) banded matrices M_kh with
    M[kh, wi*Cin+ci, w*Cout+co] = w_hwio[kh, wi-w+1, ci, co] for |wi - w| <= 1.
    Width-edge padding is handled by simply omitting out-of-range taps."""
    _, _, cin, cout = w_hwio.shape
    m = jnp.zeros((3, W * cin, W * cout), jnp.float32)
    for w in range(W):
        for kw in range(3):
            wi = w + kw - 1
            if 0 <= wi < W:
                m = m.at[:, wi * cin:(wi + 1) * cin,
                         w * cout:(w + 1) * cout].set(w_hwio[:, kw])
    return m


def init_params(key):
    """Kernel-ready parameters (deterministic, PyTorch-style init).

    Loading real PyTorch weights instead: conv weights are OIHW -> permute to HWIO
    before _band_conv_weight and tile their biases over w (jnp.tile(b, W)); Linear
    weights are (out,in) -> transpose to (in,out); fc1_grid's 12800 input rows must
    additionally be permuted from torch's (c,h,w) flatten order to the (h,w,c) order
    used here; fc2's rows split into [:128] (grid) and [128:] (vector); fc3 becomes a
    (1,128) row vector."""
    ks = jax.random.split(key, 6)

    def kaiming_conv(k, kh, kw, cin, cout):          # kaiming_normal, fan_out, relu
        std = math.sqrt(2.0 / (cout * kh * kw))
        return jax.random.normal(k, (kh, kw, cin, cout), jnp.float32) * std

    def xavier_linear(k, fin, fout):                 # xavier_uniform, stored (in, out)
        limit = math.sqrt(6.0 / (fin + fout))
        return jax.random.uniform(k, (fin, fout), jnp.float32, -limit, limit)

    conv1_w = kaiming_conv(ks[0], 3, 3, 1, C1)
    conv2_w = kaiming_conv(ks[1], 3, 3, C1, C2)
    fc1_grid_w = xavier_linear(ks[2], GRID_FEATS, FC1)   # rows already in (h,w,c) order
    fc1_vec_w = xavier_linear(ks[3], VEC_DIM, FCV)
    fc2_w = xavier_linear(ks[4], FC1 + FCV, FC2)
    fc3_w = xavier_linear(ks[5], FC2, 1)

    bf16 = jnp.bfloat16
    return {
        "conv1_m": _band_conv_weight(conv1_w).astype(bf16),     # (3, 10, 320)
        "conv1_b": jnp.zeros((1, W * C1), jnp.float32),         # bias tiled over w (zero init)
        "conv2_m": _band_conv_weight(conv2_w).astype(bf16),     # (3, 320, 640)
        "conv2_b": jnp.zeros((1, W * C2), jnp.float32),
        "fc1_grid_w": fc1_grid_w.astype(bf16),                  # (12800, 128)
        "fc1_grid_b": jnp.zeros((1, FC1), jnp.float32),
        "fc1_vec_w": fc1_vec_w.astype(bf16),                    # (30, 64)
        "fc1_vec_b": jnp.zeros((1, FCV), jnp.float32),
        "fc2_w_grid": fc2_w[:FC1].astype(bf16),                 # (128, 128)
        "fc2_w_vec": fc2_w[FC1:].astype(bf16),                  # (64, 128)
        "fc2_b": jnp.zeros((1, FC2), jnp.float32),
        "fc3_w": fc3_w.reshape(1, FC2).astype(jnp.float32),     # row vector
        "fc3_b": jnp.zeros((1, 1), jnp.float32),
    }


# ---------------------------------------------------------------------------
# Forward pass (mirrors ValueNetworkAug.forward)
# ---------------------------------------------------------------------------
def value_network_aug_forward(params, grid_nchw, vector):
    B = grid_nchw.shape[0]
    # NCHW (B,1,20,10) -> (B,20,10); with a single channel this is a pure metadata
    # reshape, no data movement.
    board = grid_nchw.reshape(B, H, W).astype(jnp.float32)

    # fused conv1+conv2 (one dispatch; padded intermediates live only in VMEM)
    feat = _conv_stage(board,
                       params["conv1_m"], params["conv1_b"],
                       params["conv2_m"], params["conv2_b"])    # (B, 20, 640) bf16

    # contiguous (h, w, c) flatten -> (B, 12800): free row-major reshape. fc1_grid_w's
    # rows were pre-permuted to this order, so no runtime NCHW transpose is needed.
    x_flat = feat.reshape(B, GRID_FEATS)

    # fused fc1_grid + fc1_vector + fc2 + fc3 (one dispatch)
    return _fc_tail(x_flat, vector.astype(jnp.float32), params)


if __name__ == "__main__":
    key = jax.random.PRNGKey(0)
    kg, kv = jax.random.split(key, 2)

    B = 2
    grid_in = jax.random.uniform(kg, (B, 1, H, W), jnp.float32)     # (2, 1, 20, 10)
    vector_in = jax.random.uniform(kv, (B, VEC_DIM), jnp.float32)   # (2, 30)

    params = init_params(jax.random.PRNGKey(42))

    fwd = jax.jit(value_network_aug_forward)
    out = jax.block_until_ready(fwd(params, grid_in, vector_in))

    assert out.shape == (B, 1), out.shape
    assert out.dtype == jnp.float32
    print("KERNEL_OK")
</pallas_src>

<mosaic_0001>
module attributes {stable_mosaic.version = 11 : i64} {
  func.func @_conv_kernel(%arg0: memref<2x20x10xf32, #tpu.memory_space<vmem>>, %arg1: memref<3x10x320xbf16, #tpu.memory_space<vmem>>, %arg2: memref<1x320xf32, #tpu.memory_space<vmem>>, %arg3: memref<3x320x640xbf16, #tpu.memory_space<vmem>>, %arg4: memref<1x640xf32, #tpu.memory_space<vmem>>, %arg5: memref<2x20x640xbf16, #tpu.memory_space<vmem>>, %arg6: memref<50x10xf32, #tpu.memory_space<vmem>>, %arg7: memref<50x320xf32, #tpu.memory_space<vmem>>) attributes {dimension_semantics = [], scalar_prefetch = 0 : i64, scratch_operands = 2 : i64, tpu.core_type = #tpu.core_type<tc>} {
    %cst = arith.constant 0.000000e+00 : f32
    %0 = vector.broadcast %cst : f32 to vector<50x10xf32>
    %c0 = arith.constant 0 : index
    %c0_0 = arith.constant 0 : index
    %1 = vector.load %arg6[%c0, %c0_0] : memref<50x10xf32, #tpu.memory_space<vmem>>, vector<50x10xf32>
    tpu.vector_store %arg6[%c0, %c0_0], %0 {strides = array<i32>} : memref<50x10xf32, #tpu.memory_space<vmem>>, vector<50x10xf32>,
    %c0_1 = arith.constant 0 : index
    %c0_2 = arith.constant 0 : index
    %c0_3 = arith.constant 0 : index
    %2 = vector.load %arg0[%c0_1, %c0_2, %c0_3] : memref<2x20x10xf32, #tpu.memory_space<vmem>>, vector<1x20x10xf32>
    %3 = vector.shape_cast %2 : vector<1x20x10xf32> to vector<20x10xf32>
    %c2 = arith.constant 2 : index
    %c0_4 = arith.constant 0 : index
    %4 = vector.load %arg6[%c2, %c0_4] : memref<50x10xf32, #tpu.memory_space<vmem>>, vector<20x10xf32>
    tpu.vector_store %arg6[%c2, %c0_4], %3 {strides = array<i32>} : memref<50x10xf32, #tpu.memory_space<vmem>>, vector<20x10xf32>,
    %c1 = arith.constant 1 : index
    %c0_5 = arith.constant 0 : index
    %c0_6 = arith.constant 0 : index
    %5 = vector.load %arg0[%c1, %c0_5, %c0_6] : memref<2x20x10xf32, #tpu.memory_space<vmem>>, vector<1x20x10xf32>
    %6 = vector.shape_cast %5 : vector<1x20x10xf32> to vector<20x10xf32>
    %c26 = arith.constant 26 : index
    %c0_7 = arith.constant 0 : index
    %7 = vector.load %arg6[%c26, %c0_7] : memref<50x10xf32, #tpu.memory_space<vmem>>, vector<20x10xf32>
    tpu.vector_store %arg6[%c26, %c0_7], %6 {strides = array<i32>} : memref<50x10xf32, #tpu.memory_space<vmem>>, vector<20x10xf32>,
    %c0_8 = arith.constant 0 : index
    %c0_9 = arith.constant 0 : index
    %8 = vector.load %arg6[%c0_8, %c0_9] : memref<50x10xf32, #tpu.memory_space<vmem>>, vector<50x10xf32>
    %9 = vector.extract_strided_slice %8 {offsets = [0, 0], sizes = [48, 10], strides = [1, 1]} : vector<50x10xf32> to vector<48x10xf32>
    %10 = arith.truncf %9 : vector<48x10xf32> to vector<48x10xbf16>
    %c0_10 = arith.constant 0 : index
    %c0_11 = arith.constant 0 : index
    %c0_12 = arith.constant 0 : index
    %11 = vector.load %arg1[%c0_10, %c0_11, %c0_12] : memref<3x10x320xbf16, #tpu.memory_space<vmem>>, vector<1x10x320xbf16>
    %12 = vector.shape_cast %11 : vector<1x10x320xbf16> to vector<10x320xbf16>
    %cst_13 = arith.constant dense<0.000000e+00> : vector<48x320xf32>
    %13 = tpu.matmul %10, %12, %cst_13 {dimension_numbers = #tpu.dot_dimension_numbers<[1], [0], [0], [1], [0, 0, 1, 1], [], []>} : vector<48x10xbf16>, vector<10x320xbf16>, vector<48x320xf32> -> vector<48x320xf32>
    %14 = vector.extract_strided_slice %8 {offsets = [1, 0], sizes = [48, 10], strides = [1, 1]} : vector<50x10xf32> to vector<48x10xf32>
    %15 = arith.truncf %14 : vector<48x10xf32> to vector<48x10xbf16>
    %c1_14 = arith.constant 1 : index
    %c0_15 = arith.constant 0 : index
    %c0_16 = arith.constant 0 : index
    %16 = vector.load %arg1[%c1_14, %c0_15, %c0_16] : memref<3x10x320xbf16, #tpu.memory_space<vmem>>, vector<1x10x320xbf16>
    %17 = vector.shape_cast %16 : vector<1x10x320xbf16> to vector<10x320xbf16>
    %cst_17 = arith.constant dense<0.000000e+00> : vector<48x320xf32>
    %18 = tpu.matmul %15, %17, %cst_17 {dimension_numbers = #tpu.dot_dimension_numbers<[1], [0], [0], [1], [0, 0, 1, 1], [], []>} : vector<48x10xbf16>, vector<10x320xbf16>, vector<48x320xf32> -> vector<48x320xf32>
    %19 = arith.addf %13, %18 : vector<48x320xf32>
    %20 = vector.extract_strided_slice %8 {offsets = [2, 0], sizes = [48, 10], strides = [1, 1]} : vector<50x10xf32> to vector<48x10xf32>
    %21 = arith.truncf %20 : vector<48x10xf32> to vector<48x10xbf16>
    %c2_18 = arith.constant 2 : index
    %c0_19 = arith.constant 0 : index
    %c0_20 = arith.constant 0 : index
    %22 = vector.load %arg1[%c2_18, %c0_19, %c0_20] : memref<3x10x320xbf16, #tpu.memory_space<vmem>>, vector<1x10x320xbf16>
    %23 = vector.shape_cast %22 : vector<1x10x320xbf16> to vector<10x320xbf16>
    %cst_21 = arith.constant dense<0.000000e+00> : vector<48x320xf32>
    %24 = tpu.matmul %21, %23, %cst_21 {dimension_numbers = #tpu.dot_dimension_numbers<[1], [0], [0], [1], [0, 0, 1, 1], [], []>} : vector<48x10xbf16>, vector<10x320xbf16>, vector<48x320xf32> -> vector<48x320xf32>
    %25 = arith.addf %19, %24 : vector<48x320xf32>
    %c0_22 = arith.constant 0 : index
    %c0_23 = arith.constant 0 : index
    %26 = vector.load %arg2[%c0_22, %c0_23] : memref<1x320xf32, #tpu.memory_space<vmem>>, vector<1x320xf32>
    %27 = vector.broadcast %26 : vector<1x320xf32> to vector<48x320xf32>
    %28 = arith.addf %25, %27 : vector<48x320xf32>
    %cst_24 = arith.constant 0.000000e+00 : f32
    %29 = vector.broadcast %cst_24 : f32 to vector<48x320xf32>
    %30 = arith.maximumf %28, %29 : vector<48x320xf32>
    %cst_25 = arith.constant 0.000000e+00 : f32
    %31 = vector.broadcast %cst_25 : f32 to vector<50x320xf32>
    %c0_26 = arith.constant 0 : index
    %c0_27 = arith.constant 0 : index
    %32 = vector.load %arg7[%c0_26, %c0_27] : memref<50x320xf32, #tpu.memory_space<vmem>>, vector<50x320xf32>
    tpu.vector_store %arg7[%c0_26, %c0_27], %31 {strides = array<i32>} : memref<50x320xf32, #tpu.memory_space<vmem>>, vector<50x320xf32>,
    %33 = vector.extract_strided_slice %30 {offsets = [1, 0], sizes = [20, 320], strides = [1, 1]} : vector<48x320xf32> to vector<20x320xf32>
    %c2_28 = arith.constant 2 : index
    %c0_29 = arith.constant 0 : index
    %34 = vector.load %arg7[%c2_28, %c0_29] : memref<50x320xf32, #tpu.memory_space<vmem>>, vector<20x320xf32>
    tpu.vector_store %arg7[%c2_28, %c0_29], %33 {strides = array<i32>} : memref<50x320xf32, #tpu.memory_space<vmem>>, vector<20x320xf32>,
    %35 = vector.extract_strided_slice %30 {offsets = [25, 0], sizes = [20, 320], strides = [1, 1]} : vector<48x320xf32> to vector<20x320xf32>
    %c26_30 = arith.constant 26 : index
    %c0_31 = arith.constant 0 : index
    %36 = vector.load %arg7[%c26_30, %c0_31] : memref<50x320xf32, #tpu.memory_space<vmem>>, vector<20x320xf32>
    tpu.vector_store %arg7[%c26_30, %c0_31], %35 {strides = array<i32>} : memref<50x320xf32, #tpu.memory_space<vmem>>, vector<20x320xf32>,
    %c0_32 = arith.constant 0 : index
    %c0_33 = arith.constant 0 : index
    %37 = vector.load %arg7[%c0_32, %c0_33] : memref<50x320xf32, #tpu.memory_space<vmem>>, vector<50x320xf32>
    %38 = vector.extract_strided_slice %37 {offsets = [0, 0], sizes = [48, 320], strides = [1, 1]} : vector<50x320xf32> to vector<48x320xf32>
    %39 = arith.truncf %38 : vector<48x320xf32> to vector<48x320xbf16>
    %c0_34 = arith.constant 0 : index
    %c0_35 = arith.constant 0 : index
    %c0_36 = arith.constant 0 : index
    %40 = vector.load %arg3[%c0_34, %c0_35, %c0_36] : memref<3x320x640xbf16, #tpu.memory_space<vmem>>, vector<1x320x640xbf16>
    %41 = vector.shape_cast %40 : vector<1x320x640xbf16> to vector<320x640xbf16>
    %cst_37 = arith.constant dense<0.000000e+00> : vector<48x640xf32>
    %42 = tpu.matmul %39, %41, %cst_37 {dimension_numbers = #tpu.dot_dimension_numbers<[1], [0], [0], [1], [0, 0, 1, 1], [], []>} : vector<48x320xbf16>, vector<320x640xbf16>, vector<48x640xf32> -> vector<48x640xf32>
    %43 = vector.extract_strided_slice %37 {offsets = [1, 0], sizes = [48, 320], strides = [1, 1]} : vector<50x320xf32> to vector<48x320xf32>
    %44 = arith.truncf %43 : vector<48x320xf32> to vector<48x320xbf16>
    %c1_38 = arith.constant 1 : index
    %c0_39 = arith.constant 0 : index
    %c0_40 = arith.constant 0 : index
    %45 = vector.load %arg3[%c1_38, %c0_39, %c0_40] : memref<3x320x640xbf16, #tpu.memory_space<vmem>>, vector<1x320x640xbf16>
    %46 = vector.shape_cast %45 : vector<1x320x640xbf16> to vector<320x640xbf16>
    %cst_41 = arith.constant dense<0.000000e+00> : vector<48x640xf32>
    %47 = tpu.matmul %44, %46, %cst_41 {dimension_numbers = #tpu.dot_dimension_numbers<[1], [0], [0], [1], [0, 0, 1, 1], [], []>} : vector<48x320xbf16>, vector<320x640xbf16>, vector<48x640xf32> -> vector<48x640xf32>
    %48 = arith.addf %42, %47 : vector<48x640xf32>
    %49 = vector.extract_strided_slice %37 {offsets = [2, 0], sizes = [48, 320], strides = [1, 1]} : vector<50x320xf32> to vector<48x320xf32>
    %50 = arith.truncf %49 : vector<48x320xf32> to vector<48x320xbf16>
    %c2_42 = arith.constant 2 : index
    %c0_43 = arith.constant 0 : index
    %c0_44 = arith.constant 0 : index
    %51 = vector.load %arg3[%c2_42, %c0_43, %c0_44] : memref<3x320x640xbf16, #tpu.memory_space<vmem>>, vector<1x320x640xbf16>
    %52 = vector.shape_cast %51 : vector<1x320x640xbf16> to vector<320x640xbf16>
    %cst_45 = arith.constant dense<0.000000e+00> : vector<48x640xf32>
    %53 = tpu.matmul %50, %52, %cst_45 {dimension_numbers = #tpu.dot_dimension_numbers<[1], [0], [0], [1], [0, 0, 1, 1], [], []>} : vector<48x320xbf16>, vector<320x640xbf16>, vector<48x640xf32> -> vector<48x640xf32>
    %54 = arith.addf %48, %53 : vector<48x640xf32>
    %c0_46 = arith.constant 0 : index
    %c0_47 = arith.constant 0 : index
    %55 = vector.load %arg4[%c0_46, %c0_47] : memref<1x640xf32, #tpu.memory_space<vmem>>, vector<1x640xf32>
    %56 = vector.broadcast %55 : vector<1x640xf32> to vector<48x640xf32>
    %57 = arith.addf %54, %56 : vector<48x640xf32>
    %cst_48 = arith.constant 0.000000e+00 : f32
    %58 = vector.broadcast %cst_48 : f32 to vector<48x640xf32>
    %59 = arith.maximumf %57, %58 : vector<48x640xf32>
    %60 = vector.extract_strided_slice %59 {offsets = [1, 0], sizes = [20, 640], strides = [1, 1]} : vector<48x640xf32> to vector<20x640xf32>
    %61 = arith.truncf %60 : vector<20x640xf32> to vector<20x640xbf16>
    %c0_49 = arith.constant 0 : index
    %c0_50 = arith.constant 0 : index
    %c0_51 = arith.constant 0 : index
    %62 = vector.load %arg5[%c0_49, %c0_50, %c0_51] : memref<2x20x640xbf16, #tpu.memory_space<vmem>>, vector<1x20x640xbf16>
    %63 = vector.shape_cast %62 : vector<1x20x640xbf16> to vector<20x640xbf16>
    %64 = vector.shape_cast %61 : vector<20x640xbf16> to vector<1x20x640xbf16>
    tpu.vector_store %arg5[%c0_49, %c0_50, %c0_51], %64 {strides = array<i32>} : memref<2x20x640xbf16, #tpu.memory_space<vmem>>, vector<1x20x640xbf16>,
    %65 = vector.extract_strided_slice %59 {offsets = [25, 0], sizes = [20, 640], strides = [1, 1]} : vector<48x640xf32> to vector<20x640xf32>
    %66 = arith.truncf %65 : vector<20x640xf32> to vector<20x640xbf16>
    %c1_52 = arith.constant 1 : index
    %c0_53 = arith.constant 0 : index
    %c0_54 = arith.constant 0 : index
    %67 = vector.load %arg5[%c1_52, %c0_53, %c0_54] : memref<2x20x640xbf16, #tpu.memory_space<vmem>>, vector<1x20x640xbf16>
    %68 = vector.shape_cast %67 : vector<1x20x640xbf16> to vector<20x640xbf16>
    %69 = vector.shape_cast %66 : vector<20x640xbf16> to vector<1x20x640xbf16>
    tpu.vector_store %arg5[%c1_52, %c0_53, %c0_54], %69 {strides = array<i32>} : memref<2x20x640xbf16, #tpu.memory_space<vmem>>, vector<1x20x640xbf16>,
    return
  }
}

module attributes {stable_mosaic.version = 11 : i64} {
  func.func @_fc_tail_kernel(%arg0: memref<2x12800xbf16, #tpu.memory_space<vmem>>, %arg1: memref<2x30xf32, #tpu.memory_space<vmem>>, %arg2: memref<12800x128xbf16, #tpu.memory_space<vmem>>, %arg3: memref<1x128xf32, #tpu.memory_space<vmem>>, %arg4: memref<30x64xbf16, #tpu.memory_space<vmem>>, %arg5: memref<1x64xf32, #tpu.memory_space<vmem>>, %arg6: memref<128x128xbf16, #tpu.memory_space<vmem>>, %arg7: memref<64x128xbf16, #tpu.memory_space<vmem>>, %arg8: memref<1x128xf32, #tpu.memory_space<vmem>>, %arg9: memref<1x128xf32, #tpu.memory_space<vmem>>, %arg10: memref<1x1xf32, #tpu.memory_space<vmem>>, %arg11: memref<2x1xf32, #tpu.memory_space<vmem>>) attributes {dimension_semantics = [], scalar_prefetch = 0 : i64, scratch_operands = 0 : i64, tpu.core_type = #tpu.core_type<tc>} {
    %c0 = arith.constant 0 : index
    %c0_0 = arith.constant 0 : index
    %0 = vector.load %arg0[%c0, %c0_0] : memref<2x12800xbf16, #tpu.memory_space<vmem>>, vector<2x12800xbf16>
    %c0_1 = arith.constant 0 : index
    %c0_2 = arith.constant 0 : index
    %1 = vector.load %arg2[%c0_1, %c0_2] : memref<12800x128xbf16, #tpu.memory_space<vmem>>, vector<12800x128xbf16>
    %cst = arith.constant dense<0.000000e+00> : vector<2x128xf32>
    %2 = tpu.matmul %0, %1, %cst {dimension_numbers = #tpu.dot_dimension_numbers<[1], [0], [0], [1], [0, 0, 1, 1], [], []>} : vector<2x12800xbf16>, vector<12800x128xbf16>, vector<2x128xf32> -> vector<2x128xf32>
    %c0_3 = arith.constant 0 : index
    %c0_4 = arith.constant 0 : index
    %3 = vector.load %arg3[%c0_3, %c0_4] : memref<1x128xf32, #tpu.memory_space<vmem>>, vector<1x128xf32>
    %4 = vector.broadcast %3 : vector<1x128xf32> to vector<2x128xf32>
    %5 = arith.addf %2, %4 : vector<2x128xf32>
    %cst_5 = arith.constant 0.000000e+00 : f32
    %6 = vector.broadcast %cst_5 : f32 to vector<2x128xf32>
    %7 = arith.maximumf %5, %6 : vector<2x128xf32>
    %c0_6 = arith.constant 0 : index
    %c0_7 = arith.constant 0 : index
    %8 = vector.load %arg1[%c0_6, %c0_7] : memref<2x30xf32, #tpu.memory_space<vmem>>, vector<2x30xf32>
    %9 = arith.truncf %8 : vector<2x30xf32> to vector<2x30xbf16>
    %c0_8 = arith.constant 0 : index
    %c0_9 = arith.constant 0 : index
    %10 = vector.load %arg4[%c0_8, %c0_9] : memref<30x64xbf16, #tpu.memory_space<vmem>>, vector<30x64xbf16>
    %cst_10 = arith.constant dense<0.000000e+00> : vector<2x64xf32>
    %11 = tpu.matmul %9, %10, %cst_10 {dimension_numbers = #tpu.dot_dimension_numbers<[1], [0], [0], [1], [0, 0, 1, 1], [], []>} : vector<2x30xbf16>, vector<30x64xbf16>, vector<2x64xf32> -> vector<2x64xf32>
    %c0_11 = arith.constant 0 : index
    %c0_12 = arith.constant 0 : index
    %12 = vector.load %arg5[%c0_11, %c0_12] : memref<1x64xf32, #tpu.memory_space<vmem>>, vector<1x64xf32>
    %13 = vector.broadcast %12 : vector<1x64xf32> to vector<2x64xf32>
    %14 = arith.addf %11, %13 : vector<2x64xf32>
    %cst_13 = arith.constant 0.000000e+00 : f32
    %15 = vector.broadcast %cst_13 : f32 to vector<2x64xf32>
    %16 = arith.maximumf %14, %15 : vector<2x64xf32>
    %17 = arith.truncf %7 : vector<2x128xf32> to vector<2x128xbf16>
    %c0_14 = arith.constant 0 : index
    %c0_15 = arith.constant 0 : index
    %18 = vector.load %arg6[%c0_14, %c0_15] : memref<128x128xbf16, #tpu.memory_space<vmem>>, vector<128x128xbf16>
    %cst_16 = arith.constant dense<0.000000e+00> : vector<2x128xf32>
    %19 = tpu.matmul %17, %18, %cst_16 {dimension_numbers = #tpu.dot_dimension_numbers<[1], [0], [0], [1], [0, 0, 1, 1], [], []>} : vector<2x128xbf16>, vector<128x128xbf16>, vector<2x128xf32> -> vector<2x128xf32>
    %20 = arith.truncf %16 : vector<2x64xf32> to vector<2x64xbf16>
    %c0_17 = arith.constant 0 : index
    %c0_18 = arith.constant 0 : index
    %21 = vector.load %arg7[%c0_17, %c0_18] : memref<64x128xbf16, #tpu.memory_space<vmem>>, vector<64x128xbf16>
    %cst_19 = arith.constant dense<0.000000e+00> : vector<2x128xf32>
    %22 = tpu.matmul %20, %21, %cst_19 {dimension_numbers = #tpu.dot_dimension_numbers<[1], [0], [0], [1], [0, 0, 1, 1], [], []>} : vector<2x64xbf16>, vector<64x128xbf16>, vector<2x128xf32> -> vector<2x128xf32>
    %23 = arith.addf %19, %22 : vector<2x128xf32>
    %c0_20 = arith.constant 0 : index
    %c0_21 = arith.constant 0 : index
    %24 = vector.load %arg8[%c0_20, %c0_21] : memref<1x128xf32, #tpu.memory_space<vmem>>, vector<1x128xf32>
    %25 = vector.broadcast %24 : vector<1x128xf32> to vector<2x128xf32>
    %26 = arith.addf %23, %25 : vector<2x128xf32>
    %cst_22 = arith.constant 0.000000e+00 : f32
    %27 = vector.broadcast %cst_22 : f32 to vector<2x128xf32>
    %28 = arith.maximumf %26, %27 : vector<2x128xf32>
    %c0_23 = arith.constant 0 : index
    %c0_24 = arith.constant 0 : index
    %29 = vector.load %arg9[%c0_23, %c0_24] : memref<1x128xf32, #tpu.memory_space<vmem>>, vector<1x128xf32>
    %30 = vector.broadcast %29 : vector<1x128xf32> to vector<2x128xf32>
    %31 = arith.mulf %28, %30 : vector<2x128xf32>
    %cst_25 = arith.constant dense<0.000000e+00> : vector<2xf32>
    %32 = vector.multi_reduction <add>, %31, %cst_25 [1] : vector<2x128xf32> to vector<2xf32>
    %33 = vector.shape_cast %32 : vector<2xf32> to vector<2x1xf32>
    %c0_26 = arith.constant 0 : index
    %c0_27 = arith.constant 0 : index
    %34 = vector.load %arg10[%c0_26, %c0_27] : memref<1x1xf32, #tpu.memory_space<vmem>>, vector<1x1xf32>
    %35 = vector.broadcast %34 : vector<1x1xf32> to vector<2x1xf32>
    %36 = arith.addf %33, %35 : vector<2x1xf32>
    %c0_28 = arith.constant 0 : index
    %c0_29 = arith.constant 0 : index
    %37 = vector.load %arg11[%c0_28, %c0_29] : memref<2x1xf32, #tpu.memory_space<vmem>>, vector<2x1xf32>
    tpu.vector_store %arg11[%c0_28, %c0_29], %36 {strides = array<i32>} : memref<2x1xf32, #tpu.memory_space<vmem>>, vector<2x1xf32>,
    return
  }
}

</mosaic_0001>

<llo_original>
// kernel: value_network_aug_forward.2
$region0: #{value_network_aug_forward.2}
  #allocation0 [shape = 'u32[]', space=smem, size = 0x4, offset = 0x4, fixed_abs, tag = 'smem constant byte address 0x4 - core index']
  #allocation1 [shape = 'u32[72,128]{1,0:T(1,128)}', space=vmem, size = 0x9000, scoped, tag = 'internal scratch']
  #allocation2 [shape = 'f32[50,10]{1,0:T(8,128)}', space=vmem, size = 0x7000, scoped, tag = 'scratch operand']
  #allocation3 [shape = 'f32[50,320]{1,0:T(8,128)}', space=vmem, size = 0x15000, scoped, tag = 'scratch operand']
  %s0 = inlined_call_operand.vmem [shape: f32[2,20,10], index: 0, kind: input, shape index: {}]
  %s1 = inlined_call_operand.vmem [shape: bf16[3,10,320], index: 1, kind: input, shape index: {}]
  %s2 = inlined_call_operand.hbm [shape: f32[1,320], index: 2, kind: input, shape index: {}]
  %s3 = inlined_call_operand.hbm [shape: bf16[3,320,640], index: 3, kind: input, shape index: {}]
  %s4 = inlined_call_operand.hbm [shape: f32[1,640], index: 4, kind: input, shape index: {}]
  %s5 = inlined_call_operand.vmem [shape: bf16[2,20,640], index: 5, kind: output, shape index: {}]
  %s6 = sld [smem:[#allocation0]]
  $region42: #{value_network_aug_forward.2} parent=0
    _
  %s8 = ssub.s32 1, %s6
  %s9 = scalar_select 0, %s8, %s6
  $region1: #{value_network_aug_forward.2} parent=0
    #allocation4 [shape = 'u8[1536]{0}', space=vmem, size = 0x800, scoped, tag = 'input window, operand 2, single buffered']
    #allocation5 [shape = 's32[1]{0}', space=sflag, size = 0x4, scoped, tag = 'scoped memory for value_network_aug_forward.2']
    #allocation6 [shape = 'u8[1228800]{0}', space=vmem, size = 0x12c000, scoped, tag = 'input window, operand 3, single buffered']
    #allocation7 [shape = 's32[1]{0}', space=sflag, size = 0x4, scoped, tag = 'scoped memory for value_network_aug_forward.2']
    #allocation8 [shape = 'u8[2560]{0}', space=vmem, size = 0xc00, scoped, tag = 'input window, operand 4, single buffered']
    %10 = vsyncpa [#allocation5], 0
    %11 = vsyncpa [#allocation7], 0
    // Predicated region
    $region2: #{value_network_aug_forward.2} parent=1 // pred_check
      _
    $region3: #{value_network_aug_forward.2} parent=1 // pred_check_branch
      %13 = sbr.rel (0) target = $region5
    $region4: #{value_network_aug_forward.2} parent=1 // pred_region
      _
    $region5: #{value_network_aug_forward.2} parent=1 // pred_fallthru
      _
    // Predicated region
    $region6: #{value_network_aug_forward.2} parent=1 // pred_check
      _
    $region7: #{value_network_aug_forward.2} parent=1 // pred_check_branch
      %15 = sbr.rel (0) target = $region9
    $region8: #{value_network_aug_forward.2} parent=1 // pred_region
      _
    $region9: #{value_network_aug_forward.2} parent=1 // pred_fallthru
      _
    // Predicated region
    $region10: #{value_network_aug_forward.2} parent=1 // pred_check
      _
    $region11: #{value_network_aug_forward.2} parent=1 // pred_check_branch
      %17 = sbr.rel (0) target = $region13
    $region12: #{value_network_aug_forward.2} parent=1 // pred_region
      %19 = vsyncadd [#allocation5], 0
      %s21 = sshll.u32 %s2, 4
      %s22 = int_to_ptr.hbm [resolvable:$true] %s21
      %s23 = sshll.u32 [#allocation4], 4
      %s24 = int_to_ptr.vmem [resolvable:$true] %s23
      %26 = dma.hbm_to_vmem [thread:$0]  %s22, 48, %s24, [#allocation5]
    $region13: #{value_network_aug_forward.2} parent=1 // pred_fallthru
      _
    // Predicated region
    $region14: #{value_network_aug_forward.2} parent=1 // pred_check
      _
    $region15: #{value_network_aug_forward.2} parent=1 // pred_check_branch
      %28 = sbr.rel (0) target = $region17
    $region16: #{value_network_aug_forward.2} parent=1 // pred_region
      %30 = vsyncadd [#allocation7], 0
      %s31 = sshll.u32 %s3, 4
      %s32 = int_to_ptr.hbm [resolvable:$true] %s31
      %s33 = sshll.u32 [#allocation6], 4
      %s34 = int_to_ptr.vmem [resolvable:$true] %s33
      %39 = dma.hbm_to_vmem [thread:$0]  %s32, 38400, %s34, [#allocation7], 320, 320, 20
    $region17: #{value_network_aug_forward.2} parent=1 // pred_fallthru
      _
    // Predicated region
    $region18: #{value_network_aug_forward.2} parent=1 // pred_check
      _
    $region19: #{value_network_aug_forward.2} parent=1 // pred_check_branch
      %41 = sbr.rel (0) target = $region21
    $region20: #{value_network_aug_forward.2} parent=1 // pred_region
      %43 = vsyncadd [#allocation7], 0
      %s45 = sshll.u32 %s4, 4
      %s46 = int_to_ptr.hbm [resolvable:$true] %s45
      %s47 = sshll.u32 [#allocation8], 4
      %s48 = int_to_ptr.vmem [resolvable:$true] %s47
      %50 = dma.hbm_to_vmem [thread:$0]  %s46, 80, %s48, [#allocation7]
    $region21: #{value_network_aug_forward.2} parent=1 // pred_fallthru
      _
    // Predicated region
    $region22: #{value_network_aug_forward.2} parent=1 // pred_check
      _
    $region23: #{value_network_aug_forward.2} parent=1 // pred_check_branch
      %52 = sbr.rel (0) target = $region25
    $region24: #{value_network_aug_forward.2} parent=1 // pred_region
      %54 = dma.done [#allocation5], 48
    $region25: #{value_network_aug_forward.2} parent=1 // pred_fallthru
      _
    // Predicated region
    $region26: #{value_network_aug_forward.2} parent=1 // pred_check
      _
    $region27: #{value_network_aug_forward.2} parent=1 // pred_check_branch
      %56 = sbr.rel (0) target = $region29
    $region28: #{value_network_aug_forward.2} parent=1 // pred_region
      %58 = dma.done [#allocation7], 38400
    $region29: #{value_network_aug_forward.2} parent=1 // pred_fallthru
      _
    // Predicated region
    $region30: #{value_network_aug_forward.2} parent=1 // pred_check
      _
    $region31: #{value_network_aug_forward.2} parent=1 // pred_check_branch
      %60 = sbr.rel (0) target = $region33
    $region32: #{value_network_aug_forward.2} parent=1 // pred_region
      %62 = dma.done [#allocation7], 80
    $region33: #{value_network_aug_forward.2} parent=1 // pred_fallthru
      _
    %vm64 = vcmask 80896
    %65 = vst.msk [vmem:[#allocation2] sm:$0xff] %vm64, 0.0
    %66 = vst.msk [vmem:[#allocation2 + $0x8] sm:$0xff] %vm64, 0.0
    %67 = vst.msk [vmem:[#allocation2 + $0x10] sm:$0xff] %vm64, 0.0
    %68 = vst.msk [vmem:[#allocation2 + $0x18] sm:$0xff] %vm64, 0.0
    %69 = vst.msk [vmem:[#allocation2 + $0x20] sm:$0xff] %vm64, 0.0
    %70 = vst.msk [vmem:[#allocation2 + $0x28] sm:$0xff] %vm64, 0.0
    %vm71 = vcmask 74752
    %72 = vst.msk [vmem:[#allocation2 + $0x30] sm:$0x3] %vm71, 0.0
    %v73 = vld [vmem:[%s0] sm:$0xff]
    %v74 = vld [vmem:[%s0 + $0x8] sm:$0xff]
    %v75 = vld [vmem:[%s0 + $0x10] sm:$0xf]
    %76 = vst.msk [vmem:[#allocation2 + $0x2] sm:$0xff] %vm64, %v73
    %77 = vst.msk [vmem:[#allocation2 + $0xa] sm:$0xff] %vm64, %v74
    %vm78 = vcmask 76800
    %79 = vst.msk [vmem:[#allocation2 + $0x12] sm:$0xf] %vm78, %v75
    %s80 = scalar_lea.vmem %s0, 24
    %v81 = vld [vmem:[%s80] sm:$0xff]
    %v82 = vld [vmem:[%s80 + $0x8] sm:$0xff]
    %v83 = vld [vmem:[%s80 + $0x10] sm:$0xf]
    %84 = vst.msk [vmem:[#allocation2 + $0x1a] sm:$0xff] %vm64, %v81
    %85 = vst.msk [vmem:[#allocation2 + $0x22] sm:$0xff] %vm64, %v82
    %86 = vst.msk [vmem:[#allocation2 + $0x2a] sm:$0xf] %vm78, %v83
    %v87 = vld [vmem:[#allocation2] sm:$0xff]
    %v88 = vld [vmem:[#allocation2 + $0x8] sm:$0xff]
    %v89 = vld [vmem:[#allocation2 + $0x10] sm:$0xff]
    %v90 = vld [vmem:[#allocation2 + $0x18] sm:$0xff]
    %v91 = vld [vmem:[#allocation2 + $0x20] sm:$0xff]
    %v92 = vld [vmem:[#allocation2 + $0x28] sm:$0xff]
    %v93 = vld [vmem:[#allocation2 + $0x30] sm:$0x3]
    %v94 = vpack.c.bf16 %v88, %v87
    %v95 = vpack.c.bf16 %v90, %v89
    %v96 = vpack.c.bf16 %v92, %v91
    %v97 = vld [vmem:[%s1] sm:$0xff]
    %v98 = vld [vmem:[%s1 + $0x8] sm:$0xf]
    %v99 = vld [vmem:[%s1 + $0xc] sm:$0x11]
    %v100 = vld [vmem:[%s1 + $0x14] sm:$0x1]
    %v101 = vpack.c.bf16 %v93, %v93
    %s102 = scalar_lea.vmem %s1, 24
    %v103 = vld [vmem:[%s102] sm:$0xff]
    %v104 = vld [vmem:[%s102 + $0x8] sm:$0xf]
    %v105 = vld [vmem:[%s102 + $0xc] sm:$0x11]
    %v106 = vld [vmem:[%s102 + $0x14] sm:$0x1]
    %vm107 = vsmask.f32 7424
    %v109 = vshrl.u32 %v94, 16
    %v111 = vshll.u32 %v94, 16
    %v113 = vrot.slane %v111, 1
    %v114 = vor.u32 %v109, %v113
    %v116 = vshll.u32 %v95, 16
    %v118 = vrot.slane %v116, 1
    %v119 = vsel %vm107, %v114, %v118
    %v120 = vshrl.u32 %v95, 16
    %v122 = vor.u32 %v120, %v118
    %v124 = vshll.u32 %v96, 16
    %v126 = vrot.slane %v124, 1
    %v127 = vsel %vm107, %v122, %v126
    %v128 = vshrl.u32 %v96, 16
    %v130 = vor.u32 %v128, %v126
    %v132 = vshll.u32 %v101, 16
    %v134 = vrot.slane %v132, 1
    %v135 = vsel %vm107, %v130, %v134
    %v140 = vunpack.c.l.b16 %v103
    %v141 = vunpack.c.h.b16 %v103
    %v142 = vunpack.c.l.b16 %v104
    %v143 = vunpack.c.l.b16 %v105
    %v144 = vunpack.c.h.b16 %v105
    %v145 = vunpack.c.l.b16 %v106
    %v146 = vpack.c.b16 %v143, %v140
    %v147 = vpack.c.b16 %v144, %v141
    %v148 = vpack.c.b16 %v145, %v142
    %v150 = vsel %vm64, %v119, 0
    %v153 = vsel %vm64, %v127, 0
    %v156 = vsel %vm64, %v135, 0
    %vm158 = vcmask 1044480
    %v160 = vsel %vm158, %v146, 0
    %v163 = vsel %vm158, %v147, 0
    %v166 = vsel %vm158, %v148, 0
    %168 = vmatpush.bf16.msra.mxu0 0
    %169 = vmatpush.bf16.msra.mxu0 0
    %170 = vmatpush.bf16.msra.mxu0 0
    %171 = vmatpush.bf16.msra.mxu0 0
    %172 = vmatpush.bf16.msra.mxu0 0
    %173 = vmatpush.bf16.msra.mxu0 0
    %174 = vmatpush.bf16.msra.mxu0 0
    %175 = vmatpush.bf16.msra.mxu0 %v160
    %176 = vmatmul.bf16.gmra.mxu0 %v150
    %v177 = vpop.f32.mrf.mxu0
    %v178 = vadd.f32 0.0, %v177
    %v179 = vpop.f32.mrf.mxu0
    %v180 = vadd.f32 0.0, %v179
    %181 = vmatmul.bf16.gmra.mxu0 %v153
    %v182 = vpop.f32.mrf.mxu0
    %v183 = vadd.f32 0.0, %v182
    %v184 = vpop.f32.mrf.mxu0
    %v185 = vadd.f32 0.0, %v184
    %186 = vmatmul.bf16.gmra.mxu0 %v156
    %v187 = vpop.f32.mrf.mxu0
    %v188 = vadd.f32 0.0, %v187
    %v189 = vpop.f32.mrf.mxu0
    %v190 = vadd.f32 0.0, %v189
    %191 = vdwg.mxu0
    %192 = vmatpush.bf16.msra.mxu0 0
    %193 = vmatpush.bf16.msra.mxu0 0
    %194 = vmatpush.bf16.msra.mxu0 0
    %195 = vmatpush.bf16.msra.mxu0 0
    %196 = vmatpush.bf16.msra.mxu0 0
    %197 = vmatpush.bf16.msra.mxu0 0
    %198 = vmatpush.bf16.msra.mxu0 0
    %199 = vmatpush.bf16.msra.mxu0 %v163
    %200 = vmatmul.bf16.gmra.mxu0 %v150
    %v201 = vpop.f32.mrf.mxu0
    %v202 = vadd.f32 0.0, %v201
    %v203 = vpop.f32.mrf.mxu0
    %v204 = vadd.f32 0.0, %v203
    %205 = vmatmul.bf16.gmra.mxu0 %v153
    %v206 = vpop.f32.mrf.mxu0
    %v207 = vadd.f32 0.0, %v206
    %v208 = vpop.f32.mrf.mxu0
    %v209 = vadd.f32 0.0, %v208
    %210 = vmatmul.bf16.gmra.mxu0 %v156
    %v211 = vpop.f32.mrf.mxu0
    %v212 = vadd.f32 0.0, %v211
    %v213 = vpop.f32.mrf.mxu0
    %v214 = vadd.f32 0.0, %v213
    %215 = vdwg.mxu0
    %216 = vmatpush.bf16.msra.mxu0 0
    %217 = vmatpush.bf16.msra.mxu0 0
    %218 = vmatpush.bf16.msra.mxu0 0
    %219 = vmatpush.bf16.msra.mxu0 0
    %220 = vmatpush.bf16.msra.mxu0 0
    %221 = vmatpush.bf16.msra.mxu0 0
    %222 = vmatpush.bf16.msra.mxu0 0
    %223 = vmatpush.bf16.msra.mxu0 %v166
    %224 = vmatmul.bf16.gmra.mxu0 %v150
    %v225 = vpop.f32.mrf.mxu0
    %v226 = vadd.f32 0.0, %v225
    %v227 = vpop.f32.mrf.mxu0
    %v228 = vadd.f32 0.0, %v227
    %229 = vmatmul.bf16.gmra.mxu0 %v153
    %v230 = vpop.f32.mrf.mxu0
    %v231 = vadd.f32 0.0, %v230
    %v232 = vpop.f32.mrf.mxu0
    %v233 = vadd.f32 0.0, %v232
    %234 = vmatmul.bf16.gmra.mxu0 %v156
    %v235 = vpop.f32.mrf.mxu0
    %v236 = vadd.f32 0.0, %v235
    %v237 = vpop.f32.mrf.mxu0
    %v238 = vadd.f32 0.0, %v237
    %239 = vdwg.mxu0
    %v244 = vunpack.c.l.b16 %v97
    %v245 = vunpack.c.h.b16 %v97
    %v246 = vunpack.c.l.b16 %v98
    %v247 = vunpack.c.l.b16 %v99
    %v248 = vunpack.c.h.b16 %v99
    %v249 = vunpack.c.l.b16 %v100
    %v250 = vpack.c.b16 %v247, %v244
    %v251 = vpack.c.b16 %v248, %v245
    %v252 = vpack.c.b16 %v249, %v246
    %v253 = vsel %vm64, %v94, 0
    %v255 = vsel %vm64, %v95, 0
    %v257 = vsel %vm64, %v96, 0
    %v260 = vsel %vm158, %v250, 0
    %v263 = vsel %vm158, %v251, 0
    %v266 = vsel %vm158, %v252, 0
    %268 = vmatpush.bf16.msra.mxu0 0
    %269 = vmatpush.bf16.msra.mxu0 0
    %270 = vmatpush.bf16.msra.mxu0 0
    %271 = vmatpush.bf16.msra.mxu0 0
    %272 = vmatpush.bf16.msra.mxu0 0
    %273 = vmatpush.bf16.msra.mxu0 0
    %274 = vmatpush.bf16.msra.mxu0 0
    %275 = vmatpush.bf16.msra.mxu0 %v260
    %276 = vmatmul.bf16.gmra.mxu0 %v253
    %v277 = vpop.f32.mrf.mxu0
    %v278 = vadd.f32 %v178, %v277
    %v279 = vpop.f32.mrf.mxu0
    %v280 = vadd.f32 %v180, %v279
    %281 = vmatmul.bf16.gmra.mxu0 %v255
    %v282 = vpop.f32.mrf.mxu0
    %v283 = vadd.f32 %v183, %v282
    %v284 = vpop.f32.mrf.mxu0
    %v285 = vadd.f32 %v185, %v284
    %286 = vmatmul.bf16.gmra.mxu0 %v257
    %v287 = vpop.f32.mrf.mxu0
    %v288 = vadd.f32 %v188, %v287
    %v289 = vpop.f32.mrf.mxu0
    %v290 = vadd.f32 %v190, %v289
    %291 = vdwg.mxu0
    %292 = vmatpush.bf16.msra.mxu0 0
    %293 = vmatpush.bf16.msra.mxu0 0
    %294 = vmatpush.bf16.msra.mxu0 0
    %295 = vmatpush.bf16.msra.mxu0 0
    %296 = vmatpush.bf16.msra.mxu0 0
    %297 = vmatpush.bf16.msra.mxu0 0
    %298 = vmatpush.bf16.msra.mxu0 0
    %299 = vmatpush.bf16.msra.mxu0 %v263
    %300 = vmatmul.bf16.gmra.mxu0 %v253
    %v301 = vpop.f32.mrf.mxu0
    %v302 = vadd.f32 %v202, %v301
    %v303 = vpop.f32.mrf.mxu0
    %v304 = vadd.f32 %v204, %v303
    %305 = vmatmul.bf16.gmra.mxu0 %v255
    %v306 = vpop.f32.mrf.mxu0
    %v307 = vadd.f32 %v207, %v306
    %v308 = vpop.f32.mrf.mxu0
    %v309 = vadd.f32 %v209, %v308
    %310 = vmatmul.bf16.gmra.mxu0 %v257
    %v311 = vpop.f32.mrf.mxu0
    %v312 = vadd.f32 %v212, %v311
    %v313 = vpop.f32.mrf.mxu0
    %v314 = vadd.f32 %v214, %v313
    %315 = vdwg.mxu0
    %316 = vmatpush.bf16.msra.mxu0 0
    %317 = vmatpush.bf16.msra.mxu0 0
    %318 = vmatpush.bf16.msra.mxu0 0
    %319 = vmatpush.bf16.msra.mxu0 0
    %320 = vmatpush.bf16.msra.mxu0 0
    %321 = vmatpush.bf16.msra.mxu0 0
    %322 = vmatpush.bf16.msra.mxu0 0
    %323 = vmatpush.bf16.msra.mxu0 %v266
    %324 = vmatmul.bf16.gmra.mxu0 %v253
    %v325 = vpop.f32.mrf.mxu0
    %v326 = vadd.f32 %v226, %v325
    %v327 = vpop.f32.mrf.mxu0
    %v328 = vadd.f32 %v228, %v327
    %329 = vmatmul.bf16.gmra.mxu0 %v255
    %v330 = vpop.f32.mrf.mxu0
    %v331 = vadd.f32 %v231, %v330
    %v332 = vpop.f32.mrf.mxu0
    %v333 = vadd.f32 %v233, %v332
    %334 = vmatmul.bf16.gmra.mxu0 %v257
    %v335 = vpop.f32.mrf.mxu0
    %v336 = vadd.f32 %v236, %v335
    %v337 = vpop.f32.mrf.mxu0
    %v338 = vadd.f32 %v238, %v337
    %339 = vdwg.mxu0
    %s340 = scalar_lea.vmem %s1, 48
    %v341 = vld [vmem:[%s340] sm:$0xff]
    %v342 = vld [vmem:[%s340 + $0x8] sm:$0xf]
    %v343 = vld [vmem:[%s340 + $0xc] sm:$0x11]
    %v344 = vld [vmem:[%s340 + $0x14] sm:$0x1]
    %vm349 = vcmask 1046528
    %v350 = vrot.slane %v94, 1
    %v351 = vrot.slane %v95, 1
    %v352 = vsel %vm349, %v350, %v351
    %v353 = vrot.slane %v96, 1
    %v354 = vsel %vm349, %v351, %v353
    %v355 = vrot.slane %v101, 1
    %v356 = vsel %vm349, %v353, %v355
    %v361 = vunpack.c.l.b16 %v341
    %v362 = vunpack.c.h.b16 %v341
    %v363 = vunpack.c.l.b16 %v342
    %v364 = vunpack.c.l.b16 %v343
    %v365 = vunpack.c.h.b16 %v343
    %v366 = vunpack.c.l.b16 %v344
    %v367 = vpack.c.b16 %v364, %v361
    %v368 = vpack.c.b16 %v365, %v362
    %v369 = vpack.c.b16 %v366, %v363
    %v371 = vsel %vm64, %v352, 0
    %v374 = vsel %vm64, %v354, 0
    %v377 = vsel %vm64, %v356, 0
    %v380 = vsel %vm158, %v367, 0
    %v383 = vsel %vm158, %v368, 0
    %v386 = vsel %vm158, %v369, 0
    %388 = vmatpush.bf16.msra.mxu0 0
    %389 = vmatpush.bf16.msra.mxu0 0
    %390 = vmatpush.bf16.msra.mxu0 0
    %391 = vmatpush.bf16.msra.mxu0 0
    %392 = vmatpush.bf16.msra.mxu0 0
    %393 = vmatpush.bf16.msra.mxu0 0
    %394 = vmatpush.bf16.msra.mxu0 0
    %395 = vmatpush.bf16.msra.mxu0 %v380
    %396 = vmatmul.bf16.gmra.mxu0 %v371
    %v397 = vpop.f32.mrf.mxu0
    %v398 = vadd.f32 0.0, %v397
    %v399 = vpop.f32.mrf.mxu0
    %v400 = vadd.f32 0.0, %v399
    %401 = vmatmul.bf16.gmra.mxu0 %v374
    %v402 = vpop.f32.mrf.mxu0
    %v403 = vadd.f32 0.0, %v402
    %v404 = vpop.f32.mrf.mxu0
    %v405 = vadd.f32 0.0, %v404
    %406 = vmatmul.bf16.gmra.mxu0 %v377
    %v407 = vpop.f32.mrf.mxu0
    %v408 = vadd.f32 0.0, %v407
    %v409 = vpop.f32.mrf.mxu0
    %v410 = vadd.f32 0.0, %v409
    %411 = vdwg.mxu0
    %412 = vmatpush.bf16.msra.mxu0 0
    %413 = vmatpush.bf16.msra.mxu0 0
    %414 = vmatpush.bf16.msra.mxu0 0
    %415 = vmatpush.bf16.msra.mxu0 0
    %416 = vmatpush.bf16.msra.mxu0 0
    %417 = vmatpush.bf16.msra.mxu0 0
    %418 = vmatpush.bf16.msra.mxu0 0
    %419 = vmatpush.bf16.msra.mxu0 %v383
    %420 = vmatmul.bf16.gmra.mxu0 %v371
    %v421 = vpop.f32.mrf.mxu0
    %v422 = vadd.f32 0.0, %v421
    %v423 = vpop.f32.mrf.mxu0
    %v424 = vadd.f32 0.0, %v423
    %425 = vmatmul.bf16.gmra.mxu0 %v374
    %v426 = vpop.f32.mrf.mxu0
    %v427 = vadd.f32 0.0, %v426
    %v428 = vpop.f32.mrf.mxu0
    %v429 = vadd.f32 0.0, %v428
    %430 = vmatmul.bf16.gmra.mxu0 %v377
    %v431 = vpop.f32.mrf.mxu0
    %v432 = vadd.f32 0.0, %v431
    %v433 = vpop.f32.mrf.mxu0
    %v434 = vadd.f32 0.0, %v433
    %435 = vdwg.mxu0
    %436 = vmatpush.bf16.msra.mxu0 0
    %437 = vmatpush.bf16.msra.mxu0 0
    %438 = vmatpush.bf16.msra.mxu0 0
    %439 = vmatpush.bf16.msra.mxu0 0
    %440 = vmatpush.bf16.msra.mxu0 0
    %441 = vmatpush.bf16.msra.mxu0 0
    %442 = vmatpush.bf16.msra.mxu0 0
    %443 = vmatpush.bf16.msra.mxu0 %v386
    %444 = vmatmul.bf16.gmra.mxu0 %v371
    %v445 = vpop.f32.mrf.mxu0
    %v446 = vadd.f32 0.0, %v445
    %v447 = vpop.f32.mrf.mxu0
    %v448 = vadd.f32 0.0, %v447
    %449 = vmatmul.bf16.gmra.mxu0 %v374
    %v450 = vpop.f32.mrf.mxu0
    %v451 = vadd.f32 0.0, %v450
    %v452 = vpop.f32.mrf.mxu0
    %v453 = vadd.f32 0.0, %v452
    %454 = vmatmul.bf16.gmra.mxu0 %v377
    %v455 = vpop.f32.mrf.mxu0
    %v456 = vadd.f32 0.0, %v455
    %v457 = vpop.f32.mrf.mxu0
    %v458 = vadd.f32 0.0, %v457
    %459 = vdwg.mxu0
    %v460 = vadd.f32 %v278, %v398
    %v461 = vadd.f32 %v302, %v422
    %v462 = vadd.f32 %v326, %v446
    %v463 = vadd.f32 %v280, %v400
    %v464 = vadd.f32 %v304, %v424
    %v465 = vadd.f32 %v328, %v448
    %v466 = vadd.f32 %v283, %v403
    %v467 = vadd.f32 %v307, %v427
    %v468 = vadd.f32 %v331, %v451
    %v469 = vadd.f32 %v285, %v405
    %v470 = vadd.f32 %v309, %v429
    %v471 = vadd.f32 %v333, %v453
    %v472 = vadd.f32 %v288, %v408
    %v473 = vadd.f32 %v312, %v432
    %v474 = vadd.f32 %v336, %v456
    %v475 = vadd.f32 %v290, %v410
    %v476 = vadd.f32 %v314, %v434
    %v477 = vadd.f32 %v338, %v458
    %v478 = vld [vmem:[#allocation4] sm:$0x7]
    %v480 = vperm.slane %v478, 0
    %v481 = vperm.slane %v478, 1
    %v482 = vperm.slane %v478, 2
    %v486 = vadd.f32 %v460, %v480
    %v487 = vadd.f32 %v461, %v481
    %v488 = vadd.f32 %v462, %v482
    %v489 = vadd.f32 %v463, %v480
    %v490 = vadd.f32 %v464, %v481
    %v491 = vadd.f32 %v465, %v482
    %v492 = vadd.f32 %v466, %v480
    %v493 = vadd.f32 %v467, %v481
    %v494 = vadd.f32 %v468, %v482
    %v495 = vadd.f32 %v469, %v480
    %v496 = vadd.f32 %v470, %v481
    %v497 = vadd.f32 %v471, %v482
    %v498 = vadd.f32 %v472, %v480
    %v499 = vadd.f32 %v473, %v481
    %v500 = vadd.f32 %v474, %v482
    %v501 = vadd.f32 %v475, %v480
    %v502 = vadd.f32 %v476, %v481
    %v503 = vadd.f32 %v477, %v482
    %v504 = vmax.f32 %v486, 0.0
    %v505 = vmax.f32 %v487, 0.0
    %v506 = vmax.f32 %v488, 0.0
    %v507 = vmax.f32 %v489, 0.0
    %v508 = vmax.f32 %v490, 0.0
    %v509 = vmax.f32 %v491, 0.0
    %v510 = vmax.f32 %v492, 0.0
    %v511 = vmax.f32 %v493, 0.0
    %v512 = vmax.f32 %v494, 0.0
    %v513 = vmax.f32 %v495, 0.0
    %v514 = vmax.f32 %v496, 0.0
    %v515 = vmax.f32 %v497, 0.0
    %v516 = vmax.f32 %v498, 0.0
    %v517 = vmax.f32 %v499, 0.0
    %v518 = vmax.f32 %v500, 0.0
    %v519 = vmax.f32 %v501, 0.0
    %v520 = vmax.f32 %v502, 0.0
    %v521 = vmax.f32 %v503, 0.0
    %522 = vst [vmem:[#allocation3] sm:$0xff] 0.0
    %523 = vst [vmem:[#allocation3 + $0x8] sm:$0xff] 0.0
    %vm524 = vcmask 523264
    %525 = vst.msk [vmem:[#allocation3 + $0x10] sm:$0xff] %vm524, 0.0
    %526 = vst [vmem:[#allocation3 + $0x18] sm:$0xff] 0.0
    %527 = vst [vmem:[#allocation3 + $0x20] sm:$0xff] 0.0
    %528 = vst.msk [vmem:[#allocation3 + $0x28] sm:$0xff] %vm524, 0.0
    %529 = vst [vmem:[#allocation3 + $0x30] sm:$0xff] 0.0
    %530 = vst [vmem:[#allocation3 + $0x38] sm:$0xff] 0.0
    %531 = vst.msk [vmem:[#allocation3 + $0x40] sm:$0xff] %vm524, 0.0
    %532 = vst [vmem:[#allocation3 + $0x48] sm:$0xff] 0.0
    %533 = vst [vmem:[#allocation3 + $0x50] sm:$0xff] 0.0
    %534 = vst.msk [vmem:[#allocation3 + $0x58] sm:$0xff] %vm524, 0.0
    %535 = vst [vmem:[#allocation3 + $0x60] sm:$0xff] 0.0
    %536 = vst [vmem:[#allocation3 + $0x68] sm:$0xff] 0.0
    %537 = vst.msk [vmem:[#allocation3 + $0x70] sm:$0xff] %vm524, 0.0
    %538 = vst [vmem:[#allocation3 + $0x78] sm:$0xff] 0.0
    %539 = vst [vmem:[#allocation3 + $0x80] sm:$0xff] 0.0
    %540 = vst.msk [vmem:[#allocation3 + $0x88] sm:$0xff] %vm524, 0.0
    %541 = vst [vmem:[#allocation3 + $0x90] sm:$0x3] 0.0
    %542 = vst [vmem:[#allocation3 + $0x98] sm:$0x3] 0.0
    %vm543 = vcmask 517120
    %544 = vst.msk [vmem:[#allocation3 + $0xa0] sm:$0x3] %vm543, 0.0
    %vm554 = vcmask 1040384
    %v555 = vrot.slane %v504, 7
    %v556 = vrot.slane %v505, 7
    %v557 = vrot.slane %v506, 7
    %v558 = vrot.slane %v507, 7
    %v559 = vsel %vm554, %v555, %v558
    %v560 = vrot.slane %v508, 7
    %v561 = vsel %vm554, %v556, %v560
    %v562 = vrot.slane %v509, 7
    %v563 = vsel %vm554, %v557, %v562
    %v564 = vrot.slane %v510, 7
    %v565 = vsel %vm554, %v558, %v564
    %v566 = vrot.slane %v511, 7
    %v567 = vsel %vm554, %v560, %v566
    %v568 = vrot.slane %v512, 7
    %v569 = vsel %vm554, %v562, %v568
    %579 = vst [vmem:[#allocation3] sm:$0xfc] %v555
    %580 = vst [vmem:[#allocation3 + $0x8] sm:$0xfc] %v556
    %vm581 = vcmask 523266
    %582 = vst.msk [vmem:[#allocation3 + $0x10] sm:$0xfc] %vm581, %v557
    %583 = vst [vmem:[#allocation3 + $0x18] sm:$0xff] %v559
    %584 = vst [vmem:[#allocation3 + $0x20] sm:$0xff] %v561
    %585 = vst.msk [vmem:[#allocation3 + $0x28] sm:$0xff] %vm524, %v563
    %586 = vst [vmem:[#allocation3 + $0x30] sm:$0x3f] %v565
    %587 = vst [vmem:[#allocation3 + $0x38] sm:$0x3f] %v567
    %vm588 = vcmask 521216
    %589 = vst.msk [vmem:[#allocation3 + $0x40] sm:$0x3f] %vm588, %v569
    %v599 = vrot.slane %v513, 7
    %v600 = vrot.slane %v514, 7
    %v601 = vrot.slane %v515, 7
    %v602 = vrot.slane %v516, 7
    %v603 = vsel %vm554, %v599, %v602
    %v604 = vrot.slane %v517, 7
    %v605 = vsel %vm554, %v600, %v604
    %v606 = vrot.slane %v518, 7
    %v607 = vsel %vm554, %v601, %v606
    %v608 = vrot.slane %v519, 7
    %v609 = vsel %vm554, %v602, %v608
    %v610 = vrot.slane %v520, 7
    %v611 = vsel %vm554, %v604, %v610
    %v612 = vrot.slane %v521, 7
    %v613 = vsel %vm554, %v606, %v612
    %623 = vst [vmem:[#allocation3 + $0x48] sm:$0xfc] %v599
    %624 = vst [vmem:[#allocation3 + $0x50] sm:$0xfc] %v600
    %625 = vst.msk [vmem:[#allocation3 + $0x58] sm:$0xfc] %vm581, %v601
    %626 = vst [vmem:[#allocation3 + $0x60] sm:$0xff] %v603
    %627 = vst [vmem:[#allocation3 + $0x68] sm:$0xff] %v605
    %628 = vst.msk [vmem:[#allocation3 + $0x70] sm:$0xff] %vm524, %v607
    %629 = vst [vmem:[#allocation3 + $0x78] sm:$0x3f] %v609
    %630 = vst [vmem:[#allocation3 + $0x80] sm:$0x3f] %v611
    %631 = vst.msk [vmem:[#allocation3 + $0x88] sm:$0x3f] %vm588, %v613
    %v632 = vld [vmem:[#allocation3] sm:$0xff]
    %v633 = vld [vmem:[#allocation3 + $0x8] sm:$0xff]
    %v634 = vld [vmem:[#allocation3 + $0x10] sm:$0xff]
    %v635 = vld [vmem:[#allocation3 + $0x18] sm:$0xff]
    %v636 = vld [vmem:[#allocation3 + $0x20] sm:$0xff]
    %v637 = vld [vmem:[#allocation3 + $0x28] sm:$0xff]
    %v638 = vld [vmem:[#allocation3 + $0x30] sm:$0xff]
    %v639 = vld [vmem:[#allocation3 + $0x38] sm:$0xff]
    %v640 = vld [vmem:[#allocation3 + $0x40] sm:$0xff]
    %v641 = vld [vmem:[#allocation3 + $0x48] sm:$0xff]
    %v642 = vld [vmem:[#allocation3 + $0x50] sm:$0xff]
    %v643 = vld [vmem:[#allocation3 + $0x58] sm:$0xff]
    %v644 = vld [vmem:[#allocation3 + $0x60] sm:$0xff]
    %v645 = vld [vmem:[#allocation3 + $0x68] sm:$0xff]
    %v646 = vld [vmem:[#allocation3 + $0x70] sm:$0xff]
    %v647 = vld [vmem:[#allocation3 + $0x78] sm:$0xff]
    %v648 = vld [vmem:[#allocation3 + $0x80] sm:$0xff]
    %v649 = vld [vmem:[#allocation3 + $0x88] sm:$0xff]
    %v650 = vld [vmem:[#allocation3 + $0x90] sm:$0x3]
    %v651 = vld [vmem:[#allocation3 + $0x98] sm:$0x3]
    %v652 = vld [vmem:[#allocation3 + $0xa0] sm:$0x3]
    %v653 = vpack.c.bf16 %v635, %v632
    %v654 = vpack.c.bf16 %v636, %v633
    %v655 = vpack.c.bf16 %v637, %v634
    %v656 = vpack.c.bf16 %v641, %v638
    %v657 = vpack.c.bf16 %v642, %v639
    %v658 = vpack.c.bf16 %v643, %v640
    %v659 = vpack.c.bf16 %v647, %v644
    %v660 = vpack.c.bf16 %v648, %v645
    %v661 = vpack.c.bf16 %v649, %v646
    %v662 = vld [vmem:[#allocation6] sm:$0xff]
    %v663 = vld [vmem:[#allocation6 + $0x8] sm:$0xff]
    %v664 = vld [vmem:[#allocation6 + $0x10] sm:$0xf]
    %v665 = vld [vmem:[#allocation6 + $0x14] sm:$0xff]
    %v666 = vld [vmem:[#allocation6 + $0x1c] sm:$0xff]
    %v667 = vld [vmem:[#allocation6 + $0x24] sm:$0xf]
    %v668 = vld [vmem:[#allocation6 + $0x28] sm:$0xff]
    %v669 = vld [vmem:[#allocation6 + $0x30] sm:$0xff]
    %v670 = vld [vmem:[#allocation6 + $0x38] sm:$0xf]
    %v671 = vld [vmem:[#allocation6 + $0x3c] sm:$0xff]
    %v672 = vld [vmem:[#allocation6 + $0x44] sm:$0xff]
    %v673 = vld [vmem:[#allocation6 + $0x4c] sm:$0xf]
    %v674 = vld [vmem:[#allocation6 + $0x50] sm:$0xff]
    %v675 = vld [vmem:[#allocation6 + $0x58] sm:$0xff]
    %v676 = vld [vmem:[#allocation6 + $0x60] sm:$0xf]
    %v677 = vld [vmem:[#allocation6 + $0x64] sm:$0xff]
    %v678 = vld [vmem:[#allocation6 + $0x6c] sm:$0xff]
    %v679 = vld [vmem:[#allocation6 + $0x74] sm:$0xf]
    %v680 = vld [vmem:[#allocation6 + $0x78] sm:$0xff]
    %v681 = vld [vmem:[#allocation6 + $0x80] sm:$0xff]
    %v682 = vld [vmem:[#allocation6 + $0x88] sm:$0xf]
    %v683 = vld [vmem:[#allocation6 + $0x8c] sm:$0xff]
    %v684 = vld [vmem:[#allocation6 + $0x94] sm:$0xff]
    %v685 = vld [vmem:[#allocation6 + $0x9c] sm:$0xf]
    %v686 = vld [vmem:[#allocation6 + $0xa0] sm:$0xff]
    %v687 = vld [vmem:[#allocation6 + $0xa8] sm:$0xff]
    %v688 = vld [vmem:[#allocation6 + $0xb0] sm:$0xf]
    %v689 = vld [vmem:[#allocation6 + $0xb4] sm:$0xff]
    %v690 = vld [vmem:[#allocation6 + $0xbc] sm:$0xff]
    %v691 = vld [vmem:[#allocation6 + $0xc4] sm:$0xf]
    %v692 = vld [vmem:[#allocation6 + $0xc8] sm:$0xff]
    %v693 = vld [vmem:[#allocation6 + $0xd0] sm:$0xff]
    %v694 = vld [vmem:[#allocation6 + $0xd8] sm:$0xf]
    %v695 = vld [vmem:[#allocation6 + $0xdc] sm:$0xff]
    %v696 = vld [vmem:[#allocation6 + $0xe4] sm:$0xff]
    %v697 = vld [vmem:[#allocation6 + $0xec] sm:$0xf]
    %v698 = vld [vmem:[#allocation6 + $0xf0] sm:$0xff]
    %v699 = vld [vmem:[#allocation6 + $0xf8] sm:$0xff]
    %v700 = vld [vmem:[#allocation6 + $0x100] sm:$0xf]
    %v701 = vld [vmem:[#allocation6 + $0x104] sm:$0xff]
    %v702 = vld [vmem:[#allocation6 + $0x10c] sm:$0xff]
    %v703 = vld [vmem:[#allocation6 + $0x114] sm:$0xf]
    %v704 = vld [vmem:[#allocation6 + $0x118] sm:$0xff]
    %v705 = vld [vmem:[#allocation6 + $0x120] sm:$0xff]
    %v706 = vld [vmem:[#allocation6 + $0x128] sm:$0xf]
    %v707 = vld [vmem:[#allocation6 + $0x12c] sm:$0xff]
    %v708 = vld [vmem:[#allocation6 + $0x134] sm:$0xff]
    %v709 = vld [vmem:[#allocation6 + $0x13c] sm:$0xf]
    %v710 = vld [vmem:[#allocation6 + $0x140] sm:$0xff]
    %v711 = vld [vmem:[#allocation6 + $0x148] sm:$0xff]
    %v712 = vld [vmem:[#allocation6 + $0x150] sm:$0xf]
    %v713 = vld [vmem:[#allocation6 + $0x154] sm:$0xff]
    %v714 = vld [vmem:[#allocation6 + $0x15c] sm:$0xff]
    %v715 = vld [vmem:[#allocation6 + $0x164] sm:$0xf]
    %v716 = vld [vmem:[#allocation6 + $0x168] sm:$0xff]
    %v717 = vld [vmem:[#allocation6 + $0x170] sm:$0xff]
    %v718 = vld [vmem:[#allocation6 + $0x178] sm:$0xf]
    %v719 = vld [vmem:[#allocation6 + $0x17c] sm:$0xff]
    %v720 = vld [vmem:[#allocation6 + $0x184] sm:$0xff]
    %v721 = vld [vmem:[#allocation6 + $0x18c] sm:$0xf]
    %v722 = vld [vmem:[#allocation6 + $0x190] sm:$0xff]
    %v723 = vld [vmem:[#allocation6 + $0x198] sm:$0xff]
    %v724 = vld [vmem:[#allocation6 + $0x1a0] sm:$0xf]
    %v725 = vld [vmem:[#allocation6 + $0x1a4] sm:$0xff]
    %v726 = vld [vmem:[#allocation6 + $0x1ac] sm:$0xff]
    %v727 = vld [vmem:[#allocation6 + $0x1b4] sm:$0xf]
    %v728 = vld [vmem:[#allocation6 + $0x1b8] sm:$0xff]
    %v729 = vld [vmem:[#allocation6 + $0x1c0] sm:$0xff]
    %v730 = vld [vmem:[#allocation6 + $0x1c8] sm:$0xf]
    %v731 = vld [vmem:[#allocation6 + $0x1cc] sm:$0xff]
    %v732 = vld [vmem:[#allocation6 + $0x1d4] sm:$0xff]
    %v733 = vld [vmem:[#allocation6 + $0x1dc] sm:$0xf]
    %v734 = vld [vmem:[#allocation6 + $0x1e0] sm:$0xff]
    %v735 = vld [vmem:[#allocation6 + $0x1e8] sm:$0xff]
    %v736 = vld [vmem:[#allocation6 + $0x1f0] sm:$0xf]
    %v737 = vld [vmem:[#allocation6 + $0x1f4] sm:$0xff]
    %v738 = vld [vmem:[#allocation6 + $0x1fc] sm:$0xff]
    %v739 = vld [vmem:[#allocation6 + $0x204] sm:$0xf]
    %v740 = vld [vmem:[#allocation6 + $0x208] sm:$0xff]
    %v741 = vld [vmem:[#allocation6 + $0x210] sm:$0xff]
    %v742 = vld [vmem:[#allocation6 + $0x218] sm:$0xf]
    %v743 = vld [vmem:[#allocation6 + $0x21c] sm:$0xff]
    %v744 = vld [vmem:[#allocation6 + $0x224] sm:$0xff]
    %v745 = vld [vmem:[#allocation6 + $0x22c] sm:$0xf]
    %v746 = vld [vmem:[#allocation6 + $0x230] sm:$0xff]
    %v747 = vld [vmem:[#allocation6 + $0x238] sm:$0xff]
    %v748 = vld [vmem:[#allocation6 + $0x240] sm:$0xf]
    %v749 = vld [vmem:[#allocation6 + $0x244] sm:$0xff]
    %v750 = vld [vmem:[#allocation6 + $0x24c] sm:$0xff]
    %v751 = vld [vmem:[#allocation6 + $0x254] sm:$0xf]
    %v752 = vld [vmem:[#allocation6 + $0x258] sm:$0xff]
    %v753 = vld [vmem:[#allocation6 + $0x260] sm:$0xff]
    %v754 = vld [vmem:[#allocation6 + $0x268] sm:$0xf]
    %v755 = vld [vmem:[#allocation6 + $0x26c] sm:$0xff]
    %v756 = vld [vmem:[#allocation6 + $0x274] sm:$0xff]
    %v757 = vld [vmem:[#allocation6 + $0x27c] sm:$0xf]
    %v758 = vld [vmem:[#allocation6 + $0x280] sm:$0xff]
    %v759 = vld [vmem:[#allocation6 + $0x288] sm:$0xff]
    %v760 = vld [vmem:[#allocation6 + $0x290] sm:$0xf]
    %v761 = vld [vmem:[#allocation6 + $0x294] sm:$0xff]
    %v762 = vld [vmem:[#allocation6 + $0x29c] sm:$0xff]
    %v763 = vld [vmem:[#allocation6 + $0x2a4] sm:$0xf]
    %v764 = vld [vmem:[#allocation6 + $0x2a8] sm:$0xff]
    %v765 = vld [vmem:[#allocation6 + $0x2b0] sm:$0xff]
    %v766 = vld [vmem:[#allocation6 + $0x2b8] sm:$0xf]
    %v767 = vld [vmem:[#allocation6 + $0x2bc] sm:$0xff]
    %v768 = vld [vmem:[#allocation6 + $0x2c4] sm:$0xff]
    %v769 = vld [vmem:[#allocation6 + $0x2cc] sm:$0xf]
    %v770 = vld [vmem:[#allocation6 + $0x2d0] sm:$0xff]
    %v771 = vld [vmem:[#allocation6 + $0x2d8] sm:$0xff]
    %v772 = vld [vmem:[#allocation6 + $0x2e0] sm:$0xf]
    %v773 = vld [vmem:[#allocation6 + $0x2e4] sm:$0xff]
    %v774 = vld [vmem:[#allocation6 + $0x2ec] sm:$0xff]
    %v775 = vld [vmem:[#allocation6 + $0x2f4] sm:$0xf]
    %v776 = vld [vmem:[#allocation6 + $0x2f8] sm:$0xff]
    %v777 = vld [vmem:[#allocation6 + $0x300] sm:$0xff]
    %v778 = vld [vmem:[#allocation6 + $0x308] sm:$0xf]
    %v779 = vld [vmem:[#allocation6 + $0x30c] sm:$0xff]
    %v780 = vld [vmem:[#allocation6 + $0x314] sm:$0xff]
    %v781 = vld [vmem:[#allocation6 + $0x31c] sm:$0xf]
    %v782 = vpack.c.bf16 %v650, %v650
    %v783 = vpack.c.bf16 %v651, %v651
    %v784 = vpack.c.bf16 %v652, %v652
    %s785 = scalar_lea.vmem [#allocation6], 800
    %v786 = vld [vmem:[%s785] sm:$0xff]
    %v787 = vld [vmem:[%s785 + $0x8] sm:$0xff]
    %v788 = vld [vmem:[%s785 + $0x10] sm:$0xf]
    %v789 = vld [vmem:[%s785 + $0x14] sm:$0xff]
    %v790 = vld [vmem:[%s785 + $0x1c] sm:$0xff]
    %v791 = vld [vmem:[%s785 + $0x24] sm:$0xf]
    %v792 = vld [vmem:[%s785 + $0x28] sm:$0xff]
    %v793 = vld [vmem:[%s785 + $0x30] sm:$0xff]
    %v794 = vld [vmem:[%s785 + $0x38] sm:$0xf]
    %v795 = vld [vmem:[%s785 + $0x3c] sm:$0xff]
    %v796 = vld [vmem:[%s785 + $0x44] sm:$0xff]
    %v797 = vld [vmem:[%s785 + $0x4c] sm:$0xf]
    %v798 = vld [vmem:[%s785 + $0x50] sm:$0xff]
    %v799 = vld [vmem:[%s785 + $0x58] sm:$0xff]
    %v800 = vld [vmem:[%s785 + $0x60] sm:$0xf]
    %v801 = vld [vmem:[%s785 + $0x64] sm:$0xff]
    %v802 = vld [vmem:[%s785 + $0x6c] sm:$0xff]
    %v803 = vld [vmem:[%s785 + $0x74] sm:$0xf]
    %v804 = vld [vmem:[%s785 + $0x78] sm:$0xff]
    %v805 = vld [vmem:[%s785 + $0x80] sm:$0xff]
    %v806 = vld [vmem:[%s785 + $0x88] sm:$0xf]
    %v807 = vld [vmem:[%s785 + $0x8c] sm:$0xff]
    %v808 = vld [vmem:[%s785 + $0x94] sm:$0xff]
    %v809 = vld [vmem:[%s785 + $0x9c] sm:$0xf]
    %v810 = vld [vmem:[%s785 + $0xa0] sm:$0xff]
    %v811 = vld [vmem:[%s785 + $0xa8] sm:$0xff]
    %v812 = vld [vmem:[%s785 + $0xb0] sm:$0xf]
    %v813 = vld [vmem:[%s785 + $0xb4] sm:$0xff]
    %v814 = vld [vmem:[%s785 + $0xbc] sm:$0xff]
    %v815 = vld [vmem:[%s785 + $0xc4] sm:$0xf]
    %v816 = vld [vmem:[%s785 + $0xc8] sm:$0xff]
    %v817 = vld [vmem:[%s785 + $0xd0] sm:$0xff]
    %v818 = vld [vmem:[%s785 + $0xd8] sm:$0xf]
    %v819 = vld [vmem:[%s785 + $0xdc] sm:$0xff]
    %v820 = vld [vmem:[%s785 + $0xe4] sm:$0xff]
    %v821 = vld [vmem:[%s785 + $0xec] sm:$0xf]
    %v822 = vld [vmem:[%s785 + $0xf0] sm:$0xff]
    %v823 = vld [vmem:[%s785 + $0xf8] sm:$0xff]
    %v824 = vld [vmem:[%s785 + $0x100] sm:$0xf]
    %v825 = vld [vmem:[%s785 + $0x104] sm:$0xff]
    %v826 = vld [vmem:[%s785 + $0x10c] sm:$0xff]
    %v827 = vld [vmem:[%s785 + $0x114] sm:$0xf]
    %v828 = vld [vmem:[%s785 + $0x118] sm:$0xff]
    %v829 = vld [vmem:[%s785 + $0x120] sm:$0xff]
    %v830 = vld [vmem:[%s785 + $0x128] sm:$0xf]
    %v831 = vld [vmem:[%s785 + $0x12c] sm:$0xff]
    %v832 = vld [vmem:[%s785 + $0x134] sm:$0xff]
    %v833 = vld [vmem:[%s785 + $0x13c] sm:$0xf]
    %v834 = vld [vmem:[%s785 + $0x140] sm:$0xff]
    %v835 = vld [vmem:[%s785 + $0x148] sm:$0xff]
    %v836 = vld [vmem:[%s785 + $0x150] sm:$0xf]
    %v837 = vld [vmem:[%s785 + $0x154] sm:$0xff]
    %v838 = vld [vmem:[%s785 + $0x15c] sm:$0xff]
    %v839 = vld [vmem:[%s785 + $0x164] sm:$0xf]
    %v840 = vld [vmem:[%s785 + $0x168] sm:$0xff]
    %v841 = vld [vmem:[%s785 + $0x170] sm:$0xff]
    %v842 = vld [vmem:[%s785 + $0x178] sm:$0xf]
    %v843 = vld [vmem:[%s785 + $0x17c] sm:$0xff]
    %v844 = vld [vmem:[%s785 + $0x184] sm:$0xff]
    %v845 = vld [vmem:[%s785 + $0x18c] sm:$0xf]
    %v846 = vld [vmem:[%s785 + $0x190] sm:$0xff]
    %v847 = vld [vmem:[%s785 + $0x198] sm:$0xff]
    %v848 = vld [vmem:[%s785 + $0x1a0] sm:$0xf]
    %v849 = vld [vmem:[%s785 + $0x1a4] sm:$0xff]
    %v850 = vld [vmem:[%s785 + $0x1ac] sm:$0xff]
    %v851 = vld [vmem:[%s785 + $0x1b4] sm:$0xf]
    %v852 = vld [vmem:[%s785 + $0x1b8] sm:$0xff]
    %v853 = vld [vmem:[%s785 + $0x1c0] sm:$0xff]
    %v854 = vld [vmem:[%s785 + $0x1c8] sm:$0xf]
    %v855 = vld [vmem:[%s785 + $0x1cc] sm:$0xff]
    %v856 = vld [vmem:[%s785 + $0x1d4] sm:$0xff]
    %v857 = vld [vmem:[%s785 + $0x1dc] sm:$0xf]
    %v858 = vld [vmem:[%s785 + $0x1e0] sm:$0xff]
    %v859 = vld [vmem:[%s785 + $0x1e8] sm:$0xff]
    %v860 = vld [vmem:[%s785 + $0x1f0] sm:$0xf]
    %v861 = vld [vmem:[%s785 + $0x1f4] sm:$0xff]
    %v862 = vld [vmem:[%s785 + $0x1fc] sm:$0xff]
    %v863 = vld [vmem:[%s785 + $0x204] sm:$0xf]
    %v864 = vld [vmem:[%s785 + $0x208] sm:$0xff]
    %v865 = vld [vmem:[%s785 + $0x210] sm:$0xff]
    %v866 = vld [vmem:[%s785 + $0x218] sm:$0xf]
    %v867 = vld [vmem:[%s785 + $0x21c] sm:$0xff]
    %v868 = vld [vmem:[%s785 + $0x224] sm:$0xff]
    %v869 = vld [vmem:[%s785 + $0x22c] sm:$0xf]
    %v870 = vld [vmem:[%s785 + $0x230] sm:$0xff]
    %v871 = vld [vmem:[%s785 + $0x238] sm:$0xff]
    %v872 = vld [vmem:[%s785 + $0x240] sm:$0xf]
    %v873 = vld [vmem:[%s785 + $0x244] sm:$0xff]
    %v874 = vld [vmem:[%s785 + $0x24c] sm:$0xff]
    %v875 = vld [vmem:[%s785 + $0x254] sm:$0xf]
    %v876 = vld [vmem:[%s785 + $0x258] sm:$0xff]
    %v877 = vld [vmem:[%s785 + $0x260] sm:$0xff]
    %v878 = vld [vmem:[%s785 + $0x268] sm:$0xf]
    %v879 = vld [vmem:[%s785 + $0x26c] sm:$0xff]
    %v880 = vld [vmem:[%s785 + $0x274] sm:$0xff]
    %v881 = vld [vmem:[%s785 + $0x27c] sm:$0xf]
    %v882 = vld [vmem:[%s785 + $0x280] sm:$0xff]
    %v883 = vld [vmem:[%s785 + $0x288] sm:$0xff]
    %v884 = vld [vmem:[%s785 + $0x290] sm:$0xf]
    %v885 = vld [vmem:[%s785 + $0x294] sm:$0xff]
    %v886 = vld [vmem:[%s785 + $0x29c] sm:$0xff]
    %v887 = vld [vmem:[%s785 + $0x2a4] sm:$0xf]
    %v888 = vld [vmem:[%s785 + $0x2a8] sm:$0xff]
    %v889 = vld [vmem:[%s785 + $0x2b0] sm:$0xff]
    %v890 = vld [vmem:[%s785 + $0x2b8] sm:$0xf]
    %v891 = vld [vmem:[%s785 + $0x2bc] sm:$0xff]
    %v892 = vld [vmem:[%s785 + $0x2c4] sm:$0xff]
    %v893 = vld [vmem:[%s785 + $0x2cc] sm:$0xf]
    %v894 = vld [vmem:[%s785 + $0x2d0] sm:$0xff]
    %v895 = vld [vmem:[%s785 + $0x2d8] sm:$0xff]
    %v896 = vld [vmem:[%s785 + $0x2e0] sm:$0xf]
    %v897 = vld [vmem:[%s785 + $0x2e4] sm:$0xff]
    %v898 = vld [vmem:[%s785 + $0x2ec] sm:$0xff]
    %v899 = vld [vmem:[%s785 + $0x2f4] sm:$0xf]
    %v900 = vld [vmem:[%s785 + $0x2f8] sm:$0xff]
    %v901 = vld [vmem:[%s785 + $0x300] sm:$0xff]
    %v902 = vld [vmem:[%s785 + $0x308] sm:$0xf]
    %v903 = vld [vmem:[%s785 + $0x30c] sm:$0xff]
    %v904 = vld [vmem:[%s785 + $0x314] sm:$0xff]
    %v905 = vld [vmem:[%s785 + $0x31c] sm:$0xf]
    %v907 = vshrl.u32 %v653, 16
    %v909 = vshll.u32 %v653, 16
    %v911 = vrot.slane %v909, 1
    %v912 = vor.u32 %v907, %v911
    %v914 = vshll.u32 %v656, 16
    %v916 = vrot.slane %v914, 1
    %v917 = vsel %vm107, %v912, %v916
    %v919 = vshrl.u32 %v654, 16
    %v921 = vshll.u32 %v654, 16
    %v923 = vrot.slane %v921, 1
    %v924 = vor.u32 %v919, %v923
    %v926 = vshll.u32 %v657, 16
    %v928 = vrot.slane %v926, 1
    %v929 = vsel %vm107, %v924, %v928
    %v931 = vshrl.u32 %v655, 16
    %v933 = vshll.u32 %v655, 16
    %v935 = vrot.slane %v933, 1
    %v936 = vor.u32 %v931, %v935
    %v938 = vshll.u32 %v658, 16
    %v940 = vrot.slane %v938, 1
    %v941 = vsel %vm107, %v936, %v940
    %v942 = vshrl.u32 %v656, 16
    %v944 = vor.u32 %v942, %v916
    %v946 = vshll.u32 %v659, 16
    %v948 = vrot.slane %v946, 1
    %v949 = vsel %vm107, %v944, %v948
    %v950 = vshrl.u32 %v657, 16
    %v952 = vor.u32 %v950, %v928
    %v954 = vshll.u32 %v660, 16
    %v956 = vrot.slane %v954, 1
    %v957 = vsel %vm107, %v952, %v956
    %v958 = vshrl.u32 %v658, 16
    %v960 = vor.u32 %v958, %v940
    %v962 = vshll.u32 %v661, 16
    %v964 = vrot.slane %v962, 1
    %v965 = vsel %vm107, %v960, %v964
    %v966 = vshrl.u32 %v659, 16
    %v968 = vor.u32 %v966, %v948
    %v970 = vshll.u32 %v782, 16
    %v972 = vrot.slane %v970, 1
    %v973 = vsel %vm107, %v968, %v972
    %v974 = vshrl.u32 %v660, 16
    %v976 = vor.u32 %v974, %v956
    %v978 = vshll.u32 %v783, 16
    %v980 = vrot.slane %v978, 1
    %v981 = vsel %vm107, %v976, %v980
    %v982 = vshrl.u32 %v661, 16
    %v984 = vor.u32 %v982, %v964
    %v986 = vshll.u32 %v784, 16
    %v988 = vrot.slane %v986, 1
    %v989 = vsel %vm107, %v984, %v988
    %v1116 = vunpack.c.l.b16 %v786
    %v1117 = vunpack.c.h.b16 %v786
    %v1118 = vunpack.c.l.b16 %v787
    %v1119 = vunpack.c.h.b16 %v787
    %v1120 = vunpack.c.l.b16 %v788
    %v1121 = vunpack.c.l.b16 %v789
    %v1122 = vunpack.c.h.b16 %v789
    %v1123 = vunpack.c.l.b16 %v790
    %v1124 = vunpack.c.h.b16 %v790
    %v1125 = vunpack.c.l.b16 %v791
    %v1126 = vunpack.c.l.b16 %v792
    %v1127 = vunpack.c.h.b16 %v792
    %v1128 = vunpack.c.l.b16 %v793
    %v1129 = vunpack.c.h.b16 %v793
    %v1130 = vunpack.c.l.b16 %v794
    %v1131 = vunpack.c.l.b16 %v795
    %v1132 = vunpack.c.h.b16 %v795
    %v1133 = vunpack.c.l.b16 %v796
    %v1134 = vunpack.c.h.b16 %v796
    %v1135 = vunpack.c.l.b16 %v797
    %v1136 = vunpack.c.l.b16 %v798
    %v1137 = vunpack.c.h.b16 %v798
    %v1138 = vunpack.c.l.b16 %v799
    %v1139 = vunpack.c.h.b16 %v799
    %v1140 = vunpack.c.l.b16 %v800
    %v1141 = vunpack.c.l.b16 %v801
    %v1142 = vunpack.c.h.b16 %v801
    %v1143 = vunpack.c.l.b16 %v802
    %v1144 = vunpack.c.h.b16 %v802
    %v1145 = vunpack.c.l.b16 %v803
    %v1146 = vunpack.c.l.b16 %v804
    %v1147 = vunpack.c.h.b16 %v804
    %v1148 = vunpack.c.l.b16 %v805
    %v1149 = vunpack.c.h.b16 %v805
    %v1150 = vunpack.c.l.b16 %v806
    %v1151 = vunpack.c.l.b16 %v807
    %v1152 = vunpack.c.h.b16 %v807
    %v1153 = vunpack.c.l.b16 %v808
    %v1154 = vunpack.c.h.b16 %v808
    %v1155 = vunpack.c.l.b16 %v809
    %v1156 = vunpack.c.l.b16 %v810
    %v1157 = vunpack.c.h.b16 %v810
    %v1158 = vunpack.c.l.b16 %v811
    %v1159 = vunpack.c.h.b16 %v811
    %v1160 = vunpack.c.l.b16 %v812
    %v1161 = vunpack.c.l.b16 %v813
    %v1162 = vunpack.c.h.b16 %v813
    %v1163 = vunpack.c.l.b16 %v814
    %v1164 = vunpack.c.h.b16 %v814
    %v1165 = vunpack.c.l.b16 %v815
    %v1166 = vunpack.c.l.b16 %v816
    %v1167 = vunpack.c.h.b16 %v816
    %v1168 = vunpack.c.l.b16 %v817
    %v1169 = vunpack.c.h.b16 %v817
    %v1170 = vunpack.c.l.b16 %v818
    %v1171 = vunpack.c.l.b16 %v819
    %v1172 = vunpack.c.h.b16 %v819
    %v1173 = vunpack.c.l.b16 %v820
    %v1174 = vunpack.c.h.b16 %v820
    %v1175 = vunpack.c.l.b16 %v821
    %v1176 = vunpack.c.l.b16 %v822
    %v1177 = vunpack.c.h.b16 %v822
    %v1178 = vunpack.c.l.b16 %v823
    %v1179 = vunpack.c.h.b16 %v823
    %v1180 = vunpack.c.l.b16 %v824
    %v1181 = vunpack.c.l.b16 %v825
    %v1182 = vunpack.c.h.b16 %v825
    %v1183 = vunpack.c.l.b16 %v826
    %v1184 = vunpack.c.h.b16 %v826
    %v1185 = vunpack.c.l.b16 %v827
    %v1186 = vunpack.c.l.b16 %v828
    %v1187 = vunpack.c.h.b16 %v828
    %v1188 = vunpack.c.l.b16 %v829
    %v1189 = vunpack.c.h.b16 %v829
    %v1190 = vunpack.c.l.b16 %v830
    %v1191 = vunpack.c.l.b16 %v831
    %v1192 = vunpack.c.h.b16 %v831
    %v1193 = vunpack.c.l.b16 %v832
    %v1194 = vunpack.c.h.b16 %v832
    %v1195 = vunpack.c.l.b16 %v833
    %v1196 = vunpack.c.l.b16 %v834
    %v1197 = vunpack.c.h.b16 %v834
    %v1198 = vunpack.c.l.b16 %v835
    %v1199 = vunpack.c.h.b16 %v835
    %v1200 = vunpack.c.l.b16 %v836
    %v1201 = vunpack.c.l.b16 %v837
    %v1202 = vunpack.c.h.b16 %v837
    %v1203 = vunpack.c.l.b16 %v838
    %v1204 = vunpack.c.h.b16 %v838
    %v1205 = vunpack.c.l.b16 %v839
    %v1206 = vunpack.c.l.b16 %v840
    %v1207 = vunpack.c.h.b16 %v840
    %v1208 = vunpack.c.l.b16 %v841
    %v1209 = vunpack.c.h.b16 %v841
    %v1210 = vunpack.c.l.b16 %v842
    %v1211 = vunpack.c.l.b16 %v843
    %v1212 = vunpack.c.h.b16 %v843
    %v1213 = vunpack.c.l.b16 %v844
    %v1214 = vunpack.c.h.b16 %v844
    %v1215 = vunpack.c.l.b16 %v845
    %v1216 = vunpack.c.l.b16 %v846
    %v1217 = vunpack.c.h.b16 %v846
    %v1218 = vunpack.c.l.b16 %v847
    %v1219 = vunpack.c.h.b16 %v847
    %v1220 = vunpack.c.l.b16 %v848
    %v1221 = vunpack.c.l.b16 %v849
    %v1222 = vunpack.c.h.b16 %v849
    %v1223 = vunpack.c.l.b16 %v850
    %v1224 = vunpack.c.h.b16 %v850
    %v1225 = vunpack.c.l.b16 %v851
    %v1226 = vunpack.c.l.b16 %v852
    %v1227 = vunpack.c.h.b16 %v852
    %v1228 = vunpack.c.l.b16 %v853
    %v1229 = vunpack.c.h.b16 %v853
    %v1230 = vunpack.c.l.b16 %v854
    %v1231 = vunpack.c.l.b16 %v855
    %v1232 = vunpack.c.h.b16 %v855
    %v1233 = vunpack.c.l.b16 %v856
    %v1234 = vunpack.c.h.b16 %v856
    %v1235 = vunpack.c.l.b16 %v857
    %v1236 = vunpack.c.l.b16 %v858
    %v1237 = vunpack.c.h.b16 %v858
    %v1238 = vunpack.c.l.b16 %v859
    %v1239 = vunpack.c.h.b16 %v859
    %v1240 = vunpack.c.l.b16 %v860
    %v1241 = vunpack.c.l.b16 %v861
    %v1242 = vunpack.c.h.b16 %v861
    %v1243 = vunpack.c.l.b16 %v862
    %v1244 = vunpack.c.h.b16 %v862
    %v1245 = vunpack.c.l.b16 %v863
    %v1246 = vunpack.c.l.b16 %v864
    %v1247 = vunpack.c.h.b16 %v864
    %v1248 = vunpack.c.l.b16 %v865
    %v1249 = vunpack.c.h.b16 %v865
    %v1250 = vunpack.c.l.b16 %v866
    %v1251 = vunpack.c.l.b16 %v867
    %v1252 = vunpack.c.h.b16 %v867
    %v1253 = vunpack.c.l.b16 %v868
    %v1254 = vunpack.c.h.b16 %v868
    %v1255 = vunpack.c.l.b16 %v869
    %v1256 = vunpack.c.l.b16 %v870
    %v1257 = vunpack.c.h.b16 %v870
    %v1258 = vunpack.c.l.b16 %v871
    %v1259 = vunpack.c.h.b16 %v871
    %v1260 = vunpack.c.l.b16 %v872
    %v1261 = vunpack.c.l.b16 %v873
    %v1262 = vunpack.c.h.b16 %v873
    %v1263 = vunpack.c.l.b16 %v874
    %v1264 = vunpack.c.h.b16 %v874
    %v1265 = vunpack.c.l.b16 %v875
    %v1266 = vunpack.c.l.b16 %v876
    %v1267 = vunpack.c.h.b16 %v876
    %v1268 = vunpack.c.l.b16 %v877
    %v1269 = vunpack.c.h.b16 %v877
    %v1270 = vunpack.c.l.b16 %v878
    %v1271 = vunpack.c.l.b16 %v879
    %v1272 = vunpack.c.h.b16 %v879
    %v1273 = vunpack.c.l.b16 %v880
    %v1274 = vunpack.c.h.b16 %v880
    %v1275 = vunpack.c.l.b16 %v881
    %v1276 = vunpack.c.l.b16 %v882
    %v1277 = vunpack.c.h.b16 %v882
    %v1278 = vunpack.c.l.b16 %v883
    %v1279 = vunpack.c.h.b16 %v883
    %v1280 = vunpack.c.l.b16 %v884
    %v1281 = vunpack.c.l.b16 %v885
    %v1282 = vunpack.c.h.b16 %v885
    %v1283 = vunpack.c.l.b16 %v886
    %v1284 = vunpack.c.h.b16 %v886
    %v1285 = vunpack.c.l.b16 %v887
    %v1286 = vunpack.c.l.b16 %v888
    %v1287 = vunpack.c.h.b16 %v888
    %v1288 = vunpack.c.l.b16 %v889
    %v1289 = vunpack.c.h.b16 %v889
    %v1290 = vunpack.c.l.b16 %v890
    %v1291 = vunpack.c.l.b16 %v891
    %v1292 = vunpack.c.h.b16 %v891
    %v1293 = vunpack.c.l.b16 %v892
    %v1294 = vunpack.c.h.b16 %v892
    %v1295 = vunpack.c.l.b16 %v893
    %v1296 = vunpack.c.l.b16 %v894
    %v1297 = vunpack.c.h.b16 %v894
    %v1298 = vunpack.c.l.b16 %v895
    %v1299 = vunpack.c.h.b16 %v895
    %v1300 = vunpack.c.l.b16 %v896
    %v1301 = vunpack.c.l.b16 %v897
    %v1302 = vunpack.c.h.b16 %v897
    %v1303 = vunpack.c.l.b16 %v898
    %v1304 = vunpack.c.h.b16 %v898
    %v1305 = vunpack.c.l.b16 %v899
    %v1306 = vunpack.c.l.b16 %v900
    %v1307 = vunpack.c.h.b16 %v900
    %v1308 = vunpack.c.l.b16 %v901
    %v1309 = vunpack.c.h.b16 %v901
    %v1310 = vunpack.c.l.b16 %v902
    %v1311 = vunpack.c.l.b16 %v903
    %v1312 = vunpack.c.h.b16 %v903
    %v1313 = vunpack.c.l.b16 %v904
    %v1314 = vunpack.c.h.b16 %v904
    %v1315 = vunpack.c.l.b16 %v905
    %v1316 = vpack.c.b16 %v1121, %v1116
    %v1317 = vpack.c.b16 %v1122, %v1117
    %v1318 = vpack.c.b16 %v1123, %v1118
    %v1319 = vpack.c.b16 %v1124, %v1119
    %v1320 = vpack.c.b16 %v1125, %v1120
    %v1321 = vpack.c.b16 %v1131, %v1126
    %v1322 = vpack.c.b16 %v1132, %v1127
    %v1323 = vpack.c.b16 %v1133, %v1128
    %v1324 = vpack.c.b16 %v1134, %v1129
    %v1325 = vpack.c.b16 %v1135, %v1130
    %v1326 = vpack.c.b16 %v1141, %v1136
    %v1327 = vpack.c.b16 %v1142, %v1137
    %v1328 = vpack.c.b16 %v1143, %v1138
    %v1329 = vpack.c.b16 %v1144, %v1139
    %v1330 = vpack.c.b16 %v1145, %v1140
    %v1331 = vpack.c.b16 %v1151, %v1146
    %v1332 = vpack.c.b16 %v1152, %v1147
    %v1333 = vpack.c.b16 %v1153, %v1148
    %v1334 = vpack.c.b16 %v1154, %v1149
    %v1335 = vpack.c.b16 %v1155, %v1150
    %v1336 = vpack.c.b16 %v1161, %v1156
    %v1337 = vpack.c.b16 %v1162, %v1157
    %v1338 = vpack.c.b16 %v1163, %v1158
    %v1339 = vpack.c.b16 %v1164, %v1159
    %v1340 = vpack.c.b16 %v1165, %v1160
    %v1341 = vpack.c.b16 %v1171, %v1166
    %v1342 = vpack.c.b16 %v1172, %v1167
    %v1343 = vpack.c.b16 %v1173, %v1168
    %v1344 = vpack.c.b16 %v1174, %v1169
    %v1345 = vpack.c.b16 %v1175, %v1170
    %v1346 = vpack.c.b16 %v1181, %v1176
    %v1347 = vpack.c.b16 %v1182, %v1177
    %v1348 = vpack.c.b16 %v1183, %v1178
    %v1349 = vpack.c.b16 %v1184, %v1179
    %v1350 = vpack.c.b16 %v1185, %v1180
    %v1351 = vpack.c.b16 %v1191, %v1186
    %v1352 = vpack.c.b16 %v1192, %v1187
    %v1353 = vpack.c.b16 %v1193, %v1188
    %v1354 = vpack.c.b16 %v1194, %v1189
    %v1355 = vpack.c.b16 %v1195, %v1190
    %v1356 = vpack.c.b16 %v1201, %v1196
    %v1357 = vpack.c.b16 %v1202, %v1197
    %v1358 = vpack.c.b16 %v1203, %v1198
    %v1359 = vpack.c.b16 %v1204, %v1199
    %v1360 = vpack.c.b16 %v1205, %v1200
    %v1361 = vpack.c.b16 %v1211, %v1206
    %v1362 = vpack.c.b16 %v1212, %v1207
    %v1363 = vpack.c.b16 %v1213, %v1208
    %v1364 = vpack.c.b16 %v1214, %v1209
    %v1365 = vpack.c.b16 %v1215, %v1210
    %v1366 = vpack.c.b16 %v1221, %v1216
    %v1367 = vpack.c.b16 %v1222, %v1217
    %v1368 = vpack.c.b16 %v1223, %v1218
    %v1369 = vpack.c.b16 %v1224, %v1219
    %v1370 = vpack.c.b16 %v1225, %v1220
    %v1371 = vpack.c.b16 %v1231, %v1226
    %v1372 = vpack.c.b16 %v1232, %v1227
    %v1373 = vpack.c.b16 %v1233, %v1228
    %v1374 = vpack.c.b16 %v1234, %v1229
    %v1375 = vpack.c.b16 %v1235, %v1230
    %v1376 = vpack.c.b16 %v1241, %v1236
    %v1377 = vpack.c.b16 %v1242, %v1237
    %v1378 = vpack.c.b16 %v1243, %v1238
    %v1379 = vpack.c.b16 %v1244, %v1239
    %v1380 = vpack.c.b16 %v1245, %v1240
    %v1381 = vpack.c.b16 %v1251, %v1246
    %v1382 = vpack.c.b16 %v1252, %v1247
    %v1383 = vpack.c.b16 %v1253, %v1248
    %v1384 = vpack.c.b16 %v1254, %v1249
    %v1385 = vpack.c.b16 %v1255, %v1250
    %v1386 = vpack.c.b16 %v1261, %v1256
    %v1387 = vpack.c.b16 %v1262, %v1257
    %v1388 = vpack.c.b16 %v1263, %v1258
    %v1389 = vpack.c.b16 %v1264, %v1259
    %v1390 = vpack.c.b16 %v1265, %v1260
    %v1391 = vpack.c.b16 %v1271, %v1266
    %v1392 = vpack.c.b16 %v1272, %v1267
    %v1393 = vpack.c.b16 %v1273, %v1268
    %v1394 = vpack.c.b16 %v1274, %v1269
    %v1395 = vpack.c.b16 %v1275, %v1270
    %v1396 = vpack.c.b16 %v1281, %v1276
    %v1397 = vpack.c.b16 %v1282, %v1277
    %v1398 = vpack.c.b16 %v1283, %v1278
    %v1399 = vpack.c.b16 %v1284, %v1279
    %v1400 = vpack.c.b16 %v1285, %v1280
    %v1401 = vpack.c.b16 %v1291, %v1286
    %v1402 = vpack.c.b16 %v1292, %v1287
    %v1403 = vpack.c.b16 %v1293, %v1288
    %v1404 = vpack.c.b16 %v1294, %v1289
    %v1405 = vpack.c.b16 %v1295, %v1290
    %v1406 = vpack.c.b16 %v1301, %v1296
    %v1407 = vpack.c.b16 %v1302, %v1297
    %v1408 = vpack.c.b16 %v1303, %v1298
    %v1409 = vpack.c.b16 %v1304, %v1299
    %v1410 = vpack.c.b16 %v1305, %v1300
    %v1411 = vpack.c.b16 %v1311, %v1306
    %v1412 = vpack.c.b16 %v1312, %v1307
    %v1413 = vpack.c.b16 %v1313, %v1308
    %v1414 = vpack.c.b16 %v1314, %v1309
    %v1415 = vpack.c.b16 %v1315, %v1310
    %v1517 = vsel %vm524, %v941, 0
    %v1520 = vsel %vm524, %v965, 0
    %v1523 = vsel %vm524, %v989, 0
    %1525 = vmatpush.bf16.msra.mxu0 %v1351
    %1526 = vmatpush.bf16.msra.mxu0 %v1346
    %1527 = vmatpush.bf16.msra.mxu0 %v1341
    %1528 = vmatpush.bf16.msra.mxu0 %v1336
    %1529 = vmatpush.bf16.msra.mxu0 %v1331
    %1530 = vmatpush.bf16.msra.mxu0 %v1326
    %1531 = vmatpush.bf16.msra.mxu0 %v1321
    %1532 = vmatpush.bf16.msra.mxu0 %v1316
    %1533 = vmatmul.bf16.gmra.mxu0 %v917
    %v1534 = vpop.f32.mrf.mxu0
    %v1535 = vadd.f32 0.0, %v1534
    %v1536 = vpop.f32.mrf.mxu0
    %v1537 = vadd.f32 0.0, %v1536
    %1538 = vmatmul.bf16.gmra.mxu0 %v949
    %v1539 = vpop.f32.mrf.mxu0
    %v1540 = vadd.f32 0.0, %v1539
    %v1541 = vpop.f32.mrf.mxu0
    %v1542 = vadd.f32 0.0, %v1541
    %1543 = vmatmul.bf16.gmra.mxu0 %v973
    %v1544 = vpop.f32.mrf.mxu0
    %v1545 = vadd.f32 0.0, %v1544
    %v1546 = vpop.f32.mrf.mxu0
    %v1547 = vadd.f32 0.0, %v1546
    %1548 = vdwg.mxu0
    %1549 = vmatpush.bf16.msra.mxu0 %v1391
    %1550 = vmatpush.bf16.msra.mxu0 %v1386
    %1551 = vmatpush.bf16.msra.mxu0 %v1381
    %1552 = vmatpush.bf16.msra.mxu0 %v1376
    %1553 = vmatpush.bf16.msra.mxu0 %v1371
    %1554 = vmatpush.bf16.msra.mxu0 %v1366
    %1555 = vmatpush.bf16.msra.mxu0 %v1361
    %1556 = vmatpush.bf16.msra.mxu0 %v1356
    %1557 = vmatmul.bf16.gmra.mxu0 %v929
    %v1558 = vpop.f32.mrf.mxu0
    %v1559 = vadd.f32 %v1535, %v1558
    %v1560 = vpop.f32.mrf.mxu0
    %v1561 = vadd.f32 %v1537, %v1560
    %1562 = vmatmul.bf16.gmra.mxu0 %v957
    %v1563 = vpop.f32.mrf.mxu0
    %v1564 = vadd.f32 %v1540, %v1563
    %v1565 = vpop.f32.mrf.mxu0
    %v1566 = vadd.f32 %v1542, %v1565
    %1567 = vmatmul.bf16.gmra.mxu0 %v981
    %v1568 = vpop.f32.mrf.mxu0
    %v1569 = vadd.f32 %v1545, %v1568
    %v1570 = vpop.f32.mrf.mxu0
    %v1571 = vadd.f32 %v1547, %v1570
    %1572 = vdwg.mxu0
    %1573 = vmatpush.bf16.msra.mxu0 0
    %1574 = vmatpush.bf16.msra.mxu0 0
    %1575 = vmatpush.bf16.msra.mxu0 0
    %1576 = vmatpush.bf16.msra.mxu0 0
    %1577 = vmatpush.bf16.msra.mxu0 %v1411
    %1578 = vmatpush.bf16.msra.mxu0 %v1406
    %1579 = vmatpush.bf16.msra.mxu0 %v1401
    %1580 = vmatpush.bf16.msra.mxu0 %v1396
    %1581 = vmatmul.bf16.gmra.mxu0 %v1517
    %v1582 = vpop.f32.mrf.mxu0
    %v1583 = vadd.f32 %v1559, %v1582
    %v1584 = vpop.f32.mrf.mxu0
    %v1585 = vadd.f32 %v1561, %v1584
    %1586 = vmatmul.bf16.gmra.mxu0 %v1520
    %v1587 = vpop.f32.mrf.mxu0
    %v1588 = vadd.f32 %v1564, %v1587
    %v1589 = vpop.f32.mrf.mxu0
    %v1590 = vadd.f32 %v1566, %v1589
    %1591 = vmatmul.bf16.gmra.mxu0 %v1523
    %v1592 = vpop.f32.mrf.mxu0
    %v1593 = vadd.f32 %v1569, %v1592
    %v1594 = vpop.f32.mrf.mxu0
    %v1595 = vadd.f32 %v1571, %v1594
    %1596 = vdwg.mxu0
    %1597 = vmatpush.bf16.msra.mxu0 %v1352
    %1598 = vmatpush.bf16.msra.mxu0 %v1347
    %1599 = vmatpush.bf16.msra.mxu0 %v1342
    %1600 = vmatpush.bf16.msra.mxu0 %v1337
    %1601 = vmatpush.bf16.msra.mxu0 %v1332
    %1602 = vmatpush.bf16.msra.mxu0 %v1327
    %1603 = vmatpush.bf16.msra.mxu0 %v1322
    %1604 = vmatpush.bf16.msra.mxu0 %v1317
    %1605 = vmatmul.bf16.gmra.mxu0 %v917
    %v1606 = vpop.f32.mrf.mxu0
    %v1607 = vadd.f32 0.0, %v1606
    %v1608 = vpop.f32.mrf.mxu0
    %v1609 = vadd.f32 0.0, %v1608
    %1610 = vmatmul.bf16.gmra.mxu0 %v949
    %v1611 = vpop.f32.mrf.mxu0
    %v1612 = vadd.f32 0.0, %v1611
    %v1613 = vpop.f32.mrf.mxu0
    %v1614 = vadd.f32 0.0, %v1613
    %1615 = vmatmul.bf16.gmra.mxu0 %v973
    %v1616 = vpop.f32.mrf.mxu0
    %v1617 = vadd.f32 0.0, %v1616
    %v1618 = vpop.f32.mrf.mxu0
    %v1619 = vadd.f32 0.0, %v1618
    %1620 = vdwg.mxu0
    %1621 = vmatpush.bf16.msra.mxu0 %v1392
    %1622 = vmatpush.bf16.msra.mxu0 %v1387
    %1623 = vmatpush.bf16.msra.mxu0 %v1382
    %1624 = vmatpush.bf16.msra.mxu0 %v1377
    %1625 = vmatpush.bf16.msra.mxu0 %v1372
    %1626 = vmatpush.bf16.msra.mxu0 %v1367
    %1627 = vmatpush.bf16.msra.mxu0 %v1362
    %1628 = vmatpush.bf16.msra.mxu0 %v1357
    %1629 = vmatmul.bf16.gmra.mxu0 %v929
    %v1630 = vpop.f32.mrf.mxu0
    %v1631 = vadd.f32 %v1607, %v1630
    %v1632 = vpop.f32.mrf.mxu0
    %v1633 = vadd.f32 %v1609, %v1632
    %1634 = vmatmul.bf16.gmra.mxu0 %v957
    %v1635 = vpop.f32.mrf.mxu0
    %v1636 = vadd.f32 %v1612, %v1635
    %v1637 = vpop.f32.mrf.mxu0
    %v1638 = vadd.f32 %v1614, %v1637
    %1639 = vmatmul.bf16.gmra.mxu0 %v981
    %v1640 = vpop.f32.mrf.mxu0
    %v1641 = vadd.f32 %v1617, %v1640
    %v1642 = vpop.f32.mrf.mxu0
    %v1643 = vadd.f32 %v1619, %v1642
    %1644 = vdwg.mxu0
    %1645 = vmatpush.bf16.msra.mxu0 0
    %1646 = vmatpush.bf16.msra.mxu0 0
    %1647 = vmatpush.bf16.msra.mxu0 0
    %1648 = vmatpush.bf16.msra.mxu0 0
    %1649 = vmatpush.bf16.msra.mxu0 %v1412
    %1650 = vmatpush.bf16.msra.mxu0 %v1407
    %1651 = vmatpush.bf16.msra.mxu0 %v1402
    %1652 = vmatpush.bf16.msra.mxu0 %v1397
    %1653 = vmatmul.bf16.gmra.mxu0 %v1517
    %v1654 = vpop.f32.mrf.mxu0
    %v1655 = vadd.f32 %v1631, %v1654
    %v1656 = vpop.f32.mrf.mxu0
    %v1657 = vadd.f32 %v1633, %v1656
    %1658 = vmatmul.bf16.gmra.mxu0 %v1520
    %v1659 = vpop.f32.mrf.mxu0
    %v1660 = vadd.f32 %v1636, %v1659
    %v1661 = vpop.f32.mrf.mxu0
    %v1662 = vadd.f32 %v1638, %v1661
    %1663 = vmatmul.bf16.gmra.mxu0 %v1523
    %v1664 = vpop.f32.mrf.mxu0
    %v1665 = vadd.f32 %v1641, %v1664
    %v1666 = vpop.f32.mrf.mxu0
    %v1667 = vadd.f32 %v1643, %v1666
    %1668 = vdwg.mxu0
    %1669 = vmatpush.bf16.msra.mxu0 %v1353
    %1670 = vmatpush.bf16.msra.mxu0 %v1348
    %1671 = vmatpush.bf16.msra.mxu0 %v1343
    %1672 = vmatpush.bf16.msra.mxu0 %v1338
    %1673 = vmatpush.bf16.msra.mxu0 %v1333
    %1674 = vmatpush.bf16.msra.mxu0 %v1328
    %1675 = vmatpush.bf16.msra.mxu0 %v1323
    %1676 = vmatpush.bf16.msra.mxu0 %v1318
    %1677 = vmatmul.bf16.gmra.mxu0 %v917
    %v1678 = vpop.f32.mrf.mxu0
    %v1679 = vadd.f32 0.0, %v1678
    %v1680 = vpop.f32.mrf.mxu0
    %v1681 = vadd.f32 0.0, %v1680
    %1682 = vmatmul.bf16.gmra.mxu0 %v949
    %v1683 = vpop.f32.mrf.mxu0
    %v1684 = vadd.f32 0.0, %v1683
    %v1685 = vpop.f32.mrf.mxu0
    %v1686 = vadd.f32 0.0, %v1685
    %1687 = vmatmul.bf16.gmra.mxu0 %v973
    %v1688 = vpop.f32.mrf.mxu0
    %v1689 = vadd.f32 0.0, %v1688
    %v1690 = vpop.f32.mrf.mxu0
    %v1691 = vadd.f32 0.0, %v1690
    %1692 = vdwg.mxu0
    %1693 = vmatpush.bf16.msra.mxu0 %v1393
    %1694 = vmatpush.bf16.msra.mxu0 %v1388
    %1695 = vmatpush.bf16.msra.mxu0 %v1383
    %1696 = vmatpush.bf16.msra.mxu0 %v1378
    %1697 = vmatpush.bf16.msra.mxu0 %v1373
    %1698 = vmatpush.bf16.msra.mxu0 %v1368
    %1699 = vmatpush.bf16.msra.mxu0 %v1363
    %1700 = vmatpush.bf16.msra.mxu0 %v1358
    %1701 = vmatmul.bf16.gmra.mxu0 %v929
    %v1702 = vpop.f32.mrf.mxu0
    %v1703 = vadd.f32 %v1679, %v1702
    %v1704 = vpop.f32.mrf.mxu0
    %v1705 = vadd.f32 %v1681, %v1704
    %1706 = vmatmul.bf16.gmra.mxu0 %v957
    %v1707 = vpop.f32.mrf.mxu0
    %v1708 = vadd.f32 %v1684, %v1707
    %v1709 = vpop.f32.mrf.mxu0
    %v1710 = vadd.f32 %v1686, %v1709
    %1711 = vmatmul.bf16.gmra.mxu0 %v981
    %v1712 = vpop.f32.mrf.mxu0
    %v1713 = vadd.f32 %v1689, %v1712
    %v1714 = vpop.f32.mrf.mxu0
    %v1715 = vadd.f32 %v1691, %v1714
    %1716 = vdwg.mxu0
    %1717 = vmatpush.bf16.msra.mxu0 0
    %1718 = vmatpush.bf16.msra.mxu0 0
    %1719 = vmatpush.bf16.msra.mxu0 0
    %1720 = vmatpush.bf16.msra.mxu0 0
    %1721 = vmatpush.bf16.msra.mxu0 %v1413
    %1722 = vmatpush.bf16.msra.mxu0 %v1408
    %1723 = vmatpush.bf16.msra.mxu0 %v1403
    %1724 = vmatpush.bf16.msra.mxu0 %v1398
    %1725 = vmatmul.bf16.gmra.mxu0 %v1517
    %v1726 = vpop.f32.mrf.mxu0
    %v1727 = vadd.f32 %v1703, %v1726
    %v1728 = vpop.f32.mrf.mxu0
    %v1729 = vadd.f32 %v1705, %v1728
    %1730 = vmatmul.bf16.gmra.mxu0 %v1520
    %v1731 = vpop.f32.mrf.mxu0
    %v1732 = vadd.f32 %v1708, %v1731
    %v1733 = vpop.f32.mrf.mxu0
    %v1734 = vadd.f32 %v1710, %v1733
    %1735 = vmatmul.bf16.gmra.mxu0 %v1523
    %v1736 = vpop.f32.mrf.mxu0
    %v1737 = vadd.f32 %v1713, %v1736
    %v1738 = vpop.f32.mrf.mxu0
    %v1739 = vadd.f32 %v1715, %v1738
    %1740 = vdwg.mxu0
    %1741 = vmatpush.bf16.msra.mxu0 %v1354
    %1742 = vmatpush.bf16.msra.mxu0 %v1349
    %1743 = vmatpush.bf16.msra.mxu0 %v1344
    %1744 = vmatpush.bf16.msra.mxu0 %v1339
    %1745 = vmatpush.bf16.msra.mxu0 %v1334
    %1746 = vmatpush.bf16.msra.mxu0 %v1329
    %1747 = vmatpush.bf16.msra.mxu0 %v1324
    %1748 = vmatpush.bf16.msra.mxu0 %v1319
    %1749 = vmatmul.bf16.gmra.mxu0 %v917
    %v1750 = vpop.f32.mrf.mxu0
    %v1751 = vadd.f32 0.0, %v1750
    %v1752 = vpop.f32.mrf.mxu0
    %v1753 = vadd.f32 0.0, %v1752
    %1754 = vmatmul.bf16.gmra.mxu0 %v949
    %v1755 = vpop.f32.mrf.mxu0
    %v1756 = vadd.f32 0.0, %v1755
    %v1757 = vpop.f32.mrf.mxu0
    %v1758 = vadd.f32 0.0, %v1757
    %1759 = vmatmul.bf16.gmra.mxu0 %v973
    %v1760 = vpop.f32.mrf.mxu0
    %v1761 = vadd.f32 0.0, %v1760
    %v1762 = vpop.f32.mrf.mxu0
    %v1763 = vadd.f32 0.0, %v1762
    %1764 = vdwg.mxu0
    %1765 = vmatpush.bf16.msra.mxu0 %v1394
    %1766 = vmatpush.bf16.msra.mxu0 %v1389
    %1767 = vmatpush.bf16.msra.mxu0 %v1384
    %1768 = vmatpush.bf16.msra.mxu0 %v1379
    %1769 = vmatpush.bf16.msra.mxu0 %v1374
    %1770 = vmatpush.bf16.msra.mxu0 %v1369
    %1771 = vmatpush.bf16.msra.mxu0 %v1364
    %1772 = vmatpush.bf16.msra.mxu0 %v1359
    %1773 = vmatmul.bf16.gmra.mxu0 %v929
    %v1774 = vpop.f32.mrf.mxu0
    %v1775 = vadd.f32 %v1751, %v1774
    %v1776 = vpop.f32.mrf.mxu0
    %v1777 = vadd.f32 %v1753, %v1776
    %1778 = vmatmul.bf16.gmra.mxu0 %v957
    %v1779 = vpop.f32.mrf.mxu0
    %v1780 = vadd.f32 %v1756, %v1779
    %v1781 = vpop.f32.mrf.mxu0
    %v1782 = vadd.f32 %v1758, %v1781
    %1783 = vmatmul.bf16.gmra.mxu0 %v981
    %v1784 = vpop.f32.mrf.mxu0
    %v1785 = vadd.f32 %v1761, %v1784
    %v1786 = vpop.f32.mrf.mxu0
    %v1787 = vadd.f32 %v1763, %v1786
    %1788 = vdwg.mxu0
    %1789 = vmatpush.bf16.msra.mxu0 0
    %1790 = vmatpush.bf16.msra.mxu0 0
    %1791 = vmatpush.bf16.msra.mxu0 0
    %1792 = vmatpush.bf16.msra.mxu0 0
    %1793 = vmatpush.bf16.msra.mxu0 %v1414
    %1794 = vmatpush.bf16.msra.mxu0 %v1409
    %1795 = vmatpush.bf16.msra.mxu0 %v1404
    %1796 = vmatpush.bf16.msra.mxu0 %v1399
    %1797 = vmatmul.bf16.gmra.mxu0 %v1517
    %v1798 = vpop.f32.mrf.mxu0
    %v1799 = vadd.f32 %v1775, %v1798
    %v1800 = vpop.f32.mrf.mxu0
    %v1801 = vadd.f32 %v1777, %v1800
    %1802 = vmatmul.bf16.gmra.mxu0 %v1520
    %v1803 = vpop.f32.mrf.mxu0
    %v1804 = vadd.f32 %v1780, %v1803
    %v1805 = vpop.f32.mrf.mxu0
    %v1806 = vadd.f32 %v1782, %v1805
    %1807 = vmatmul.bf16.gmra.mxu0 %v1523
    %v1808 = vpop.f32.mrf.mxu0
    %v1809 = vadd.f32 %v1785, %v1808
    %v1810 = vpop.f32.mrf.mxu0
    %v1811 = vadd.f32 %v1787, %v1810
    %1812 = vdwg.mxu0
    %1813 = vmatpush.bf16.msra.mxu0 %v1355
    %1814 = vmatpush.bf16.msra.mxu0 %v1350
    %1815 = vmatpush.bf16.msra.mxu0 %v1345
    %1816 = vmatpush.bf16.msra.mxu0 %v1340
    %1817 = vmatpush.bf16.msra.mxu0 %v1335
    %1818 = vmatpush.bf16.msra.mxu0 %v1330
    %1819 = vmatpush.bf16.msra.mxu0 %v1325
    %1820 = vmatpush.bf16.msra.mxu0 %v1320
    %1821 = vmatmul.bf16.gmra.mxu0 %v917
    %v1822 = vpop.f32.mrf.mxu0
    %v1823 = vadd.f32 0.0, %v1822
    %v1824 = vpop.f32.mrf.mxu0
    %v1825 = vadd.f32 0.0, %v1824
    %1826 = vmatmul.bf16.gmra.mxu0 %v949
    %v1827 = vpop.f32.mrf.mxu0
    %v1828 = vadd.f32 0.0, %v1827
    %v1829 = vpop.f32.mrf.mxu0
    %v1830 = vadd.f32 0.0, %v1829
    %1831 = vmatmul.bf16.gmra.mxu0 %v973
    %v1832 = vpop.f32.mrf.mxu0
    %v1833 = vadd.f32 0.0, %v1832
    %v1834 = vpop.f32.mrf.mxu0
    %v1835 = vadd.f32 0.0, %v1834
    %1836 = vdwg.mxu0
    %1837 = vmatpush.bf16.msra.mxu0 %v1395
    %1838 = vmatpush.bf16.msra.mxu0 %v1390
    %1839 = vmatpush.bf16.msra.mxu0 %v1385
    %1840 = vmatpush.bf16.msra.mxu0 %v1380
    %1841 = vmatpush.bf16.msra.mxu0 %v1375
    %1842 = vmatpush.bf16.msra.mxu0 %v1370
    %1843 = vmatpush.bf16.msra.mxu0 %v1365
    %1844 = vmatpush.bf16.msra.mxu0 %v1360
    %1845 = vmatmul.bf16.gmra.mxu0 %v929
    %v1846 = vpop.f32.mrf.mxu0
    %v1847 = vadd.f32 %v1823, %v1846
    %v1848 = vpop.f32.mrf.mxu0
    %v1849 = vadd.f32 %v1825, %v1848
    %1850 = vmatmul.bf16.gmra.mxu0 %v957
    %v1851 = vpop.f32.mrf.mxu0
    %v1852 = vadd.f32 %v1828, %v1851
    %v1853 = vpop.f32.mrf.mxu0
    %v1854 = vadd.f32 %v1830, %v1853
    %1855 = vmatmul.bf16.gmra.mxu0 %v981
    %v1856 = vpop.f32.mrf.mxu0
    %v1857 = vadd.f32 %v1833, %v1856
    %v1858 = vpop.f32.mrf.mxu0
    %v1859 = vadd.f32 %v1835, %v1858
    %1860 = vdwg.mxu0
    %1861 = vmatpush.bf16.msra.mxu0 0
    %1862 = vmatpush.bf16.msra.mxu0 0
    %1863 = vmatpush.bf16.msra.mxu0 0
    %1864 = vmatpush.bf16.msra.mxu0 0
    %1865 = vmatpush.bf16.msra.mxu0 %v1415
    %1866 = vmatpush.bf16.msra.mxu0 %v1410
    %1867 = vmatpush.bf16.msra.mxu0 %v1405
    %1868 = vmatpush.bf16.msra.mxu0 %v1400
    %1869 = vmatmul.bf16.gmra.mxu0 %v1517
    %v1870 = vpop.f32.mrf.mxu0
    %v1871 = vadd.f32 %v1847, %v1870
    %v1872 = vpop.f32.mrf.mxu0
    %v1873 = vadd.f32 %v1849, %v1872
    %1874 = vmatmul.bf16.gmra.mxu0 %v1520
    %v1875 = vpop.f32.mrf.mxu0
    %v1876 = vadd.f32 %v1852, %v1875
    %v1877 = vpop.f32.mrf.mxu0
    %v1878 = vadd.f32 %v1854, %v1877
    %1879 = vmatmul.bf16.gmra.mxu0 %v1523
    %v1880 = vpop.f32.mrf.mxu0
    %v1881 = vadd.f32 %v1857, %v1880
    %v1882 = vpop.f32.mrf.mxu0
    %v1883 = vadd.f32 %v1859, %v1882
    %1884 = vdwg.mxu0
    %v2005 = vunpack.c.l.b16 %v662
    %v2006 = vunpack.c.h.b16 %v662
    %v2007 = vunpack.c.l.b16 %v663
    %v2008 = vunpack.c.h.b16 %v663
    %v2009 = vunpack.c.l.b16 %v664
    %v2010 = vunpack.c.l.b16 %v665
    %v2011 = vunpack.c.h.b16 %v665
    %v2012 = vunpack.c.l.b16 %v666
    %v2013 = vunpack.c.h.b16 %v666
    %v2014 = vunpack.c.l.b16 %v667
    %v2015 = vunpack.c.l.b16 %v668
    %v2016 = vunpack.c.h.b16 %v668
    %v2017 = vunpack.c.l.b16 %v669
    %v2018 = vunpack.c.h.b16 %v669
    %v2019 = vunpack.c.l.b16 %v670
    %v2020 = vunpack.c.l.b16 %v671
    %v2021 = vunpack.c.h.b16 %v671
    %v2022 = vunpack.c.l.b16 %v672
    %v2023 = vunpack.c.h.b16 %v672
    %v2024 = vunpack.c.l.b16 %v673
    %v2025 = vunpack.c.l.b16 %v674
    %v2026 = vunpack.c.h.b16 %v674
    %v2027 = vunpack.c.l.b16 %v675
    %v2028 = vunpack.c.h.b16 %v675
    %v2029 = vunpack.c.l.b16 %v676
    %v2030 = vunpack.c.l.b16 %v677
    %v2031 = vunpack.c.h.b16 %v677
    %v2032 = vunpack.c.l.b16 %v678
    %v2033 = vunpack.c.h.b16 %v678
    %v2034 = vunpack.c.l.b16 %v679
    %v2035 = vunpack.c.l.b16 %v680
    %v2036 = vunpack.c.h.b16 %v680
    %v2037 = vunpack.c.l.b16 %v681
    %v2038 = vunpack.c.h.b16 %v681
    %v2039 = vunpack.c.l.b16 %v682
    %v2040 = vunpack.c.l.b16 %v683
    %v2041 = vunpack.c.h.b16 %v683
    %v2042 = vunpack.c.l.b16 %v684
    %v2043 = vunpack.c.h.b16 %v684
    %v2044 = vunpack.c.l.b16 %v685
    %v2045 = vunpack.c.l.b16 %v686
    %v2046 = vunpack.c.h.b16 %v686
    %v2047 = vunpack.c.l.b16 %v687
    %v2048 = vunpack.c.h.b16 %v687
    %v2049 = vunpack.c.l.b16 %v688
    %v2050 = vunpack.c.l.b16 %v689
    %v2051 = vunpack.c.h.b16 %v689
    %v2052 = vunpack.c.l.b16 %v690
    %v2053 = vunpack.c.h.b16 %v690
    %v2054 = vunpack.c.l.b16 %v691
    %v2055 = vunpack.c.l.b16 %v692
    %v2056 = vunpack.c.h.b16 %v692
    %v2057 = vunpack.c.l.b16 %v693
    %v2058 = vunpack.c.h.b16 %v693
    %v2059 = vunpack.c.l.b16 %v694
    %v2060 = vunpack.c.l.b16 %v695
    %v2061 = vunpack.c.h.b16 %v695
    %v2062 = vunpack.c.l.b16 %v696
    %v2063 = vunpack.c.h.b16 %v696
    %v2064 = vunpack.c.l.b16 %v697
    %v2065 = vunpack.c.l.b16 %v698
    %v2066 = vunpack.c.h.b16 %v698
    %v2067 = vunpack.c.l.b16 %v699
    %v2068 = vunpack.c.h.b16 %v699
    %v2069 = vunpack.c.l.b16 %v700
    %v2070 = vunpack.c.l.b16 %v701
    %v2071 = vunpack.c.h.b16 %v701
    %v2072 = vunpack.c.l.b16 %v702
    %v2073 = vunpack.c.h.b16 %v702
    %v2074 = vunpack.c.l.b16 %v703
    %v2075 = vunpack.c.l.b16 %v704
    %v2076 = vunpack.c.h.b16 %v704
    %v2077 = vunpack.c.l.b16 %v705
    %v2078 = vunpack.c.h.b16 %v705
    %v2079 = vunpack.c.l.b16 %v706
    %v2080 = vunpack.c.l.b16 %v707
    %v2081 = vunpack.c.h.b16 %v707
    %v2082 = vunpack.c.l.b16 %v708
    %v2083 = vunpack.c.h.b16 %v708
    %v2084 = vunpack.c.l.b16 %v709
    %v2085 = vunpack.c.l.b16 %v710
    %v2086 = vunpack.c.h.b16 %v710
    %v2087 = vunpack.c.l.b16 %v711
    %v2088 = vunpack.c.h.b16 %v711
    %v2089 = vunpack.c.l.b16 %v712
    %v2090 = vunpack.c.l.b16 %v713
    %v2091 = vunpack.c.h.b16 %v713
    %v2092 = vunpack.c.l.b16 %v714
    %v2093 = vunpack.c.h.b16 %v714
    %v2094 = vunpack.c.l.b16 %v715
    %v2095 = vunpack.c.l.b16 %v716
    %v2096 = vunpack.c.h.b16 %v716
    %v2097 = vunpack.c.l.b16 %v717
    %v2098 = vunpack.c.h.b16 %v717
    %v2099 = vunpack.c.l.b16 %v718
    %v2100 = vunpack.c.l.b16 %v719
    %v2101 = vunpack.c.h.b16 %v719
    %v2102 = vunpack.c.l.b16 %v720
    %v2103 = vunpack.c.h.b16 %v720
    %v2104 = vunpack.c.l.b16 %v721
    %v2105 = vunpack.c.l.b16 %v722
    %v2106 = vunpack.c.h.b16 %v722
    %v2107 = vunpack.c.l.b16 %v723
    %v2108 = vunpack.c.h.b16 %v723
    %v2109 = vunpack.c.l.b16 %v724
    %v2110 = vunpack.c.l.b16 %v725
    %v2111 = vunpack.c.h.b16 %v725
    %v2112 = vunpack.c.l.b16 %v726
    %v2113 = vunpack.c.h.b16 %v726
    %v2114 = vunpack.c.l.b16 %v727
    %v2115 = vunpack.c.l.b16 %v728
    %v2116 = vunpack.c.h.b16 %v728
    %v2117 = vunpack.c.l.b16 %v729
    %v2118 = vunpack.c.h.b16 %v729
    %v2119 = vunpack.c.l.b16 %v730
    %v2120 = vunpack.c.l.b16 %v731
    %v2121 = vunpack.c.h.b16 %v731
    %v2122 = vunpack.c.l.b16 %v732
    %v2123 = vunpack.c.h.b16 %v732
    %v2124 = vunpack.c.l.b16 %v733
    %v2125 = vunpack.c.l.b16 %v734
    %v2126 = vunpack.c.h.b16 %v734
    %v2127 = vunpack.c.l.b16 %v735
    %v2128 = vunpack.c.h.b16 %v735
    %v2129 = vunpack.c.l.b16 %v736
    %v2130 = vunpack.c.l.b16 %v737
    %v2131 = vunpack.c.h.b16 %v737
    %v2132 = vunpack.c.l.b16 %v738
    %v2133 = vunpack.c.h.b16 %v738
    %v2134 = vunpack.c.l.b16 %v739
    %v2135 = vunpack.c.l.b16 %v740
    %v2136 = vunpack.c.h.b16 %v740
    %v2137 = vunpack.c.l.b16 %v741
    %v2138 = vunpack.c.h.b16 %v741
    %v2139 = vunpack.c.l.b16 %v742
    %v2140 = vunpack.c.l.b16 %v743
    %v2141 = vunpack.c.h.b16 %v743
    %v2142 = vunpack.c.l.b16 %v744
    %v2143 = vunpack.c.h.b16 %v744
    %v2144 = vunpack.c.l.b16 %v745
    %v2145 = vunpack.c.l.b16 %v746
    %v2146 = vunpack.c.h.b16 %v746
    %v2147 = vunpack.c.l.b16 %v747
    %v2148 = vunpack.c.h.b16 %v747
    %v2149 = vunpack.c.l.b16 %v748
    %v2150 = vunpack.c.l.b16 %v749
    %v2151 = vunpack.c.h.b16 %v749
    %v2152 = vunpack.c.l.b16 %v750
    %v2153 = vunpack.c.h.b16 %v750
    %v2154 = vunpack.c.l.b16 %v751
    %v2155 = vunpack.c.l.b16 %v752
    %v2156 = vunpack.c.h.b16 %v752
    %v2157 = vunpack.c.l.b16 %v753
    %v2158 = vunpack.c.h.b16 %v753
    %v2159 = vunpack.c.l.b16 %v754
    %v2160 = vunpack.c.l.b16 %v755
    %v2161 = vunpack.c.h.b16 %v755
    %v2162 = vunpack.c.l.b16 %v756
    %v2163 = vunpack.c.h.b16 %v756
    %v2164 = vunpack.c.l.b16 %v757
    %v2165 = vunpack.c.l.b16 %v758
    %v2166 = vunpack.c.h.b16 %v758
    %v2167 = vunpack.c.l.b16 %v759
    %v2168 = vunpack.c.h.b16 %v759
    %v2169 = vunpack.c.l.b16 %v760
    %v2170 = vunpack.c.l.b16 %v761
    %v2171 = vunpack.c.h.b16 %v761
    %v2172 = vunpack.c.l.b16 %v762
    %v2173 = vunpack.c.h.b16 %v762
    %v2174 = vunpack.c.l.b16 %v763
    %v2175 = vunpack.c.l.b16 %v764
    %v2176 = vunpack.c.h.b16 %v764
    %v2177 = vunpack.c.l.b16 %v765
    %v2178 = vunpack.c.h.b16 %v765
    %v2179 = vunpack.c.l.b16 %v766
    %v2180 = vunpack.c.l.b16 %v767
    %v2181 = vunpack.c.h.b16 %v767
    %v2182 = vunpack.c.l.b16 %v768
    %v2183 = vunpack.c.h.b16 %v768
    %v2184 = vunpack.c.l.b16 %v769
    %v2185 = vunpack.c.l.b16 %v770
    %v2186 = vunpack.c.h.b16 %v770
    %v2187 = vunpack.c.l.b16 %v771
    %v2188 = vunpack.c.h.b16 %v771
    %v2189 = vunpack.c.l.b16 %v772
    %v2190 = vunpack.c.l.b16 %v773
    %v2191 = vunpack.c.h.b16 %v773
    %v2192 = vunpack.c.l.b16 %v774
    %v2193 = vunpack.c.h.b16 %v774
    %v2194 = vunpack.c.l.b16 %v775
    %v2195 = vunpack.c.l.b16 %v776
    %v2196 = vunpack.c.h.b16 %v776
    %v2197 = vunpack.c.l.b16 %v777
    %v2198 = vunpack.c.h.b16 %v777
    %v2199 = vunpack.c.l.b16 %v778
    %v2200 = vunpack.c.l.b16 %v779
    %v2201 = vunpack.c.h.b16 %v779
    %v2202 = vunpack.c.l.b16 %v780
    %v2203 = vunpack.c.h.b16 %v780
    %v2204 = vunpack.c.l.b16 %v781
    %v2205 = vpack.c.b16 %v2010, %v2005
    %v2206 = vpack.c.b16 %v2011, %v2006
    %v2207 = vpack.c.b16 %v2012, %v2007
    %v2208 = vpack.c.b16 %v2013, %v2008
    %v2209 = vpack.c.b16 %v2014, %v2009
    %v2210 = vpack.c.b16 %v2020, %v2015
    %v2211 = vpack.c.b16 %v2021, %v2016
    %v2212 = vpack.c.b16 %v2022, %v2017
    %v2213 = vpack.c.b16 %v2023, %v2018
    %v2214 = vpack.c.b16 %v2024, %v2019
    %v2215 = vpack.c.b16 %v2030, %v2025
    %v2216 = vpack.c.b16 %v2031, %v2026
    %v2217 = vpack.c.b16 %v2032, %v2027
    %v2218 = vpack.c.b16 %v2033, %v2028
    %v2219 = vpack.c.b16 %v2034, %v2029
    %v2220 = vpack.c.b16 %v2040, %v2035
    %v2221 = vpack.c.b16 %v2041, %v2036
    %v2222 = vpack.c.b16 %v2042, %v2037
    %v2223 = vpack.c.b16 %v2043, %v2038
    %v2224 = vpack.c.b16 %v2044, %v2039
    %v2225 = vpack.c.b16 %v2050, %v2045
    %v2226 = vpack.c.b16 %v2051, %v2046
    %v2227 = vpack.c.b16 %v2052, %v2047
    %v2228 = vpack.c.b16 %v2053, %v2048
    %v2229 = vpack.c.b16 %v2054, %v2049
    %v2230 = vpack.c.b16 %v2060, %v2055
    %v2231 = vpack.c.b16 %v2061, %v2056
    %v2232 = vpack.c.b16 %v2062, %v2057
    %v2233 = vpack.c.b16 %v2063, %v2058
    %v2234 = vpack.c.b16 %v2064, %v2059
    %v2235 = vpack.c.b16 %v2070, %v2065
    %v2236 = vpack.c.b16 %v2071, %v2066
    %v2237 = vpack.c.b16 %v2072, %v2067
    %v2238 = vpack.c.b16 %v2073, %v2068
    %v2239 = vpack.c.b16 %v2074, %v2069
    %v2240 = vpack.c.b16 %v2080, %v2075
    %v2241 = vpack.c.b16 %v2081, %v2076
    %v2242 = vpack.c.b16 %v2082, %v2077
    %v2243 = vpack.c.b16 %v2083, %v2078
    %v2244 = vpack.c.b16 %v2084, %v2079
    %v2245 = vpack.c.b16 %v2090, %v2085
    %v2246 = vpack.c.b16 %v2091, %v2086
    %v2247 = vpack.c.b16 %v2092, %v2087
    %v2248 = vpack.c.b16 %v2093, %v2088
    %v2249 = vpack.c.b16 %v2094, %v2089
    %v2250 = vpack.c.b16 %v2100, %v2095
    %v2251 = vpack.c.b16 %v2101, %v2096
    %v2252 = vpack.c.b16 %v2102, %v2097
    %v2253 = vpack.c.b16 %v2103, %v2098
    %v2254 = vpack.c.b16 %v2104, %v2099
    %v2255 = vpack.c.b16 %v2110, %v2105
    %v2256 = vpack.c.b16 %v2111, %v2106
    %v2257 = vpack.c.b16 %v2112, %v2107
    %v2258 = vpack.c.b16 %v2113, %v2108
    %v2259 = vpack.c.b16 %v2114, %v2109
    %v2260 = vpack.c.b16 %v2120, %v2115
    %v2261 = vpack.c.b16 %v2121, %v2116
    %v2262 = vpack.c.b16 %v2122, %v2117
    %v2263 = vpack.c.b16 %v2123, %v2118
    %v2264 = vpack.c.b16 %v2124, %v2119
    %v2265 = vpack.c.b16 %v2130, %v2125
    %v2266 = vpack.c.b16 %v2131, %v2126
    %v2267 = vpack.c.b16 %v2132, %v2127
    %v2268 = vpack.c.b16 %v2133, %v2128
    %v2269 = vpack.c.b16 %v2134, %v2129
    %v2270 = vpack.c.b16 %v2140, %v2135
    %v2271 = vpack.c.b16 %v2141, %v2136
    %v2272 = vpack.c.b16 %v2142, %v2137
    %v2273 = vpack.c.b16 %v2143, %v2138
    %v2274 = vpack.c.b16 %v2144, %v2139
    %v2275 = vpack.c.b16 %v2150, %v2145
    %v2276 = vpack.c.b16 %v2151, %v2146
    %v2277 = vpack.c.b16 %v2152, %v2147
    %v2278 = vpack.c.b16 %v2153, %v2148
    %v2279 = vpack.c.b16 %v2154, %v2149
    %v2280 = vpack.c.b16 %v2160, %v2155
    %v2281 = vpack.c.b16 %v2161, %v2156
    %v2282 = vpack.c.b16 %v2162, %v2157
    %v2283 = vpack.c.b16 %v2163, %v2158
    %v2284 = vpack.c.b16 %v2164, %v2159
    %v2285 = vpack.c.b16 %v2170, %v2165
    %v2286 = vpack.c.b16 %v2171, %v2166
    %v2287 = vpack.c.b16 %v2172, %v2167
    %v2288 = vpack.c.b16 %v2173, %v2168
    %v2289 = vpack.c.b16 %v2174, %v2169
    %v2290 = vpack.c.b16 %v2180, %v2175
    %v2291 = vpack.c.b16 %v2181, %v2176
    %v2292 = vpack.c.b16 %v2182, %v2177
    %v2293 = vpack.c.b16 %v2183, %v2178
    %v2294 = vpack.c.b16 %v2184, %v2179
    %v2295 = vpack.c.b16 %v2190, %v2185
    %v2296 = vpack.c.b16 %v2191, %v2186
    %v2297 = vpack.c.b16 %v2192, %v2187
    %v2298 = vpack.c.b16 %v2193, %v2188
    %v2299 = vpack.c.b16 %v2194, %v2189
    %v2300 = vpack.c.b16 %v2200, %v2195
    %v2301 = vpack.c.b16 %v2201, %v2196
    %v2302 = vpack.c.b16 %v2202, %v2197
    %v2303 = vpack.c.b16 %v2203, %v2198
    %v2304 = vpack.c.b16 %v2204, %v2199
    %v2405 = vsel %vm524, %v655, 0
    %v2407 = vsel %vm524, %v658, 0
    %v2409 = vsel %vm524, %v661, 0
    %2411 = vmatpush.bf16.msra.mxu0 %v2240
    %2412 = vmatpush.bf16.msra.mxu0 %v2235
    %2413 = vmatpush.bf16.msra.mxu0 %v2230
    %2414 = vmatpush.bf16.msra.mxu0 %v2225
    %2415 = vmatpush.bf16.msra.mxu0 %v2220
    %2416 = vmatpush.bf16.msra.mxu0 %v2215
    %2417 = vmatpush.bf16.msra.mxu0 %v2210
    %2418 = vmatpush.bf16.msra.mxu0 %v2205
    %2419 = vmatmul.bf16.gmra.mxu0 %v653
    %v2420 = vpop.f32.mrf.mxu0
    %v2421 = vadd.f32 %v1583, %v2420
    %v2422 = vpop.f32.mrf.mxu0
    %v2423 = vadd.f32 %v1585, %v2422
    %2424 = vmatmul.bf16.gmra.mxu0 %v656
    %v2425 = vpop.f32.mrf.mxu0
    %v2426 = vadd.f32 %v1588, %v2425
    %v2427 = vpop.f32.mrf.mxu0
    %v2428 = vadd.f32 %v1590, %v2427
    %2429 = vmatmul.bf16.gmra.mxu0 %v659
    %v2430 = vpop.f32.mrf.mxu0
    %v2431 = vadd.f32 %v1593, %v2430
    %v2432 = vpop.f32.mrf.mxu0
    %v2433 = vadd.f32 %v1595, %v2432
    %2434 = vdwg.mxu0
    %2435 = vmatpush.bf16.msra.mxu0 %v2280
    %2436 = vmatpush.bf16.msra.mxu0 %v2275
    %2437 = vmatpush.bf16.msra.mxu0 %v2270
    %2438 = vmatpush.bf16.msra.mxu0 %v2265
    %2439 = vmatpush.bf16.msra.mxu0 %v2260
    %2440 = vmatpush.bf16.msra.mxu0 %v2255
    %2441 = vmatpush.bf16.msra.mxu0 %v2250
    %2442 = vmatpush.bf16.msra.mxu0 %v2245
    %2443 = vmatmul.bf16.gmra.mxu0 %v654
    %v2444 = vpop.f32.mrf.mxu0
    %v2445 = vadd.f32 %v2421, %v2444
    %v2446 = vpop.f32.mrf.mxu0
    %v2447 = vadd.f32 %v2423, %v2446
    %2448 = vmatmul.bf16.gmra.mxu0 %v657
    %v2449 = vpop.f32.mrf.mxu0
    %v2450 = vadd.f32 %v2426, %v2449
    %v2451 = vpop.f32.mrf.mxu0
    %v2452 = vadd.f32 %v2428, %v2451
    %2453 = vmatmul.bf16.gmra.mxu0 %v660
    %v2454 = vpop.f32.mrf.mxu0
    %v2455 = vadd.f32 %v2431, %v2454
    %v2456 = vpop.f32.mrf.mxu0
    %v2457 = vadd.f32 %v2433, %v2456
    %2458 = vdwg.mxu0
    %2459 = vmatpush.bf16.msra.mxu0 0
    %2460 = vmatpush.bf16.msra.mxu0 0
    %2461 = vmatpush.bf16.msra.mxu0 0
    %2462 = vmatpush.bf16.msra.mxu0 0
    %2463 = vmatpush.bf16.msra.mxu0 %v2300
    %2464 = vmatpush.bf16.msra.mxu0 %v2295
    %2465 = vmatpush.bf16.msra.mxu0 %v2290
    %2466 = vmatpush.bf16.msra.mxu0 %v2285
    %2467 = vmatmul.bf16.gmra.mxu0 %v2405
    %v2468 = vpop.f32.mrf.mxu0
    %v2469 = vadd.f32 %v2445, %v2468
    %v2470 = vpop.f32.mrf.mxu0
    %v2471 = vadd.f32 %v2447, %v2470
    %2472 = vmatmul.bf16.gmra.mxu0 %v2407
    %v2473 = vpop.f32.mrf.mxu0
    %v2474 = vadd.f32 %v2450, %v2473
    %v2475 = vpop.f32.mrf.mxu0
    %v2476 = vadd.f32 %v2452, %v2475
    %2477 = vmatmul.bf16.gmra.mxu0 %v2409
    %v2478 = vpop.f32.mrf.mxu0
    %v2479 = vadd.f32 %v2455, %v2478
    %v2480 = vpop.f32.mrf.mxu0
    %v2481 = vadd.f32 %v2457, %v2480
    %2482 = vdwg.mxu0
    %2483 = vmatpush.bf16.msra.mxu0 %v2241
    %2484 = vmatpush.bf16.msra.mxu0 %v2236
    %2485 = vmatpush.bf16.msra.mxu0 %v2231
    %2486 = vmatpush.bf16.msra.mxu0 %v2226
    %2487 = vmatpush.bf16.msra.mxu0 %v2221
    %2488 = vmatpush.bf16.msra.mxu0 %v2216
    %2489 = vmatpush.bf16.msra.mxu0 %v2211
    %2490 = vmatpush.bf16.msra.mxu0 %v2206
    %2491 = vmatmul.bf16.gmra.mxu0 %v653
    %v2492 = vpop.f32.mrf.mxu0
    %v2493 = vadd.f32 %v1655, %v2492
    %v2494 = vpop.f32.mrf.mxu0
    %v2495 = vadd.f32 %v1657, %v2494
    %2496 = vmatmul.bf16.gmra.mxu0 %v656
    %v2497 = vpop.f32.mrf.mxu0
    %v2498 = vadd.f32 %v1660, %v2497
    %v2499 = vpop.f32.mrf.mxu0
    %v2500 = vadd.f32 %v1662, %v2499
    %2501 = vmatmul.bf16.gmra.mxu0 %v659
    %v2502 = vpop.f32.mrf.mxu0
    %v2503 = vadd.f32 %v1665, %v2502
    %v2504 = vpop.f32.mrf.mxu0
    %v2505 = vadd.f32 %v1667, %v2504
    %2506 = vdwg.mxu0
    %2507 = vmatpush.bf16.msra.mxu0 %v2281
    %2508 = vmatpush.bf16.msra.mxu0 %v2276
    %2509 = vmatpush.bf16.msra.mxu0 %v2271
    %2510 = vmatpush.bf16.msra.mxu0 %v2266
    %2511 = vmatpush.bf16.msra.mxu0 %v2261
    %2512 = vmatpush.bf16.msra.mxu0 %v2256
    %2513 = vmatpush.bf16.msra.mxu0 %v2251
    %2514 = vmatpush.bf16.msra.mxu0 %v2246
    %2515 = vmatmul.bf16.gmra.mxu0 %v654
    %v2516 = vpop.f32.mrf.mxu0
    %v2517 = vadd.f32 %v2493, %v2516
    %v2518 = vpop.f32.mrf.mxu0
    %v2519 = vadd.f32 %v2495, %v2518
    %2520 = vmatmul.bf16.gmra.mxu0 %v657
    %v2521 = vpop.f32.mrf.mxu0
    %v2522 = vadd.f32 %v2498, %v2521
    %v2523 = vpop.f32.mrf.mxu0
    %v2524 = vadd.f32 %v2500, %v2523
    %2525 = vmatmul.bf16.gmra.mxu0 %v660
    %v2526 = vpop.f32.mrf.mxu0
    %v2527 = vadd.f32 %v2503, %v2526
    %v2528 = vpop.f32.mrf.mxu0
    %v2529 = vadd.f32 %v2505, %v2528
    %2530 = vdwg.mxu0
    %2531 = vmatpush.bf16.msra.mxu0 0
    %2532 = vmatpush.bf16.msra.mxu0 0
    %2533 = vmatpush.bf16.msra.mxu0 0
    %2534 = vmatpush.bf16.msra.mxu0 0
    %2535 = vmatpush.bf16.msra.mxu0 %v2301
    %2536 = vmatpush.bf16.msra.mxu0 %v2296
    %2537 = vmatpush.bf16.msra.mxu0 %v2291
    %2538 = vmatpush.bf16.msra.mxu0 %v2286
    %2539 = vmatmul.bf16.gmra.mxu0 %v2405
    %v2540 = vpop.f32.mrf.mxu0
    %v2541 = vadd.f32 %v2517, %v2540
    %v2542 = vpop.f32.mrf.mxu0
    %v2543 = vadd.f32 %v2519, %v2542
    %2544 = vmatmul.bf16.gmra.mxu0 %v2407
    %v2545 = vpop.f32.mrf.mxu0
    %v2546 = vadd.f32 %v2522, %v2545
    %v2547 = vpop.f32.mrf.mxu0
    %v2548 = vadd.f32 %v2524, %v2547
    %2549 = vmatmul.bf16.gmra.mxu0 %v2409
    %v2550 = vpop.f32.mrf.mxu0
    %v2551 = vadd.f32 %v2527, %v2550
    %v2552 = vpop.f32.mrf.mxu0
    %v2553 = vadd.f32 %v2529, %v2552
    %2554 = vdwg.mxu0
    %2555 = vmatpush.bf16.msra.mxu0 %v2242
    %2556 = vmatpush.bf16.msra.mxu0 %v2237
    %2557 = vmatpush.bf16.msra.mxu0 %v2232
    %2558 = vmatpush.bf16.msra.mxu0 %v2227
    %2559 = vmatpush.bf16.msra.mxu0 %v2222
    %2560 = vmatpush.bf16.msra.mxu0 %v2217
    %2561 = vmatpush.bf16.msra.mxu0 %v2212
    %2562 = vmatpush.bf16.msra.mxu0 %v2207
    %2563 = vmatmul.bf16.gmra.mxu0 %v653
    %v2564 = vpop.f32.mrf.mxu0
    %v2565 = vadd.f32 %v1727, %v2564
    %v2566 = vpop.f32.mrf.mxu0
    %v2567 = vadd.f32 %v1729, %v2566
    %2568 = vmatmul.bf16.gmra.mxu0 %v656
    %v2569 = vpop.f32.mrf.mxu0
    %v2570 = vadd.f32 %v1732, %v2569
    %v2571 = vpop.f32.mrf.mxu0
    %v2572 = vadd.f32 %v1734, %v2571
    %2573 = vmatmul.bf16.gmra.mxu0 %v659
    %v2574 = vpop.f32.mrf.mxu0
    %v2575 = vadd.f32 %v1737, %v2574
    %v2576 = vpop.f32.mrf.mxu0
    %v2577 = vadd.f32 %v1739, %v2576
    %2578 = vdwg.mxu0
    %2579 = vmatpush.bf16.msra.mxu0 %v2282
    %2580 = vmatpush.bf16.msra.mxu0 %v2277
    %2581 = vmatpush.bf16.msra.mxu0 %v2272
    %2582 = vmatpush.bf16.msra.mxu0 %v2267
    %2583 = vmatpush.bf16.msra.mxu0 %v2262
    %2584 = vmatpush.bf16.msra.mxu0 %v2257
    %2585 = vmatpush.bf16.msra.mxu0 %v2252
    %2586 = vmatpush.bf16.msra.mxu0 %v2247
    %2587 = vmatmul.bf16.gmra.mxu0 %v654
    %v2588 = vpop.f32.mrf.mxu0
    %v2589 = vadd.f32 %v2565, %v2588
    %v2590 = vpop.f32.mrf.mxu0
    %v2591 = vadd.f32 %v2567, %v2590
    %2592 = vmatmul.bf16.gmra.mxu0 %v657
    %v2593 = vpop.f32.mrf.mxu0
    %v2594 = vadd.f32 %v2570, %v2593
    %v2595 = vpop.f32.mrf.mxu0
    %v2596 = vadd.f32 %v2572, %v2595
    %2597 = vmatmul.bf16.gmra.mxu0 %v660
    %v2598 = vpop.f32.mrf.mxu0
    %v2599 = vadd.f32 %v2575, %v2598
    %v2600 = vpop.f32.mrf.mxu0
    %v2601 = vadd.f32 %v2577, %v2600
    %2602 = vdwg.mxu0
    %2603 = vmatpush.bf16.msra.mxu0 0
    %2604 = vmatpush.bf16.msra.mxu0 0
    %2605 = vmatpush.bf16.msra.mxu0 0
    %2606 = vmatpush.bf16.msra.mxu0 0
    %2607 = vmatpush.bf16.msra.mxu0 %v2302
    %2608 = vmatpush.bf16.msra.mxu0 %v2297
    %2609 = vmatpush.bf16.msra.mxu0 %v2292
    %2610 = vmatpush.bf16.msra.mxu0 %v2287
    %2611 = vmatmul.bf16.gmra.mxu0 %v2405
    %v2612 = vpop.f32.mrf.mxu0
    %v2613 = vadd.f32 %v2589, %v2612
    %v2614 = vpop.f32.mrf.mxu0
    %v2615 = vadd.f32 %v2591, %v2614
    %2616 = vmatmul.bf16.gmra.mxu0 %v2407
    %v2617 = vpop.f32.mrf.mxu0
    %v2618 = vadd.f32 %v2594, %v2617
    %v2619 = vpop.f32.mrf.mxu0
    %v2620 = vadd.f32 %v2596, %v2619
    %2621 = vmatmul.bf16.gmra.mxu0 %v2409
    %v2622 = vpop.f32.mrf.mxu0
    %v2623 = vadd.f32 %v2599, %v2622
    %v2624 = vpop.f32.mrf.mxu0
    %v2625 = vadd.f32 %v2601, %v2624
    %2626 = vdwg.mxu0
    %2627 = vmatpush.bf16.msra.mxu0 %v2243
    %2628 = vmatpush.bf16.msra.mxu0 %v2238
    %2629 = vmatpush.bf16.msra.mxu0 %v2233
    %2630 = vmatpush.bf16.msra.mxu0 %v2228
    %2631 = vmatpush.bf16.msra.mxu0 %v2223
    %2632 = vmatpush.bf16.msra.mxu0 %v2218
    %2633 = vmatpush.bf16.msra.mxu0 %v2213
    %2634 = vmatpush.bf16.msra.mxu0 %v2208
    %2635 = vmatmul.bf16.gmra.mxu0 %v653
    %v2636 = vpop.f32.mrf.mxu0
    %v2637 = vadd.f32 %v1799, %v2636
    %v2638 = vpop.f32.mrf.mxu0
    %v2639 = vadd.f32 %v1801, %v2638
    %2640 = vmatmul.bf16.gmra.mxu0 %v656
    %v2641 = vpop.f32.mrf.mxu0
    %v2642 = vadd.f32 %v1804, %v2641
    %v2643 = vpop.f32.mrf.mxu0
    %v2644 = vadd.f32 %v1806, %v2643
    %2645 = vmatmul.bf16.gmra.mxu0 %v659
    %v2646 = vpop.f32.mrf.mxu0
    %v2647 = vadd.f32 %v1809, %v2646
    %v2648 = vpop.f32.mrf.mxu0
    %v2649 = vadd.f32 %v1811, %v2648
    %2650 = vdwg.mxu0
    %2651 = vmatpush.bf16.msra.mxu0 %v2283
    %2652 = vmatpush.bf16.msra.mxu0 %v2278
    %2653 = vmatpush.bf16.msra.mxu0 %v2273
    %2654 = vmatpush.bf16.msra.mxu0 %v2268
    %2655 = vmatpush.bf16.msra.mxu0 %v2263
    %2656 = vmatpush.bf16.msra.mxu0 %v2258
    %2657 = vmatpush.bf16.msra.mxu0 %v2253
    %2658 = vmatpush.bf16.msra.mxu0 %v2248
    %2659 = vmatmul.bf16.gmra.mxu0 %v654
    %v2660 = vpop.f32.mrf.mxu0
    %v2661 = vadd.f32 %v2637, %v2660
    %v2662 = vpop.f32.mrf.mxu0
    %v2663 = vadd.f32 %v2639, %v2662
    %2664 = vmatmul.bf16.gmra.mxu0 %v657
    %v2665 = vpop.f32.mrf.mxu0
    %v2666 = vadd.f32 %v2642, %v2665
    %v2667 = vpop.f32.mrf.mxu0
    %v2668 = vadd.f32 %v2644, %v2667
    %2669 = vmatmul.bf16.gmra.mxu0 %v660
    %v2670 = vpop.f32.mrf.mxu0
    %v2671 = vadd.f32 %v2647, %v2670
    %v2672 = vpop.f32.mrf.mxu0
    %v2673 = vadd.f32 %v2649, %v2672
    %2674 = vdwg.mxu0
    %2675 = vmatpush.bf16.msra.mxu0 0
    %2676 = vmatpush.bf16.msra.mxu0 0
    %2677 = vmatpush.bf16.msra.mxu0 0
    %2678 = vmatpush.bf16.msra.mxu0 0
    %2679 = vmatpush.bf16.msra.mxu0 %v2303
    %2680 = vmatpush.bf16.msra.mxu0 %v2298
    %2681 = vmatpush.bf16.msra.mxu0 %v2293
    %2682 = vmatpush.bf16.msra.mxu0 %v2288
    %2683 = vmatmul.bf16.gmra.mxu0 %v2405
    %v2684 = vpop.f32.mrf.mxu0
    %v2685 = vadd.f32 %v2661, %v2684
    %v2686 = vpop.f32.mrf.mxu0
    %v2687 = vadd.f32 %v2663, %v2686
    %2688 = vmatmul.bf16.gmra.mxu0 %v2407
    %v2689 = vpop.f32.mrf.mxu0
    %v2690 = vadd.f32 %v2666, %v2689
    %v2691 = vpop.f32.mrf.mxu0
    %v2692 = vadd.f32 %v2668, %v2691
    %2693 = vmatmul.bf16.gmra.mxu0 %v2409
    %v2694 = vpop.f32.mrf.mxu0
    %v2695 = vadd.f32 %v2671, %v2694
    %v2696 = vpop.f32.mrf.mxu0
    %v2697 = vadd.f32 %v2673, %v2696
    %2698 = vdwg.mxu0
    %2699 = vmatpush.bf16.msra.mxu0 %v2244
    %2700 = vmatpush.bf16.msra.mxu0 %v2239
    %2701 = vmatpush.bf16.msra.mxu0 %v2234
    %2702 = vmatpush.bf16.msra.mxu0 %v2229
    %2703 = vmatpush.bf16.msra.mxu0 %v2224
    %2704 = vmatpush.bf16.msra.mxu0 %v2219
    %2705 = vmatpush.bf16.msra.mxu0 %v2214
    %2706 = vmatpush.bf16.msra.mxu0 %v2209
    %2707 = vmatmul.bf16.gmra.mxu0 %v653
    %v2708 = vpop.f32.mrf.mxu0
    %v2709 = vadd.f32 %v1871, %v2708
    %v2710 = vpop.f32.mrf.mxu0
    %v2711 = vadd.f32 %v1873, %v2710
    %2712 = vmatmul.bf16.gmra.mxu0 %v656
    %v2713 = vpop.f32.mrf.mxu0
    %v2714 = vadd.f32 %v1876, %v2713
    %v2715 = vpop.f32.mrf.mxu0
    %v2716 = vadd.f32 %v1878, %v2715
    %2717 = vmatmul.bf16.gmra.mxu0 %v659
    %v2718 = vpop.f32.mrf.mxu0
    %v2719 = vadd.f32 %v1881, %v2718
    %v2720 = vpop.f32.mrf.mxu0
    %v2721 = vadd.f32 %v1883, %v2720
    %2722 = vdwg.mxu0
    %2723 = vmatpush.bf16.msra.mxu0 %v2284
    %2724 = vmatpush.bf16.msra.mxu0 %v2279
    %2725 = vmatpush.bf16.msra.mxu0 %v2274
    %2726 = vmatpush.bf16.msra.mxu0 %v2269
    %2727 = vmatpush.bf16.msra.mxu0 %v2264
    %2728 = vmatpush.bf16.msra.mxu0 %v2259
    %2729 = vmatpush.bf16.msra.mxu0 %v2254
    %2730 = vmatpush.bf16.msra.mxu0 %v2249
    %2731 = vmatmul.bf16.gmra.mxu0 %v654
    %v2732 = vpop.f32.mrf.mxu0
    %v2733 = vadd.f32 %v2709, %v2732
    %v2734 = vpop.f32.mrf.mxu0
    %v2735 = vadd.f32 %v2711, %v2734
    %2736 = vmatmul.bf16.gmra.mxu0 %v657
    %v2737 = vpop.f32.mrf.mxu0
    %v2738 = vadd.f32 %v2714, %v2737
    %v2739 = vpop.f32.mrf.mxu0
    %v2740 = vadd.f32 %v2716, %v2739
    %2741 = vmatmul.bf16.gmra.mxu0 %v660
    %v2742 = vpop.f32.mrf.mxu0
    %v2743 = vadd.f32 %v2719, %v2742
    %v2744 = vpop.f32.mrf.mxu0
    %v2745 = vadd.f32 %v2721, %v2744
    %2746 = vdwg.mxu0
    %2747 = vmatpush.bf16.msra.mxu0 0
    %2748 = vmatpush.bf16.msra.mxu0 0
    %2749 = vmatpush.bf16.msra.mxu0 0
    %2750 = vmatpush.bf16.msra.mxu0 0
    %2751 = vmatpush.bf16.msra.mxu0 %v2304
    %2752 = vmatpush.bf16.msra.mxu0 %v2299
    %2753 = vmatpush.bf16.msra.mxu0 %v2294
    %2754 = vmatpush.bf16.msra.mxu0 %v2289
    %2755 = vmatmul.bf16.gmra.mxu0 %v2405
    %v2756 = vpop.f32.mrf.mxu0
    %v2757 = vadd.f32 %v2733, %v2756
    %v2758 = vpop.f32.mrf.mxu0
    %v2759 = vadd.f32 %v2735, %v2758
    %2760 = vmatmul.bf16.gmra.mxu0 %v2407
    %v2761 = vpop.f32.mrf.mxu0
    %v2762 = vadd.f32 %v2738, %v2761
    %v2763 = vpop.f32.mrf.mxu0
    %v2764 = vadd.f32 %v2740, %v2763
    %2765 = vmatmul.bf16.gmra.mxu0 %v2409
    %v2766 = vpop.f32.mrf.mxu0
    %v2767 = vadd.f32 %v2743, %v2766
    %v2768 = vpop.f32.mrf.mxu0
    %v2769 = vadd.f32 %v2745, %v2768
    %2770 = vdwg.mxu0
    %s2771 = scalar_lea.vmem [#allocation6], 1600
    %v2772 = vld [vmem:[%s2771] sm:$0xff]
    %v2773 = vld [vmem:[%s2771 + $0x8] sm:$0xff]
    %v2774 = vld [vmem:[%s2771 + $0x10] sm:$0xf]
    %v2775 = vld [vmem:[%s2771 + $0x14] sm:$0xff]
    %v2776 = vld [vmem:[%s2771 + $0x1c] sm:$0xff]
    %v2777 = vld [vmem:[%s2771 + $0x24] sm:$0xf]
    %v2778 = vld [vmem:[%s2771 + $0x28] sm:$0xff]
    %v2779 = vld [vmem:[%s2771 + $0x30] sm:$0xff]
    %v2780 = vld [vmem:[%s2771 + $0x38] sm:$0xf]
    %v2781 = vld [vmem:[%s2771 + $0x3c] sm:$0xff]
    %v2782 = vld [vmem:[%s2771 + $0x44] sm:$0xff]
    %v2783 = vld [vmem:[%s2771 + $0x4c] sm:$0xf]
    %v2784 = vld [vmem:[%s2771 + $0x50] sm:$0xff]
    %v2785 = vld [vmem:[%s2771 + $0x58] sm:$0xff]
    %v2786 = vld [vmem:[%s2771 + $0x60] sm:$0xf]
    %v2787 = vld [vmem:[%s2771 + $0x64] sm:$0xff]
    %v2788 = vld [vmem:[%s2771 + $0x6c] sm:$0xff]
    %v2789 = vld [vmem:[%s2771 + $0x74] sm:$0xf]
    %v2790 = vld [vmem:[%s2771 + $0x78] sm:$0xff]
    %v2791 = vld [vmem:[%s2771 + $0x80] sm:$0xff]
    %v2792 = vld [vmem:[%s2771 + $0x88] sm:$0xf]
    %v2793 = vld [vmem:[%s2771 + $0x8c] sm:$0xff]
    %v2794 = vld [vmem:[%s2771 + $0x94] sm:$0xff]
    %v2795 = vld [vmem:[%s2771 + $0x9c] sm:$0xf]
    %v2796 = vld [vmem:[%s2771 + $0xa0] sm:$0xff]
    %v2797 = vld [vmem:[%s2771 + $0xa8] sm:$0xff]
    %v2798 = vld [vmem:[%s2771 + $0xb0] sm:$0xf]
    %v2799 = vld [vmem:[%s2771 + $0xb4] sm:$0xff]
    %v2800 = vld [vmem:[%s2771 + $0xbc] sm:$0xff]
    %v2801 = vld [vmem:[%s2771 + $0xc4] sm:$0xf]
    %v2802 = vld [vmem:[%s2771 + $0xc8] sm:$0xff]
    %v2803 = vld [vmem:[%s2771 + $0xd0] sm:$0xff]
    %v2804 = vld [vmem:[%s2771 + $0xd8] sm:$0xf]
    %v2805 = vld [vmem:[%s2771 + $0xdc] sm:$0xff]
    %v2806 = vld [vmem:[%s2771 + $0xe4] sm:$0xff]
    %v2807 = vld [vmem:[%s2771 + $0xec] sm:$0xf]
    %v2808 = vld [vmem:[%s2771 + $0xf0] sm:$0xff]
    %v2809 = vld [vmem:[%s2771 + $0xf8] sm:$0xff]
    %v2810 = vld [vmem:[%s2771 + $0x100] sm:$0xf]
    %v2811 = vld [vmem:[%s2771 + $0x104] sm:$0xff]
    %v2812 = vld [vmem:[%s2771 + $0x10c] sm:$0xff]
    %v2813 = vld [vmem:[%s2771 + $0x114] sm:$0xf]
    %v2814 = vld [vmem:[%s2771 + $0x118] sm:$0xff]
    %v2815 = vld [vmem:[%s2771 + $0x120] sm:$0xff]
    %v2816 = vld [vmem:[%s2771 + $0x128] sm:$0xf]
    %v2817 = vld [vmem:[%s2771 + $0x12c] sm:$0xff]
    %v2818 = vld [vmem:[%s2771 + $0x134] sm:$0xff]
    %v2819 = vld [vmem:[%s2771 + $0x13c] sm:$0xf]
    %v2820 = vld [vmem:[%s2771 + $0x140] sm:$0xff]
    %v2821 = vld [vmem:[%s2771 + $0x148] sm:$0xff]
    %v2822 = vld [vmem:[%s2771 + $0x150] sm:$0xf]
    %v2823 = vld [vmem:[%s2771 + $0x154] sm:$0xff]
    %v2824 = vld [vmem:[%s2771 + $0x15c] sm:$0xff]
    %v2825 = vld [vmem:[%s2771 + $0x164] sm:$0xf]
    %v2826 = vld [vmem:[%s2771 + $0x168] sm:$0xff]
    %v2827 = vld [vmem:[%s2771 + $0x170] sm:$0xff]
    %v2828 = vld [vmem:[%s2771 + $0x178] sm:$0xf]
    %v2829 = vld [vmem:[%s2771 + $0x17c] sm:$0xff]
    %v2830 = vld [vmem:[%s2771 + $0x184] sm:$0xff]
    %v2831 = vld [vmem:[%s2771 + $0x18c] sm:$0xf]
    %v2832 = vld [vmem:[%s2771 + $0x190] sm:$0xff]
    %v2833 = vld [vmem:[%s2771 + $0x198] sm:$0xff]
    %v2834 = vld [vmem:[%s2771 + $0x1a0] sm:$0xf]
    %v2835 = vld [vmem:[%s2771 + $0x1a4] sm:$0xff]
    %v2836 = vld [vmem:[%s2771 + $0x1ac] sm:$0xff]
    %v2837 = vld [vmem:[%s2771 + $0x1b4] sm:$0xf]
    %v2838 = vld [vmem:[%s2771 + $0x1b8] sm:$0xff]
    %v2839 = vld [vmem:[%s2771 + $0x1c0] sm:$0xff]
    %v2840 = vld [vmem:[%s2771 + $0x1c8] sm:$0xf]
    %v2841 = vld [vmem:[%s2771 + $0x1cc] sm:$0xff]
    %v2842 = vld [vmem:[%s2771 + $0x1d4] sm:$0xff]
    %v2843 = vld [vmem:[%s2771 + $0x1dc] sm:$0xf]
    %v2844 = vld [vmem:[%s2771 + $0x1e0] sm:$0xff]
    %v2845 = vld [vmem:[%s2771 + $0x1e8] sm:$0xff]
    %v2846 = vld [vmem:[%s2771 + $0x1f0] sm:$0xf]
    %v2847 = vld [vmem:[%s2771 + $0x1f4] sm:$0xff]
    %v2848 = vld [vmem:[%s2771 + $0x1fc] sm:$0xff]
    %v2849 = vld [vmem:[%s2771 + $0x204] sm:$0xf]
    %v2850 = vld [vmem:[%s2771 + $0x208] sm:$0xff]
    %v2851 = vld [vmem:[%s2771 + $0x210] sm:$0xff]
    %v2852 = vld [vmem:[%s2771 + $0x218] sm:$0xf]
    %v2853 = vld [vmem:[%s2771 + $0x21c] sm:$0xff]
    %v2854 = vld [vmem:[%s2771 + $0x224] sm:$0xff]
    %v2855 = vld [vmem:[%s2771 + $0x22c] sm:$0xf]
    %v2856 = vld [vmem:[%s2771 + $0x230] sm:$0xff]
    %v2857 = vld [vmem:[%s2771 + $0x238] sm:$0xff]
    %v2858 = vld [vmem:[%s2771 + $0x240] sm:$0xf]
    %v2859 = vld [vmem:[%s2771 + $0x244] sm:$0xff]
    %v2860 = vld [vmem:[%s2771 + $0x24c] sm:$0xff]
    %v2861 = vld [vmem:[%s2771 + $0x254] sm:$0xf]
    %v2862 = vld [vmem:[%s2771 + $0x258] sm:$0xff]
    %v2863 = vld [vmem:[%s2771 + $0x260] sm:$0xff]
    %v2864 = vld [vmem:[%s2771 + $0x268] sm:$0xf]
    %v2865 = vld [vmem:[%s2771 + $0x26c] sm:$0xff]
    %v2866 = vld [vmem:[%s2771 + $0x274] sm:$0xff]
    %v2867 = vld [vmem:[%s2771 + $0x27c] sm:$0xf]
    %v2868 = vld [vmem:[%s2771 + $0x280] sm:$0xff]
    %v2869 = vld [vmem:[%s2771 + $0x288] sm:$0xff]
    %v2870 = vld [vmem:[%s2771 + $0x290] sm:$0xf]
    %v2871 = vld [vmem:[%s2771 + $0x294] sm:$0xff]
    %v2872 = vld [vmem:[%s2771 + $0x29c] sm:$0xff]
    %v2873 = vld [vmem:[%s2771 + $0x2a4] sm:$0xf]
    %v2874 = vld [vmem:[%s2771 + $0x2a8] sm:$0xff]
    %v2875 = vld [vmem:[%s2771 + $0x2b0] sm:$0xff]
    %v2876 = vld [vmem:[%s2771 + $0x2b8] sm:$0xf]
    %v2877 = vld [vmem:[%s2771 + $0x2bc] sm:$0xff]
    %v2878 = vld [vmem:[%s2771 + $0x2c4] sm:$0xff]
    %v2879 = vld [vmem:[%s2771 + $0x2cc] sm:$0xf]
    %v2880 = vld [vmem:[%s2771 + $0x2d0] sm:$0xff]
    %v2881 = vld [vmem:[%s2771 + $0x2d8] sm:$0xff]
    %v2882 = vld [vmem:[%s2771 + $0x2e0] sm:$0xf]
    %v2883 = vld [vmem:[%s2771 + $0x2e4] sm:$0xff]
    %v2884 = vld [vmem:[%s2771 + $0x2ec] sm:$0xff]
    %v2885 = vld [vmem:[%s2771 + $0x2f4] sm:$0xf]
    %v2886 = vld [vmem:[%s2771 + $0x2f8] sm:$0xff]
    %v2887 = vld [vmem:[%s2771 + $0x300] sm:$0xff]
    %v2888 = vld [vmem:[%s2771 + $0x308] sm:$0xf]
    %v2889 = vld [vmem:[%s2771 + $0x30c] sm:$0xff]
    %v2890 = vld [vmem:[%s2771 + $0x314] sm:$0xff]
    %v2891 = vld [vmem:[%s2771 + $0x31c] sm:$0xf]
    %v2904 = vrot.slane %v653, 1
    %v2905 = vrot.slane %v656, 1
    %v2906 = vsel %vm349, %v2904, %v2905
    %v2907 = vrot.slane %v654, 1
    %v2908 = vrot.slane %v657, 1
    %v2909 = vsel %vm349, %v2907, %v2908
    %v2910 = vrot.slane %v655, 1
    %v2911 = vrot.slane %v658, 1
    %v2912 = vsel %vm349, %v2910, %v2911
    %v2913 = vrot.slane %v659, 1
    %v2914 = vsel %vm349, %v2905, %v2913
    %v2915 = vrot.slane %v660, 1
    %v2916 = vsel %vm349, %v2908, %v2915
    %v2917 = vrot.slane %v661, 1
    %v2918 = vsel %vm349, %v2911, %v2917
    %v2919 = vrot.slane %v782, 1
    %v2920 = vsel %vm349, %v2913, %v2919
    %v2921 = vrot.slane %v783, 1
    %v2922 = vsel %vm349, %v2915, %v2921
    %v2923 = vrot.slane %v784, 1
    %v2924 = vsel %vm349, %v2917, %v2923
    %v3051 = vunpack.c.l.b16 %v2772
    %v3052 = vunpack.c.h.b16 %v2772
    %v3053 = vunpack.c.l.b16 %v2773
    %v3054 = vunpack.c.h.b16 %v2773
    %v3055 = vunpack.c.l.b16 %v2774
    %v3056 = vunpack.c.l.b16 %v2775
    %v3057 = vunpack.c.h.b16 %v2775
    %v3058 = vunpack.c.l.b16 %v2776
    %v3059 = vunpack.c.h.b16 %v2776
    %v3060 = vunpack.c.l.b16 %v2777
    %v3061 = vunpack.c.l.b16 %v2778
    %v3062 = vunpack.c.h.b16 %v2778
    %v3063 = vunpack.c.l.b16 %v2779
    %v3064 = vunpack.c.h.b16 %v2779
    %v3065 = vunpack.c.l.b16 %v2780
    %v3066 = vunpack.c.l.b16 %v2781
    %v3067 = vunpack.c.h.b16 %v2781
    %v3068 = vunpack.c.l.b16 %v2782
    %v3069 = vunpack.c.h.b16 %v2782
    %v3070 = vunpack.c.l.b16 %v2783
    %v3071 = vunpack.c.l.b16 %v2784
    %v3072 = vunpack.c.h.b16 %v2784
    %v3073 = vunpack.c.l.b16 %v2785
    %v3074 = vunpack.c.h.b16 %v2785
    %v3075 = vunpack.c.l.b16 %v2786
    %v3076 = vunpack.c.l.b16 %v2787
    %v3077 = vunpack.c.h.b16 %v2787
    %v3078 = vunpack.c.l.b16 %v2788
    %v3079 = vunpack.c.h.b16 %v2788
    %v3080 = vunpack.c.l.b16 %v2789
    %v3081 = vunpack.c.l.b16 %v2790
    %v3082 = vunpack.c.h.b16 %v2790
    %v3083 = vunpack.c.l.b16 %v2791
    %v3084 = vunpack.c.h.b16 %v2791
    %v3085 = vunpack.c.l.b16 %v2792
    %v3086 = vunpack.c.l.b16 %v2793
    %v3087 = vunpack.c.h.b16 %v2793
    %v3088 = vunpack.c.l.b16 %v2794
    %v3089 = vunpack.c.h.b16 %v2794
    %v3090 = vunpack.c.l.b16 %v2795
    %v3091 = vunpack.c.l.b16 %v2796
    %v3092 = vunpack.c.h.b16 %v2796
    %v3093 = vunpack.c.l.b16 %v2797
    %v3094 = vunpack.c.h.b16 %v2797
    %v3095 = vunpack.c.l.b16 %v2798
    %v3096 = vunpack.c.l.b16 %v2799
    %v3097 = vunpack.c.h.b16 %v2799
    %v3098 = vunpack.c.l.b16 %v2800
    %v3099 = vunpack.c.h.b16 %v2800
    %v3100 = vunpack.c.l.b16 %v2801
    %v3101 = vunpack.c.l.b16 %v2802
    %v3102 = vunpack.c.h.b16 %v2802
    %v3103 = vunpack.c.l.b16 %v2803
    %v3104 = vunpack.c.h.b16 %v2803
    %v3105 = vunpack.c.l.b16 %v2804
    %v3106 = vunpack.c.l.b16 %v2805
    %v3107 = vunpack.c.h.b16 %v2805
    %v3108 = vunpack.c.l.b16 %v2806
    %v3109 = vunpack.c.h.b16 %v2806
    %v3110 = vunpack.c.l.b16 %v2807
    %v3111 = vunpack.c.l.b16 %v2808
    %v3112 = vunpack.c.h.b16 %v2808
    %v3113 = vunpack.c.l.b16 %v2809
    %v3114 = vunpack.c.h.b16 %v2809
    %v3115 = vunpack.c.l.b16 %v2810
    %v3116 = vunpack.c.l.b16 %v2811
    %v3117 = vunpack.c.h.b16 %v2811
    %v3118 = vunpack.c.l.b16 %v2812
    %v3119 = vunpack.c.h.b16 %v2812
    %v3120 = vunpack.c.l.b16 %v2813
    %v3121 = vunpack.c.l.b16 %v2814
    %v3122 = vunpack.c.h.b16 %v2814
    %v3123 = vunpack.c.l.b16 %v2815
    %v3124 = vunpack.c.h.b16 %v2815
    %v3125 = vunpack.c.l.b16 %v2816
    %v3126 = vunpack.c.l.b16 %v2817
    %v3127 = vunpack.c.h.b16 %v2817
    %v3128 = vunpack.c.l.b16 %v2818
    %v3129 = vunpack.c.h.b16 %v2818
    %v3130 = vunpack.c.l.b16 %v2819
    %v3131 = vunpack.c.l.b16 %v2820
    %v3132 = vunpack.c.h.b16 %v2820
    %v3133 = vunpack.c.l.b16 %v2821
    %v3134 = vunpack.c.h.b16 %v2821
    %v3135 = vunpack.c.l.b16 %v2822
    %v3136 = vunpack.c.l.b16 %v2823
    %v3137 = vunpack.c.h.b16 %v2823
    %v3138 = vunpack.c.l.b16 %v2824
    %v3139 = vunpack.c.h.b16 %v2824
    %v3140 = vunpack.c.l.b16 %v2825
    %v3141 = vunpack.c.l.b16 %v2826
    %v3142 = vunpack.c.h.b16 %v2826
    %v3143 = vunpack.c.l.b16 %v2827
    %v3144 = vunpack.c.h.b16 %v2827
    %v3145 = vunpack.c.l.b16 %v2828
    %v3146 = vunpack.c.l.b16 %v2829
    %v3147 = vunpack.c.h.b16 %v2829
    %v3148 = vunpack.c.l.b16 %v2830
    %v3149 = vunpack.c.h.b16 %v2830
    %v3150 = vunpack.c.l.b16 %v2831
    %v3151 = vunpack.c.l.b16 %v2832
    %v3152 = vunpack.c.h.b16 %v2832
    %v3153 = vunpack.c.l.b16 %v2833
    %v3154 = vunpack.c.h.b16 %v2833
    %v3155 = vunpack.c.l.b16 %v2834
    %v3156 = vunpack.c.l.b16 %v2835
    %v3157 = vunpack.c.h.b16 %v2835
    %v3158 = vunpack.c.l.b16 %v2836
    %v3159 = vunpack.c.h.b16 %v2836
    %v3160 = vunpack.c.l.b16 %v2837
    %v3161 = vunpack.c.l.b16 %v2838
    %v3162 = vunpack.c.h.b16 %v2838
    %v3163 = vunpack.c.l.b16 %v2839
    %v3164 = vunpack.c.h.b16 %v2839
    %v3165 = vunpack.c.l.b16 %v2840
    %v3166 = vunpack.c.l.b16 %v2841
    %v3167 = vunpack.c.h.b16 %v2841
    %v3168 = vunpack.c.l.b16 %v2842
    %v3169 = vunpack.c.h.b16 %v2842
    %v3170 = vunpack.c.l.b16 %v2843
    %v3171 = vunpack.c.l.b16 %v2844
    %v3172 = vunpack.c.h.b16 %v2844
    %v3173 = vunpack.c.l.b16 %v2845
    %v3174 = vunpack.c.h.b16 %v2845
    %v3175 = vunpack.c.l.b16 %v2846
    %v3176 = vunpack.c.l.b16 %v2847
    %v3177 = vunpack.c.h.b16 %v2847
    %v3178 = vunpack.c.l.b16 %v2848
    %v3179 = vunpack.c.h.b16 %v2848
    %v3180 = vunpack.c.l.b16 %v2849
    %v3181 = vunpack.c.l.b16 %v2850
    %v3182 = vunpack.c.h.b16 %v2850
    %v3183 = vunpack.c.l.b16 %v2851
    %v3184 = vunpack.c.h.b16 %v2851
    %v3185 = vunpack.c.l.b16 %v2852
    %v3186 = vunpack.c.l.b16 %v2853
    %v3187 = vunpack.c.h.b16 %v2853
    %v3188 = vunpack.c.l.b16 %v2854
    %v3189 = vunpack.c.h.b16 %v2854
    %v3190 = vunpack.c.l.b16 %v2855
    %v3191 = vunpack.c.l.b16 %v2856
    %v3192 = vunpack.c.h.b16 %v2856
    %v3193 = vunpack.c.l.b16 %v2857
    %v3194 = vunpack.c.h.b16 %v2857
    %v3195 = vunpack.c.l.b16 %v2858
    %v3196 = vunpack.c.l.b16 %v2859
    %v3197 = vunpack.c.h.b16 %v2859
    %v3198 = vunpack.c.l.b16 %v2860
    %v3199 = vunpack.c.h.b16 %v2860
    %v3200 = vunpack.c.l.b16 %v2861
    %v3201 = vunpack.c.l.b16 %v2862
    %v3202 = vunpack.c.h.b16 %v2862
    %v3203 = vunpack.c.l.b16 %v2863
    %v3204 = vunpack.c.h.b16 %v2863
    %v3205 = vunpack.c.l.b16 %v2864
    %v3206 = vunpack.c.l.b16 %v2865
    %v3207 = vunpack.c.h.b16 %v2865
    %v3208 = vunpack.c.l.b16 %v2866
    %v3209 = vunpack.c.h.b16 %v2866
    %v3210 = vunpack.c.l.b16 %v2867
    %v3211 = vunpack.c.l.b16 %v2868
    %v3212 = vunpack.c.h.b16 %v2868
    %v3213 = vunpack.c.l.b16 %v2869
    %v3214 = vunpack.c.h.b16 %v2869
    %v3215 = vunpack.c.l.b16 %v2870
    %v3216 = vunpack.c.l.b16 %v2871
    %v3217 = vunpack.c.h.b16 %v2871
    %v3218 = vunpack.c.l.b16 %v2872
    %v3219 = vunpack.c.h.b16 %v2872
    %v3220 = vunpack.c.l.b16 %v2873
    %v3221 = vunpack.c.l.b16 %v2874
    %v3222 = vunpack.c.h.b16 %v2874
    %v3223 = vunpack.c.l.b16 %v2875
    %v3224 = vunpack.c.h.b16 %v2875
    %v3225 = vunpack.c.l.b16 %v2876
    %v3226 = vunpack.c.l.b16 %v2877
    %v3227 = vunpack.c.h.b16 %v2877
    %v3228 = vunpack.c.l.b16 %v2878
    %v3229 = vunpack.c.h.b16 %v2878
    %v3230 = vunpack.c.l.b16 %v2879
    %v3231 = vunpack.c.l.b16 %v2880
    %v3232 = vunpack.c.h.b16 %v2880
    %v3233 = vunpack.c.l.b16 %v2881
    %v3234 = vunpack.c.h.b16 %v2881
    %v3235 = vunpack.c.l.b16 %v2882
    %v3236 = vunpack.c.l.b16 %v2883
    %v3237 = vunpack.c.h.b16 %v2883
    %v3238 = vunpack.c.l.b16 %v2884
    %v3239 = vunpack.c.h.b16 %v2884
    %v3240 = vunpack.c.l.b16 %v2885
    %v3241 = vunpack.c.l.b16 %v2886
    %v3242 = vunpack.c.h.b16 %v2886
    %v3243 = vunpack.c.l.b16 %v2887
    %v3244 = vunpack.c.h.b16 %v2887
    %v3245 = vunpack.c.l.b16 %v2888
    %v3246 = vunpack.c.l.b16 %v2889
    %v3247 = vunpack.c.h.b16 %v2889
    %v3248 = vunpack.c.l.b16 %v2890
    %v3249 = vunpack.c.h.b16 %v2890
    %v3250 = vunpack.c.l.b16 %v2891
    %v3251 = vpack.c.b16 %v3056, %v3051
    %v3252 = vpack.c.b16 %v3057, %v3052
    %v3253 = vpack.c.b16 %v3058, %v3053
    %v3254 = vpack.c.b16 %v3059, %v3054
    %v3255 = vpack.c.b16 %v3060, %v3055
    %v3256 = vpack.c.b16 %v3066, %v3061
    %v3257 = vpack.c.b16 %v3067, %v3062
    %v3258 = vpack.c.b16 %v3068, %v3063
    %v3259 = vpack.c.b16 %v3069, %v3064
    %v3260 = vpack.c.b16 %v3070, %v3065
    %v3261 = vpack.c.b16 %v3076, %v3071
    %v3262 = vpack.c.b16 %v3077, %v3072
    %v3263 = vpack.c.b16 %v3078, %v3073
    %v3264 = vpack.c.b16 %v3079, %v3074
    %v3265 = vpack.c.b16 %v3080, %v3075
    %v3266 = vpack.c.b16 %v3086, %v3081
    %v3267 = vpack.c.b16 %v3087, %v3082
    %v3268 = vpack.c.b16 %v3088, %v3083
    %v3269 = vpack.c.b16 %v3089, %v3084
    %v3270 = vpack.c.b16 %v3090, %v3085
    %v3271 = vpack.c.b16 %v3096, %v3091
    %v3272 = vpack.c.b16 %v3097, %v3092
    %v3273 = vpack.c.b16 %v3098, %v3093
    %v3274 = vpack.c.b16 %v3099, %v3094
    %v3275 = vpack.c.b16 %v3100, %v3095
    %v3276 = vpack.c.b16 %v3106, %v3101
    %v3277 = vpack.c.b16 %v3107, %v3102
    %v3278 = vpack.c.b16 %v3108, %v3103
    %v3279 = vpack.c.b16 %v3109, %v3104
    %v3280 = vpack.c.b16 %v3110, %v3105
    %v3281 = vpack.c.b16 %v3116, %v3111
    %v3282 = vpack.c.b16 %v3117, %v3112
    %v3283 = vpack.c.b16 %v3118, %v3113
    %v3284 = vpack.c.b16 %v3119, %v3114
    %v3285 = vpack.c.b16 %v3120, %v3115
    %v3286 = vpack.c.b16 %v3126, %v3121
    %v3287 = vpack.c.b16 %v3127, %v3122
    %v3288 = vpack.c.b16 %v3128, %v3123
    %v3289 = vpack.c.b16 %v3129, %v3124
    %v3290 = vpack.c.b16 %v3130, %v3125
    %v3291 = vpack.c.b16 %v3136, %v3131
    %v3292 = vpack.c.b16 %v3137, %v3132
    %v3293 = vpack.c.b16 %v3138, %v3133
    %v3294 = vpack.c.b16 %v3139, %v3134
    %v3295 = vpack.c.b16 %v3140, %v3135
    %v3296 = vpack.c.b16 %v3146, %v3141
    %v3297 = vpack.c.b16 %v3147, %v3142
    %v3298 = vpack.c.b16 %v3148, %v3143
    %v3299 = vpack.c.b16 %v3149, %v3144
    %v3300 = vpack.c.b16 %v3150, %v3145
    %v3301 = vpack.c.b16 %v3156, %v3151
    %v3302 = vpack.c.b16 %v3157, %v3152
    %v3303 = vpack.c.b16 %v3158, %v3153
    %v3304 = vpack.c.b16 %v3159, %v3154
    %v3305 = vpack.c.b16 %v3160, %v3155
    %v3306 = vpack.c.b16 %v3166, %v3161
    %v3307 = vpack.c.b16 %v3167, %v3162
    %v3308 = vpack.c.b16 %v3168, %v3163
    %v3309 = vpack.c.b16 %v3169, %v3164
    %v3310 = vpack.c.b16 %v3170, %v3165
    %v3311 = vpack.c.b16 %v3176, %v3171
    %v3312 = vpack.c.b16 %v3177, %v3172
    %v3313 = vpack.c.b16 %v3178, %v3173
    %v3314 = vpack.c.b16 %v3179, %v3174
    %v3315 = vpack.c.b16 %v3180, %v3175
    %v3316 = vpack.c.b16 %v3186, %v3181
    %v3317 = vpack.c.b16 %v3187, %v3182
    %v3318 = vpack.c.b16 %v3188, %v3183
    %v3319 = vpack.c.b16 %v3189, %v3184
    %v3320 = vpack.c.b16 %v3190, %v3185
    %v3321 = vpack.c.b16 %v3196, %v3191
    %v3322 = vpack.c.b16 %v3197, %v3192
    %v3323 = vpack.c.b16 %v3198, %v3193
    %v3324 = vpack.c.b16 %v3199, %v3194
    %v3325 = vpack.c.b16 %v3200, %v3195
    %v3326 = vpack.c.b16 %v3206, %v3201
    %v3327 = vpack.c.b16 %v3207, %v3202
    %v3328 = vpack.c.b16 %v3208, %v3203
    %v3329 = vpack.c.b16 %v3209, %v3204
    %v3330 = vpack.c.b16 %v3210, %v3205
    %v3331 = vpack.c.b16 %v3216, %v3211
    %v3332 = vpack.c.b16 %v3217, %v3212
    %v3333 = vpack.c.b16 %v3218, %v3213
    %v3334 = vpack.c.b16 %v3219, %v3214
    %v3335 = vpack.c.b16 %v3220, %v3215
    %v3336 = vpack.c.b16 %v3226, %v3221
    %v3337 = vpack.c.b16 %v3227, %v3222
    %v3338 = vpack.c.b16 %v3228, %v3223
    %v3339 = vpack.c.b16 %v3229, %v3224
    %v3340 = vpack.c.b16 %v3230, %v3225
    %v3341 = vpack.c.b16 %v3236, %v3231
    %v3342 = vpack.c.b16 %v3237, %v3232
    %v3343 = vpack.c.b16 %v3238, %v3233
    %v3344 = vpack.c.b16 %v3239, %v3234
    %v3345 = vpack.c.b16 %v3240, %v3235
    %v3346 = vpack.c.b16 %v3246, %v3241
    %v3347 = vpack.c.b16 %v3247, %v3242
    %v3348 = vpack.c.b16 %v3248, %v3243
    %v3349 = vpack.c.b16 %v3249, %v3244
    %v3350 = vpack.c.b16 %v3250, %v3245
    %v3452 = vsel %vm524, %v2912, 0
    %v3455 = vsel %vm524, %v2918, 0
    %v3458 = vsel %vm524, %v2924, 0
    %3460 = vmatpush.bf16.msra.mxu0 %v3286
    %3461 = vmatpush.bf16.msra.mxu0 %v3281
    %3462 = vmatpush.bf16.msra.mxu0 %v3276
    %3463 = vmatpush.bf16.msra.mxu0 %v3271
    %3464 = vmatpush.bf16.msra.mxu0 %v3266
    %3465 = vmatpush.bf16.msra.mxu0 %v3261
    %3466 = vmatpush.bf16.msra.mxu0 %v3256
    %3467 = vmatpush.bf16.msra.mxu0 %v3251
    %3468 = vmatmul.bf16.gmra.mxu0 %v2906
    %v3469 = vpop.f32.mrf.mxu0
    %v3470 = vadd.f32 0.0, %v3469
    %v3471 = vpop.f32.mrf.mxu0
    %v3472 = vadd.f32 0.0, %v3471
    %3473 = vmatmul.bf16.gmra.mxu0 %v2914
    %v3474 = vpop.f32.mrf.mxu0
    %v3475 = vadd.f32 0.0, %v3474
    %v3476 = vpop.f32.mrf.mxu0
    %v3477 = vadd.f32 0.0, %v3476
    %3478 = vmatmul.bf16.gmra.mxu0 %v2920
    %v3479 = vpop.f32.mrf.mxu0
    %v3480 = vadd.f32 0.0, %v3479
    %v3481 = vpop.f32.mrf.mxu0
    %v3482 = vadd.f32 0.0, %v3481
    %3483 = vdwg.mxu0
    %3484 = vmatpush.bf16.msra.mxu0 %v3326
    %3485 = vmatpush.bf16.msra.mxu0 %v3321
    %3486 = vmatpush.bf16.msra.mxu0 %v3316
    %3487 = vmatpush.bf16.msra.mxu0 %v3311
    %3488 = vmatpush.bf16.msra.mxu0 %v3306
    %3489 = vmatpush.bf16.msra.mxu0 %v3301
    %3490 = vmatpush.bf16.msra.mxu0 %v3296
    %3491 = vmatpush.bf16.msra.mxu0 %v3291
    %3492 = vmatmul.bf16.gmra.mxu0 %v2909
    %v3493 = vpop.f32.mrf.mxu0
    %v3494 = vadd.f32 %v3470, %v3493
    %v3495 = vpop.f32.mrf.mxu0
    %v3496 = vadd.f32 %v3472, %v3495
    %3497 = vmatmul.bf16.gmra.mxu0 %v2916
    %v3498 = vpop.f32.mrf.mxu0
    %v3499 = vadd.f32 %v3475, %v3498
    %v3500 = vpop.f32.mrf.mxu0
    %v3501 = vadd.f32 %v3477, %v3500
    %3502 = vmatmul.bf16.gmra.mxu0 %v2922
    %v3503 = vpop.f32.mrf.mxu0
    %v3504 = vadd.f32 %v3480, %v3503
    %v3505 = vpop.f32.mrf.mxu0
    %v3506 = vadd.f32 %v3482, %v3505
    %3507 = vdwg.mxu0
    %3508 = vmatpush.bf16.msra.mxu0 0
    %3509 = vmatpush.bf16.msra.mxu0 0
    %3510 = vmatpush.bf16.msra.mxu0 0
    %3511 = vmatpush.bf16.msra.mxu0 0
    %3512 = vmatpush.bf16.msra.mxu0 %v3346
    %3513 = vmatpush.bf16.msra.mxu0 %v3341
    %3514 = vmatpush.bf16.msra.mxu0 %v3336
    %3515 = vmatpush.bf16.msra.mxu0 %v3331
    %3516 = vmatmul.bf16.gmra.mxu0 %v3452
    %v3517 = vpop.f32.mrf.mxu0
    %v3518 = vadd.f32 %v3494, %v3517
    %v3519 = vpop.f32.mrf.mxu0
    %v3520 = vadd.f32 %v3496, %v3519
    %3521 = vmatmul.bf16.gmra.mxu0 %v3455
    %v3522 = vpop.f32.mrf.mxu0
    %v3523 = vadd.f32 %v3499, %v3522
    %v3524 = vpop.f32.mrf.mxu0
    %v3525 = vadd.f32 %v3501, %v3524
    %3526 = vmatmul.bf16.gmra.mxu0 %v3458
    %v3527 = vpop.f32.mrf.mxu0
    %v3528 = vadd.f32 %v3504, %v3527
    %v3529 = vpop.f32.mrf.mxu0
    %v3530 = vadd.f32 %v3506, %v3529
    %3531 = vdwg.mxu0
    %3532 = vmatpush.bf16.msra.mxu0 %v3287
    %3533 = vmatpush.bf16.msra.mxu0 %v3282
    %3534 = vmatpush.bf16.msra.mxu0 %v3277
    %3535 = vmatpush.bf16.msra.mxu0 %v3272
    %3536 = vmatpush.bf16.msra.mxu0 %v3267
    %3537 = vmatpush.bf16.msra.mxu0 %v3262
    %3538 = vmatpush.bf16.msra.mxu0 %v3257
    %3539 = vmatpush.bf16.msra.mxu0 %v3252
    %3540 = vmatmul.bf16.gmra.mxu0 %v2906
    %v3541 = vpop.f32.mrf.mxu0
    %v3542 = vadd.f32 0.0, %v3541
    %v3543 = vpop.f32.mrf.mxu0
    %v3544 = vadd.f32 0.0, %v3543
    %3545 = vmatmul.bf16.gmra.mxu0 %v2914
    %v3546 = vpop.f32.mrf.mxu0
    %v3547 = vadd.f32 0.0, %v3546
    %v3548 = vpop.f32.mrf.mxu0
    %v3549 = vadd.f32 0.0, %v3548
    %3550 = vmatmul.bf16.gmra.mxu0 %v2920
    %v3551 = vpop.f32.mrf.mxu0
    %v3552 = vadd.f32 0.0, %v3551
    %v3553 = vpop.f32.mrf.mxu0
    %v3554 = vadd.f32 0.0, %v3553
    %3555 = vdwg.mxu0
    %3556 = vmatpush.bf16.msra.mxu0 %v3327
    %3557 = vmatpush.bf16.msra.mxu0 %v3322
    %3558 = vmatpush.bf16.msra.mxu0 %v3317
    %3559 = vmatpush.bf16.msra.mxu0 %v3312
    %3560 = vmatpush.bf16.msra.mxu0 %v3307
    %3561 = vmatpush.bf16.msra.mxu0 %v3302
    %3562 = vmatpush.bf16.msra.mxu0 %v3297
    %3563 = vmatpush.bf16.msra.mxu0 %v3292
    %3564 = vmatmul.bf16.gmra.mxu0 %v2909
    %v3565 = vpop.f32.mrf.mxu0
    %v3566 = vadd.f32 %v3542, %v3565
    %v3567 = vpop.f32.mrf.mxu0
    %v3568 = vadd.f32 %v3544, %v3567
    %3569 = vmatmul.bf16.gmra.mxu0 %v2916
    %v3570 = vpop.f32.mrf.mxu0
    %v3571 = vadd.f32 %v3547, %v3570
    %v3572 = vpop.f32.mrf.mxu0
    %v3573 = vadd.f32 %v3549, %v3572
    %3574 = vmatmul.bf16.gmra.mxu0 %v2922
    %v3575 = vpop.f32.mrf.mxu0
    %v3576 = vadd.f32 %v3552, %v3575
    %v3577 = vpop.f32.mrf.mxu0
    %v3578 = vadd.f32 %v3554, %v3577
    %3579 = vdwg.mxu0
    %3580 = vmatpush.bf16.msra.mxu0 0
    %3581 = vmatpush.bf16.msra.mxu0 0
    %3582 = vmatpush.bf16.msra.mxu0 0
    %3583 = vmatpush.bf16.msra.mxu0 0
    %3584 = vmatpush.bf16.msra.mxu0 %v3347
    %3585 = vmatpush.bf16.msra.mxu0 %v3342
    %3586 = vmatpush.bf16.msra.mxu0 %v3337
    %3587 = vmatpush.bf16.msra.mxu0 %v3332
    %3588 = vmatmul.bf16.gmra.mxu0 %v3452
    %v3589 = vpop.f32.mrf.mxu0
    %v3590 = vadd.f32 %v3566, %v3589
    %v3591 = vpop.f32.mrf.mxu0
    %v3592 = vadd.f32 %v3568, %v3591
    %3593 = vmatmul.bf16.gmra.mxu0 %v3455
    %v3594 = vpop.f32.mrf.mxu0
    %v3595 = vadd.f32 %v3571, %v3594
    %v3596 = vpop.f32.mrf.mxu0
    %v3597 = vadd.f32 %v3573, %v3596
    %3598 = vmatmul.bf16.gmra.mxu0 %v3458
    %v3599 = vpop.f32.mrf.mxu0
    %v3600 = vadd.f32 %v3576, %v3599
    %v3601 = vpop.f32.mrf.mxu0
    %v3602 = vadd.f32 %v3578, %v3601
    %3603 = vdwg.mxu0
    %3604 = vmatpush.bf16.msra.mxu0 %v3288
    %3605 = vmatpush.bf16.msra.mxu0 %v3283
    %3606 = vmatpush.bf16.msra.mxu0 %v3278
    %3607 = vmatpush.bf16.msra.mxu0 %v3273
    %3608 = vmatpush.bf16.msra.mxu0 %v3268
    %3609 = vmatpush.bf16.msra.mxu0 %v3263
    %3610 = vmatpush.bf16.msra.mxu0 %v3258
    %3611 = vmatpush.bf16.msra.mxu0 %v3253
    %3612 = vmatmul.bf16.gmra.mxu0 %v2906
    %v3613 = vpop.f32.mrf.mxu0
    %v3614 = vadd.f32 0.0, %v3613
    %v3615 = vpop.f32.mrf.mxu0
    %v3616 = vadd.f32 0.0, %v3615
    %3617 = vmatmul.bf16.gmra.mxu0 %v2914
    %v3618 = vpop.f32.mrf.mxu0
    %v3619 = vadd.f32 0.0, %v3618
    %v3620 = vpop.f32.mrf.mxu0
    %v3621 = vadd.f32 0.0, %v3620
    %3622 = vmatmul.bf16.gmra.mxu0 %v2920
    %v3623 = vpop.f32.mrf.mxu0
    %v3624 = vadd.f32 0.0, %v3623
    %v3625 = vpop.f32.mrf.mxu0
    %v3626 = vadd.f32 0.0, %v3625
    %3627 = vdwg.mxu0
    %3628 = vmatpush.bf16.msra.mxu0 %v3328
    %3629 = vmatpush.bf16.msra.mxu0 %v3323
    %3630 = vmatpush.bf16.msra.mxu0 %v3318
    %3631 = vmatpush.bf16.msra.mxu0 %v3313
    %3632 = vmatpush.bf16.msra.mxu0 %v3308
    %3633 = vmatpush.bf16.msra.mxu0 %v3303
    %3634 = vmatpush.bf16.msra.mxu0 %v3298
    %3635 = vmatpush.bf16.msra.mxu0 %v3293
    %3636 = vmatmul.bf16.gmra.mxu0 %v2909
    %v3637 = vpop.f32.mrf.mxu0
    %v3638 = vadd.f32 %v3614, %v3637
    %v3639 = vpop.f32.mrf.mxu0
    %v3640 = vadd.f32 %v3616, %v3639
    %3641 = vmatmul.bf16.gmra.mxu0 %v2916
    %v3642 = vpop.f32.mrf.mxu0
    %v3643 = vadd.f32 %v3619, %v3642
    %v3644 = vpop.f32.mrf.mxu0
    %v3645 = vadd.f32 %v3621, %v3644
    %3646 = vmatmul.bf16.gmra.mxu0 %v2922
    %v3647 = vpop.f32.mrf.mxu0
    %v3648 = vadd.f32 %v3624, %v3647
    %v3649 = vpop.f32.mrf.mxu0
    %v3650 = vadd.f32 %v3626, %v3649
    %3651 = vdwg.mxu0
    %3652 = vmatpush.bf16.msra.mxu0 0
    %3653 = vmatpush.bf16.msra.mxu0 0
    %3654 = vmatpush.bf16.msra.mxu0 0
    %3655 = vmatpush.bf16.msra.mxu0 0
    %3656 = vmatpush.bf16.msra.mxu0 %v3348
    %3657 = vmatpush.bf16.msra.mxu0 %v3343
    %3658 = vmatpush.bf16.msra.mxu0 %v3338
    %3659 = vmatpush.bf16.msra.mxu0 %v3333
    %3660 = vmatmul.bf16.gmra.mxu0 %v3452
    %v3661 = vpop.f32.mrf.mxu0
    %v3662 = vadd.f32 %v3638, %v3661
    %v3663 = vpop.f32.mrf.mxu0
    %v3664 = vadd.f32 %v3640, %v3663
    %3665 = vmatmul.bf16.gmra.mxu0 %v3455
    %v3666 = vpop.f32.mrf.mxu0
    %v3667 = vadd.f32 %v3643, %v3666
    %v3668 = vpop.f32.mrf.mxu0
    %v3669 = vadd.f32 %v3645, %v3668
    %3670 = vmatmul.bf16.gmra.mxu0 %v3458
    %v3671 = vpop.f32.mrf.mxu0
    %v3672 = vadd.f32 %v3648, %v3671
    %v3673 = vpop.f32.mrf.mxu0
    %v3674 = vadd.f32 %v3650, %v3673
    %3675 = vdwg.mxu0
    %3676 = vmatpush.bf16.msra.mxu0 %v3289
    %3677 = vmatpush.bf16.msra.mxu0 %v3284
    %3678 = vmatpush.bf16.msra.mxu0 %v3279
    %3679 = vmatpush.bf16.msra.mxu0 %v3274
    %3680 = vmatpush.bf16.msra.mxu0 %v3269
    %3681 = vmatpush.bf16.msra.mxu0 %v3264
    %3682 = vmatpush.bf16.msra.mxu0 %v3259
    %3683 = vmatpush.bf16.msra.mxu0 %v3254
    %3684 = vmatmul.bf16.gmra.mxu0 %v2906
    %v3685 = vpop.f32.mrf.mxu0
    %v3686 = vadd.f32 0.0, %v3685
    %v3687 = vpop.f32.mrf.mxu0
    %v3688 = vadd.f32 0.0, %v3687
    %3689 = vmatmul.bf16.gmra.mxu0 %v2914
    %v3690 = vpop.f32.mrf.mxu0
    %v3691 = vadd.f32 0.0, %v3690
    %v3692 = vpop.f32.mrf.mxu0
    %v3693 = vadd.f32 0.0, %v3692
    %3694 = vmatmul.bf16.gmra.mxu0 %v2920
    %v3695 = vpop.f32.mrf.mxu0
    %v3696 = vadd.f32 0.0, %v3695
    %v3697 = vpop.f32.mrf.mxu0
    %v3698 = vadd.f32 0.0, %v3697
    %3699 = vdwg.mxu0
    %3700 = vmatpush.bf16.msra.mxu0 %v3329
    %3701 = vmatpush.bf16.msra.mxu0 %v3324
    %3702 = vmatpush.bf16.msra.mxu0 %v3319
    %3703 = vmatpush.bf16.msra.mxu0 %v3314
    %3704 = vmatpush.bf16.msra.mxu0 %v3309
    %3705 = vmatpush.bf16.msra.mxu0 %v3304
    %3706 = vmatpush.bf16.msra.mxu0 %v3299
    %3707 = vmatpush.bf16.msra.mxu0 %v3294
    %3708 = vmatmul.bf16.gmra.mxu0 %v2909
    %v3709 = vpop.f32.mrf.mxu0
    %v3710 = vadd.f32 %v3686, %v3709
    %v3711 = vpop.f32.mrf.mxu0
    %v3712 = vadd.f32 %v3688, %v3711
    %3713 = vmatmul.bf16.gmra.mxu0 %v2916
    %v3714 = vpop.f32.mrf.mxu0
    %v3715 = vadd.f32 %v3691, %v3714
    %v3716 = vpop.f32.mrf.mxu0
    %v3717 = vadd.f32 %v3693, %v3716
    %3718 = vmatmul.bf16.gmra.mxu0 %v2922
    %v3719 = vpop.f32.mrf.mxu0
    %v3720 = vadd.f32 %v3696, %v3719
    %v3721 = vpop.f32.mrf.mxu0
    %v3722 = vadd.f32 %v3698, %v3721
    %3723 = vdwg.mxu0
    %3724 = vmatpush.bf16.msra.mxu0 0
    %3725 = vmatpush.bf16.msra.mxu0 0
    %3726 = vmatpush.bf16.msra.mxu0 0
    %3727 = vmatpush.bf16.msra.mxu0 0
    %3728 = vmatpush.bf16.msra.mxu0 %v3349
    %3729 = vmatpush.bf16.msra.mxu0 %v3344
    %3730 = vmatpush.bf16.msra.mxu0 %v3339
    %3731 = vmatpush.bf16.msra.mxu0 %v3334
    %3732 = vmatmul.bf16.gmra.mxu0 %v3452
    %v3733 = vpop.f32.mrf.mxu0
    %v3734 = vadd.f32 %v3710, %v3733
    %v3735 = vpop.f32.mrf.mxu0
    %v3736 = vadd.f32 %v3712, %v3735
    %3737 = vmatmul.bf16.gmra.mxu0 %v3455
    %v3738 = vpop.f32.mrf.mxu0
    %v3739 = vadd.f32 %v3715, %v3738
    %v3740 = vpop.f32.mrf.mxu0
    %v3741 = vadd.f32 %v3717, %v3740
    %3742 = vmatmul.bf16.gmra.mxu0 %v3458
    %v3743 = vpop.f32.mrf.mxu0
    %v3744 = vadd.f32 %v3720, %v3743
    %v3745 = vpop.f32.mrf.mxu0
    %v3746 = vadd.f32 %v3722, %v3745
    %3747 = vdwg.mxu0
    %3748 = vmatpush.bf16.msra.mxu0 %v3290
    %3749 = vmatpush.bf16.msra.mxu0 %v3285
    %3750 = vmatpush.bf16.msra.mxu0 %v3280
    %3751 = vmatpush.bf16.msra.mxu0 %v3275
    %3752 = vmatpush.bf16.msra.mxu0 %v3270
    %3753 = vmatpush.bf16.msra.mxu0 %v3265
    %3754 = vmatpush.bf16.msra.mxu0 %v3260
    %3755 = vmatpush.bf16.msra.mxu0 %v3255
    %3756 = vmatmul.bf16.gmra.mxu0 %v2906
    %v3757 = vpop.f32.mrf.mxu0
    %v3758 = vadd.f32 0.0, %v3757
    %v3759 = vpop.f32.mrf.mxu0
    %v3760 = vadd.f32 0.0, %v3759
    %3761 = vmatmul.bf16.gmra.mxu0 %v2914
    %v3762 = vpop.f32.mrf.mxu0
    %v3763 = vadd.f32 0.0, %v3762
    %v3764 = vpop.f32.mrf.mxu0
    %v3765 = vadd.f32 0.0, %v3764
    %3766 = vmatmul.bf16.gmra.mxu0 %v2920
    %v3767 = vpop.f32.mrf.mxu0
    %v3768 = vadd.f32 0.0, %v3767
    %v3769 = vpop.f32.mrf.mxu0
    %v3770 = vadd.f32 0.0, %v3769
    %3771 = vdwg.mxu0
    %3772 = vmatpush.bf16.msra.mxu0 %v3330
    %3773 = vmatpush.bf16.msra.mxu0 %v3325
    %3774 = vmatpush.bf16.msra.mxu0 %v3320
    %3775 = vmatpush.bf16.msra.mxu0 %v3315
    %3776 = vmatpush.bf16.msra.mxu0 %v3310
    %3777 = vmatpush.bf16.msra.mxu0 %v3305
    %3778 = vmatpush.bf16.msra.mxu0 %v3300
    %3779 = vmatpush.bf16.msra.mxu0 %v3295
    %3780 = vmatmul.bf16.gmra.mxu0 %v2909
    %v3781 = vpop.f32.mrf.mxu0
    %v3782 = vadd.f32 %v3758, %v3781
    %v3783 = vpop.f32.mrf.mxu0
    %v3784 = vadd.f32 %v3760, %v3783
    %3785 = vmatmul.bf16.gmra.mxu0 %v2916
    %v3786 = vpop.f32.mrf.mxu0
    %v3787 = vadd.f32 %v3763, %v3786
    %v3788 = vpop.f32.mrf.mxu0
    %v3789 = vadd.f32 %v3765, %v3788
    %3790 = vmatmul.bf16.gmra.mxu0 %v2922
    %v3791 = vpop.f32.mrf.mxu0
    %v3792 = vadd.f32 %v3768, %v3791
    %v3793 = vpop.f32.mrf.mxu0
    %v3794 = vadd.f32 %v3770, %v3793
    %3795 = vdwg.mxu0
    %3796 = vmatpush.bf16.msra.mxu0 0
    %3797 = vmatpush.bf16.msra.mxu0 0
    %3798 = vmatpush.bf16.msra.mxu0 0
    %3799 = vmatpush.bf16.msra.mxu0 0
    %3800 = vmatpush.bf16.msra.mxu0 %v3350
    %3801 = vmatpush.bf16.msra.mxu0 %v3345
    %3802 = vmatpush.bf16.msra.mxu0 %v3340
    %3803 = vmatpush.bf16.msra.mxu0 %v3335
    %3804 = vmatmul.bf16.gmra.mxu0 %v3452
    %v3805 = vpop.f32.mrf.mxu0
    %v3806 = vadd.f32 %v3782, %v3805
    %v3807 = vpop.f32.mrf.mxu0
    %v3808 = vadd.f32 %v3784, %v3807
    %3809 = vmatmul.bf16.gmra.mxu0 %v3455
    %v3810 = vpop.f32.mrf.mxu0
    %v3811 = vadd.f32 %v3787, %v3810
    %v3812 = vpop.f32.mrf.mxu0
    %v3813 = vadd.f32 %v3789, %v3812
    %3814 = vmatmul.bf16.gmra.mxu0 %v3458
    %v3815 = vpop.f32.mrf.mxu0
    %v3816 = vadd.f32 %v3792, %v3815
    %v3817 = vpop.f32.mrf.mxu0
    %v3818 = vadd.f32 %v3794, %v3817
    %3819 = vdwg.mxu0
    %v3820 = vadd.f32 %v2469, %v3518
    %v3821 = vadd.f32 %v2541, %v3590
    %v3822 = vadd.f32 %v2613, %v3662
    %v3823 = vadd.f32 %v2685, %v3734
    %v3824 = vadd.f32 %v2757, %v3806
    %v3825 = vadd.f32 %v2471, %v3520
    %v3826 = vadd.f32 %v2543, %v3592
    %v3827 = vadd.f32 %v2615, %v3664
    %v3828 = vadd.f32 %v2687, %v3736
    %v3829 = vadd.f32 %v2759, %v3808
    %v3830 = vadd.f32 %v2474, %v3523
    %v3831 = vadd.f32 %v2546, %v3595
    %v3832 = vadd.f32 %v2618, %v3667
    %v3833 = vadd.f32 %v2690, %v3739
    %v3834 = vadd.f32 %v2762, %v3811
    %v3835 = vadd.f32 %v2476, %v3525
    %v3836 = vadd.f32 %v2548, %v3597
    %v3837 = vadd.f32 %v2620, %v3669
    %v3838 = vadd.f32 %v2692, %v3741
    %v3839 = vadd.f32 %v2764, %v3813
    %v3840 = vadd.f32 %v2479, %v3528
    %v3841 = vadd.f32 %v2551, %v3600
    %v3842 = vadd.f32 %v2623, %v3672
    %v3843 = vadd.f32 %v2695, %v3744
    %v3844 = vadd.f32 %v2767, %v3816
    %v3845 = vadd.f32 %v2481, %v3530
    %v3846 = vadd.f32 %v2553, %v3602
    %v3847 = vadd.f32 %v2625, %v3674
    %v3848 = vadd.f32 %v2697, %v3746
    %v3849 = vadd.f32 %v2769, %v3818
    %v3850 = vld [vmem:[#allocation8] sm:$0x1f]
    %v3852 = vperm.slane %v3850, 0
    %v3853 = vperm.slane %v3850, 1
    %v3854 = vperm.slane %v3850, 2
    %v3855 = vperm.slane %v3850, 3
    %v3856 = vperm.slane %v3850, 4
    %v3862 = vadd.f32 %v3820, %v3852
    %v3863 = vadd.f32 %v3821, %v3853
    %v3864 = vadd.f32 %v3822, %v3854
    %v3865 = vadd.f32 %v3823, %v3855
    %v3866 = vadd.f32 %v3824, %v3856
    %v3867 = vadd.f32 %v3825, %v3852
    %v3868 = vadd.f32 %v3826, %v3853
    %v3869 = vadd.f32 %v3827, %v3854
    %v3870 = vadd.f32 %v3828, %v3855
    %v3871 = vadd.f32 %v3829, %v3856
    %v3872 = vadd.f32 %v3830, %v3852
    %v3873 = vadd.f32 %v3831, %v3853
    %v3874 = vadd.f32 %v3832, %v3854
    %v3875 = vadd.f32 %v3833, %v3855
    %v3876 = vadd.f32 %v3834, %v3856
    %v3877 = vadd.f32 %v3835, %v3852
    %v3878 = vadd.f32 %v3836, %v3853
    %v3879 = vadd.f32 %v3837, %v3854
    %v3880 = vadd.f32 %v3838, %v3855
    %v3881 = vadd.f32 %v3839, %v3856
    %v3882 = vadd.f32 %v3840, %v3852
    %v3883 = vadd.f32 %v3841, %v3853
    %v3884 = vadd.f32 %v3842, %v3854
    %v3885 = vadd.f32 %v3843, %v3855
    %v3886 = vadd.f32 %v3844, %v3856
    %v3887 = vadd.f32 %v3845, %v3852
    %v3888 = vadd.f32 %v3846, %v3853
    %v3889 = vadd.f32 %v3847, %v3854
    %v3890 = vadd.f32 %v3848, %v3855
    %v3891 = vadd.f32 %v3849, %v3856
    %v3892 = vmax.f32 %v3862, 0.0
    %v3893 = vmax.f32 %v3863, 0.0
    %v3894 = vmax.f32 %v3864, 0.0
    %v3895 = vmax.f32 %v3865, 0.0
    %v3896 = vmax.f32 %v3866, 0.0
    %v3897 = vmax.f32 %v3867, 0.0
    %v3898 = vmax.f32 %v3868, 0.0
    %v3899 = vmax.f32 %v3869, 0.0
    %v3900 = vmax.f32 %v3870, 0.0
    %v3901 = vmax.f32 %v3871, 0.0
    %v3902 = vmax.f32 %v3872, 0.0
    %v3903 = vmax.f32 %v3873, 0.0
    %v3904 = vmax.f32 %v3874, 0.0
    %v3905 = vmax.f32 %v3875, 0.0
    %v3906 = vmax.f32 %v3876, 0.0
    %v3907 = vmax.f32 %v3877, 0.0
    %v3908 = vmax.f32 %v3878, 0.0
    %v3909 = vmax.f32 %v3879, 0.0
    %v3910 = vmax.f32 %v3880, 0.0
    %v3911 = vmax.f32 %v3881, 0.0
    %v3912 = vmax.f32 %v3882, 0.0
    %v3913 = vmax.f32 %v3883, 0.0
    %v3914 = vmax.f32 %v3884, 0.0
    %v3915 = vmax.f32 %v3885, 0.0
    %v3916 = vmax.f32 %v3886, 0.0
    %v3917 = vmax.f32 %v3887, 0.0
    %v3918 = vmax.f32 %v3888, 0.0
    %v3919 = vmax.f32 %v3889, 0.0
    %v3920 = vmax.f32 %v3890, 0.0
    %v3921 = vmax.f32 %v3891, 0.0
    %v3922 = vpack.c.bf16 %v3893, %v3892
    %v3923 = vpack.c.bf16 %v3895, %v3894
    %v3924 = vpack.c.bf16 %v3896, %v3896
    %v3925 = vpack.c.bf16 %v3898, %v3897
    %v3926 = vpack.c.bf16 %v3900, %v3899
    %v3927 = vpack.c.bf16 %v3901, %v3901
    %v3928 = vpack.c.bf16 %v3903, %v3902
    %v3929 = vpack.c.bf16 %v3905, %v3904
    %v3930 = vpack.c.bf16 %v3906, %v3906
    %vm3931 = vsmask.f32 3328
    %vm3932 = vsmask.f32 7440
    %vm3933 = vmor %vm3931, %vm3932
    %v3935 = vshrl.u32 %v3922, 16
    %v3937 = vrot.slane %v3935, 4
    %v3938 = vshll.u32 %v3922, 16
    %v3940 = vrot.slane %v3938, 5
    %v3941 = vor.u32 %v3937, %v3940
    %v3942 = vrot.slane %v3941, 4
    %v3944 = vshll.u32 %v3925, 16
    %v3946 = vrot.slane %v3944, 5
    %v3947 = vsel %vm3933, %v3942, %v3946
    %v3949 = vshrl.u32 %v3923, 16
    %v3951 = vrot.slane %v3949, 4
    %v3952 = vshll.u32 %v3923, 16
    %v3954 = vrot.slane %v3952, 5
    %v3955 = vor.u32 %v3951, %v3954
    %v3956 = vrot.slane %v3955, 4
    %v3958 = vshll.u32 %v3926, 16
    %v3960 = vrot.slane %v3958, 5
    %v3961 = vsel %vm3933, %v3956, %v3960
    %v3963 = vshrl.u32 %v3924, 16
    %v3965 = vrot.slane %v3963, 4
    %v3966 = vshll.u32 %v3924, 16
    %v3968 = vrot.slane %v3966, 5
    %v3969 = vor.u32 %v3965, %v3968
    %v3970 = vrot.slane %v3969, 4
    %v3972 = vshll.u32 %v3927, 16
    %v3974 = vrot.slane %v3972, 5
    %v3975 = vsel %vm3933, %v3970, %v3974
    %v3976 = vshrl.u32 %v3925, 16
    %v3978 = vrot.slane %v3976, 4
    %v3979 = vor.u32 %v3978, %v3946
    %v3980 = vrot.slane %v3979, 4
    %v3982 = vshll.u32 %v3928, 16
    %v3984 = vrot.slane %v3982, 5
    %v3985 = vsel %vm3933, %v3980, %v3984
    %v3986 = vshrl.u32 %v3926, 16
    %v3988 = vrot.slane %v3986, 4
    %v3989 = vor.u32 %v3988, %v3960
    %v3990 = vrot.slane %v3989, 4
    %v3992 = vshll.u32 %v3929, 16
    %v3994 = vrot.slane %v3992, 5
    %v3995 = vsel %vm3933, %v3990, %v3994
    %v3996 = vshrl.u32 %v3927, 16
    %v3998 = vrot.slane %v3996, 4
    %v3999 = vor.u32 %v3998, %v3974
    %v4000 = vrot.slane %v3999, 4
    %v4002 = vshll.u32 %v3930, 16
    %v4004 = vrot.slane %v4002, 5
    %v4005 = vsel %vm3933, %v4000, %v4004
    %v4006 = vshrl.u32 %v3928, 16
    %v4008 = vrot.slane %v4006, 4
    %v4009 = vor.u32 %v4008, %v3984
    %v4010 = vrot.slane %v4009, 4
    %v4011 = vshrl.u32 %v3929, 16
    %v4013 = vrot.slane %v4011, 4
    %v4014 = vor.u32 %v4013, %v3994
    %v4015 = vrot.slane %v4014, 4
    %v4016 = vshrl.u32 %v3930, 16
    %v4018 = vrot.slane %v4016, 4
    %v4019 = vor.u32 %v4018, %v4004
    %v4020 = vrot.slane %v4019, 4
    %4030 = vst [vmem:[%s5] sm:$0xff] %v3947
    %4031 = vst [vmem:[%s5 + $0x8] sm:$0xff] %v3961
    %4032 = vst [vmem:[%s5 + $0x10] sm:$0xf] %v3975
    %4033 = vst [vmem:[%s5 + $0x14] sm:$0xff] %v3985
    %4034 = vst [vmem:[%s5 + $0x1c] sm:$0xff] %v3995
    %4035 = vst [vmem:[%s5 + $0x24] sm:$0xf] %v4005
    %4036 = vst [vmem:[%s5 + $0x28] sm:$0x33] %v4010
    %4037 = vst [vmem:[%s5 + $0x30] sm:$0x33] %v4015
    %4038 = vst [vmem:[%s5 + $0x38] sm:$0x3] %v4020
    %v4039 = vpack.c.bf16 %v3908, %v3907
    %v4040 = vpack.c.bf16 %v3910, %v3909
    %v4041 = vpack.c.bf16 %v3911, %v3911
    %v4042 = vpack.c.bf16 %v3913, %v3912
    %v4043 = vpack.c.bf16 %v3915, %v3914
    %v4044 = vpack.c.bf16 %v3916, %v3916
    %v4045 = vpack.c.bf16 %v3918, %v3917
    %v4046 = vpack.c.bf16 %v3920, %v3919
    %v4047 = vpack.c.bf16 %v3921, %v3921
    %v4049 = vshrl.u32 %v4039, 16
    %v4051 = vrot.slane %v4049, 4
    %v4052 = vshll.u32 %v4039, 16
    %v4054 = vrot.slane %v4052, 5
    %v4055 = vor.u32 %v4051, %v4054
    %v4056 = vrot.slane %v4055, 4
    %v4058 = vshll.u32 %v4042, 16
    %v4060 = vrot.slane %v4058, 5
    %v4061 = vsel %vm3933, %v4056, %v4060
    %v4063 = vshrl.u32 %v4040, 16
    %v4065 = vrot.slane %v4063, 4
    %v4066 = vshll.u32 %v4040, 16
    %v4068 = vrot.slane %v4066, 5
    %v4069 = vor.u32 %v4065, %v4068
    %v4070 = vrot.slane %v4069, 4
    %v4072 = vshll.u32 %v4043, 16
    %v4074 = vrot.slane %v4072, 5
    %v4075 = vsel %vm3933, %v4070, %v4074
    %v4077 = vshrl.u32 %v4041, 16
    %v4079 = vrot.slane %v4077, 4
    %v4080 = vshll.u32 %v4041, 16
    %v4082 = vrot.slane %v4080, 5
    %v4083 = vor.u32 %v4079, %v4082
    %v4084 = vrot.slane %v4083, 4
    %v4086 = vshll.u32 %v4044, 16
    %v4088 = vrot.slane %v4086, 5
    %v4089 = vsel %vm3933, %v4084, %v4088
    %v4090 = vshrl.u32 %v4042, 16
    %v4092 = vrot.slane %v4090, 4
    %v4093 = vor.u32 %v4092, %v4060
    %v4094 = vrot.slane %v4093, 4
    %v4096 = vshll.u32 %v4045, 16
    %v4098 = vrot.slane %v4096, 5
    %v4099 = vsel %vm3933, %v4094, %v4098
    %v4100 = vshrl.u32 %v4043, 16
    %v4102 = vrot.slane %v4100, 4
    %v4103 = vor.u32 %v4102, %v4074
    %v4104 = vrot.slane %v4103, 4
    %v4106 = vshll.u32 %v4046, 16
    %v4108 = vrot.slane %v4106, 5
    %v4109 = vsel %vm3933, %v4104, %v4108
    %v4110 = vshrl.u32 %v4044, 16
    %v4112 = vrot.slane %v4110, 4
    %v4113 = vor.u32 %v4112, %v4088
    %v4114 = vrot.slane %v4113, 4
    %v4116 = vshll.u32 %v4047, 16
    %v4118 = vrot.slane %v4116, 5
    %v4119 = vsel %vm3933, %v4114, %v4118
    %v4120 = vshrl.u32 %v4045, 16
    %v4122 = vrot.slane %v4120, 4
    %v4123 = vor.u32 %v4122, %v4098
    %v4124 = vrot.slane %v4123, 4
    %v4125 = vshrl.u32 %v4046, 16
    %v4127 = vrot.slane %v4125, 4
    %v4128 = vor.u32 %v4127, %v4108
    %v4129 = vrot.slane %v4128, 4
    %v4130 = vshrl.u32 %v4047, 16
    %v4132 = vrot.slane %v4130, 4
    %v4133 = vor.u32 %v4132, %v4118
    %v4134 = vrot.slane %v4133, 4
    %s4144 = scalar_lea.vmem %s5, 60
    %4145 = vst [vmem:[%s4144] sm:$0xff] %v4061
    %4146 = vst [vmem:[%s4144 + $0x8] sm:$0xff] %v4075
    %4147 = vst [vmem:[%s4144 + $0x10] sm:$0xf] %v4089
    %4148 = vst [vmem:[%s4144 + $0x14] sm:$0xff] %v4099
    %4149 = vst [vmem:[%s4144 + $0x1c] sm:$0xff] %v4109
    %4150 = vst [vmem:[%s4144 + $0x24] sm:$0xf] %v4119
    %4151 = vst [vmem:[%s4144 + $0x28] sm:$0x33] %v4124
    %4152 = vst [vmem:[%s4144 + $0x30] sm:$0x33] %v4129
    %4153 = vst [vmem:[%s4144 + $0x38] sm:$0x3] %v4134
    // Predicated region
    $region34: #{value_network_aug_forward.2} parent=1 // pred_check
      _
    $region35: #{value_network_aug_forward.2} parent=1 // pred_check_branch
      %4155 = sbr.rel (0) target = $region37
    $region36: #{value_network_aug_forward.2} parent=1 // pred_region
      _
    $region37: #{value_network_aug_forward.2} parent=1 // pred_fallthru
      _
    // Predicated region
    $region38: #{value_network_aug_forward.2} parent=1 // pred_check
      _
    $region39: #{value_network_aug_forward.2} parent=1 // pred_check_branch
      %4157 = sbr.rel (0) target = $region41
    $region40: #{value_network_aug_forward.2} parent=1 // pred_region
      _
    $region41: #{value_network_aug_forward.2} parent=1 // pred_fallthru
      _
    %4158 = vsyncpa [#allocation5], 1
    %4159 = vsyncpa [#allocation7], 1

// kernel: value_network_aug_forward.3
$region0: #{value_network_aug_forward.3}
  #allocation0 [shape = 'u32[]', space=smem, size = 0x4, offset = 0x4, fixed_abs, tag = 'smem constant byte address 0x4 - core index']
  #allocation1 [shape = 'u32[72,128]{1,0:T(1,128)}', space=vmem, size = 0x9000, scoped, tag = 'internal scratch']
  #allocation2 [shape = 'f32[1,1]{1,0:T(1,128)S(1)}', space=vmem, size = 0x200, scoped, tag = 'scoped memory for value_network_aug_forward.3']
  %s0 = inlined_call_operand.vmem [shape: bf16[2,12800], index: 0, kind: input, shape index: {}]
  %s1 = inlined_call_operand.hbm [shape: f32[2,30], index: 1, kind: input, shape index: {}]
  %s2 = inlined_call_operand.hbm [shape: bf16[12800,128], index: 2, kind: input, shape index: {}]
  %s3 = inlined_call_operand.hbm [shape: f32[1,128], index: 3, kind: input, shape index: {}]
  %s4 = inlined_call_operand.hbm [shape: bf16[30,64], index: 4, kind: input, shape index: {}]
  %s5 = inlined_call_operand.hbm [shape: f32[1,64], index: 5, kind: input, shape index: {}]
  %s6 = inlined_call_operand.hbm [shape: bf16[128,128], index: 6, kind: input, shape index: {}]
  %s7 = inlined_call_operand.hbm [shape: bf16[64,128], index: 7, kind: input, shape index: {}]
  %s8 = inlined_call_operand.hbm [shape: f32[1,128], index: 8, kind: input, shape index: {}]
  %s9 = inlined_call_operand.hbm [shape: f32[1,128], index: 9, kind: input, shape index: {}]
  %s10 = inlined_call_operand.<no memory space> [shape: f32[1,1], index: 10, kind: input, shape index: {}]
  %s11 = inlined_call_operand.vmem [shape: f32[2,1], index: 11, kind: output, shape index: {}]
  %s12 = sld [smem:[#allocation0]]
  $region90: #{value_network_aug_forward.3} parent=0
    _
  %s14 = ssub.s32 1, %s12
  %s15 = scalar_select 0, %s14, %s12
  %v16 = vstv %s10
  %17 = vst [vmem:[#allocation2] sm:$0x1] %v16
  $region1: #{value_network_aug_forward.3} parent=0
    #allocation3 [shape = 'u8[1024]{0}', space=vmem, size = 0x400, scoped, tag = 'input window, operand 1, single buffered']
    #allocation4 [shape = 's32[1]{0}', space=sflag, size = 0x4, scoped, tag = 'scoped memory for value_network_aug_forward.3']
    #allocation5 [shape = 'u8[3276800]{0}', space=vmem, size = 0x320000, scoped, tag = 'input window, operand 2, single buffered']
    #allocation6 [shape = 's32[1]{0}', space=sflag, size = 0x4, scoped, tag = 'scoped memory for value_network_aug_forward.3']
    #allocation7 [shape = 'u8[512]{0}', space=vmem, size = 0x400, scoped, tag = 'input window, operand 3, single buffered']
    #allocation8 [shape = 'u8[8192]{0}', space=vmem, size = 0x2000, scoped, tag = 'input window, operand 4, single buffered']
    #allocation9 [shape = 's32[1]{0}', space=sflag, size = 0x4, scoped, tag = 'scoped memory for value_network_aug_forward.3']
    #allocation10 [shape = 'u8[512]{0}', space=vmem, size = 0x400, scoped, tag = 'input window, operand 5, single buffered']
    #allocation11 [shape = 'u8[32768]{0}', space=vmem, size = 0x8000, scoped, tag = 'input window, operand 6, single buffered']
    #allocation12 [shape = 's32[1]{0}', space=sflag, size = 0x4, scoped, tag = 'scoped memory for value_network_aug_forward.3']
    #allocation13 [shape = 'u8[16384]{0}', space=vmem, size = 0x4000, scoped, tag = 'input window, operand 7, single buffered']
    #allocation14 [shape = 'u8[512]{0}', space=vmem, size = 0x400, scoped, tag = 'input window, operand 8, single buffered']
    #allocation15 [shape = 's32[1]{0}', space=sflag, size = 0x4, scoped, tag = 'scoped memory for value_network_aug_forward.3']
    #allocation16 [shape = 'u8[512]{0}', space=vmem, size = 0x400, scoped, tag = 'input window, operand 9, single buffered']
    %18 = vsyncpa [#allocation4], 0
    %19 = vsyncpa [#allocation6], 0
    %20 = vsyncpa [#allocation9], 0
    %21 = vsyncpa [#allocation12], 0
    %22 = vsyncpa [#allocation15], 0
    // Predicated region
    $region2: #{value_network_aug_forward.3} parent=1 // pred_check
      _
    $region3: #{value_network_aug_forward.3} parent=1 // pred_check_branch
      %24 = sbr.rel (0) target = $region5
    $region4: #{value_network_aug_forward.3} parent=1 // pred_region
      _
    $region5: #{value_network_aug_forward.3} parent=1 // pred_fallthru
      _
    // Predicated region
    $region6: #{value_network_aug_forward.3} parent=1 // pred_check
      _
    $region7: #{value_network_aug_forward.3} parent=1 // pred_check_branch
      %26 = sbr.rel (0) target = $region9
    $region8: #{value_network_aug_forward.3} parent=1 // pred_region
      %28 = vsyncadd [#allocation4], 0
      %s30 = sshll.u32 %s1, 4
      %s31 = int_to_ptr.hbm [resolvable:$true] %s30
      %s32 = sshll.u32 [#allocation3], 4
      %s33 = int_to_ptr.vmem [resolvable:$true] %s32
      %35 = dma.hbm_to_vmem [thread:$0]  %s31, 32, %s33, [#allocation4]
    $region9: #{value_network_aug_forward.3} parent=1 // pred_fallthru
      _
    // Predicated region
    $region10: #{value_network_aug_forward.3} parent=1 // pred_check
      _
    $region11: #{value_network_aug_forward.3} parent=1 // pred_check_branch
      %37 = sbr.rel (0) target = $region13
    $region12: #{value_network_aug_forward.3} parent=1 // pred_region
      %39 = vsyncadd [#allocation6], 0
      %s40 = sshll.u32 %s2, 4
      %s41 = int_to_ptr.hbm [resolvable:$true] %s40
      %s42 = sshll.u32 [#allocation5], 4
      %s43 = int_to_ptr.vmem [resolvable:$true] %s42
      %48 = dma.hbm_to_vmem [thread:$0]  %s41, 102400, %s43, [#allocation6], 64, 64, 4
    $region13: #{value_network_aug_forward.3} parent=1 // pred_fallthru
      _
    // Predicated region
    $region14: #{value_network_aug_forward.3} parent=1 // pred_check
      _
    $region15: #{value_network_aug_forward.3} parent=1 // pred_check_branch
      %50 = sbr.rel (0) target = $region17
    $region16: #{value_network_aug_forward.3} parent=1 // pred_region
      %52 = vsyncadd [#allocation6], 0
      %s54 = sshll.u32 %s3, 4
      %s55 = int_to_ptr.hbm [resolvable:$true] %s54
      %s56 = sshll.u32 [#allocation7], 4
      %s57 = int_to_ptr.vmem [resolvable:$true] %s56
      %59 = dma.hbm_to_vmem [thread:$0]  %s55, 16, %s57, [#allocation6]
    $region17: #{value_network_aug_forward.3} parent=1 // pred_fallthru
      _
    // Predicated region
    $region18: #{value_network_aug_forward.3} parent=1 // pred_check
      _
    $region19: #{value_network_aug_forward.3} parent=1 // pred_check_branch
      %61 = sbr.rel (0) target = $region21
    $region20: #{value_network_aug_forward.3} parent=1 // pred_region
      %63 = vsyncadd [#allocation9], 0
      %s64 = sshll.u32 %s4, 4
      %s65 = int_to_ptr.hbm [resolvable:$true] %s64
      %s66 = sshll.u32 [#allocation8], 4
      %s67 = int_to_ptr.vmem [resolvable:$true] %s66
      %72 = dma.hbm_to_vmem [thread:$0]  %s65, 256, %s67, [#allocation9], 64, 64, 4
    $region21: #{value_network_aug_forward.3} parent=1 // pred_fallthru
      _
    // Predicated region
    $region22: #{value_network_aug_forward.3} parent=1 // pred_check
      _
    $region23: #{value_network_aug_forward.3} parent=1 // pred_check_branch
      %74 = sbr.rel (0) target = $region25
    $region24: #{value_network_aug_forward.3} parent=1 // pred_region
      %76 = vsyncadd [#allocation9], 0
      %s78 = sshll.u32 %s5, 4
      %s79 = int_to_ptr.hbm [resolvable:$true] %s78
      %s80 = sshll.u32 [#allocation10], 4
      %s81 = int_to_ptr.vmem [resolvable:$true] %s80
      %83 = dma.hbm_to_vmem [thread:$0]  %s79, 16, %s81, [#allocation9]
    $region25: #{value_network_aug_forward.3} parent=1 // pred_fallthru
      _
    // Predicated region
    $region26: #{value_network_aug_forward.3} parent=1 // pred_check
      _
    $region27: #{value_network_aug_forward.3} parent=1 // pred_check_branch
      %85 = sbr.rel (0) target = $region29
    $region28: #{value_network_aug_forward.3} parent=1 // pred_region
      %87 = vsyncadd [#allocation12], 0
      %s88 = sshll.u32 %s6, 4
      %s89 = int_to_ptr.hbm [resolvable:$true] %s88
      %s90 = sshll.u32 [#allocation11], 4
      %s91 = int_to_ptr.vmem [resolvable:$true] %s90
      %96 = dma.hbm_to_vmem [thread:$0]  %s89, 1024, %s91, [#allocation12], 64, 64, 4
    $region29: #{value_network_aug_forward.3} parent=1 // pred_fallthru
      _
    // Predicated region
    $region30: #{value_network_aug_forward.3} parent=1 // pred_check
      _
    $region31: #{value_network_aug_forward.3} parent=1 // pred_check_branch
      %98 = sbr.rel (0) target = $region33
    $region32: #{value_network_aug_forward.3} parent=1 // pred_region
      %100 = vsyncadd [#allocation12], 0
      %s101 = sshll.u32 %s7, 4
      %s102 = int_to_ptr.hbm [resolvable:$true] %s101
      %s103 = sshll.u32 [#allocation13], 4
      %s104 = int_to_ptr.vmem [resolvable:$true] %s103
      %109 = dma.hbm_to_vmem [thread:$0]  %s102, 512, %s104, [#allocation12], 64, 64, 4
    $region33: #{value_network_aug_forward.3} parent=1 // pred_fallthru
      _
    // Predicated region
    $region34: #{value_network_aug_forward.3} parent=1 // pred_check
      _
    $region35: #{value_network_aug_forward.3} parent=1 // pred_check_branch
      %111 = sbr.rel (0) target = $region37
    $region36: #{value_network_aug_forward.3} parent=1 // pred_region
      %113 = vsyncadd [#allocation15], 0
      %s115 = sshll.u32 %s8, 4
      %s116 = int_to_ptr.hbm [resolvable:$true] %s115
      %s117 = sshll.u32 [#allocation14], 4
      %s118 = int_to_ptr.vmem [resolvable:$true] %s117
      %120 = dma.hbm_to_vmem [thread:$0]  %s116, 16, %s118, [#allocation15]
    $region37: #{value_network_aug_forward.3} parent=1 // pred_fallthru
      _
    // Predicated region
    $region38: #{value_network_aug_forward.3} parent=1 // pred_check
      _
    $region39: #{value_network_aug_forward.3} parent=1 // pred_check_branch
      %122 = sbr.rel (0) target = $region41
    $region40: #{value_network_aug_forward.3} parent=1 // pred_region
      %124 = vsyncadd [#allocation15], 0
      %s126 = sshll.u32 %s9, 4
      %s127 = int_to_ptr.hbm [resolvable:$true] %s126
      %s128 = sshll.u32 [#allocation16], 4
      %s129 = int_to_ptr.vmem [resolvable:$true] %s128
      %131 = dma.hbm_to_vmem [thread:$0]  %s127, 16, %s129, [#allocation15]
    $region41: #{value_network_aug_forward.3} parent=1 // pred_fallthru
      _
    // Predicated region
    $region42: #{value_network_aug_forward.3} parent=1 // pred_check
      _
    $region43: #{value_network_aug_forward.3} parent=1 // pred_check_branch
      %133 = sbr.rel (0) target = $region45
    $region44: #{value_network_aug_forward.3} parent=1 // pred_region
      _
    $region45: #{value_network_aug_forward.3} parent=1 // pred_fallthru
      _
    // Predicated region
    $region46: #{value_network_aug_forward.3} parent=1 // pred_check
      _
    $region47: #{value_network_aug_forward.3} parent=1 // pred_check_branch
      %135 = sbr.rel (0) target = $region49
    $region48: #{value_network_aug_forward.3} parent=1 // pred_region
      %137 = dma.done [#allocation4], 32
    $region49: #{value_network_aug_forward.3} parent=1 // pred_fallthru
      _
    // Predicated region
    $region50: #{value_network_aug_forward.3} parent=1 // pred_check
      _
    $region51: #{value_network_aug_forward.3} parent=1 // pred_check_branch
      %139 = sbr.rel (0) target = $region53
    $region52: #{value_network_aug_forward.3} parent=1 // pred_region
      %141 = dma.done [#allocation6], 102400
    $region53: #{value_network_aug_forward.3} parent=1 // pred_fallthru
      _
    // Predicated region
    $region54: #{value_network_aug_forward.3} parent=1 // pred_check
      _
    $region55: #{value_network_aug_forward.3} parent=1 // pred_check_branch
      %143 = sbr.rel (0) target = $region57
    $region56: #{value_network_aug_forward.3} parent=1 // pred_region
      %145 = dma.done [#allocation6], 16
    $region57: #{value_network_aug_forward.3} parent=1 // pred_fallthru
      _
    // Predicated region
    $region58: #{value_network_aug_forward.3} parent=1 // pred_check
      _
    $region59: #{value_network_aug_forward.3} parent=1 // pred_check_branch
      %147 = sbr.rel (0) target = $region61
    $region60: #{value_network_aug_forward.3} parent=1 // pred_region
      %149 = dma.done [#allocation9], 256
    $region61: #{value_network_aug_forward.3} parent=1 // pred_fallthru
      _
    // Predicated region
    $region62: #{value_network_aug_forward.3} parent=1 // pred_check
      _
    $region63: #{value_network_aug_forward.3} parent=1 // pred_check_branch
      %151 = sbr.rel (0) target = $region65
    $region64: #{value_network_aug_forward.3} parent=1 // pred_region
      %153 = dma.done [#allocation9], 16
    $region65: #{value_network_aug_forward.3} parent=1 // pred_fallthru
      _
    // Predicated region
    $region66: #{value_network_aug_forward.3} parent=1 // pred_check
      _
    $region67: #{value_network_aug_forward.3} parent=1 // pred_check_branch
      %155 = sbr.rel (0) target = $region69
    $region68: #{value_network_aug_forward.3} parent=1 // pred_region
      %157 = dma.done [#allocation12], 1024
    $region69: #{value_network_aug_forward.3} parent=1 // pred_fallthru
      _
    // Predicated region
    $region70: #{value_network_aug_forward.3} parent=1 // pred_check
      _
    $region71: #{value_network_aug_forward.3} parent=1 // pred_check_branch
      %159 = sbr.rel (0) target = $region73
    $region72: #{value_network_aug_forward.3} parent=1 // pred_region
      %161 = dma.done [#allocation12], 512
    $region73: #{value_network_aug_forward.3} parent=1 // pred_fallthru
      _
    // Predicated region
    $region74: #{value_network_aug_forward.3} parent=1 // pred_check
      _
    $region75: #{value_network_aug_forward.3} parent=1 // pred_check_branch
      %163 = sbr.rel (0) target = $region77
    $region76: #{value_network_aug_forward.3} parent=1 // pred_region
      %165 = dma.done [#allocation15], 16
    $region77: #{value_network_aug_forward.3} parent=1 // pred_fallthru
      _
    // Predicated region
    $region78: #{value_network_aug_forward.3} parent=1 // pred_check
      _
    $region79: #{value_network_aug_forward.3} parent=1 // pred_check_branch
      %167 = sbr.rel (0) target = $region81
    $region80: #{value_network_aug_forward.3} parent=1 // pred_region
      %169 = dma.done [#allocation15], 16
    $region81: #{value_network_aug_forward.3} parent=1 // pred_fallthru
      _
    %v171 = vld [vmem:[%s0] sm:$0xff]
    %v172 = vld [vmem:[%s0 + $0x8] sm:$0xff]
    %v173 = vld [vmem:[%s0 + $0x10] sm:$0xff]
    %v174 = vld [vmem:[%s0 + $0x18] sm:$0xff]
    %v175 = vld [vmem:[%s0 + $0x20] sm:$0xff]
    %v176 = vld [vmem:[%s0 + $0x28] sm:$0xff]
    %v177 = vld [vmem:[%s0 + $0x30] sm:$0xff]
    %v178 = vld [vmem:[%s0 + $0x38] sm:$0xff]
    %v179 = vld [vmem:[%s0 + $0x40] sm:$0xff]
    %v180 = vld [vmem:[%s0 + $0x48] sm:$0xff]
    %v181 = vld [vmem:[%s0 + $0x50] sm:$0xff]
    %v182 = vld [vmem:[%s0 + $0x58] sm:$0xff]
    %v183 = vld [vmem:[%s0 + $0x60] sm:$0xf]
    %v184 = vld [vmem:[#allocation5] sm:$0xf]
    %v185 = vld [vmem:[#allocation5 + $0x4] sm:$0xf]
    %v186 = vld [vmem:[#allocation5 + $0x8] sm:$0xf]
    %v187 = vld [vmem:[#allocation5 + $0xc] sm:$0xf]
    %v188 = vld [vmem:[#allocation5 + $0x10] sm:$0xf]
    %v189 = vld [vmem:[#allocation5 + $0x14] sm:$0xf]
    %v190 = vld [vmem:[#allocation5 + $0x18] sm:$0xf]
    %v191 = vld [vmem:[#allocation5 + $0x1c] sm:$0xf]
    %v192 = vld [vmem:[#allocation5 + $0x20] sm:$0xf]
    %v193 = vld [vmem:[#allocation5 + $0x24] sm:$0xf]
    %v194 = vld [vmem:[#allocation5 + $0x28] sm:$0xf]
    %v195 = vld [vmem:[#allocation5 + $0x2c] sm:$0xf]
    %v196 = vld [vmem:[#allocation5 + $0x30] sm:$0xf]
    %v197 = vld [vmem:[#allocation5 + $0x34] sm:$0xf]
    %v198 = vld [vmem:[#allocation5 + $0x38] sm:$0xf]
    %v199 = vld [vmem:[#allocation5 + $0x3c] sm:$0xf]
    %v200 = vld [vmem:[#allocation5 + $0x40] sm:$0xf]
    %v201 = vld [vmem:[#allocation5 + $0x44] sm:$0xf]
    %v202 = vld [vmem:[#allocation5 + $0x48] sm:$0xf]
    %v203 = vld [vmem:[#allocation5 + $0x4c] sm:$0xf]
    %v204 = vld [vmem:[#allocation5 + $0x50] sm:$0xf]
    %v205 = vld [vmem:[#allocation5 + $0x54] sm:$0xf]
    %v206 = vld [vmem:[#allocation5 + $0x58] sm:$0xf]
    %v207 = vld [vmem:[#allocation5 + $0x5c] sm:$0xf]
    %v208 = vld [vmem:[#allocation5 + $0x60] sm:$0xf]
    %v209 = vld [vmem:[#allocation5 + $0x64] sm:$0xf]
    %v210 = vld [vmem:[#allocation5 + $0x68] sm:$0xf]
    %v211 = vld [vmem:[#allocation5 + $0x6c] sm:$0xf]
    %v212 = vld [vmem:[#allocation5 + $0x70] sm:$0xf]
    %v213 = vld [vmem:[#allocation5 + $0x74] sm:$0xf]
    %v214 = vld [vmem:[#allocation5 + $0x78] sm:$0xf]
    %v215 = vld [vmem:[#allocation5 + $0x7c] sm:$0xf]
    %v216 = vld [vmem:[#allocation5 + $0x80] sm:$0xf]
    %v217 = vld [vmem:[#allocation5 + $0x84] sm:$0xf]
    %v218 = vld [vmem:[#allocation5 + $0x88] sm:$0xf]
    %v219 = vld [vmem:[#allocation5 + $0x8c] sm:$0xf]
    %v220 = vld [vmem:[#allocation5 + $0x90] sm:$0xf]
    %v221 = vld [vmem:[#allocation5 + $0x94] sm:$0xf]
    %v222 = vld [vmem:[#allocation5 + $0x98] sm:$0xf]
    %v223 = vld [vmem:[#allocation5 + $0x9c] sm:$0xf]
    %v224 = vld [vmem:[#allocation5 + $0xa0] sm:$0xf]
    %v225 = vld [vmem:[#allocation5 + $0xa4] sm:$0xf]
    %v226 = vld [vmem:[#allocation5 + $0xa8] sm:$0xf]
    %v227 = vld [vmem:[#allocation5 + $0xac] sm:$0xf]
    %v228 = vld [vmem:[#allocation5 + $0xb0] sm:$0xf]
    %v229 = vld [vmem:[#allocation5 + $0xb4] sm:$0xf]
    %v230 = vld [vmem:[#allocation5 + $0xb8] sm:$0xf]
    %v231 = vld [vmem:[#allocation5 + $0xbc] sm:$0xf]
    %v232 = vld [vmem:[#allocation5 + $0xc0] sm:$0xf]
    %v233 = vld [vmem:[#allocation5 + $0xc4] sm:$0xf]
    %v234 = vld [vmem:[#allocation5 + $0xc8] sm:$0xf]
    %v235 = vld [vmem:[#allocation5 + $0xcc] sm:$0xf]
    %v236 = vld [vmem:[#allocation5 + $0xd0] sm:$0xf]
    %v237 = vld [vmem:[#allocation5 + $0xd4] sm:$0xf]
    %v238 = vld [vmem:[#allocation5 + $0xd8] sm:$0xf]
    %v239 = vld [vmem:[#allocation5 + $0xdc] sm:$0xf]
    %v240 = vld [vmem:[#allocation5 + $0xe0] sm:$0xf]
    %v241 = vld [vmem:[#allocation5 + $0xe4] sm:$0xf]
    %v242 = vld [vmem:[#allocation5 + $0xe8] sm:$0xf]
    %v243 = vld [vmem:[#allocation5 + $0xec] sm:$0xf]
    %v244 = vld [vmem:[#allocation5 + $0xf0] sm:$0xf]
    %v245 = vld [vmem:[#allocation5 + $0xf4] sm:$0xf]
    %v246 = vld [vmem:[#allocation5 + $0xf8] sm:$0xf]
    %v247 = vld [vmem:[#allocation5 + $0xfc] sm:$0xf]
    %v248 = vld [vmem:[#allocation5 + $0x100] sm:$0xf]
    %v249 = vld [vmem:[#allocation5 + $0x104] sm:$0xf]
    %v250 = vld [vmem:[#allocation5 + $0x108] sm:$0xf]
    %v251 = vld [vmem:[#allocation5 + $0x10c] sm:$0xf]
    %v252 = vld [vmem:[#allocation5 + $0x110] sm:$0xf]
    %v253 = vld [vmem:[#allocation5 + $0x114] sm:$0xf]
    %v254 = vld [vmem:[#allocation5 + $0x118] sm:$0xf]
    %v255 = vld [vmem:[#allocation5 + $0x11c] sm:$0xf]
    %v256 = vld [vmem:[#allocation5 + $0x120] sm:$0xf]
    %v257 = vld [vmem:[#allocation5 + $0x124] sm:$0xf]
    %v258 = vld [vmem:[#allocation5 + $0x128] sm:$0xf]
    %v259 = vld [vmem:[#allocation5 + $0x12c] sm:$0xf]
    %v260 = vld [vmem:[#allocation5 + $0x130] sm:$0xf]
    %v261 = vld [vmem:[#allocation5 + $0x134] sm:$0xf]
    %v262 = vld [vmem:[#allocation5 + $0x138] sm:$0xf]
    %v263 = vld [vmem:[#allocation5 + $0x13c] sm:$0xf]
    %v264 = vld [vmem:[#allocation5 + $0x140] sm:$0xf]
    %v265 = vld [vmem:[#allocation5 + $0x144] sm:$0xf]
    %v266 = vld [vmem:[#allocation5 + $0x148] sm:$0xf]
    %v267 = vld [vmem:[#allocation5 + $0x14c] sm:$0xf]
    %v268 = vld [vmem:[#allocation5 + $0x150] sm:$0xf]
    %v269 = vld [vmem:[#allocation5 + $0x154] sm:$0xf]
    %v270 = vld [vmem:[#allocation5 + $0x158] sm:$0xf]
    %v271 = vld [vmem:[#allocation5 + $0x15c] sm:$0xf]
    %v272 = vld [vmem:[#allocation5 + $0x160] sm:$0xf]
    %v273 = vld [vmem:[#allocation5 + $0x164] sm:$0xf]
    %v274 = vld [vmem:[#allocation5 + $0x168] sm:$0xf]
    %v275 = vld [vmem:[#allocation5 + $0x16c] sm:$0xf]
    %v276 = vld [vmem:[#allocation5 + $0x170] sm:$0xf]
    %v277 = vld [vmem:[#allocation5 + $0x174] sm:$0xf]
    %v278 = vld [vmem:[#allocation5 + $0x178] sm:$0xf]
    %v279 = vld [vmem:[#allocation5 + $0x17c] sm:$0xf]
    %v280 = vld [vmem:[#allocation5 + $0x180] sm:$0xf]
    %v281 = vld [vmem:[#allocation5 + $0x184] sm:$0xf]
    %v282 = vld [vmem:[#allocation5 + $0x188] sm:$0xf]
    %v283 = vld [vmem:[#allocation5 + $0x18c] sm:$0xf]
    %v284 = vld [vmem:[#allocation5 + $0x190] sm:$0xf]
    %v285 = vld [vmem:[#allocation5 + $0x194] sm:$0xf]
    %v286 = vld [vmem:[#allocation5 + $0x198] sm:$0xf]
    %v287 = vld [vmem:[#allocation5 + $0x19c] sm:$0xf]
    %v288 = vld [vmem:[#allocation5 + $0x1a0] sm:$0xf]
    %v289 = vld [vmem:[#allocation5 + $0x1a4] sm:$0xf]
    %v290 = vld [vmem:[#allocation5 + $0x1a8] sm:$0xf]
    %v291 = vld [vmem:[#allocation5 + $0x1ac] sm:$0xf]
    %v292 = vld [vmem:[#allocation5 + $0x1b0] sm:$0xf]
    %v293 = vld [vmem:[#allocation5 + $0x1b4] sm:$0xf]
    %v294 = vld [vmem:[#allocation5 + $0x1b8] sm:$0xf]
    %v295 = vld [vmem:[#allocation5 + $0x1bc] sm:$0xf]
    %v296 = vld [vmem:[#allocation5 + $0x1c0] sm:$0xf]
    %v297 = vld [vmem:[#allocation5 + $0x1c4] sm:$0xf]
    %v298 = vld [vmem:[#allocation5 + $0x1c8] sm:$0xf]
    %v299 = vld [vmem:[#allocation5 + $0x1cc] sm:$0xf]
    %v300 = vld [vmem:[#allocation5 + $0x1d0] sm:$0xf]
    %v301 = vld [vmem:[#allocation5 + $0x1d4] sm:$0xf]
    %v302 = vld [vmem:[#allocation5 + $0x1d8] sm:$0xf]
    %v303 = vld [vmem:[#allocation5 + $0x1dc] sm:$0xf]
    %v304 = vld [vmem:[#allocation5 + $0x1e0] sm:$0xf]
    %v305 = vld [vmem:[#allocation5 + $0x1e4] sm:$0xf]
    %v306 = vld [vmem:[#allocation5 + $0x1e8] sm:$0xf]
    %v307 = vld [vmem:[#allocation5 + $0x1ec] sm:$0xf]
    %v308 = vld [vmem:[#allocation5 + $0x1f0] sm:$0xf]
    %v309 = vld [vmem:[#allocation5 + $0x1f4] sm:$0xf]
    %v310 = vld [vmem:[#allocation5 + $0x1f8] sm:$0xf]
    %v311 = vld [vmem:[#allocation5 + $0x1fc] sm:$0xf]
    %v312 = vld [vmem:[#allocation5 + $0x200] sm:$0xf]
    %v313 = vld [vmem:[#allocation5 + $0x204] sm:$0xf]
    %v314 = vld [vmem:[#allocation5 + $0x208] sm:$0xf]
    %v315 = vld [vmem:[#allocation5 + $0x20c] sm:$0xf]
    %v316 = vld [vmem:[#allocation5 + $0x210] sm:$0xf]
    %v317 = vld [vmem:[#allocation5 + $0x214] sm:$0xf]
    %v318 = vld [vmem:[#allocation5 + $0x218] sm:$0xf]
    %v319 = vld [vmem:[#allocation5 + $0x21c] sm:$0xf]
    %v320 = vld [vmem:[#allocation5 + $0x220] sm:$0xf]
    %v321 = vld [vmem:[#allocation5 + $0x224] sm:$0xf]
    %v322 = vld [vmem:[#allocation5 + $0x228] sm:$0xf]
    %v323 = vld [vmem:[#allocation5 + $0x22c] sm:$0xf]
    %v324 = vld [vmem:[#allocation5 + $0x230] sm:$0xf]
    %v325 = vld [vmem:[#allocation5 + $0x234] sm:$0xf]
    %v326 = vld [vmem:[#allocation5 + $0x238] sm:$0xf]
    %v327 = vld [vmem:[#allocation5 + $0x23c] sm:$0xf]
    %v328 = vld [vmem:[#allocation5 + $0x240] sm:$0xf]
    %v329 = vld [vmem:[#allocation5 + $0x244] sm:$0xf]
    %v330 = vld [vmem:[#allocation5 + $0x248] sm:$0xf]
    %v331 = vld [vmem:[#allocation5 + $0x24c] sm:$0xf]
    %v332 = vld [vmem:[#allocation5 + $0x250] sm:$0xf]
    %v333 = vld [vmem:[#allocation5 + $0x254] sm:$0xf]
    %v334 = vld [vmem:[#allocation5 + $0x258] sm:$0xf]
    %v335 = vld [vmem:[#allocation5 + $0x25c] sm:$0xf]
    %v336 = vld [vmem:[#allocation5 + $0x260] sm:$0xf]
    %v337 = vld [vmem:[#allocation5 + $0x264] sm:$0xf]
    %v338 = vld [vmem:[#allocation5 + $0x268] sm:$0xf]
    %v339 = vld [vmem:[#allocation5 + $0x26c] sm:$0xf]
    %v340 = vld [vmem:[#allocation5 + $0x270] sm:$0xf]
    %v341 = vld [vmem:[#allocation5 + $0x274] sm:$0xf]
    %v342 = vld [vmem:[#allocation5 + $0x278] sm:$0xf]
    %v343 = vld [vmem:[#allocation5 + $0x27c] sm:$0xf]
    %v344 = vld [vmem:[#allocation5 + $0x280] sm:$0xf]
    %v345 = vld [vmem:[#allocation5 + $0x284] sm:$0xf]
    %v346 = vld [vmem:[#allocation5 + $0x288] sm:$0xf]
    %v347 = vld [vmem:[#allocation5 + $0x28c] sm:$0xf]
    %v348 = vld [vmem:[#allocation5 + $0x290] sm:$0xf]
    %v349 = vld [vmem:[#allocation5 + $0x294] sm:$0xf]
    %v350 = vld [vmem:[#allocation5 + $0x298] sm:$0xf]
    %v351 = vld [vmem:[#allocation5 + $0x29c] sm:$0xf]
    %v352 = vld [vmem:[#allocation5 + $0x2a0] sm:$0xf]
    %v353 = vld [vmem:[#allocation5 + $0x2a4] sm:$0xf]
    %v354 = vld [vmem:[#allocation5 + $0x2a8] sm:$0xf]
    %v355 = vld [vmem:[#allocation5 + $0x2ac] sm:$0xf]
    %v356 = vld [vmem:[#allocation5 + $0x2b0] sm:$0xf]
    %v357 = vld [vmem:[#allocation5 + $0x2b4] sm:$0xf]
    %v358 = vld [vmem:[#allocation5 + $0x2b8] sm:$0xf]
    %v359 = vld [vmem:[#allocation5 + $0x2bc] sm:$0xf]
    %v360 = vld [vmem:[#allocation5 + $0x2c0] sm:$0xf]
    %v361 = vld [vmem:[#allocation5 + $0x2c4] sm:$0xf]
    %v362 = vld [vmem:[#allocation5 + $0x2c8] sm:$0xf]
    %v363 = vld [vmem:[#allocation5 + $0x2cc] sm:$0xf]
    %v364 = vld [vmem:[#allocation5 + $0x2d0] sm:$0xf]
    %v365 = vld [vmem:[#allocation5 + $0x2d4] sm:$0xf]
    %v366 = vld [vmem:[#allocation5 + $0x2d8] sm:$0xf]
    %v367 = vld [vmem:[#allocation5 + $0x2dc] sm:$0xf]
    %v368 = vld [vmem:[#allocation5 + $0x2e0] sm:$0xf]
    %v369 = vld [vmem:[#allocation5 + $0x2e4] sm:$0xf]
    %v370 = vld [vmem:[#allocation5 + $0x2e8] sm:$0xf]
    %v371 = vld [vmem:[#allocation5 + $0x2ec] sm:$0xf]
    %v372 = vld [vmem:[#allocation5 + $0x2f0] sm:$0xf]
    %v373 = vld [vmem:[#allocation5 + $0x2f4] sm:$0xf]
    %v374 = vld [vmem:[#allocation5 + $0x2f8] sm:$0xf]
    %v375 = vld [vmem:[#allocation5 + $0x2fc] sm:$0xf]
    %v376 = vld [vmem:[#allocation5 + $0x300] sm:$0xf]
    %v377 = vld [vmem:[#allocation5 + $0x304] sm:$0xf]
    %v378 = vld [vmem:[#allocation5 + $0x308] sm:$0xf]
    %v379 = vld [vmem:[#allocation5 + $0x30c] sm:$0xf]
    %v380 = vld [vmem:[#allocation5 + $0x310] sm:$0xf]
    %v381 = vld [vmem:[#allocation5 + $0x314] sm:$0xf]
    %v382 = vld [vmem:[#allocation5 + $0x318] sm:$0xf]
    %v383 = vld [vmem:[#allocation5 + $0x31c] sm:$0xf]
    %v384 = vld [vmem:[#allocation5 + $0x320] sm:$0xf]
    %v385 = vld [vmem:[#allocation5 + $0x324] sm:$0xf]
    %v386 = vld [vmem:[#allocation5 + $0x328] sm:$0xf]
    %v387 = vld [vmem:[#allocation5 + $0x32c] sm:$0xf]
    %v388 = vld [vmem:[#allocation5 + $0x330] sm:$0xf]
    %v389 = vld [vmem:[#allocation5 + $0x334] sm:$0xf]
    %v390 = vld [vmem:[#allocation5 + $0x338] sm:$0xf]
    %v391 = vld [vmem:[#allocation5 + $0x33c] sm:$0xf]
    %v392 = vld [vmem:[#allocation5 + $0x340] sm:$0xf]
    %v393 = vld [vmem:[#allocation5 + $0x344] sm:$0xf]
    %v394 = vld [vmem:[#allocation5 + $0x348] sm:$0xf]
    %v395 = vld [vmem:[#allocation5 + $0x34c] sm:$0xf]
    %v396 = vld [vmem:[#allocation5 + $0x350] sm:$0xf]
    %v397 = vld [vmem:[#allocation5 + $0x354] sm:$0xf]
    %v398 = vld [vmem:[#allocation5 + $0x358] sm:$0xf]
    %v399 = vld [vmem:[#allocation5 + $0x35c] sm:$0xf]
    %v400 = vld [vmem:[#allocation5 + $0x360] sm:$0xf]
    %v401 = vld [vmem:[#allocation5 + $0x364] sm:$0xf]
    %v402 = vld [vmem:[#allocation5 + $0x368] sm:$0xf]
    %v403 = vld [vmem:[#allocation5 + $0x36c] sm:$0xf]
    %v404 = vld [vmem:[#allocation5 + $0x370] sm:$0xf]
    %v405 = vld [vmem:[#allocation5 + $0x374] sm:$0xf]
    %v406 = vld [vmem:[#allocation5 + $0x378] sm:$0xf]
    %v407 = vld [vmem:[#allocation5 + $0x37c] sm:$0xf]
    %v408 = vld [vmem:[#allocation5 + $0x380] sm:$0xf]
    %v409 = vld [vmem:[#allocation5 + $0x384] sm:$0xf]
    %v410 = vld [vmem:[#allocation5 + $0x388] sm:$0xf]
    %v411 = vld [vmem:[#allocation5 + $0x38c] sm:$0xf]
    %v412 = vld [vmem:[#allocation5 + $0x390] sm:$0xf]
    %v413 = vld [vmem:[#allocation5 + $0x394] sm:$0xf]
    %v414 = vld [vmem:[#allocation5 + $0x398] sm:$0xf]
    %v415 = vld [vmem:[#allocation5 + $0x39c] sm:$0xf]
    %v416 = vld [vmem:[#allocation5 + $0x3a0] sm:$0xf]
    %v417 = vld [vmem:[#allocation5 + $0x3a4] sm:$0xf]
    %v418 = vld [vmem:[#allocation5 + $0x3a8] sm:$0xf]
    %v419 = vld [vmem:[#allocation5 + $0x3ac] sm:$0xf]
    %v420 = vld [vmem:[#allocation5 + $0x3b0] sm:$0xf]
    %v421 = vld [vmem:[#allocation5 + $0x3b4] sm:$0xf]
    %v422 = vld [vmem:[#allocation5 + $0x3b8] sm:$0xf]
    %v423 = vld [vmem:[#allocation5 + $0x3bc] sm:$0xf]
    %v424 = vld [vmem:[#allocation5 + $0x3c0] sm:$0xf]
    %v425 = vld [vmem:[#allocation5 + $0x3c4] sm:$0xf]
    %v426 = vld [vmem:[#allocation5 + $0x3c8] sm:$0xf]
    %v427 = vld [vmem:[#allocation5 + $0x3cc] sm:$0xf]
    %v428 = vld [vmem:[#allocation5 + $0x3d0] sm:$0xf]
    %v429 = vld [vmem:[#allocation5 + $0x3d4] sm:$0xf]
    %v430 = vld [vmem:[#allocation5 + $0x3d8] sm:$0xf]
    %v431 = vld [vmem:[#allocation5 + $0x3dc] sm:$0xf]
    %v432 = vld [vmem:[#allocation5 + $0x3e0] sm:$0xf]
    %v433 = vld [vmem:[#allocation5 + $0x3e4] sm:$0xf]
    %v434 = vld [vmem:[#allocation5 + $0x3e8] sm:$0xf]
    %v435 = vld [vmem:[#allocation5 + $0x3ec] sm:$0xf]
    %v436 = vld [vmem:[#allocation5 + $0x3f0] sm:$0xf]
    %v437 = vld [vmem:[#allocation5 + $0x3f4] sm:$0xf]
    %v438 = vld [vmem:[#allocation5 + $0x3f8] sm:$0xf]
    %v439 = vld [vmem:[#allocation5 + $0x3fc] sm:$0xf]
    %v440 = vld [vmem:[#allocation5 + $0x400] sm:$0xf]
    %v441 = vld [vmem:[#allocation5 + $0x404] sm:$0xf]
    %v442 = vld [vmem:[#allocation5 + $0x408] sm:$0xf]
    %v443 = vld [vmem:[#allocation5 + $0x40c] sm:$0xf]
    %v444 = vld [vmem:[#allocation5 + $0x410] sm:$0xf]
    %v445 = vld [vmem:[#allocation5 + $0x414] sm:$0xf]
    %v446 = vld [vmem:[#allocation5 + $0x418] sm:$0xf]
    %v447 = vld [vmem:[#allocation5 + $0x41c] sm:$0xf]
    %v448 = vld [vmem:[#allocation5 + $0x420] sm:$0xf]
    %v449 = vld [vmem:[#allocation5 + $0x424] sm:$0xf]
    %v450 = vld [vmem:[#allocation5 + $0x428] sm:$0xf]
    %v451 = vld [vmem:[#allocation5 + $0x42c] sm:$0xf]
    %v452 = vld [vmem:[#allocation5 + $0x430] sm:$0xf]
    %v453 = vld [vmem:[#allocation5 + $0x434] sm:$0xf]
    %v454 = vld [vmem:[#allocation5 + $0x438] sm:$0xf]
    %v455 = vld [vmem:[#allocation5 + $0x43c] sm:$0xf]
    %v456 = vld [vmem:[#allocation5 + $0x440] sm:$0xf]
    %v457 = vld [vmem:[#allocation5 + $0x444] sm:$0xf]
    %v458 = vld [vmem:[#allocation5 + $0x448] sm:$0xf]
    %v459 = vld [vmem:[#allocation5 + $0x44c] sm:$0xf]
    %v460 = vld [vmem:[#allocation5 + $0x450] sm:$0xf]
    %v461 = vld [vmem:[#allocation5 + $0x454] sm:$0xf]
    %v462 = vld [vmem:[#allocation5 + $0x458] sm:$0xf]
    %v463 = vld [vmem:[#allocation5 + $0x45c] sm:$0xf]
    %v464 = vld [vmem:[#allocation5 + $0x460] sm:$0xf]
    %v465 = vld [vmem:[#allocation5 + $0x464] sm:$0xf]
    %v466 = vld [vmem:[#allocation5 + $0x468] sm:$0xf]
    %v467 = vld [vmem:[#allocation5 + $0x46c] sm:$0xf]
    %v468 = vld [vmem:[#allocation5 + $0x470] sm:$0xf]
    %v469 = vld [vmem:[#allocation5 + $0x474] sm:$0xf]
    %v470 = vld [vmem:[#allocation5 + $0x478] sm:$0xf]
    %v471 = vld [vmem:[#allocation5 + $0x47c] sm:$0xf]
    %v472 = vld [vmem:[#allocation5 + $0x480] sm:$0xf]
    %v473 = vld [vmem:[#allocation5 + $0x484] sm:$0xf]
    %v474 = vld [vmem:[#allocation5 + $0x488] sm:$0xf]
    %v475 = vld [vmem:[#allocation5 + $0x48c] sm:$0xf]
    %v476 = vld [vmem:[#allocation5 + $0x490] sm:$0xf]
    %v477 = vld [vmem:[#allocation5 + $0x494] sm:$0xf]
    %v478 = vld [vmem:[#allocation5 + $0x498] sm:$0xf]
    %v479 = vld [vmem:[#allocation5 + $0x49c] sm:$0xf]
    %v480 = vld [vmem:[#allocation5 + $0x4a0] sm:$0xf]
    %v481 = vld [vmem:[#allocation5 + $0x4a4] sm:$0xf]
    %v482 = vld [vmem:[#allocation5 + $0x4a8] sm:$0xf]
    %v483 = vld [vmem:[#allocation5 + $0x4ac] sm:$0xf]
    %v484 = vld [vmem:[#allocation5 + $0x4b0] sm:$0xf]
    %v485 = vld [vmem:[#allocation5 + $0x4b4] sm:$0xf]
    %v486 = vld [vmem:[#allocation5 + $0x4b8] sm:$0xf]
    %v487 = vld [vmem:[#allocation5 + $0x4bc] sm:$0xf]
    %v488 = vld [vmem:[#allocation5 + $0x4c0] sm:$0xf]
    %v489 = vld [vmem:[#allocation5 + $0x4c4] sm:$0xf]
    %v490 = vld [vmem:[#allocation5 + $0x4c8] sm:$0xf]
    %v491 = vld [vmem:[#allocation5 + $0x4cc] sm:$0xf]
    %v492 = vld [vmem:[#allocation5 + $0x4d0] sm:$0xf]
    %v493 = vld [vmem:[#allocation5 + $0x4d4] sm:$0xf]
    %v494 = vld [vmem:[#allocation5 + $0x4d8] sm:$0xf]
    %v495 = vld [vmem:[#allocation5 + $0x4dc] sm:$0xf]
    %v496 = vld [vmem:[#allocation5 + $0x4e0] sm:$0xf]
    %v497 = vld [vmem:[#allocation5 + $0x4e4] sm:$0xf]
    %v498 = vld [vmem:[#allocation5 + $0x4e8] sm:$0xf]
    %v499 = vld [vmem:[#allocation5 + $0x4ec] sm:$0xf]
    %v500 = vld [vmem:[#allocation5 + $0x4f0] sm:$0xf]
    %v501 = vld [vmem:[#allocation5 + $0x4f4] sm:$0xf]
    %v502 = vld [vmem:[#allocation5 + $0x4f8] sm:$0xf]
    %v503 = vld [vmem:[#allocation5 + $0x4fc] sm:$0xf]
    %v504 = vld [vmem:[#allocation5 + $0x500] sm:$0xf]
    %v505 = vld [vmem:[#allocation5 + $0x504] sm:$0xf]
    %v506 = vld [vmem:[#allocation5 + $0x508] sm:$0xf]
    %v507 = vld [vmem:[#allocation5 + $0x50c] sm:$0xf]
    %v508 = vld [vmem:[#allocation5 + $0x510] sm:$0xf]
    %v509 = vld [vmem:[#allocation5 + $0x514] sm:$0xf]
    %v510 = vld [vmem:[#allocation5 + $0x518] sm:$0xf]
    %v511 = vld [vmem:[#allocation5 + $0x51c] sm:$0xf]
    %v512 = vld [vmem:[#allocation5 + $0x520] sm:$0xf]
    %v513 = vld [vmem:[#allocation5 + $0x524] sm:$0xf]
    %v514 = vld [vmem:[#allocation5 + $0x528] sm:$0xf]
    %v515 = vld [vmem:[#allocation5 + $0x52c] sm:$0xf]
    %v516 = vld [vmem:[#allocation5 + $0x530] sm:$0xf]
    %v517 = vld [vmem:[#allocation5 + $0x534] sm:$0xf]
    %v518 = vld [vmem:[#allocation5 + $0x538] sm:$0xf]
    %v519 = vld [vmem:[#allocation5 + $0x53c] sm:$0xf]
    %v520 = vld [vmem:[#allocation5 + $0x540] sm:$0xf]
    %v521 = vld [vmem:[#allocation5 + $0x544] sm:$0xf]
    %v522 = vld [vmem:[#allocation5 + $0x548] sm:$0xf]
    %v523 = vld [vmem:[#allocation5 + $0x54c] sm:$0xf]
    %v524 = vld [vmem:[#allocation5 + $0x550] sm:$0xf]
    %v525 = vld [vmem:[#allocation5 + $0x554] sm:$0xf]
    %v526 = vld [vmem:[#allocation5 + $0x558] sm:$0xf]
    %v527 = vld [vmem:[#allocation5 + $0x55c] sm:$0xf]
    %v528 = vld [vmem:[#allocation5 + $0x560] sm:$0xf]
    %v529 = vld [vmem:[#allocation5 + $0x564] sm:$0xf]
    %v530 = vld [vmem:[#allocation5 + $0x568] sm:$0xf]
    %v531 = vld [vmem:[#allocation5 + $0x56c] sm:$0xf]
    %v532 = vld [vmem:[#allocation5 + $0x570] sm:$0xf]
    %v533 = vld [vmem:[#allocation5 + $0x574] sm:$0xf]
    %v534 = vld [vmem:[#allocation5 + $0x578] sm:$0xf]
    %v535 = vld [vmem:[#allocation5 + $0x57c] sm:$0xf]
    %v536 = vld [vmem:[#allocation5 + $0x580] sm:$0xf]
    %v537 = vld [vmem:[#allocation5 + $0x584] sm:$0xf]
    %v538 = vld [vmem:[#allocation5 + $0x588] sm:$0xf]
    %v539 = vld [vmem:[#allocation5 + $0x58c] sm:$0xf]
    %v540 = vld [vmem:[#allocation5 + $0x590] sm:$0xf]
    %v541 = vld [vmem:[#allocation5 + $0x594] sm:$0xf]
    %v542 = vld [vmem:[#allocation5 + $0x598] sm:$0xf]
    %v543 = vld [vmem:[#allocation5 + $0x59c] sm:$0xf]
    %v544 = vld [vmem:[#allocation5 + $0x5a0] sm:$0xf]
    %v545 = vld [vmem:[#allocation5 + $0x5a4] sm:$0xf]
    %v546 = vld [vmem:[#allocation5 + $0x5a8] sm:$0xf]
    %v547 = vld [vmem:[#allocation5 + $0x5ac] sm:$0xf]
    %v548 = vld [vmem:[#allocation5 + $0x5b0] sm:$0xf]
    %v549 = vld [vmem:[#allocation5 + $0x5b4] sm:$0xf]
    %v550 = vld [vmem:[#allocation5 + $0x5b8] sm:$0xf]
    %v551 = vld [vmem:[#allocation5 + $0x5bc] sm:$0xf]
    %v552 = vld [vmem:[#allocation5 + $0x5c0] sm:$0xf]
    %v553 = vld [vmem:[#allocation5 + $0x5c4] sm:$0xf]
    %v554 = vld [vmem:[#allocation5 + $0x5c8] sm:$0xf]
    %v555 = vld [vmem:[#allocation5 + $0x5cc] sm:$0xf]
    %v556 = vld [vmem:[#allocation5 + $0x5d0] sm:$0xf]
    %v557 = vld [vmem:[#allocation5 + $0x5d4] sm:$0xf]
    %v558 = vld [vmem:[#allocation5 + $0x5d8] sm:$0xf]
    %v559 = vld [vmem:[#allocation5 + $0x5dc] sm:$0xf]
    %v560 = vld [vmem:[#allocation5 + $0x5e0] sm:$0xf]
    %v561 = vld [vmem:[#allocation5 + $0x5e4] sm:$0xf]
    %v562 = vld [vmem:[#allocation5 + $0x5e8] sm:$0xf]
    %v563 = vld [vmem:[#allocation5 + $0x5ec] sm:$0xf]
    %v564 = vld [vmem:[#allocation5 + $0x5f0] sm:$0xf]
    %v565 = vld [vmem:[#allocation5 + $0x5f4] sm:$0xf]
    %v566 = vld [vmem:[#allocation5 + $0x5f8] sm:$0xf]
    %v567 = vld [vmem:[#allocation5 + $0x5fc] sm:$0xf]
    %v568 = vld [vmem:[#allocation5 + $0x600] sm:$0xf]
    %v569 = vld [vmem:[#allocation5 + $0x604] sm:$0xf]
    %v570 = vld [vmem:[#allocation5 + $0x608] sm:$0xf]
    %v571 = vld [vmem:[#allocation5 + $0x60c] sm:$0xf]
    %v572 = vld [vmem:[#allocation5 + $0x610] sm:$0xf]
    %v573 = vld [vmem:[#allocation5 + $0x614] sm:$0xf]
    %v574 = vld [vmem:[#allocation5 + $0x618] sm:$0xf]
    %v575 = vld [vmem:[#allocation5 + $0x61c] sm:$0xf]
    %v576 = vld [vmem:[#allocation5 + $0x620] sm:$0xf]
    %v577 = vld [vmem:[#allocation5 + $0x624] sm:$0xf]
    %v578 = vld [vmem:[#allocation5 + $0x628] sm:$0xf]
    %v579 = vld [vmem:[#allocation5 + $0x62c] sm:$0xf]
    %v580 = vld [vmem:[#allocation5 + $0x630] sm:$0xf]
    %v581 = vld [vmem:[#allocation5 + $0x634] sm:$0xf]
    %v582 = vld [vmem:[#allocation5 + $0x638] sm:$0xf]
    %v583 = vld [vmem:[#allocation5 + $0x63c] sm:$0xf]
    %v584 = vld [vmem:[#allocation5 + $0x640] sm:$0xf]
    %v585 = vld [vmem:[#allocation5 + $0x644] sm:$0xf]
    %v586 = vld [vmem:[#allocation5 + $0x648] sm:$0xf]
    %v587 = vld [vmem:[#allocation5 + $0x64c] sm:$0xf]
    %v588 = vld [vmem:[#allocation5 + $0x650] sm:$0xf]
    %v589 = vld [vmem:[#allocation5 + $0x654] sm:$0xf]
    %v590 = vld [vmem:[#allocation5 + $0x658] sm:$0xf]
    %v591 = vld [vmem:[#allocation5 + $0x65c] sm:$0xf]
    %v592 = vld [vmem:[#allocation5 + $0x660] sm:$0xf]
    %v593 = vld [vmem:[#allocation5 + $0x664] sm:$0xf]
    %v594 = vld [vmem:[#allocation5 + $0x668] sm:$0xf]
    %v595 = vld [vmem:[#allocation5 + $0x66c] sm:$0xf]
    %v596 = vld [vmem:[#allocation5 + $0x670] sm:$0xf]
    %v597 = vld [vmem:[#allocation5 + $0x674] sm:$0xf]
    %v598 = vld [vmem:[#allocation5 + $0x678] sm:$0xf]
    %v599 = vld [vmem:[#allocation5 + $0x67c] sm:$0xf]
    %v600 = vld [vmem:[#allocation5 + $0x680] sm:$0xf]
    %v601 = vld [vmem:[#allocation5 + $0x684] sm:$0xf]
    %v602 = vld [vmem:[#allocation5 + $0x688] sm:$0xf]
    %v603 = vld [vmem:[#allocation5 + $0x68c] sm:$0xf]
    %v604 = vld [vmem:[#allocation5 + $0x690] sm:$0xf]
    %v605 = vld [vmem:[#allocation5 + $0x694] sm:$0xf]
    %v606 = vld [vmem:[#allocation5 + $0x698] sm:$0xf]
    %v607 = vld [vmem:[#allocation5 + $0x69c] sm:$0xf]
    %v608 = vld [vmem:[#allocation5 + $0x6a0] sm:$0xf]
    %v609 = vld [vmem:[#allocation5 + $0x6a4] sm:$0xf]
    %v610 = vld [vmem:[#allocation5 + $0x6a8] sm:$0xf]
    %v611 = vld [vmem:[#allocation5 + $0x6ac] sm:$0xf]
    %v612 = vld [vmem:[#allocation5 + $0x6b0] sm:$0xf]
    %v613 = vld [vmem:[#allocation5 + $0x6b4] sm:$0xf]
    %v614 = vld [vmem:[#allocation5 + $0x6b8] sm:$0xf]
    %v615 = vld [vmem:[#allocation5 + $0x6bc] sm:$0xf]
    %v616 = vld [vmem:[#allocation5 + $0x6c0] sm:$0xf]
    %v617 = vld [vmem:[#allocation5 + $0x6c4] sm:$0xf]
    %v618 = vld [vmem:[#allocation5 + $0x6c8] sm:$0xf]
    %v619 = vld [vmem:[#allocation5 + $0x6cc] sm:$0xf]
    %v620 = vld [vmem:[#allocation5 + $0x6d0] sm:$0xf]
    %v621 = vld [vmem:[#allocation5 + $0x6d4] sm:$0xf]
    %v622 = vld [vmem:[#allocation5 + $0x6d8] sm:$0xf]
    %v623 = vld [vmem:[#allocation5 + $0x6dc] sm:$0xf]
    %v624 = vld [vmem:[#allocation5 + $0x6e0] sm:$0xf]
    %v625 = vld [vmem:[#allocation5 + $0x6e4] sm:$0xf]
    %v626 = vld [vmem:[#allocation5 + $0x6e8] sm:$0xf]
    %v627 = vld [vmem:[#allocation5 + $0x6ec] sm:$0xf]
    %v628 = vld [vmem:[#allocation5 + $0x6f0] sm:$0xf]
    %v629 = vld [vmem:[#allocation5 + $0x6f4] sm:$0xf]
    %v630 = vld [vmem:[#allocation5 + $0x6f8] sm:$0xf]
    %v631 = vld [vmem:[#allocation5 + $0x6fc] sm:$0xf]
    %v632 = vld [vmem:[#allocation5 + $0x700] sm:$0xf]
    %v633 = vld [vmem:[#allocation5 + $0x704] sm:$0xf]
    %v634 = vld [vmem:[#allocation5 + $0x708] sm:$0xf]
    %v635 = vld [vmem:[#allocation5 + $0x70c] sm:$0xf]
    %v636 = vld [vmem:[#allocation5 + $0x710] sm:$0xf]
    %v637 = vld [vmem:[#allocation5 + $0x714] sm:$0xf]
    %v638 = vld [vmem:[#allocation5 + $0x718] sm:$0xf]
    %v639 = vld [vmem:[#allocation5 + $0x71c] sm:$0xf]
    %v640 = vld [vmem:[#allocation5 + $0x720] sm:$0xf]
    %v641 = vld [vmem:[#allocation5 + $0x724] sm:$0xf]
    %v642 = vld [vmem:[#allocation5 + $0x728] sm:$0xf]
    %v643 = vld [vmem:[#allocation5 + $0x72c] sm:$0xf]
    %v644 = vld [vmem:[#allocation5 + $0x730] sm:$0xf]
    %v645 = vld [vmem:[#allocation5 + $0x734] sm:$0xf]
    %v646 = vld [vmem:[#allocation5 + $0x738] sm:$0xf]
    %v647 = vld [vmem:[#allocation5 + $0x73c] sm:$0xf]
    %v648 = vld [vmem:[#allocation5 + $0x740] sm:$0xf]
    %v649 = vld [vmem:[#allocation5 + $0x744] sm:$0xf]
    %v650 = vld [vmem:[#allocation5 + $0x748] sm:$0xf]
    %v651 = vld [vmem:[#allocation5 + $0x74c] sm:$0xf]
    %v652 = vld [vmem:[#allocation5 + $0x750] sm:$0xf]
    %v653 = vld [vmem:[#allocation5 + $0x754] sm:$0xf]
    %v654 = vld [vmem:[#allocation5 + $0x758] sm:$0xf]
    %v655 = vld [vmem:[#allocation5 + $0x75c] sm:$0xf]
    %v656 = vld [vmem:[#allocation5 + $0x760] sm:$0xf]
    %v657 = vld [vmem:[#allocation5 + $0x764] sm:$0xf]
    %v658 = vld [vmem:[#allocation5 + $0x768] sm:$0xf]
    %v659 = vld [vmem:[#allocation5 + $0x76c] sm:$0xf]
    %v660 = vld [vmem:[#allocation5 + $0x770] sm:$0xf]
    %v661 = vld [vmem:[#allocation5 + $0x774] sm:$0xf]
    %v662 = vld [vmem:[#allocation5 + $0x778] sm:$0xf]
    %v663 = vld [vmem:[#allocation5 + $0x77c] sm:$0xf]
    %v664 = vld [vmem:[#allocation5 + $0x780] sm:$0xf]
    %v665 = vld [vmem:[#allocation5 + $0x784] sm:$0xf]
    %v666 = vld [vmem:[#allocation5 + $0x788] sm:$0xf]
    %v667 = vld [vmem:[#allocation5 + $0x78c] sm:$0xf]
    %v668 = vld [vmem:[#allocation5 + $0x790] sm:$0xf]
    %v669 = vld [vmem:[#allocation5 + $0x794] sm:$0xf]
    %v670 = vld [vmem:[#allocation5 + $0x798] sm:$0xf]
    %v671 = vld [vmem:[#allocation5 + $0x79c] sm:$0xf]
    %v672 = vld [vmem:[#allocation5 + $0x7a0] sm:$0xf]
    %v673 = vld [vmem:[#allocation5 + $0x7a4] sm:$0xf]
    %v674 = vld [vmem:[#allocation5 + $0x7a8] sm:$0xf]
    %v675 = vld [vmem:[#allocation5 + $0x7ac] sm:$0xf]
    %v676 = vld [vmem:[#allocation5 + $0x7b0] sm:$0xf]
    %v677 = vld [vmem:[#allocation5 + $0x7b4] sm:$0xf]
    %v678 = vld [vmem:[#allocation5 + $0x7b8] sm:$0xf]
    %v679 = vld [vmem:[#allocation5 + $0x7bc] sm:$0xf]
    %v680 = vld [vmem:[#allocation5 + $0x7c0] sm:$0xf]
    %v681 = vld [vmem:[#allocation5 + $0x7c4] sm:$0xf]
    %v682 = vld [vmem:[#allocation5 + $0x7c8] sm:$0xf]
    %v683 = vld [vmem:[#allocation5 + $0x7cc] sm:$0xf]
    %v684 = vld [vmem:[#allocation5 + $0x7d0] sm:$0xf]
    %v685 = vld [vmem:[#allocation5 + $0x7d4] sm:$0xf]
    %v686 = vld [vmem:[#allocation5 + $0x7d8] sm:$0xf]
    %v687 = vld [vmem:[#allocation5 + $0x7dc] sm:$0xf]
    %v688 = vld [vmem:[#allocation5 + $0x7e0] sm:$0xf]
    %v689 = vld [vmem:[#allocation5 + $0x7e4] sm:$0xf]
    %v690 = vld [vmem:[#allocation5 + $0x7e8] sm:$0xf]
    %v691 = vld [vmem:[#allocation5 + $0x7ec] sm:$0xf]
    %v692 = vld [vmem:[#allocation5 + $0x7f0] sm:$0xf]
    %v693 = vld [vmem:[#allocation5 + $0x7f4] sm:$0xf]
    %v694 = vld [vmem:[#allocation5 + $0x7f8] sm:$0xf]
    %v695 = vld [vmem:[#allocation5 + $0x7fc] sm:$0xf]
    %v696 = vld [vmem:[#allocation5 + $0x800] sm:$0xf]
    %v697 = vld [vmem:[#allocation5 + $0x804] sm:$0xf]
    %v698 = vld [vmem:[#allocation5 + $0x808] sm:$0xf]
    %v699 = vld [vmem:[#allocation5 + $0x80c] sm:$0xf]
    %v700 = vld [vmem:[#allocation5 + $0x810] sm:$0xf]
    %v701 = vld [vmem:[#allocation5 + $0x814] sm:$0xf]
    %v702 = vld [vmem:[#allocation5 + $0x818] sm:$0xf]
    %v703 = vld [vmem:[#allocation5 + $0x81c] sm:$0xf]
    %v704 = vld [vmem:[#allocation5 + $0x820] sm:$0xf]
    %v705 = vld [vmem:[#allocation5 + $0x824] sm:$0xf]
    %v706 = vld [vmem:[#allocation5 + $0x828] sm:$0xf]
    %v707 = vld [vmem:[#allocation5 + $0x82c] sm:$0xf]
    %v708 = vld [vmem:[#allocation5 + $0x830] sm:$0xf]
    %v709 = vld [vmem:[#allocation5 + $0x834] sm:$0xf]
    %v710 = vld [vmem:[#allocation5 + $0x838] sm:$0xf]
    %v711 = vld [vmem:[#allocation5 + $0x83c] sm:$0xf]
    %v712 = vld [vmem:[#allocation5 + $0x840] sm:$0xf]
    %v713 = vld [vmem:[#allocation5 + $0x844] sm:$0xf]
    %v714 = vld [vmem:[#allocation5 + $0x848] sm:$0xf]
    %v715 = vld [vmem:[#allocation5 + $0x84c] sm:$0xf]
    %v716 = vld [vmem:[#allocation5 + $0x850] sm:$0xf]
    %v717 = vld [vmem:[#allocation5 + $0x854] sm:$0xf]
    %v718 = vld [vmem:[#allocation5 + $0x858] sm:$0xf]
    %v719 = vld [vmem:[#allocation5 + $0x85c] sm:$0xf]
    %v720 = vld [vmem:[#allocation5 + $0x860] sm:$0xf]
    %v721 = vld [vmem:[#allocation5 + $0x864] sm:$0xf]
    %v722 = vld [vmem:[#allocation5 + $0x868] sm:$0xf]
    %v723 = vld [vmem:[#allocation5 + $0x86c] sm:$0xf]
    %v724 = vld [vmem:[#allocation5 + $0x870] sm:$0xf]
    %v725 = vld [vmem:[#allocation5 + $0x874] sm:$0xf]
    %v726 = vld [vmem:[#allocation5 + $0x878] sm:$0xf]
    %v727 = vld [vmem:[#allocation5 + $0x87c] sm:$0xf]
    %v728 = vld [vmem:[#allocation5 + $0x880] sm:$0xf]
    %v729 = vld [vmem:[#allocation5 + $0x884] sm:$0xf]
    %v730 = vld [vmem:[#allocation5 + $0x888] sm:$0xf]
    %v731 = vld [vmem:[#allocation5 + $0x88c] sm:$0xf]
    %v732 = vld [vmem:[#allocation5 + $0x890] sm:$0xf]
    %v733 = vld [vmem:[#allocation5 + $0x894] sm:$0xf]
    %v734 = vld [vmem:[#allocation5 + $0x898] sm:$0xf]
    %v735 = vld [vmem:[#allocation5 + $0x89c] sm:$0xf]
    %v736 = vld [vmem:[#allocation5 + $0x8a0] sm:$0xf]
    %v737 = vld [vmem:[#allocation5 + $0x8a4] sm:$0xf]
    %v738 = vld [vmem:[#allocation5 + $0x8a8] sm:$0xf]
    %v739 = vld [vmem:[#allocation5 + $0x8ac] sm:$0xf]
    %v740 = vld [vmem:[#allocation5 + $0x8b0] sm:$0xf]
    %v741 = vld [vmem:[#allocation5 + $0x8b4] sm:$0xf]
    %v742 = vld [vmem:[#allocation5 + $0x8b8] sm:$0xf]
    %v743 = vld [vmem:[#allocation5 + $0x8bc] sm:$0xf]
    %v744 = vld [vmem:[#allocation5 + $0x8c0] sm:$0xf]
    %v745 = vld [vmem:[#allocation5 + $0x8c4] sm:$0xf]
    %v746 = vld [vmem:[#allocation5 + $0x8c8] sm:$0xf]
    %v747 = vld [vmem:[#allocation5 + $0x8cc] sm:$0xf]
    %v748 = vld [vmem:[#allocation5 + $0x8d0] sm:$0xf]
    %v749 = vld [vmem:[#allocation5 + $0x8d4] sm:$0xf]
    %v750 = vld [vmem:[#allocation5 + $0x8d8] sm:$0xf]
    %v751 = vld [vmem:[#allocation5 + $0x8dc] sm:$0xf]
    %v752 = vld [vmem:[#allocation5 + $0x8e0] sm:$0xf]
    %v753 = vld [vmem:[#allocation5 + $0x8e4] sm:$0xf]
    %v754 = vld [vmem:[#allocation5 + $0x8e8] sm:$0xf]
    %v755 = vld [vmem:[#allocation5 + $0x8ec] sm:$0xf]
    %v756 = vld [vmem:[#allocation5 + $0x8f0] sm:$0xf]
    %v757 = vld [vmem:[#allocation5 + $0x8f4] sm:$0xf]
    %v758 = vld [vmem:[#allocation5 + $0x8f8] sm:$0xf]
    %v759 = vld [vmem:[#allocation5 + $0x8fc] sm:$0xf]
    %v760 = vld [vmem:[#allocation5 + $0x900] sm:$0xf]
    %v761 = vld [vmem:[#allocation5 + $0x904] sm:$0xf]
    %v762 = vld [vmem:[#allocation5 + $0x908] sm:$0xf]
    %v763 = vld [vmem:[#allocation5 + $0x90c] sm:$0xf]
    %v764 = vld [vmem:[#allocation5 + $0x910] sm:$0xf]
    %v765 = vld [vmem:[#allocation5 + $0x914] sm:$0xf]
    %v766 = vld [vmem:[#allocation5 + $0x918] sm:$0xf]
    %v767 = vld [vmem:[#allocation5 + $0x91c] sm:$0xf]
    %v768 = vld [vmem:[#allocation5 + $0x920] sm:$0xf]
    %v769 = vld [vmem:[#allocation5 + $0x924] sm:$0xf]
    %v770 = vld [vmem:[#allocation5 + $0x928] sm:$0xf]
    %v771 = vld [vmem:[#allocation5 + $0x92c] sm:$0xf]
    %v772 = vld [vmem:[#allocation5 + $0x930] sm:$0xf]
    %v773 = vld [vmem:[#allocation5 + $0x934] sm:$0xf]
    %v774 = vld [vmem:[#allocation5 + $0x938] sm:$0xf]
    %v775 = vld [vmem:[#allocation5 + $0x93c] sm:$0xf]
    %v776 = vld [vmem:[#allocation5 + $0x940] sm:$0xf]
    %v777 = vld [vmem:[#allocation5 + $0x944] sm:$0xf]
    %v778 = vld [vmem:[#allocation5 + $0x948] sm:$0xf]
    %v779 = vld [vmem:[#allocation5 + $0x94c] sm:$0xf]
    %v780 = vld [vmem:[#allocation5 + $0x950] sm:$0xf]
    %v781 = vld [vmem:[#allocation5 + $0x954] sm:$0xf]
    %v782 = vld [vmem:[#allocation5 + $0x958] sm:$0xf]
    %v783 = vld [vmem:[#allocation5 + $0x95c] sm:$0xf]
    %v784 = vld [vmem:[#allocation5 + $0x960] sm:$0xf]
    %v785 = vld [vmem:[#allocation5 + $0x964] sm:$0xf]
    %v786 = vld [vmem:[#allocation5 + $0x968] sm:$0xf]
    %v787 = vld [vmem:[#allocation5 + $0x96c] sm:$0xf]
    %v788 = vld [vmem:[#allocation5 + $0x970] sm:$0xf]
    %v789 = vld [vmem:[#allocation5 + $0x974] sm:$0xf]
    %v790 = vld [vmem:[#allocation5 + $0x978] sm:$0xf]
    %v791 = vld [vmem:[#allocation5 + $0x97c] sm:$0xf]
    %v792 = vld [vmem:[#allocation5 + $0x980] sm:$0xf]
    %v793 = vld [vmem:[#allocation5 + $0x984] sm:$0xf]
    %v794 = vld [vmem:[#allocation5 + $0x988] sm:$0xf]
    %v795 = vld [vmem:[#allocation5 + $0x98c] sm:$0xf]
    %v796 = vld [vmem:[#allocation5 + $0x990] sm:$0xf]
    %v797 = vld [vmem:[#allocation5 + $0x994] sm:$0xf]
    %v798 = vld [vmem:[#allocation5 + $0x998] sm:$0xf]
    %v799 = vld [vmem:[#allocation5 + $0x99c] sm:$0xf]
    %v800 = vld [vmem:[#allocation5 + $0x9a0] sm:$0xf]
    %v801 = vld [vmem:[#allocation5 + $0x9a4] sm:$0xf]
    %v802 = vld [vmem:[#allocation5 + $0x9a8] sm:$0xf]
    %v803 = vld [vmem:[#allocation5 + $0x9ac] sm:$0xf]
    %v804 = vld [vmem:[#allocation5 + $0x9b0] sm:$0xf]
    %v805 = vld [vmem:[#allocation5 + $0x9b4] sm:$0xf]
    %v806 = vld [vmem:[#allocation5 + $0x9b8] sm:$0xf]
    %v807 = vld [vmem:[#allocation5 + $0x9bc] sm:$0xf]
    %v808 = vld [vmem:[#allocation5 + $0x9c0] sm:$0xf]
    %v809 = vld [vmem:[#allocation5 + $0x9c4] sm:$0xf]
    %v810 = vld [vmem:[#allocation5 + $0x9c8] sm:$0xf]
    %v811 = vld [vmem:[#allocation5 + $0x9cc] sm:$0xf]
    %v812 = vld [vmem:[#allocation5 + $0x9d0] sm:$0xf]
    %v813 = vld [vmem:[#allocation5 + $0x9d4] sm:$0xf]
    %v814 = vld [vmem:[#allocation5 + $0x9d8] sm:$0xf]
    %v815 = vld [vmem:[#allocation5 + $0x9dc] sm:$0xf]
    %v816 = vld [vmem:[#allocation5 + $0x9e0] sm:$0xf]
    %v817 = vld [vmem:[#allocation5 + $0x9e4] sm:$0xf]
    %v818 = vld [vmem:[#allocation5 + $0x9e8] sm:$0xf]
    %v819 = vld [vmem:[#allocation5 + $0x9ec] sm:$0xf]
    %v820 = vld [vmem:[#allocation5 + $0x9f0] sm:$0xf]
    %v821 = vld [vmem:[#allocation5 + $0x9f4] sm:$0xf]
    %v822 = vld [vmem:[#allocation5 + $0x9f8] sm:$0xf]
    %v823 = vld [vmem:[#allocation5 + $0x9fc] sm:$0xf]
    %v824 = vld [vmem:[#allocation5 + $0xa00] sm:$0xf]
    %v825 = vld [vmem:[#allocation5 + $0xa04] sm:$0xf]
    %v826 = vld [vmem:[#allocation5 + $0xa08] sm:$0xf]
    %v827 = vld [vmem:[#allocation5 + $0xa0c] sm:$0xf]
    %v828 = vld [vmem:[#allocation5 + $0xa10] sm:$0xf]
    %v829 = vld [vmem:[#allocation5 + $0xa14] sm:$0xf]
    %v830 = vld [vmem:[#allocation5 + $0xa18] sm:$0xf]
    %v831 = vld [vmem:[#allocation5 + $0xa1c] sm:$0xf]
    %v832 = vld [vmem:[#allocation5 + $0xa20] sm:$0xf]
    %v833 = vld [vmem:[#allocation5 + $0xa24] sm:$0xf]
    %v834 = vld [vmem:[#allocation5 + $0xa28] sm:$0xf]
    %v835 = vld [vmem:[#allocation5 + $0xa2c] sm:$0xf]
    %v836 = vld [vmem:[#allocation5 + $0xa30] sm:$0xf]
    %v837 = vld [vmem:[#allocation5 + $0xa34] sm:$0xf]
    %v838 = vld [vmem:[#allocation5 + $0xa38] sm:$0xf]
    %v839 = vld [vmem:[#allocation5 + $0xa3c] sm:$0xf]
    %v840 = vld [vmem:[#allocation5 + $0xa40] sm:$0xf]
    %v841 = vld [vmem:[#allocation5 + $0xa44] sm:$0xf]
    %v842 = vld [vmem:[#allocation5 + $0xa48] sm:$0xf]
    %v843 = vld [vmem:[#allocation5 + $0xa4c] sm:$0xf]
    %v844 = vld [vmem:[#allocation5 + $0xa50] sm:$0xf]
    %v845 = vld [vmem:[#allocation5 + $0xa54] sm:$0xf]
    %v846 = vld [vmem:[#allocation5 + $0xa58] sm:$0xf]
    %v847 = vld [vmem:[#allocation5 + $0xa5c] sm:$0xf]
    %v848 = vld [vmem:[#allocation5 + $0xa60] sm:$0xf]
    %v849 = vld [vmem:[#allocation5 + $0xa64] sm:$0xf]
    %v850 = vld [vmem:[#allocation5 + $0xa68] sm:$0xf]
    %v851 = vld [vmem:[#allocation5 + $0xa6c] sm:$0xf]
    %v852 = vld [vmem:[#allocation5 + $0xa70] sm:$0xf]
    %v853 = vld [vmem:[#allocation5 + $0xa74] sm:$0xf]
    %v854 = vld [vmem:[#allocation5 + $0xa78] sm:$0xf]
    %v855 = vld [vmem:[#allocation5 + $0xa7c] sm:$0xf]
    %v856 = vld [vmem:[#allocation5 + $0xa80] sm:$0xf]
    %v857 = vld [vmem:[#allocation5 + $0xa84] sm:$0xf]
    %v858 = vld [vmem:[#allocation5 + $0xa88] sm:$0xf]
    %v859 = vld [vmem:[#allocation5 + $0xa8c] sm:$0xf]
    %v860 = vld [vmem:[#allocation5 + $0xa90] sm:$0xf]
    %v861 = vld [vmem:[#allocation5 + $0xa94] sm:$0xf]
    %v862 = vld [vmem:[#allocation5 + $0xa98] sm:$0xf]
    %v863 = vld [vmem:[#allocation5 + $0xa9c] sm:$0xf]
    %v864 = vld [vmem:[#allocation5 + $0xaa0] sm:$0xf]
    %v865 = vld [vmem:[#allocation5 + $0xaa4] sm:$0xf]
    %v866 = vld [vmem:[#allocation5 + $0xaa8] sm:$0xf]
    %v867 = vld [vmem:[#allocation5 + $0xaac] sm:$0xf]
    %v868 = vld [vmem:[#allocation5 + $0xab0] sm:$0xf]
    %v869 = vld [vmem:[#allocation5 + $0xab4] sm:$0xf]
    %v870 = vld [vmem:[#allocation5 + $0xab8] sm:$0xf]
    %v871 = vld [vmem:[#allocation5 + $0xabc] sm:$0xf]
    %v872 = vld [vmem:[#allocation5 + $0xac0] sm:$0xf]
    %v873 = vld [vmem:[#allocation5 + $0xac4] sm:$0xf]
    %v874 = vld [vmem:[#allocation5 + $0xac8] sm:$0xf]
    %v875 = vld [vmem:[#allocation5 + $0xacc] sm:$0xf]
    %v876 = vld [vmem:[#allocation5 + $0xad0] sm:$0xf]
    %v877 = vld [vmem:[#allocation5 + $0xad4] sm:$0xf]
    %v878 = vld [vmem:[#allocation5 + $0xad8] sm:$0xf]
    %v879 = vld [vmem:[#allocation5 + $0xadc] sm:$0xf]
    %v880 = vld [vmem:[#allocation5 + $0xae0] sm:$0xf]
    %v881 = vld [vmem:[#allocation5 + $0xae4] sm:$0xf]
    %v882 = vld [vmem:[#allocation5 + $0xae8] sm:$0xf]
    %v883 = vld [vmem:[#allocation5 + $0xaec] sm:$0xf]
    %v884 = vld [vmem:[#allocation5 + $0xaf0] sm:$0xf]
    %v885 = vld [vmem:[#allocation5 + $0xaf4] sm:$0xf]
    %v886 = vld [vmem:[#allocation5 + $0xaf8] sm:$0xf]
    %v887 = vld [vmem:[#allocation5 + $0xafc] sm:$0xf]
    %v888 = vld [vmem:[#allocation5 + $0xb00] sm:$0xf]
    %v889 = vld [vmem:[#allocation5 + $0xb04] sm:$0xf]
    %v890 = vld [vmem:[#allocation5 + $0xb08] sm:$0xf]
    %v891 = vld [vmem:[#allocation5 + $0xb0c] sm:$0xf]
    %v892 = vld [vmem:[#allocation5 + $0xb10] sm:$0xf]
    %v893 = vld [vmem:[#allocation5 + $0xb14] sm:$0xf]
    %v894 = vld [vmem:[#allocation5 + $0xb18] sm:$0xf]
    %v895 = vld [vmem:[#allocation5 + $0xb1c] sm:$0xf]
    %v896 = vld [vmem:[#allocation5 + $0xb20] sm:$0xf]
    %v897 = vld [vmem:[#allocation5 + $0xb24] sm:$0xf]
    %v898 = vld [vmem:[#allocation5 + $0xb28] sm:$0xf]
    %v899 = vld [vmem:[#allocation5 + $0xb2c] sm:$0xf]
    %v900 = vld [vmem:[#allocation5 + $0xb30] sm:$0xf]
    %v901 = vld [vmem:[#allocation5 + $0xb34] sm:$0xf]
    %v902 = vld [vmem:[#allocation5 + $0xb38] sm:$0xf]
    %v903 = vld [vmem:[#allocation5 + $0xb3c] sm:$0xf]
    %v904 = vld [vmem:[#allocation5 + $0xb40] sm:$0xf]
    %v905 = vld [vmem:[#allocation5 + $0xb44] sm:$0xf]
    %v906 = vld [vmem:[#allocation5 + $0xb48] sm:$0xf]
    %v907 = vld [vmem:[#allocation5 + $0xb4c] sm:$0xf]
    %v908 = vld [vmem:[#allocation5 + $0xb50] sm:$0xf]
    %v909 = vld [vmem:[#allocation5 + $0xb54] sm:$0xf]
    %v910 = vld [vmem:[#allocation5 + $0xb58] sm:$0xf]
    %v911 = vld [vmem:[#allocation5 + $0xb5c] sm:$0xf]
    %v912 = vld [vmem:[#allocation5 + $0xb60] sm:$0xf]
    %v913 = vld [vmem:[#allocation5 + $0xb64] sm:$0xf]
    %v914 = vld [vmem:[#allocation5 + $0xb68] sm:$0xf]
    %v915 = vld [vmem:[#allocation5 + $0xb6c] sm:$0xf]
    %v916 = vld [vmem:[#allocation5 + $0xb70] sm:$0xf]
    %v917 = vld [vmem:[#allocation5 + $0xb74] sm:$0xf]
    %v918 = vld [vmem:[#allocation5 + $0xb78] sm:$0xf]
    %v919 = vld [vmem:[#allocation5 + $0xb7c] sm:$0xf]
    %v920 = vld [vmem:[#allocation5 + $0xb80] sm:$0xf]
    %v921 = vld [vmem:[#allocation5 + $0xb84] sm:$0xf]
    %v922 = vld [vmem:[#allocation5 + $0xb88] sm:$0xf]
    %v923 = vld [vmem:[#allocation5 + $0xb8c] sm:$0xf]
    %v924 = vld [vmem:[#allocation5 + $0xb90] sm:$0xf]
    %v925 = vld [vmem:[#allocation5 + $0xb94] sm:$0xf]
    %v926 = vld [vmem:[#allocation5 + $0xb98] sm:$0xf]
    %v927 = vld [vmem:[#allocation5 + $0xb9c] sm:$0xf]
    %v928 = vld [vmem:[#allocation5 + $0xba0] sm:$0xf]
    %v929 = vld [vmem:[#allocation5 + $0xba4] sm:$0xf]
    %v930 = vld [vmem:[#allocation5 + $0xba8] sm:$0xf]
    %v931 = vld [vmem:[#allocation5 + $0xbac] sm:$0xf]
    %v932 = vld [vmem:[#allocation5 + $0xbb0] sm:$0xf]
    %v933 = vld [vmem:[#allocation5 + $0xbb4] sm:$0xf]
    %v934 = vld [vmem:[#allocation5 + $0xbb8] sm:$0xf]
    %v935 = vld [vmem:[#allocation5 + $0xbbc] sm:$0xf]
    %v936 = vld [vmem:[#allocation5 + $0xbc0] sm:$0xf]
    %v937 = vld [vmem:[#allocation5 + $0xbc4] sm:$0xf]
    %v938 = vld [vmem:[#allocation5 + $0xbc8] sm:$0xf]
    %v939 = vld [vmem:[#allocation5 + $0xbcc] sm:$0xf]
    %v940 = vld [vmem:[#allocation5 + $0xbd0] sm:$0xf]
    %v941 = vld [vmem:[#allocation5 + $0xbd4] sm:$0xf]
    %v942 = vld [vmem:[#allocation5 + $0xbd8] sm:$0xf]
    %v943 = vld [vmem:[#allocation5 + $0xbdc] sm:$0xf]
    %v944 = vld [vmem:[#allocation5 + $0xbe0] sm:$0xf]
    %v945 = vld [vmem:[#allocation5 + $0xbe4] sm:$0xf]
    %v946 = vld [vmem:[#allocation5 + $0xbe8] sm:$0xf]
    %v947 = vld [vmem:[#allocation5 + $0xbec] sm:$0xf]
    %v948 = vld [vmem:[#allocation5 + $0xbf0] sm:$0xf]
    %v949 = vld [vmem:[#allocation5 + $0xbf4] sm:$0xf]
    %v950 = vld [vmem:[#allocation5 + $0xbf8] sm:$0xf]
    %v951 = vld [vmem:[#allocation5 + $0xbfc] sm:$0xf]
    %v952 = vld [vmem:[#allocation5 + $0xc00] sm:$0xf]
    %v953 = vld [vmem:[#allocation5 + $0xc04] sm:$0xf]
    %v954 = vld [vmem:[#allocation5 + $0xc08] sm:$0xf]
    %v955 = vld [vmem:[#allocation5 + $0xc0c] sm:$0xf]
    %v956 = vld [vmem:[#allocation5 + $0xc10] sm:$0xf]
    %v957 = vld [vmem:[#allocation5 + $0xc14] sm:$0xf]
    %v958 = vld [vmem:[#allocation5 + $0xc18] sm:$0xf]
    %v959 = vld [vmem:[#allocation5 + $0xc1c] sm:$0xf]
    %v960 = vld [vmem:[#allocation5 + $0xc20] sm:$0xf]
    %v961 = vld [vmem:[#allocation5 + $0xc24] sm:$0xf]
    %v962 = vld [vmem:[#allocation5 + $0xc28] sm:$0xf]
    %v963 = vld [vmem:[#allocation5 + $0xc2c] sm:$0xf]
    %v964 = vld [vmem:[#allocation5 + $0xc30] sm:$0xf]
    %v965 = vld [vmem:[#allocation5 + $0xc34] sm:$0xf]
    %v966 = vld [vmem:[#allocation5 + $0xc38] sm:$0xf]
    %v967 = vld [vmem:[#allocation5 + $0xc3c] sm:$0xf]
    %v968 = vld [vmem:[#allocation5 + $0xc40] sm:$0xf]
    %v969 = vld [vmem:[#allocation5 + $0xc44] sm:$0xf]
    %v970 = vld [vmem:[#allocation5 + $0xc48] sm:$0xf]
    %v971 = vld [vmem:[#allocation5 + $0xc4c] sm:$0xf]
    %v972 = vld [vmem:[#allocation5 + $0xc50] sm:$0xf]
    %v973 = vld [vmem:[#allocation5 + $0xc54] sm:$0xf]
    %v974 = vld [vmem:[#allocation5 + $0xc58] sm:$0xf]
    %v975 = vld [vmem:[#allocation5 + $0xc5c] sm:$0xf]
    %v976 = vld [vmem:[#allocation5 + $0xc60] sm:$0xf]
    %v977 = vld [vmem:[#allocation5 + $0xc64] sm:$0xf]
    %v978 = vld [vmem:[#allocation5 + $0xc68] sm:$0xf]
    %v979 = vld [vmem:[#allocation5 + $0xc6c] sm:$0xf]
    %v980 = vld [vmem:[#allocation5 + $0xc70] sm:$0xf]
    %v981 = vld [vmem:[#allocation5 + $0xc74] sm:$0xf]
    %v982 = vld [vmem:[#allocation5 + $0xc78] sm:$0xf]
    %v983 = vld [vmem:[#allocation5 + $0xc7c] sm:$0xf]
    %v984 = vld [vmem:[#allocation5 + $0xc80] sm:$0xf]
    %v985 = vld [vmem:[#allocation5 + $0xc84] sm:$0xf]
    %v986 = vld [vmem:[#allocation5 + $0xc88] sm:$0xf]
    %v987 = vld [vmem:[#allocation5 + $0xc8c] sm:$0xf]
    %v988 = vld [vmem:[#allocation5 + $0xc90] sm:$0xf]
    %v989 = vld [vmem:[#allocation5 + $0xc94] sm:$0xf]
    %v990 = vld [vmem:[#allocation5 + $0xc98] sm:$0xf]
    %v991 = vld [vmem:[#allocation5 + $0xc9c] sm:$0xf]
    %v992 = vld [vmem:[#allocation5 + $0xca0] sm:$0xf]
    %v993 = vld [vmem:[#allocation5 + $0xca4] sm:$0xf]
    %v994 = vld [vmem:[#allocation5 + $0xca8] sm:$0xf]
    %v995 = vld [vmem:[#allocation5 + $0xcac] sm:$0xf]
    %v996 = vld [vmem:[#allocation5 + $0xcb0] sm:$0xf]
    %v997 = vld [vmem:[#allocation5 + $0xcb4] sm:$0xf]
    %v998 = vld [vmem:[#allocation5 + $0xcb8] sm:$0xf]
    %v999 = vld [vmem:[#allocation5 + $0xcbc] sm:$0xf]
    %v1000 = vld [vmem:[#allocation5 + $0xcc0] sm:$0xf]
    %v1001 = vld [vmem:[#allocation5 + $0xcc4] sm:$0xf]
    %v1002 = vld [vmem:[#allocation5 + $0xcc8] sm:$0xf]
    %v1003 = vld [vmem:[#allocation5 + $0xccc] sm:$0xf]
    %v1004 = vld [vmem:[#allocation5 + $0xcd0] sm:$0xf]
    %v1005 = vld [vmem:[#allocation5 + $0xcd4] sm:$0xf]
    %v1006 = vld [vmem:[#allocation5 + $0xcd8] sm:$0xf]
    %v1007 = vld [vmem:[#allocation5 + $0xcdc] sm:$0xf]
    %v1008 = vld [vmem:[#allocation5 + $0xce0] sm:$0xf]
    %v1009 = vld [vmem:[#allocation5 + $0xce4] sm:$0xf]
    %v1010 = vld [vmem:[#allocation5 + $0xce8] sm:$0xf]
    %v1011 = vld [vmem:[#allocation5 + $0xcec] sm:$0xf]
    %v1012 = vld [vmem:[#allocation5 + $0xcf0] sm:$0xf]
    %v1013 = vld [vmem:[#allocation5 + $0xcf4] sm:$0xf]
    %v1014 = vld [vmem:[#allocation5 + $0xcf8] sm:$0xf]
    %v1015 = vld [vmem:[#allocation5 + $0xcfc] sm:$0xf]
    %v1016 = vld [vmem:[#allocation5 + $0xd00] sm:$0xf]
    %v1017 = vld [vmem:[#allocation5 + $0xd04] sm:$0xf]
    %v1018 = vld [vmem:[#allocation5 + $0xd08] sm:$0xf]
    %v1019 = vld [vmem:[#allocation5 + $0xd0c] sm:$0xf]
    %v1020 = vld [vmem:[#allocation5 + $0xd10] sm:$0xf]
    %v1021 = vld [vmem:[#allocation5 + $0xd14] sm:$0xf]
    %v1022 = vld [vmem:[#allocation5 + $0xd18] sm:$0xf]
    %v1023 = vld [vmem:[#allocation5 + $0xd1c] sm:$0xf]
    %v1024 = vld [vmem:[#allocation5 + $0xd20] sm:$0xf]
    %v1025 = vld [vmem:[#allocation5 + $0xd24] sm:$0xf]
    %v1026 = vld [vmem:[#allocation5 + $0xd28] sm:$0xf]
    %v1027 = vld [vmem:[#allocation5 + $0xd2c] sm:$0xf]
    %v1028 = vld [vmem:[#allocation5 + $0xd30] sm:$0xf]
    %v1029 = vld [vmem:[#allocation5 + $0xd34] sm:$0xf]
    %v1030 = vld [vmem:[#allocation5 + $0xd38] sm:$0xf]
    %v1031 = vld [vmem:[#allocation5 + $0xd3c] sm:$0xf]
    %v1032 = vld [vmem:[#allocation5 + $0xd40] sm:$0xf]
    %v1033 = vld [vmem:[#allocation5 + $0xd44] sm:$0xf]
    %v1034 = vld [vmem:[#allocation5 + $0xd48] sm:$0xf]
    %v1035 = vld [vmem:[#allocation5 + $0xd4c] sm:$0xf]
    %v1036 = vld [vmem:[#allocation5 + $0xd50] sm:$0xf]
    %v1037 = vld [vmem:[#allocation5 + $0xd54] sm:$0xf]
    %v1038 = vld [vmem:[#allocation5 + $0xd58] sm:$0xf]
    %v1039 = vld [vmem:[#allocation5 + $0xd5c] sm:$0xf]
    %v1040 = vld [vmem:[#allocation5 + $0xd60] sm:$0xf]
    %v1041 = vld [vmem:[#allocation5 + $0xd64] sm:$0xf]
    %v1042 = vld [vmem:[#allocation5 + $0xd68] sm:$0xf]
    %v1043 = vld [vmem:[#allocation5 + $0xd6c] sm:$0xf]
    %v1044 = vld [vmem:[#allocation5 + $0xd70] sm:$0xf]
    %v1045 = vld [vmem:[#allocation5 + $0xd74] sm:$0xf]
    %v1046 = vld [vmem:[#allocation5 + $0xd78] sm:$0xf]
    %v1047 = vld [vmem:[#allocation5 + $0xd7c] sm:$0xf]
    %v1048 = vld [vmem:[#allocation5 + $0xd80] sm:$0xf]
    %v1049 = vld [vmem:[#allocation5 + $0xd84] sm:$0xf]
    %v1050 = vld [vmem:[#allocation5 + $0xd88] sm:$0xf]
    %v1051 = vld [vmem:[#allocation5 + $0xd8c] sm:$0xf]
    %v1052 = vld [vmem:[#allocation5 + $0xd90] sm:$0xf]
    %v1053 = vld [vmem:[#allocation5 + $0xd94] sm:$0xf]
    %v1054 = vld [vmem:[#allocation5 + $0xd98] sm:$0xf]
    %v1055 = vld [vmem:[#allocation5 + $0xd9c] sm:$0xf]
    %v1056 = vld [vmem:[#allocation5 + $0xda0] sm:$0xf]
    %v1057 = vld [vmem:[#allocation5 + $0xda4] sm:$0xf]
    %v1058 = vld [vmem:[#allocation5 + $0xda8] sm:$0xf]
    %v1059 = vld [vmem:[#allocation5 + $0xdac] sm:$0xf]
    %v1060 = vld [vmem:[#allocation5 + $0xdb0] sm:$0xf]
    %v1061 = vld [vmem:[#allocation5 + $0xdb4] sm:$0xf]
    %v1062 = vld [vmem:[#allocation5 + $0xdb8] sm:$0xf]
    %v1063 = vld [vmem:[#allocation5 + $0xdbc] sm:$0xf]
    %v1064 = vld [vmem:[#allocation5 + $0xdc0] sm:$0xf]
    %v1065 = vld [vmem:[#allocation5 + $0xdc4] sm:$0xf]
    %v1066 = vld [vmem:[#allocation5 + $0xdc8] sm:$0xf]
    %v1067 = vld [vmem:[#allocation5 + $0xdcc] sm:$0xf]
    %v1068 = vld [vmem:[#allocation5 + $0xdd0] sm:$0xf]
    %v1069 = vld [vmem:[#allocation5 + $0xdd4] sm:$0xf]
    %v1070 = vld [vmem:[#allocation5 + $0xdd8] sm:$0xf]
    %v1071 = vld [vmem:[#allocation5 + $0xddc] sm:$0xf]
    %v1072 = vld [vmem:[#allocation5 + $0xde0] sm:$0xf]
    %v1073 = vld [vmem:[#allocation5 + $0xde4] sm:$0xf]
    %v1074 = vld [vmem:[#allocation5 + $0xde8] sm:$0xf]
    %v1075 = vld [vmem:[#allocation5 + $0xdec] sm:$0xf]
    %v1076 = vld [vmem:[#allocation5 + $0xdf0] sm:$0xf]
    %v1077 = vld [vmem:[#allocation5 + $0xdf4] sm:$0xf]
    %v1078 = vld [vmem:[#allocation5 + $0xdf8] sm:$0xf]
    %v1079 = vld [vmem:[#allocation5 + $0xdfc] sm:$0xf]
    %v1080 = vld [vmem:[#allocation5 + $0xe00] sm:$0xf]
    %v1081 = vld [vmem:[#allocation5 + $0xe04] sm:$0xf]
    %v1082 = vld [vmem:[#allocation5 + $0xe08] sm:$0xf]
    %v1083 = vld [vmem:[#allocation5 + $0xe0c] sm:$0xf]
    %v1084 = vld [vmem:[#allocation5 + $0xe10] sm:$0xf]
    %v1085 = vld [vmem:[#allocation5 + $0xe14] sm:$0xf]
    %v1086 = vld [vmem:[#allocation5 + $0xe18] sm:$0xf]
    %v1087 = vld [vmem:[#allocation5 + $0xe1c] sm:$0xf]
    %v1088 = vld [vmem:[#allocation5 + $0xe20] sm:$0xf]
    %v1089 = vld [vmem:[#allocation5 + $0xe24] sm:$0xf]
    %v1090 = vld [vmem:[#allocation5 + $0xe28] sm:$0xf]
    %v1091 = vld [vmem:[#allocation5 + $0xe2c] sm:$0xf]
    %v1092 = vld [vmem:[#allocation5 + $0xe30] sm:$0xf]
    %v1093 = vld [vmem:[#allocation5 + $0xe34] sm:$0xf]
    %v1094 = vld [vmem:[#allocation5 + $0xe38] sm:$0xf]
    %v1095 = vld [vmem:[#allocation5 + $0xe3c] sm:$0xf]
    %v1096 = vld [vmem:[#allocation5 + $0xe40] sm:$0xf]
    %v1097 = vld [vmem:[#allocation5 + $0xe44] sm:$0xf]
    %v1098 = vld [vmem:[#allocation5 + $0xe48] sm:$0xf]
    %v1099 = vld [vmem:[#allocation5 + $0xe4c] sm:$0xf]
    %v1100 = vld [vmem:[#allocation5 + $0xe50] sm:$0xf]
    %v1101 = vld [vmem:[#allocation5 + $0xe54] sm:$0xf]
    %v1102 = vld [vmem:[#allocation5 + $0xe58] sm:$0xf]
    %v1103 = vld [vmem:[#allocation5 + $0xe5c] sm:$0xf]
    %v1104 = vld [vmem:[#allocation5 + $0xe60] sm:$0xf]
    %v1105 = vld [vmem:[#allocation5 + $0xe64] sm:$0xf]
    %v1106 = vld [vmem:[#allocation5 + $0xe68] sm:$0xf]
    %v1107 = vld [vmem:[#allocation5 + $0xe6c] sm:$0xf]
    %v1108 = vld [vmem:[#allocation5 + $0xe70] sm:$0xf]
    %v1109 = vld [vmem:[#allocation5 + $0xe74] sm:$0xf]
    %v1110 = vld [vmem:[#allocation5 + $0xe78] sm:$0xf]
    %v1111 = vld [vmem:[#allocation5 + $0xe7c] sm:$0xf]
    %v1112 = vld [vmem:[#allocation5 + $0xe80] sm:$0xf]
    %v1113 = vld [vmem:[#allocation5 + $0xe84] sm:$0xf]
    %v1114 = vld [vmem:[#allocation5 + $0xe88] sm:$0xf]
    %v1115 = vld [vmem:[#allocation5 + $0xe8c] sm:$0xf]
    %v1116 = vld [vmem:[#allocation5 + $0xe90] sm:$0xf]
    %v1117 = vld [vmem:[#allocation5 + $0xe94] sm:$0xf]
    %v1118 = vld [vmem:[#allocation5 + $0xe98] sm:$0xf]
    %v1119 = vld [vmem:[#allocation5 + $0xe9c] sm:$0xf]
    %v1120 = vld [vmem:[#allocation5 + $0xea0] sm:$0xf]
    %v1121 = vld [vmem:[#allocation5 + $0xea4] sm:$0xf]
    %v1122 = vld [vmem:[#allocation5 + $0xea8] sm:$0xf]
    %v1123 = vld [vmem:[#allocation5 + $0xeac] sm:$0xf]
    %v1124 = vld [vmem:[#allocation5 + $0xeb0] sm:$0xf]
    %v1125 = vld [vmem:[#allocation5 + $0xeb4] sm:$0xf]
    %v1126 = vld [vmem:[#allocation5 + $0xeb8] sm:$0xf]
    %v1127 = vld [vmem:[#allocation5 + $0xebc] sm:$0xf]
    %v1128 = vld [vmem:[#allocation5 + $0xec0] sm:$0xf]
    %v1129 = vld [vmem:[#allocation5 + $0xec4] sm:$0xf]
    %v1130 = vld [vmem:[#allocation5 + $0xec8] sm:$0xf]
    %v1131 = vld [vmem:[#allocation5 + $0xecc] sm:$0xf]
    %v1132 = vld [vmem:[#allocation5 + $0xed0] sm:$0xf]
    %v1133 = vld [vmem:[#allocation5 + $0xed4] sm:$0xf]
    %v1134 = vld [vmem:[#allocation5 + $0xed8] sm:$0xf]
    %v1135 = vld [vmem:[#allocation5 + $0xedc] sm:$0xf]
    %v1136 = vld [vmem:[#allocation5 + $0xee0] sm:$0xf]
    %v1137 = vld [vmem:[#allocation5 + $0xee4] sm:$0xf]
    %v1138 = vld [vmem:[#allocation5 + $0xee8] sm:$0xf]
    %v1139 = vld [vmem:[#allocation5 + $0xeec] sm:$0xf]
    %v1140 = vld [vmem:[#allocation5 + $0xef0] sm:$0xf]
    %v1141 = vld [vmem:[#allocation5 + $0xef4] sm:$0xf]
    %v1142 = vld [vmem:[#allocation5 + $0xef8] sm:$0xf]
    %v1143 = vld [vmem:[#allocation5 + $0xefc] sm:$0xf]
    %v1144 = vld [vmem:[#allocation5 + $0xf00] sm:$0xf]
    %v1145 = vld [vmem:[#allocation5 + $0xf04] sm:$0xf]
    %v1146 = vld [vmem:[#allocation5 + $0xf08] sm:$0xf]
    %v1147 = vld [vmem:[#allocation5 + $0xf0c] sm:$0xf]
    %v1148 = vld [vmem:[#allocation5 + $0xf10] sm:$0xf]
    %v1149 = vld [vmem:[#allocation5 + $0xf14] sm:$0xf]
    %v1150 = vld [vmem:[#allocation5 + $0xf18] sm:$0xf]
    %v1151 = vld [vmem:[#allocation5 + $0xf1c] sm:$0xf]
    %v1152 = vld [vmem:[#allocation5 + $0xf20] sm:$0xf]
    %v1153 = vld [vmem:[#allocation5 + $0xf24] sm:$0xf]
    %v1154 = vld [vmem:[#allocation5 + $0xf28] sm:$0xf]
    %v1155 = vld [vmem:[#allocation5 + $0xf2c] sm:$0xf]
    %v1156 = vld [vmem:[#allocation5 + $0xf30] sm:$0xf]
    %v1157 = vld [vmem:[#allocation5 + $0xf34] sm:$0xf]
    %v1158 = vld [vmem:[#allocation5 + $0xf38] sm:$0xf]
    %v1159 = vld [vmem:[#allocation5 + $0xf3c] sm:$0xf]
    %v1160 = vld [vmem:[#allocation5 + $0xf40] sm:$0xf]
    %v1161 = vld [vmem:[#allocation5 + $0xf44] sm:$0xf]
    %v1162 = vld [vmem:[#allocation5 + $0xf48] sm:$0xf]
    %v1163 = vld [vmem:[#allocation5 + $0xf4c] sm:$0xf]
    %v1164 = vld [vmem:[#allocation5 + $0xf50] sm:$0xf]
    %v1165 = vld [vmem:[#allocation5 + $0xf54] sm:$0xf]
    %v1166 = vld [vmem:[#allocation5 + $0xf58] sm:$0xf]
    %v1167 = vld [vmem:[#allocation5 + $0xf5c] sm:$0xf]
    %v1168 = vld [vmem:[#allocation5 + $0xf60] sm:$0xf]
    %v1169 = vld [vmem:[#allocation5 + $0xf64] sm:$0xf]
    %v1170 = vld [vmem:[#allocation5 + $0xf68] sm:$0xf]
    %v1171 = vld [vmem:[#allocation5 + $0xf6c] sm:$0xf]
    %v1172 = vld [vmem:[#allocation5 + $0xf70] sm:$0xf]
    %v1173 = vld [vmem:[#allocation5 + $0xf74] sm:$0xf]
    %v1174 = vld [vmem:[#allocation5 + $0xf78] sm:$0xf]
    %v1175 = vld [vmem:[#allocation5 + $0xf7c] sm:$0xf]
    %v1176 = vld [vmem:[#allocation5 + $0xf80] sm:$0xf]
    %v1177 = vld [vmem:[#allocation5 + $0xf84] sm:$0xf]
    %v1178 = vld [vmem:[#allocation5 + $0xf88] sm:$0xf]
    %v1179 = vld [vmem:[#allocation5 + $0xf8c] sm:$0xf]
    %v1180 = vld [vmem:[#allocation5 + $0xf90] sm:$0xf]
    %v1181 = vld [vmem:[#allocation5 + $0xf94] sm:$0xf]
    %v1182 = vld [vmem:[#allocation5 + $0xf98] sm:$0xf]
    %v1183 = vld [vmem:[#allocation5 + $0xf9c] sm:$0xf]
    %v1184 = vld [vmem:[#allocation5 + $0xfa0] sm:$0xf]
    %v1185 = vld [vmem:[#allocation5 + $0xfa4] sm:$0xf]
    %v1186 = vld [vmem:[#allocation5 + $0xfa8] sm:$0xf]
    %v1187 = vld [vmem:[#allocation5 + $0xfac] sm:$0xf]
    %v1188 = vld [vmem:[#allocation5 + $0xfb0] sm:$0xf]
    %v1189 = vld [vmem:[#allocation5 + $0xfb4] sm:$0xf]
    %v1190 = vld [vmem:[#allocation5 + $0xfb8] sm:$0xf]
    %v1191 = vld [vmem:[#allocation5 + $0xfbc] sm:$0xf]
    %v1192 = vld [vmem:[#allocation5 + $0xfc0] sm:$0xf]
    %v1193 = vld [vmem:[#allocation5 + $0xfc4] sm:$0xf]
    %v1194 = vld [vmem:[#allocation5 + $0xfc8] sm:$0xf]
    %v1195 = vld [vmem:[#allocation5 + $0xfcc] sm:$0xf]
    %v1196 = vld [vmem:[#allocation5 + $0xfd0] sm:$0xf]
    %v1197 = vld [vmem:[#allocation5 + $0xfd4] sm:$0xf]
    %v1198 = vld [vmem:[#allocation5 + $0xfd8] sm:$0xf]
    %v1199 = vld [vmem:[#allocation5 + $0xfdc] sm:$0xf]
    %v1200 = vld [vmem:[#allocation5 + $0xfe0] sm:$0xf]
    %v1201 = vld [vmem:[#allocation5 + $0xfe4] sm:$0xf]
    %v1202 = vld [vmem:[#allocation5 + $0xfe8] sm:$0xf]
    %v1203 = vld [vmem:[#allocation5 + $0xfec] sm:$0xf]
    %v1204 = vld [vmem:[#allocation5 + $0xff0] sm:$0xf]
    %v1205 = vld [vmem:[#allocation5 + $0xff4] sm:$0xf]
    %v1206 = vld [vmem:[#allocation5 + $0xff8] sm:$0xf]
    %v1207 = vld [vmem:[#allocation5 + $0xffc] sm:$0xf]
    %v1208 = vld [vmem:[#allocation5 + $0x1000] sm:$0xf]
    %v1209 = vld [vmem:[#allocation5 + $0x1004] sm:$0xf]
    %v1210 = vld [vmem:[#allocation5 + $0x1008] sm:$0xf]
    %v1211 = vld [vmem:[#allocation5 + $0x100c] sm:$0xf]
    %v1212 = vld [vmem:[#allocation5 + $0x1010] sm:$0xf]
    %v1213 = vld [vmem:[#allocation5 + $0x1014] sm:$0xf]
    %v1214 = vld [vmem:[#allocation5 + $0x1018] sm:$0xf]
    %v1215 = vld [vmem:[#allocation5 + $0x101c] sm:$0xf]
    %v1216 = vld [vmem:[#allocation5 + $0x1020] sm:$0xf]
    %v1217 = vld [vmem:[#allocation5 + $0x1024] sm:$0xf]
    %v1218 = vld [vmem:[#allocation5 + $0x1028] sm:$0xf]
    %v1219 = vld [vmem:[#allocation5 + $0x102c] sm:$0xf]
    %v1220 = vld [vmem:[#allocation5 + $0x1030] sm:$0xf]
    %v1221 = vld [vmem:[#allocation5 + $0x1034] sm:$0xf]
    %v1222 = vld [vmem:[#allocation5 + $0x1038] sm:$0xf]
    %v1223 = vld [vmem:[#allocation5 + $0x103c] sm:$0xf]
    %v1224 = vld [vmem:[#allocation5 + $0x1040] sm:$0xf]
    %v1225 = vld [vmem:[#allocation5 + $0x1044] sm:$0xf]
    %v1226 = vld [vmem:[#allocation5 + $0x1048] sm:$0xf]
    %v1227 = vld [vmem:[#allocation5 + $0x104c] sm:$0xf]
    %v1228 = vld [vmem:[#allocation5 + $0x1050] sm:$0xf]
    %v1229 = vld [vmem:[#allocation5 + $0x1054] sm:$0xf]
    %v1230 = vld [vmem:[#allocation5 + $0x1058] sm:$0xf]
    %v1231 = vld [vmem:[#allocation5 + $0x105c] sm:$0xf]
    %v1232 = vld [vmem:[#allocation5 + $0x1060] sm:$0xf]
    %v1233 = vld [vmem:[#allocation5 + $0x1064] sm:$0xf]
    %v1234 = vld [vmem:[#allocation5 + $0x1068] sm:$0xf]
    %v1235 = vld [vmem:[#allocation5 + $0x106c] sm:$0xf]
    %v1236 = vld [vmem:[#allocation5 + $0x1070] sm:$0xf]
    %v1237 = vld [vmem:[#allocation5 + $0x1074] sm:$0xf]
    %v1238 = vld [vmem:[#allocation5 + $0x1078] sm:$0xf]
    %v1239 = vld [vmem:[#allocation5 + $0x107c] sm:$0xf]
    %v1240 = vld [vmem:[#allocation5 + $0x1080] sm:$0xf]
    %v1241 = vld [vmem:[#allocation5 + $0x1084] sm:$0xf]
    %v1242 = vld [vmem:[#allocation5 + $0x1088] sm:$0xf]
    %v1243 = vld [vmem:[#allocation5 + $0x108c] sm:$0xf]
    %v1244 = vld [vmem:[#allocation5 + $0x1090] sm:$0xf]
    %v1245 = vld [vmem:[#allocation5 + $0x1094] sm:$0xf]
    %v1246 = vld [vmem:[#allocation5 + $0x1098] sm:$0xf]
    %v1247 = vld [vmem:[#allocation5 + $0x109c] sm:$0xf]
    %v1248 = vld [vmem:[#allocation5 + $0x10a0] sm:$0xf]
    %v1249 = vld [vmem:[#allocation5 + $0x10a4] sm:$0xf]
    %v1250 = vld [vmem:[#allocation5 + $0x10a8] sm:$0xf]
    %v1251 = vld [vmem:[#allocation5 + $0x10ac] sm:$0xf]
    %v1252 = vld [vmem:[#allocation5 + $0x10b0] sm:$0xf]
    %v1253 = vld [vmem:[#allocation5 + $0x10b4] sm:$0xf]
    %v1254 = vld [vmem:[#allocation5 + $0x10b8] sm:$0xf]
    %v1255 = vld [vmem:[#allocation5 + $0x10bc] sm:$0xf]
    %v1256 = vld [vmem:[#allocation5 + $0x10c0] sm:$0xf]
    %v1257 = vld [vmem:[#allocation5 + $0x10c4] sm:$0xf]
    %v1258 = vld [vmem:[#allocation5 + $0x10c8] sm:$0xf]
    %v1259 = vld [vmem:[#allocation5 + $0x10cc] sm:$0xf]
    %v1260 = vld [vmem:[#allocation5 + $0x10d0] sm:$0xf]
    %v1261 = vld [vmem:[#allocation5 + $0x10d4] sm:$0xf]
    %v1262 = vld [vmem:[#allocation5 + $0x10d8] sm:$0xf]
    %v1263 = vld [vmem:[#allocation5 + $0x10dc] sm:$0xf]
    %v1264 = vld [vmem:[#allocation5 + $0x10e0] sm:$0xf]
    %v1265 = vld [vmem:[#allocation5 + $0x10e4] sm:$0xf]
    %v1266 = vld [vmem:[#allocation5 + $0x10e8] sm:$0xf]
    %v1267 = vld [vmem:[#allocation5 + $0x10ec] sm:$0xf]
    %v1268 = vld [vmem:[#allocation5 + $0x10f0] sm:$0xf]
    %v1269 = vld [vmem:[#allocation5 + $0x10f4] sm:$0xf]
    %v1270 = vld [vmem:[#allocation5 + $0x10f8] sm:$0xf]
    %v1271 = vld [vmem:[#allocation5 + $0x10fc] sm:$0xf]
    %v1272 = vld [vmem:[#allocation5 + $0x1100] sm:$0xf]
    %v1273 = vld [vmem:[#allocation5 + $0x1104] sm:$0xf]
    %v1274 = vld [vmem:[#allocation5 + $0x1108] sm:$0xf]
    %v1275 = vld [vmem:[#allocation5 + $0x110c] sm:$0xf]
    %v1276 = vld [vmem:[#allocation5 + $0x1110] sm:$0xf]
    %v1277 = vld [vmem:[#allocation5 + $0x1114] sm:$0xf]
    %v1278 = vld [vmem:[#allocation5 + $0x1118] sm:$0xf]
    %v1279 = vld [vmem:[#allocation5 + $0x111c] sm:$0xf]
    %v1280 = vld [vmem:[#allocation5 + $0x1120] sm:$0xf]
    %v1281 = vld [vmem:[#allocation5 + $0x1124] sm:$0xf]
    %v1282 = vld [vmem:[#allocation5 + $0x1128] sm:$0xf]
    %v1283 = vld [vmem:[#allocation5 + $0x112c] sm:$0xf]
    %v1284 = vld [vmem:[#allocation5 + $0x1130] sm:$0xf]
    %v1285 = vld [vmem:[#allocation5 + $0x1134] sm:$0xf]
    %v1286 = vld [vmem:[#allocation5 + $0x1138] sm:$0xf]
    %v1287 = vld [vmem:[#allocation5 + $0x113c] sm:$0xf]
    %v1288 = vld [vmem:[#allocation5 + $0x1140] sm:$0xf]
    %v1289 = vld [vmem:[#allocation5 + $0x1144] sm:$0xf]
    %v1290 = vld [vmem:[#allocation5 + $0x1148] sm:$0xf]
    %v1291 = vld [vmem:[#allocation5 + $0x114c] sm:$0xf]
    %v1292 = vld [vmem:[#allocation5 + $0x1150] sm:$0xf]
    %v1293 = vld [vmem:[#allocation5 + $0x1154] sm:$0xf]
    %v1294 = vld [vmem:[#allocation5 + $0x1158] sm:$0xf]
    %v1295 = vld [vmem:[#allocation5 + $0x115c] sm:$0xf]
    %v1296 = vld [vmem:[#allocation5 + $0x1160] sm:$0xf]
    %v1297 = vld [vmem:[#allocation5 + $0x1164] sm:$0xf]
    %v1298 = vld [vmem:[#allocation5 + $0x1168] sm:$0xf]
    %v1299 = vld [vmem:[#allocation5 + $0x116c] sm:$0xf]
    %v1300 = vld [vmem:[#allocation5 + $0x1170] sm:$0xf]
    %v1301 = vld [vmem:[#allocation5 + $0x1174] sm:$0xf]
    %v1302 = vld [vmem:[#allocation5 + $0x1178] sm:$0xf]
    %v1303 = vld [vmem:[#allocation5 + $0x117c] sm:$0xf]
    %v1304 = vld [vmem:[#allocation5 + $0x1180] sm:$0xf]
    %v1305 = vld [vmem:[#allocation5 + $0x1184] sm:$0xf]
    %v1306 = vld [vmem:[#allocation5 + $0x1188] sm:$0xf]
    %v1307 = vld [vmem:[#allocation5 + $0x118c] sm:$0xf]
    %v1308 = vld [vmem:[#allocation5 + $0x1190] sm:$0xf]
    %v1309 = vld [vmem:[#allocation5 + $0x1194] sm:$0xf]
    %v1310 = vld [vmem:[#allocation5 + $0x1198] sm:$0xf]
    %v1311 = vld [vmem:[#allocation5 + $0x119c] sm:$0xf]
    %v1312 = vld [vmem:[#allocation5 + $0x11a0] sm:$0xf]
    %v1313 = vld [vmem:[#allocation5 + $0x11a4] sm:$0xf]
    %v1314 = vld [vmem:[#allocation5 + $0x11a8] sm:$0xf]
    %v1315 = vld [vmem:[#allocation5 + $0x11ac] sm:$0xf]
    %v1316 = vld [vmem:[#allocation5 + $0x11b0] sm:$0xf]
    %v1317 = vld [vmem:[#allocation5 + $0x11b4] sm:$0xf]
    %v1318 = vld [vmem:[#allocation5 + $0x11b8] sm:$0xf]
    %v1319 = vld [vmem:[#allocation5 + $0x11bc] sm:$0xf]
    %v1320 = vld [vmem:[#allocation5 + $0x11c0] sm:$0xf]
    %v1321 = vld [vmem:[#allocation5 + $0x11c4] sm:$0xf]
    %v1322 = vld [vmem:[#allocation5 + $0x11c8] sm:$0xf]
    %v1323 = vld [vmem:[#allocation5 + $0x11cc] sm:$0xf]
    %v1324 = vld [vmem:[#allocation5 + $0x11d0] sm:$0xf]
    %v1325 = vld [vmem:[#allocation5 + $0x11d4] sm:$0xf]
    %v1326 = vld [vmem:[#allocation5 + $0x11d8] sm:$0xf]
    %v1327 = vld [vmem:[#allocation5 + $0x11dc] sm:$0xf]
    %v1328 = vld [vmem:[#allocation5 + $0x11e0] sm:$0xf]
    %v1329 = vld [vmem:[#allocation5 + $0x11e4] sm:$0xf]
    %v1330 = vld [vmem:[#allocation5 + $0x11e8] sm:$0xf]
    %v1331 = vld [vmem:[#allocation5 + $0x11ec] sm:$0xf]
    %v1332 = vld [vmem:[#allocation5 + $0x11f0] sm:$0xf]
    %v1333 = vld [vmem:[#allocation5 + $0x11f4] sm:$0xf]
    %v1334 = vld [vmem:[#allocation5 + $0x11f8] sm:$0xf]
    %v1335 = vld [vmem:[#allocation5 + $0x11fc] sm:$0xf]
    %v1336 = vld [vmem:[#allocation5 + $0x1200] sm:$0xf]
    %v1337 = vld [vmem:[#allocation5 + $0x1204] sm:$0xf]
    %v1338 = vld [vmem:[#allocation5 + $0x1208] sm:$0xf]
    %v1339 = vld [vmem:[#allocation5 + $0x120c] sm:$0xf]
    %v1340 = vld [vmem:[#allocation5 + $0x1210] sm:$0xf]
    %v1341 = vld [vmem:[#allocation5 + $0x1214] sm:$0xf]
    %v1342 = vld [vmem:[#allocation5 + $0x1218] sm:$0xf]
    %v1343 = vld [vmem:[#allocation5 + $0x121c] sm:$0xf]
    %v1344 = vld [vmem:[#allocation5 + $0x1220] sm:$0xf]
    %v1345 = vld [vmem:[#allocation5 + $0x1224] sm:$0xf]
    %v1346 = vld [vmem:[#allocation5 + $0x1228] sm:$0xf]
    %v1347 = vld [vmem:[#allocation5 + $0x122c] sm:$0xf]
    %v1348 = vld [vmem:[#allocation5 + $0x1230] sm:$0xf]
    %v1349 = vld [vmem:[#allocation5 + $0x1234] sm:$0xf]
    %v1350 = vld [vmem:[#allocation5 + $0x1238] sm:$0xf]
    %v1351 = vld [vmem:[#allocation5 + $0x123c] sm:$0xf]
    %v1352 = vld [vmem:[#allocation5 + $0x1240] sm:$0xf]
    %v1353 = vld [vmem:[#allocation5 + $0x1244] sm:$0xf]
    %v1354 = vld [vmem:[#allocation5 + $0x1248] sm:$0xf]
    %v1355 = vld [vmem:[#allocation5 + $0x124c] sm:$0xf]
    %v1356 = vld [vmem:[#allocation5 + $0x1250] sm:$0xf]
    %v1357 = vld [vmem:[#allocation5 + $0x1254] sm:$0xf]
    %v1358 = vld [vmem:[#allocation5 + $0x1258] sm:$0xf]
    %v1359 = vld [vmem:[#allocation5 + $0x125c] sm:$0xf]
    %v1360 = vld [vmem:[#allocation5 + $0x1260] sm:$0xf]
    %v1361 = vld [vmem:[#allocation5 + $0x1264] sm:$0xf]
    %v1362 = vld [vmem:[#allocation5 + $0x1268] sm:$0xf]
    %v1363 = vld [vmem:[#allocation5 + $0x126c] sm:$0xf]
    %v1364 = vld [vmem:[#allocation5 + $0x1270] sm:$0xf]
    %v1365 = vld [vmem:[#allocation5 + $0x1274] sm:$0xf]
    %v1366 = vld [vmem:[#allocation5 + $0x1278] sm:$0xf]
    %v1367 = vld [vmem:[#allocation5 + $0x127c] sm:$0xf]
    %v1368 = vld [vmem:[#allocation5 + $0x1280] sm:$0xf]
    %v1369 = vld [vmem:[#allocation5 + $0x1284] sm:$0xf]
    %v1370 = vld [vmem:[#allocation5 + $0x1288] sm:$0xf]
    %v1371 = vld [vmem:[#allocation5 + $0x128c] sm:$0xf]
    %v1372 = vld [vmem:[#allocation5 + $0x1290] sm:$0xf]
    %v1373 = vld [vmem:[#allocation5 + $0x1294] sm:$0xf]
    %v1374 = vld [vmem:[#allocation5 + $0x1298] sm:$0xf]
    %v1375 = vld [vmem:[#allocation5 + $0x129c] sm:$0xf]
    %v1376 = vld [vmem:[#allocation5 + $0x12a0] sm:$0xf]
    %v1377 = vld [vmem:[#allocation5 + $0x12a4] sm:$0xf]
    %v1378 = vld [vmem:[#allocation5 + $0x12a8] sm:$0xf]
    %v1379 = vld [vmem:[#allocation5 + $0x12ac] sm:$0xf]
    %v1380 = vld [vmem:[#allocation5 + $0x12b0] sm:$0xf]
    %v1381 = vld [vmem:[#allocation5 + $0x12b4] sm:$0xf]
    %v1382 = vld [vmem:[#allocation5 + $0x12b8] sm:$0xf]
    %v1383 = vld [vmem:[#allocation5 + $0x12bc] sm:$0xf]
    %v1384 = vld [vmem:[#allocation5 + $0x12c0] sm:$0xf]
    %v1385 = vld [vmem:[#allocation5 + $0x12c4] sm:$0xf]
    %v1386 = vld [vmem:[#allocation5 + $0x12c8] sm:$0xf]
    %v1387 = vld [vmem:[#allocation5 + $0x12cc] sm:$0xf]
    %v1388 = vld [vmem:[#allocation5 + $0x12d0] sm:$0xf]
    %v1389 = vld [vmem:[#allocation5 + $0x12d4] sm:$0xf]
    %v1390 = vld [vmem:[#allocation5 + $0x12d8] sm:$0xf]
    %v1391 = vld [vmem:[#allocation5 + $0x12dc] sm:$0xf]
    %v1392 = vld [vmem:[#allocation5 + $0x12e0] sm:$0xf]
    %v1393 = vld [vmem:[#allocation5 + $0x12e4] sm:$0xf]
    %v1394 = vld [vmem:[#allocation5 + $0x12e8] sm:$0xf]
    %v1395 = vld [vmem:[#allocation5 + $0x12ec] sm:$0xf]
    %v1396 = vld [vmem:[#allocation5 + $0x12f0] sm:$0xf]
    %v1397 = vld [vmem:[#allocation5 + $0x12f4] sm:$0xf]
    %v1398 = vld [vmem:[#allocation5 + $0x12f8] sm:$0xf]
    %v1399 = vld [vmem:[#allocation5 + $0x12fc] sm:$0xf]
    %v1400 = vld [vmem:[#allocation5 + $0x1300] sm:$0xf]
    %v1401 = vld [vmem:[#allocation5 + $0x1304] sm:$0xf]
    %v1402 = vld [vmem:[#allocation5 + $0x1308] sm:$0xf]
    %v1403 = vld [vmem:[#allocation5 + $0x130c] sm:$0xf]
    %v1404 = vld [vmem:[#allocation5 + $0x1310] sm:$0xf]
    %v1405 = vld [vmem:[#allocation5 + $0x1314] sm:$0xf]
    %v1406 = vld [vmem:[#allocation5 + $0x1318] sm:$0xf]
    %v1407 = vld [vmem:[#allocation5 + $0x131c] sm:$0xf]
    %v1408 = vld [vmem:[#allocation5 + $0x1320] sm:$0xf]
    %v1409 = vld [vmem:[#allocation5 + $0x1324] sm:$0xf]
    %v1410 = vld [vmem:[#allocation5 + $0x1328] sm:$0xf]
    %v1411 = vld [vmem:[#allocation5 + $0x132c] sm:$0xf]
    %v1412 = vld [vmem:[#allocation5 + $0x1330] sm:$0xf]
    %v1413 = vld [vmem:[#allocation5 + $0x1334] sm:$0xf]
    %v1414 = vld [vmem:[#allocation5 + $0x1338] sm:$0xf]
    %v1415 = vld [vmem:[#allocation5 + $0x133c] sm:$0xf]
    %v1416 = vld [vmem:[#allocation5 + $0x1340] sm:$0xf]
    %v1417 = vld [vmem:[#allocation5 + $0x1344] sm:$0xf]
    %v1418 = vld [vmem:[#allocation5 + $0x1348] sm:$0xf]
    %v1419 = vld [vmem:[#allocation5 + $0x134c] sm:$0xf]
    %v1420 = vld [vmem:[#allocation5 + $0x1350] sm:$0xf]
    %v1421 = vld [vmem:[#allocation5 + $0x1354] sm:$0xf]
    %v1422 = vld [vmem:[#allocation5 + $0x1358] sm:$0xf]
    %v1423 = vld [vmem:[#allocation5 + $0x135c] sm:$0xf]
    %v1424 = vld [vmem:[#allocation5 + $0x1360] sm:$0xf]
    %v1425 = vld [vmem:[#allocation5 + $0x1364] sm:$0xf]
    %v1426 = vld [vmem:[#allocation5 + $0x1368] sm:$0xf]
    %v1427 = vld [vmem:[#allocation5 + $0x136c] sm:$0xf]
    %v1428 = vld [vmem:[#allocation5 + $0x1370] sm:$0xf]
    %v1429 = vld [vmem:[#allocation5 + $0x1374] sm:$0xf]
    %v1430 = vld [vmem:[#allocation5 + $0x1378] sm:$0xf]
    %v1431 = vld [vmem:[#allocation5 + $0x137c] sm:$0xf]
    %v1432 = vld [vmem:[#allocation5 + $0x1380] sm:$0xf]
    %v1433 = vld [vmem:[#allocation5 + $0x1384] sm:$0xf]
    %v1434 = vld [vmem:[#allocation5 + $0x1388] sm:$0xf]
    %v1435 = vld [vmem:[#allocation5 + $0x138c] sm:$0xf]
    %v1436 = vld [vmem:[#allocation5 + $0x1390] sm:$0xf]
    %v1437 = vld [vmem:[#allocation5 + $0x1394] sm:$0xf]
    %v1438 = vld [vmem:[#allocation5 + $0x1398] sm:$0xf]
    %v1439 = vld [vmem:[#allocation5 + $0x139c] sm:$0xf]
    %v1440 = vld [vmem:[#allocation5 + $0x13a0] sm:$0xf]
    %v1441 = vld [vmem:[#allocation5 + $0x13a4] sm:$0xf]
    %v1442 = vld [vmem:[#allocation5 + $0x13a8] sm:$0xf]
    %v1443 = vld [vmem:[#allocation5 + $0x13ac] sm:$0xf]
    %v1444 = vld [vmem:[#allocation5 + $0x13b0] sm:$0xf]
    %v1445 = vld [vmem:[#allocation5 + $0x13b4] sm:$0xf]
    %v1446 = vld [vmem:[#allocation5 + $0x13b8] sm:$0xf]
    %v1447 = vld [vmem:[#allocation5 + $0x13bc] sm:$0xf]
    %v1448 = vld [vmem:[#allocation5 + $0x13c0] sm:$0xf]
    %v1449 = vld [vmem:[#allocation5 + $0x13c4] sm:$0xf]
    %v1450 = vld [vmem:[#allocation5 + $0x13c8] sm:$0xf]
    %v1451 = vld [vmem:[#allocation5 + $0x13cc] sm:$0xf]
    %v1452 = vld [vmem:[#allocation5 + $0x13d0] sm:$0xf]
    %v1453 = vld [vmem:[#allocation5 + $0x13d4] sm:$0xf]
    %v1454 = vld [vmem:[#allocation5 + $0x13d8] sm:$0xf]
    %v1455 = vld [vmem:[#allocation5 + $0x13dc] sm:$0xf]
    %v1456 = vld [vmem:[#allocation5 + $0x13e0] sm:$0xf]
    %v1457 = vld [vmem:[#allocation5 + $0x13e4] sm:$0xf]
    %v1458 = vld [vmem:[#allocation5 + $0x13e8] sm:$0xf]
    %v1459 = vld [vmem:[#allocation5 + $0x13ec] sm:$0xf]
    %v1460 = vld [vmem:[#allocation5 + $0x13f0] sm:$0xf]
    %v1461 = vld [vmem:[#allocation5 + $0x13f4] sm:$0xf]
    %v1462 = vld [vmem:[#allocation5 + $0x13f8] sm:$0xf]
    %v1463 = vld [vmem:[#allocation5 + $0x13fc] sm:$0xf]
    %v1464 = vld [vmem:[#allocation5 + $0x1400] sm:$0xf]
    %v1465 = vld [vmem:[#allocation5 + $0x1404] sm:$0xf]
    %v1466 = vld [vmem:[#allocation5 + $0x1408] sm:$0xf]
    %v1467 = vld [vmem:[#allocation5 + $0x140c] sm:$0xf]
    %v1468 = vld [vmem:[#allocation5 + $0x1410] sm:$0xf]
    %v1469 = vld [vmem:[#allocation5 + $0x1414] sm:$0xf]
    %v1470 = vld [vmem:[#allocation5 + $0x1418] sm:$0xf]
    %v1471 = vld [vmem:[#allocation5 + $0x141c] sm:$0xf]
    %v1472 = vld [vmem:[#allocation5 + $0x1420] sm:$0xf]
    %v1473 = vld [vmem:[#allocation5 + $0x1424] sm:$0xf]
    %v1474 = vld [vmem:[#allocation5 + $0x1428] sm:$0xf]
    %v1475 = vld [vmem:[#allocation5 + $0x142c] sm:$0xf]
    %v1476 = vld [vmem:[#allocation5 + $0x1430] sm:$0xf]
    %v1477 = vld [vmem:[#allocation5 + $0x1434] sm:$0xf]
    %v1478 = vld [vmem:[#allocation5 + $0x1438] sm:$0xf]
    %v1479 = vld [vmem:[#allocation5 + $0x143c] sm:$0xf]
    %v1480 = vld [vmem:[#allocation5 + $0x1440] sm:$0xf]
    %v1481 = vld [vmem:[#allocation5 + $0x1444] sm:$0xf]
    %v1482 = vld [vmem:[#allocation5 + $0x1448] sm:$0xf]
    %v1483 = vld [vmem:[#allocation5 + $0x144c] sm:$0xf]
    %v1484 = vld [vmem:[#allocation5 + $0x1450] sm:$0xf]
    %v1485 = vld [vmem:[#allocation5 + $0x1454] sm:$0xf]
    %v1486 = vld [vmem:[#allocation5 + $0x1458] sm:$0xf]
    %v1487 = vld [vmem:[#allocation5 + $0x145c] sm:$0xf]
    %v1488 = vld [vmem:[#allocation5 + $0x1460] sm:$0xf]
    %v1489 = vld [vmem:[#allocation5 + $0x1464] sm:$0xf]
    %v1490 = vld [vmem:[#allocation5 + $0x1468] sm:$0xf]
    %v1491 = vld [vmem:[#allocation5 + $0x146c] sm:$0xf]
    %v1492 = vld [vmem:[#allocation5 + $0x1470] sm:$0xf]
    %v1493 = vld [vmem:[#allocation5 + $0x1474] sm:$0xf]
    %v1494 = vld [vmem:[#allocation5 + $0x1478] sm:$0xf]
    %v1495 = vld [vmem:[#allocation5 + $0x147c] sm:$0xf]
    %v1496 = vld [vmem:[#allocation5 + $0x1480] sm:$0xf]
    %v1497 = vld [vmem:[#allocation5 + $0x1484] sm:$0xf]
    %v1498 = vld [vmem:[#allocation5 + $0x1488] sm:$0xf]
    %v1499 = vld [vmem:[#allocation5 + $0x148c] sm:$0xf]
    %v1500 = vld [vmem:[#allocation5 + $0x1490] sm:$0xf]
    %v1501 = vld [vmem:[#allocation5 + $0x1494] sm:$0xf]
    %v1502 = vld [vmem:[#allocation5 + $0x1498] sm:$0xf]
    %v1503 = vld [vmem:[#allocation5 + $0x149c] sm:$0xf]
    %v1504 = vld [vmem:[#allocation5 + $0x14a0] sm:$0xf]
    %v1505 = vld [vmem:[#allocation5 + $0x14a4] sm:$0xf]
    %v1506 = vld [vmem:[#allocation5 + $0x14a8] sm:$0xf]
    %v1507 = vld [vmem:[#allocation5 + $0x14ac] sm:$0xf]
    %v1508 = vld [vmem:[#allocation5 + $0x14b0] sm:$0xf]
    %v1509 = vld [vmem:[#allocation5 + $0x14b4] sm:$0xf]
    %v1510 = vld [vmem:[#allocation5 + $0x14b8] sm:$0xf]
    %v1511 = vld [vmem:[#allocation5 + $0x14bc] sm:$0xf]
    %v1512 = vld [vmem:[#allocation5 + $0x14c0] sm:$0xf]
    %v1513 = vld [vmem:[#allocation5 + $0x14c4] sm:$0xf]
    %v1514 = vld [vmem:[#allocation5 + $0x14c8] sm:$0xf]
    %v1515 = vld [vmem:[#allocation5 + $0x14cc] sm:$0xf]
    %v1516 = vld [vmem:[#allocation5 + $0x14d0] sm:$0xf]
    %v1517 = vld [vmem:[#allocation5 + $0x14d4] sm:$0xf]
    %v1518 = vld [vmem:[#allocation5 + $0x14d8] sm:$0xf]
    %v1519 = vld [vmem:[#allocation5 + $0x14dc] sm:$0xf]
    %v1520 = vld [vmem:[#allocation5 + $0x14e0] sm:$0xf]
    %v1521 = vld [vmem:[#allocation5 + $0x14e4] sm:$0xf]
    %v1522 = vld [vmem:[#allocation5 + $0x14e8] sm:$0xf]
    %v1523 = vld [vmem:[#allocation5 + $0x14ec] sm:$0xf]
    %v1524 = vld [vmem:[#allocation5 + $0x14f0] sm:$0xf]
    %v1525 = vld [vmem:[#allocation5 + $0x14f4] sm:$0xf]
    %v1526 = vld [vmem:[#allocation5 + $0x14f8] sm:$0xf]
    %v1527 = vld [vmem:[#allocation5 + $0x14fc] sm:$0xf]
    %v1528 = vld [vmem:[#allocation5 + $0x1500] sm:$0xf]
    %v1529 = vld [vmem:[#allocation5 + $0x1504] sm:$0xf]
    %v1530 = vld [vmem:[#allocation5 + $0x1508] sm:$0xf]
    %v1531 = vld [vmem:[#allocation5 + $0x150c] sm:$0xf]
    %v1532 = vld [vmem:[#allocation5 + $0x1510] sm:$0xf]
    %v1533 = vld [vmem:[#allocation5 + $0x1514] sm:$0xf]
    %v1534 = vld [vmem:[#allocation5 + $0x1518] sm:$0xf]
    %v1535 = vld [vmem:[#allocation5 + $0x151c] sm:$0xf]
    %v1536 = vld [vmem:[#allocation5 + $0x1520] sm:$0xf]
    %v1537 = vld [vmem:[#allocation5 + $0x1524] sm:$0xf]
    %v1538 = vld [vmem:[#allocation5 + $0x1528] sm:$0xf]
    %v1539 = vld [vmem:[#allocation5 + $0x152c] sm:$0xf]
    %v1540 = vld [vmem:[#allocation5 + $0x1530] sm:$0xf]
    %v1541 = vld [vmem:[#allocation5 + $0x1534] sm:$0xf]
    %v1542 = vld [vmem:[#allocation5 + $0x1538] sm:$0xf]
    %v1543 = vld [vmem:[#allocation5 + $0x153c] sm:$0xf]
    %v1544 = vld [vmem:[#allocation5 + $0x1540] sm:$0xf]
    %v1545 = vld [vmem:[#allocation5 + $0x1544] sm:$0xf]
    %v1546 = vld [vmem:[#allocation5 + $0x1548] sm:$0xf]
    %v1547 = vld [vmem:[#allocation5 + $0x154c] sm:$0xf]
    %v1548 = vld [vmem:[#allocation5 + $0x1550] sm:$0xf]
    %v1549 = vld [vmem:[#allocation5 + $0x1554] sm:$0xf]
    %v1550 = vld [vmem:[#allocation5 + $0x1558] sm:$0xf]
    %v1551 = vld [vmem:[#allocation5 + $0x155c] sm:$0xf]
    %v1552 = vld [vmem:[#allocation5 + $0x1560] sm:$0xf]
    %v1553 = vld [vmem:[#allocation5 + $0x1564] sm:$0xf]
    %v1554 = vld [vmem:[#allocation5 + $0x1568] sm:$0xf]
    %v1555 = vld [vmem:[#allocation5 + $0x156c] sm:$0xf]
    %v1556 = vld [vmem:[#allocation5 + $0x1570] sm:$0xf]
    %v1557 = vld [vmem:[#allocation5 + $0x1574] sm:$0xf]
    %v1558 = vld [vmem:[#allocation5 + $0x1578] sm:$0xf]
    %v1559 = vld [vmem:[#allocation5 + $0x157c] sm:$0xf]
    %v1560 = vld [vmem:[#allocation5 + $0x1580] sm:$0xf]
    %v1561 = vld [vmem:[#allocation5 + $0x1584] sm:$0xf]
    %v1562 = vld [vmem:[#allocation5 + $0x1588] sm:$0xf]
    %v1563 = vld [vmem:[#allocation5 + $0x158c] sm:$0xf]
    %v1564 = vld [vmem:[#allocation5 + $0x1590] sm:$0xf]
    %v1565 = vld [vmem:[#allocation5 + $0x1594] sm:$0xf]
    %v1566 = vld [vmem:[#allocation5 + $0x1598] sm:$0xf]
    %v1567 = vld [vmem:[#allocation5 + $0x159c] sm:$0xf]
    %v1568 = vld [vmem:[#allocation5 + $0x15a0] sm:$0xf]
    %v1569 = vld [vmem:[#allocation5 + $0x15a4] sm:$0xf]
    %v1570 = vld [vmem:[#allocation5 + $0x15a8] sm:$0xf]
    %v1571 = vld [vmem:[#allocation5 + $0x15ac] sm:$0xf]
    %v1572 = vld [vmem:[#allocation5 + $0x15b0] sm:$0xf]
    %v1573 = vld [vmem:[#allocation5 + $0x15b4] sm:$0xf]
    %v1574 = vld [vmem:[#allocation5 + $0x15b8] sm:$0xf]
    %v1575 = vld [vmem:[#allocation5 + $0x15bc] sm:$0xf]
    %v1576 = vld [vmem:[#allocation5 + $0x15c0] sm:$0xf]
    %v1577 = vld [vmem:[#allocation5 + $0x15c4] sm:$0xf]
    %v1578 = vld [vmem:[#allocation5 + $0x15c8] sm:$0xf]
    %v1579 = vld [vmem:[#allocation5 + $0x15cc] sm:$0xf]
    %v1580 = vld [vmem:[#allocation5 + $0x15d0] sm:$0xf]
    %v1581 = vld [vmem:[#allocation5 + $0x15d4] sm:$0xf]
    %v1582 = vld [vmem:[#allocation5 + $0x15d8] sm:$0xf]
    %v1583 = vld [vmem:[#allocation5 + $0x15dc] sm:$0xf]
    %v1584 = vld [vmem:[#allocation5 + $0x15e0] sm:$0xf]
    %v1585 = vld [vmem:[#allocation5 + $0x15e4] sm:$0xf]
    %v1586 = vld [vmem:[#allocation5 + $0x15e8] sm:$0xf]
    %v1587 = vld [vmem:[#allocation5 + $0x15ec] sm:$0xf]
    %v1588 = vld [vmem:[#allocation5 + $0x15f0] sm:$0xf]
    %v1589 = vld [vmem:[#allocation5 + $0x15f4] sm:$0xf]
    %v1590 = vld [vmem:[#allocation5 + $0x15f8] sm:$0xf]
    %v1591 = vld [vmem:[#allocation5 + $0x15fc] sm:$0xf]
    %v1592 = vld [vmem:[#allocation5 + $0x1600] sm:$0xf]
    %v1593 = vld [vmem:[#allocation5 + $0x1604] sm:$0xf]
    %v1594 = vld [vmem:[#allocation5 + $0x1608] sm:$0xf]
    %v1595 = vld [vmem:[#allocation5 + $0x160c] sm:$0xf]
    %v1596 = vld [vmem:[#allocation5 + $0x1610] sm:$0xf]
    %v1597 = vld [vmem:[#allocation5 + $0x1614] sm:$0xf]
    %v1598 = vld [vmem:[#allocation5 + $0x1618] sm:$0xf]
    %v1599 = vld [vmem:[#allocation5 + $0x161c] sm:$0xf]
    %v1600 = vld [vmem:[#allocation5 + $0x1620] sm:$0xf]
    %v1601 = vld [vmem:[#allocation5 + $0x1624] sm:$0xf]
    %v1602 = vld [vmem:[#allocation5 + $0x1628] sm:$0xf]
    %v1603 = vld [vmem:[#allocation5 + $0x162c] sm:$0xf]
    %v1604 = vld [vmem:[#allocation5 + $0x1630] sm:$0xf]
    %v1605 = vld [vmem:[#allocation5 + $0x1634] sm:$0xf]
    %v1606 = vld [vmem:[#allocation5 + $0x1638] sm:$0xf]
    %v1607 = vld [vmem:[#allocation5 + $0x163c] sm:$0xf]
    %v1608 = vld [vmem:[#allocation5 + $0x1640] sm:$0xf]
    %v1609 = vld [vmem:[#allocation5 + $0x1644] sm:$0xf]
    %v1610 = vld [vmem:[#allocation5 + $0x1648] sm:$0xf]
    %v1611 = vld [vmem:[#allocation5 + $0x164c] sm:$0xf]
    %v1612 = vld [vmem:[#allocation5 + $0x1650] sm:$0xf]
    %v1613 = vld [vmem:[#allocation5 + $0x1654] sm:$0xf]
    %v1614 = vld [vmem:[#allocation5 + $0x1658] sm:$0xf]
    %v1615 = vld [vmem:[#allocation5 + $0x165c] sm:$0xf]
    %v1616 = vld [vmem:[#allocation5 + $0x1660] sm:$0xf]
    %v1617 = vld [vmem:[#allocation5 + $0x1664] sm:$0xf]
    %v1618 = vld [vmem:[#allocation5 + $0x1668] sm:$0xf]
    %v1619 = vld [vmem:[#allocation5 + $0x166c] sm:$0xf]
    %v1620 = vld [vmem:[#allocation5 + $0x1670] sm:$0xf]
    %v1621 = vld [vmem:[#allocation5 + $0x1674] sm:$0xf]
    %v1622 = vld [vmem:[#allocation5 + $0x1678] sm:$0xf]
    %v1623 = vld [vmem:[#allocation5 + $0x167c] sm:$0xf]
    %v1624 = vld [vmem:[#allocation5 + $0x1680] sm:$0xf]
    %v1625 = vld [vmem:[#allocation5 + $0x1684] sm:$0xf]
    %v1626 = vld [vmem:[#allocation5 + $0x1688] sm:$0xf]
    %v1627 = vld [vmem:[#allocation5 + $0x168c] sm:$0xf]
    %v1628 = vld [vmem:[#allocation5 + $0x1690] sm:$0xf]
    %v1629 = vld [vmem:[#allocation5 + $0x1694] sm:$0xf]
    %v1630 = vld [vmem:[#allocation5 + $0x1698] sm:$0xf]
    %v1631 = vld [vmem:[#allocation5 + $0x169c] sm:$0xf]
    %v1632 = vld [vmem:[#allocation5 + $0x16a0] sm:$0xf]
    %v1633 = vld [vmem:[#allocation5 + $0x16a4] sm:$0xf]
    %v1634 = vld [vmem:[#allocation5 + $0x16a8] sm:$0xf]
    %v1635 = vld [vmem:[#allocation5 + $0x16ac] sm:$0xf]
    %v1636 = vld [vmem:[#allocation5 + $0x16b0] sm:$0xf]
    %v1637 = vld [vmem:[#allocation5 + $0x16b4] sm:$0xf]
    %v1638 = vld [vmem:[#allocation5 + $0x16b8] sm:$0xf]
    %v1639 = vld [vmem:[#allocation5 + $0x16bc] sm:$0xf]
    %v1640 = vld [vmem:[#allocation5 + $0x16c0] sm:$0xf]
    %v1641 = vld [vmem:[#allocation5 + $0x16c4] sm:$0xf]
    %v1642 = vld [vmem:[#allocation5 + $0x16c8] sm:$0xf]
    %v1643 = vld [vmem:[#allocation5 + $0x16cc] sm:$0xf]
    %v1644 = vld [vmem:[#allocation5 + $0x16d0] sm:$0xf]
    %v1645 = vld [vmem:[#allocation5 + $0x16d4] sm:$0xf]
    %v1646 = vld [vmem:[#allocation5 + $0x16d8] sm:$0xf]
    %v1647 = vld [vmem:[#allocation5 + $0x16dc] sm:$0xf]
    %v1648 = vld [vmem:[#allocation5 + $0x16e0] sm:$0xf]
    %v1649 = vld [vmem:[#allocation5 + $0x16e4] sm:$0xf]
    %v1650 = vld [vmem:[#allocation5 + $0x16e8] sm:$0xf]
    %v1651 = vld [vmem:[#allocation5 + $0x16ec] sm:$0xf]
    %v1652 = vld [vmem:[#allocation5 + $0x16f0] sm:$0xf]
    %v1653 = vld [vmem:[#allocation5 + $0x16f4] sm:$0xf]
    %v1654 = vld [vmem:[#allocation5 + $0x16f8] sm:$0xf]
    %v1655 = vld [vmem:[#allocation5 + $0x16fc] sm:$0xf]
    %v1656 = vld [vmem:[#allocation5 + $0x1700] sm:$0xf]
    %v1657 = vld [vmem:[#allocation5 + $0x1704] sm:$0xf]
    %v1658 = vld [vmem:[#allocation5 + $0x1708] sm:$0xf]
    %v1659 = vld [vmem:[#allocation5 + $0x170c] sm:$0xf]
    %v1660 = vld [vmem:[#allocation5 + $0x1710] sm:$0xf]
    %v1661 = vld [vmem:[#allocation5 + $0x1714] sm:$0xf]
    %v1662 = vld [vmem:[#allocation5 + $0x1718] sm:$0xf]
    %v1663 = vld [vmem:[#allocation5 + $0x171c] sm:$0xf]
    %v1664 = vld [vmem:[#allocation5 + $0x1720] sm:$0xf]
    %v1665 = vld [vmem:[#allocation5 + $0x1724] sm:$0xf]
    %v1666 = vld [vmem:[#allocation5 + $0x1728] sm:$0xf]
    %v1667 = vld [vmem:[#allocation5 + $0x172c] sm:$0xf]
    %v1668 = vld [vmem:[#allocation5 + $0x1730] sm:$0xf]
    %v1669 = vld [vmem:[#allocation5 + $0x1734] sm:$0xf]
    %v1670 = vld [vmem:[#allocation5 + $0x1738] sm:$0xf]
    %v1671 = vld [vmem:[#allocation5 + $0x173c] sm:$0xf]
    %v1672 = vld [vmem:[#allocation5 + $0x1740] sm:$0xf]
    %v1673 = vld [vmem:[#allocation5 + $0x1744] sm:$0xf]
    %v1674 = vld [vmem:[#allocation5 + $0x1748] sm:$0xf]
    %v1675 = vld [vmem:[#allocation5 + $0x174c] sm:$0xf]
    %v1676 = vld [vmem:[#allocation5 + $0x1750] sm:$0xf]
    %v1677 = vld [vmem:[#allocation5 + $0x1754] sm:$0xf]
    %v1678 = vld [vmem:[#allocation5 + $0x1758] sm:$0xf]
    %v1679 = vld [vmem:[#allocation5 + $0x175c] sm:$0xf]
    %v1680 = vld [vmem:[#allocation5 + $0x1760] sm:$0xf]
    %v1681 = vld [vmem:[#allocation5 + $0x1764] sm:$0xf]
    %v1682 = vld [vmem:[#allocation5 + $0x1768] sm:$0xf]
    %v1683 = vld [vmem:[#allocation5 + $0x176c] sm:$0xf]
    %v1684 = vld [vmem:[#allocation5 + $0x1770] sm:$0xf]
    %v1685 = vld [vmem:[#allocation5 + $0x1774] sm:$0xf]
    %v1686 = vld [vmem:[#allocation5 + $0x1778] sm:$0xf]
    %v1687 = vld [vmem:[#allocation5 + $0x177c] sm:$0xf]
    %v1688 = vld [vmem:[#allocation5 + $0x1780] sm:$0xf]
    %v1689 = vld [vmem:[#allocation5 + $0x1784] sm:$0xf]
    %v1690 = vld [vmem:[#allocation5 + $0x1788] sm:$0xf]
    %v1691 = vld [vmem:[#allocation5 + $0x178c] sm:$0xf]
    %v1692 = vld [vmem:[#allocation5 + $0x1790] sm:$0xf]
    %v1693 = vld [vmem:[#allocation5 + $0x1794] sm:$0xf]
    %v1694 = vld [vmem:[#allocation5 + $0x1798] sm:$0xf]
    %v1695 = vld [vmem:[#allocation5 + $0x179c] sm:$0xf]
    %v1696 = vld [vmem:[#allocation5 + $0x17a0] sm:$0xf]
    %v1697 = vld [vmem:[#allocation5 + $0x17a4] sm:$0xf]
    %v1698 = vld [vmem:[#allocation5 + $0x17a8] sm:$0xf]
    %v1699 = vld [vmem:[#allocation5 + $0x17ac] sm:$0xf]
    %v1700 = vld [vmem:[#allocation5 + $0x17b0] sm:$0xf]
    %v1701 = vld [vmem:[#allocation5 + $0x17b4] sm:$0xf]
    %v1702 = vld [vmem:[#allocation5 + $0x17b8] sm:$0xf]
    %v1703 = vld [vmem:[#allocation5 + $0x17bc] sm:$0xf]
    %v1704 = vld [vmem:[#allocation5 + $0x17c0] sm:$0xf]
    %v1705 = vld [vmem:[#allocation5 + $0x17c4] sm:$0xf]
    %v1706 = vld [vmem:[#allocation5 + $0x17c8] sm:$0xf]
    %v1707 = vld [vmem:[#allocation5 + $0x17cc] sm:$0xf]
    %v1708 = vld [vmem:[#allocation5 + $0x17d0] sm:$0xf]
    %v1709 = vld [vmem:[#allocation5 + $0x17d4] sm:$0xf]
    %v1710 = vld [vmem:[#allocation5 + $0x17d8] sm:$0xf]
    %v1711 = vld [vmem:[#allocation5 + $0x17dc] sm:$0xf]
    %v1712 = vld [vmem:[#allocation5 + $0x17e0] sm:$0xf]
    %v1713 = vld [vmem:[#allocation5 + $0x17e4] sm:$0xf]
    %v1714 = vld [vmem:[#allocation5 + $0x17e8] sm:$0xf]
    %v1715 = vld [vmem:[#allocation5 + $0x17ec] sm:$0xf]
    %v1716 = vld [vmem:[#allocation5 + $0x17f0] sm:$0xf]
    %v1717 = vld [vmem:[#allocation5 + $0x17f4] sm:$0xf]
    %v1718 = vld [vmem:[#allocation5 + $0x17f8] sm:$0xf]
    %v1719 = vld [vmem:[#allocation5 + $0x17fc] sm:$0xf]
    %v1720 = vld [vmem:[#allocation5 + $0x1800] sm:$0xf]
    %v1721 = vld [vmem:[#allocation5 + $0x1804] sm:$0xf]
    %v1722 = vld [vmem:[#allocation5 + $0x1808] sm:$0xf]
    %v1723 = vld [vmem:[#allocation5 + $0x180c] sm:$0xf]
    %v1724 = vld [vmem:[#allocation5 + $0x1810] sm:$0xf]
    %v1725 = vld [vmem:[#allocation5 + $0x1814] sm:$0xf]
    %v1726 = vld [vmem:[#allocation5 + $0x1818] sm:$0xf]
    %v1727 = vld [vmem:[#allocation5 + $0x181c] sm:$0xf]
    %v1728 = vld [vmem:[#allocation5 + $0x1820] sm:$0xf]
    %v1729 = vld [vmem:[#allocation5 + $0x1824] sm:$0xf]
    %v1730 = vld [vmem:[#allocation5 + $0x1828] sm:$0xf]
    %v1731 = vld [vmem:[#allocation5 + $0x182c] sm:$0xf]
    %v1732 = vld [vmem:[#allocation5 + $0x1830] sm:$0xf]
    %v1733 = vld [vmem:[#allocation5 + $0x1834] sm:$0xf]
    %v1734 = vld [vmem:[#allocation5 + $0x1838] sm:$0xf]
    %v1735 = vld [vmem:[#allocation5 + $0x183c] sm:$0xf]
    %v1736 = vld [vmem:[#allocation5 + $0x1840] sm:$0xf]
    %v1737 = vld [vmem:[#allocation5 + $0x1844] sm:$0xf]
    %v1738 = vld [vmem:[#allocation5 + $0x1848] sm:$0xf]
    %v1739 = vld [vmem:[#allocation5 + $0x184c] sm:$0xf]
    %v1740 = vld [vmem:[#allocation5 + $0x1850] sm:$0xf]
    %v1741 = vld [vmem:[#allocation5 + $0x1854] sm:$0xf]
    %v1742 = vld [vmem:[#allocation5 + $0x1858] sm:$0xf]
    %v1743 = vld [vmem:[#allocation5 + $0x185c] sm:$0xf]
    %v1744 = vld [vmem:[#allocation5 + $0x1860] sm:$0xf]
    %v1745 = vld [vmem:[#allocation5 + $0x1864] sm:$0xf]
    %v1746 = vld [vmem:[#allocation5 + $0x1868] sm:$0xf]
    %v1747 = vld [vmem:[#allocation5 + $0x186c] sm:$0xf]
    %v1748 = vld [vmem:[#allocation5 + $0x1870] sm:$0xf]
    %v1749 = vld [vmem:[#allocation5 + $0x1874] sm:$0xf]
    %v1750 = vld [vmem:[#allocation5 + $0x1878] sm:$0xf]
    %v1751 = vld [vmem:[#allocation5 + $0x187c] sm:$0xf]
    %v1752 = vld [vmem:[#allocation5 + $0x1880] sm:$0xf]
    %v1753 = vld [vmem:[#allocation5 + $0x1884] sm:$0xf]
    %v1754 = vld [vmem:[#allocation5 + $0x1888] sm:$0xf]
    %v1755 = vld [vmem:[#allocation5 + $0x188c] sm:$0xf]
    %v1756 = vld [vmem:[#allocation5 + $0x1890] sm:$0xf]
    %v1757 = vld [vmem:[#allocation5 + $0x1894] sm:$0xf]
    %v1758 = vld [vmem:[#allocation5 + $0x1898] sm:$0xf]
    %v1759 = vld [vmem:[#allocation5 + $0x189c] sm:$0xf]
    %v1760 = vld [vmem:[#allocation5 + $0x18a0] sm:$0xf]
    %v1761 = vld [vmem:[#allocation5 + $0x18a4] sm:$0xf]
    %v1762 = vld [vmem:[#allocation5 + $0x18a8] sm:$0xf]
    %v1763 = vld [vmem:[#allocation5 + $0x18ac] sm:$0xf]
    %v1764 = vld [vmem:[#allocation5 + $0x18b0] sm:$0xf]
    %v1765 = vld [vmem:[#allocation5 + $0x18b4] sm:$0xf]
    %v1766 = vld [vmem:[#allocation5 + $0x18b8] sm:$0xf]
    %v1767 = vld [vmem:[#allocation5 + $0x18bc] sm:$0xf]
    %v1768 = vld [vmem:[#allocation5 + $0x18c0] sm:$0xf]
    %v1769 = vld [vmem:[#allocation5 + $0x18c4] sm:$0xf]
    %v1770 = vld [vmem:[#allocation5 + $0x18c8] sm:$0xf]
    %v1771 = vld [vmem:[#allocation5 + $0x18cc] sm:$0xf]
    %v1772 = vld [vmem:[#allocation5 + $0x18d0] sm:$0xf]
    %v1773 = vld [vmem:[#allocation5 + $0x18d4] sm:$0xf]
    %v1774 = vld [vmem:[#allocation5 + $0x18d8] sm:$0xf]
    %v1775 = vld [vmem:[#allocation5 + $0x18dc] sm:$0xf]
    %v1776 = vld [vmem:[#allocation5 + $0x18e0] sm:$0xf]
    %v1777 = vld [vmem:[#allocation5 + $0x18e4] sm:$0xf]
    %v1778 = vld [vmem:[#allocation5 + $0x18e8] sm:$0xf]
    %v1779 = vld [vmem:[#allocation5 + $0x18ec] sm:$0xf]
    %v1780 = vld [vmem:[#allocation5 + $0x18f0] sm:$0xf]
    %v1781 = vld [vmem:[#allocation5 + $0x18f4] sm:$0xf]
    %v1782 = vld [vmem:[#allocation5 + $0x18f8] sm:$0xf]
    %v1783 = vld [vmem:[#allocation5 + $0x18fc] sm:$0xf]
    %v1784 = vld [vmem:[#allocation7] sm:$0x1]
    %v1786 = vperm.slane %v1784, 0
    %1789 = vst [vmem:[#allocation1] ss:$9 sm:$0xff] %v171
    %v1790 = vld [vmem:[#allocation1] sm:$0xff]
    %v1791 = vld [vmem:[#allocation1 + $0x9] sm:$0xff]
    %v1792 = vld [vmem:[#allocation1 + $0x12] sm:$0xff]
    %v1793 = vld [vmem:[#allocation1 + $0x1b] sm:$0xff]
    %v1794 = vld [vmem:[#allocation1 + $0x24] sm:$0xff]
    %v1795 = vld [vmem:[#allocation1 + $0x2d] sm:$0xff]
    %v1796 = vld [vmem:[#allocation1 + $0x36] sm:$0xff]
    %v1797 = vld [vmem:[#allocation1 + $0x3f] sm:$0xff]
    %1799 = vst [vmem:[#allocation1] ss:$9 sm:$0xff] %v172
    %v1800 = vld [vmem:[#allocation1] sm:$0xff]
    %v1801 = vld [vmem:[#allocation1 + $0x9] sm:$0xff]
    %v1802 = vld [vmem:[#allocation1 + $0x12] sm:$0xff]
    %v1803 = vld [vmem:[#allocation1 + $0x1b] sm:$0xff]
    %v1804 = vld [vmem:[#allocation1 + $0x24] sm:$0xff]
    %v1805 = vld [vmem:[#allocation1 + $0x2d] sm:$0xff]
    %v1806 = vld [vmem:[#allocation1 + $0x36] sm:$0xff]
    %v1807 = vld [vmem:[#allocation1 + $0x3f] sm:$0xff]
    %1809 = vst [vmem:[#allocation1] ss:$9 sm:$0xff] %v173
    %v1810 = vld [vmem:[#allocation1] sm:$0xff]
    %v1811 = vld [vmem:[#allocation1 + $0x9] sm:$0xff]
    %v1812 = vld [vmem:[#allocation1 + $0x12] sm:$0xff]
    %v1813 = vld [vmem:[#allocation1 + $0x1b] sm:$0xff]
    %v1814 = vld [vmem:[#allocation1 + $0x24] sm:$0xff]
    %v1815 = vld [vmem:[#allocation1 + $0x2d] sm:$0xff]
    %v1816 = vld [vmem:[#allocation1 + $0x36] sm:$0xff]
    %v1817 = vld [vmem:[#allocation1 + $0x3f] sm:$0xff]
    %1819 = vst [vmem:[#allocation1] ss:$9 sm:$0xff] %v174
    %v1820 = vld [vmem:[#allocation1] sm:$0xff]
    %v1821 = vld [vmem:[#allocation1 + $0x9] sm:$0xff]
    %v1822 = vld [vmem:[#allocation1 + $0x12] sm:$0xff]
    %v1823 = vld [vmem:[#allocation1 + $0x1b] sm:$0xff]
    %v1824 = vld [vmem:[#allocation1 + $0x24] sm:$0xff]
    %v1825 = vld [vmem:[#allocation1 + $0x2d] sm:$0xff]
    %v1826 = vld [vmem:[#allocation1 + $0x36] sm:$0xff]
    %v1827 = vld [vmem:[#allocation1 + $0x3f] sm:$0xff]
    %1829 = vst [vmem:[#allocation1] ss:$9 sm:$0xff] %v175
    %v1830 = vld [vmem:[#allocation1] sm:$0xff]
    %v1831 = vld [vmem:[#allocation1 + $0x9] sm:$0xff]
    %v1832 = vld [vmem:[#allocation1 + $0x12] sm:$0xff]
    %v1833 = vld [vmem:[#allocation1 + $0x1b] sm:$0xff]
    %v1834 = vld [vmem:[#allocation1 + $0x24] sm:$0xff]
    %v1835 = vld [vmem:[#allocation1 + $0x2d] sm:$0xff]
    %v1836 = vld [vmem:[#allocation1 + $0x36] sm:$0xff]
    %v1837 = vld [vmem:[#allocation1 + $0x3f] sm:$0xff]
    %1839 = vst [vmem:[#allocation1] ss:$9 sm:$0xff] %v176
    %v1840 = vld [vmem:[#allocation1] sm:$0xff]
    %v1841 = vld [vmem:[#allocation1 + $0x9] sm:$0xff]
    %v1842 = vld [vmem:[#allocation1 + $0x12] sm:$0xff]
    %v1843 = vld [vmem:[#allocation1 + $0x1b] sm:$0xff]
    %v1844 = vld [vmem:[#allocation1 + $0x24] sm:$0xff]
    %v1845 = vld [vmem:[#allocation1 + $0x2d] sm:$0xff]
    %v1846 = vld [vmem:[#allocation1 + $0x36] sm:$0xff]
    %v1847 = vld [vmem:[#allocation1 + $0x3f] sm:$0xff]
    %1849 = vst [vmem:[#allocation1] ss:$9 sm:$0xff] %v177
    %v1850 = vld [vmem:[#allocation1] sm:$0xff]
    %v1851 = vld [vmem:[#allocation1 + $0x9] sm:$0xff]
    %v1852 = vld [vmem:[#allocation1 + $0x12] sm:$0xff]
    %v1853 = vld [vmem:[#allocation1 + $0x1b] sm:$0xff]
    %v1854 = vld [vmem:[#allocation1 + $0x24] sm:$0xff]
    %v1855 = vld [vmem:[#allocation1 + $0x2d] sm:$0xff]
    %v1856 = vld [vmem:[#allocation1 + $0x36] sm:$0xff]
    %v1857 = vld [vmem:[#allocation1 + $0x3f] sm:$0xff]
    %1859 = vst [vmem:[#allocation1] ss:$9 sm:$0xff] %v178
    %v1860 = vld [vmem:[#allocation1] sm:$0xff]
    %v1861 = vld [vmem:[#allocation1 + $0x9] sm:$0xff]
    %v1862 = vld [vmem:[#allocation1 + $0x12] sm:$0xff]
    %v1863 = vld [vmem:[#allocation1 + $0x1b] sm:$0xff]
    %v1864 = vld [vmem:[#allocation1 + $0x24] sm:$0xff]
    %v1865 = vld [vmem:[#allocation1 + $0x2d] sm:$0xff]
    %v1866 = vld [vmem:[#allocation1 + $0x36] sm:$0xff]
    %v1867 = vld [vmem:[#allocation1 + $0x3f] sm:$0xff]
    %1869 = vst [vmem:[#allocation1] ss:$9 sm:$0xff] %v179
    %v1870 = vld [vmem:[#allocation1] sm:$0xff]
    %v1871 = vld [vmem:[#allocation1 + $0x9] sm:$0xff]
    %v1872 = vld [vmem:[#allocation1 + $0x12] sm:$0xff]
    %v1873 = vld [vmem:[#allocation1 + $0x1b] sm:$0xff]
    %v1874 = vld [vmem:[#allocation1 + $0x24] sm:$0xff]
    %v1875 = vld [vmem:[#allocation1 + $0x2d] sm:$0xff]
    %v1876 = vld [vmem:[#allocation1 + $0x36] sm:$0xff]
    %v1877 = vld [vmem:[#allocation1 + $0x3f] sm:$0xff]
    %1879 = vst [vmem:[#allocation1] ss:$9 sm:$0xff] %v180
    %v1880 = vld [vmem:[#allocation1] sm:$0xff]
    %v1881 = vld [vmem:[#allocation1 + $0x9] sm:$0xff]
    %v1882 = vld [vmem:[#allocation1 + $0x12] sm:$0xff]
    %v1883 = vld [vmem:[#allocation1 + $0x1b] sm:$0xff]
    %v1884 = vld [vmem:[#allocation1 + $0x24] sm:$0xff]
    %v1885 = vld [vmem:[#allocation1 + $0x2d] sm:$0xff]
    %v1886 = vld [vmem:[#allocation1 + $0x36] sm:$0xff]
    %v1887 = vld [vmem:[#allocation1 + $0x3f] sm:$0xff]
    %1889 = vst [vmem:[#allocation1] ss:$9 sm:$0xff] %v181
    %v1890 = vld [vmem:[#allocation1] sm:$0xff]
    %v1891 = vld [vmem:[#allocation1 + $0x9] sm:$0xff]
    %v1892 = vld [vmem:[#allocation1 + $0x12] sm:$0xff]
    %v1893 = vld [vmem:[#allocation1 + $0x1b] sm:$0xff]
    %v1894 = vld [vmem:[#allocation1 + $0x24] sm:$0xff]
    %v1895 = vld [vmem:[#allocation1 + $0x2d] sm:$0xff]
    %v1896 = vld [vmem:[#allocation1 + $0x36] sm:$0xff]
    %v1897 = vld [vmem:[#allocation1 + $0x3f] sm:$0xff]
    %1899 = vst [vmem:[#allocation1] ss:$9 sm:$0xff] %v182
    %v1900 = vld [vmem:[#allocation1] sm:$0xff]
    %v1901 = vld [vmem:[#allocation1 + $0x9] sm:$0xff]
    %v1902 = vld [vmem:[#allocation1 + $0x12] sm:$0xff]
    %v1903 = vld [vmem:[#allocation1 + $0x1b] sm:$0xff]
    %v1904 = vld [vmem:[#allocation1 + $0x24] sm:$0xff]
    %v1905 = vld [vmem:[#allocation1 + $0x2d] sm:$0xff]
    %v1906 = vld [vmem:[#allocation1 + $0x36] sm:$0xff]
    %v1907 = vld [vmem:[#allocation1 + $0x3f] sm:$0xff]
    %1909 = vst [vmem:[#allocation1] ss:$9 sm:$0xff] %v183
    %v1910 = vld [vmem:[#allocation1] sm:$0xff]
    %v1911 = vld [vmem:[#allocation1 + $0x9] sm:$0xff]
    %v1912 = vld [vmem:[#allocation1 + $0x12] sm:$0xff]
    %v1913 = vld [vmem:[#allocation1 + $0x1b] sm:$0xff]
    %v3614 = vunpack.c.l.b16 %v184
    %v3615 = vunpack.c.l.b16 %v185
    %v3616 = vunpack.c.l.b16 %v186
    %v3617 = vunpack.c.l.b16 %v187
    %v3618 = vunpack.c.l.b16 %v188
    %v3619 = vunpack.c.l.b16 %v189
    %v3620 = vunpack.c.l.b16 %v190
    %v3621 = vunpack.c.l.b16 %v191
    %v3622 = vunpack.c.l.b16 %v192
    %v3623 = vunpack.c.l.b16 %v193
    %v3624 = vunpack.c.l.b16 %v194
    %v3625 = vunpack.c.l.b16 %v195
    %v3626 = vunpack.c.l.b16 %v196
    %v3627 = vunpack.c.l.b16 %v197
    %v3628 = vunpack.c.l.b16 %v198
    %v3629 = vunpack.c.l.b16 %v199
    %v3630 = vunpack.c.l.b16 %v200
    %v3631 = vunpack.c.l.b16 %v201
    %v3632 = vunpack.c.l.b16 %v202
    %v3633 = vunpack.c.l.b16 %v203
    %v3634 = vunpack.c.l.b16 %v204
    %v3635 = vunpack.c.l.b16 %v205
    %v3636 = vunpack.c.l.b16 %v206
    %v3637 = vunpack.c.l.b16 %v207
    %v3638 = vunpack.c.l.b16 %v208
    %v3639 = vunpack.c.l.b16 %v209
    %v3640 = vunpack.c.l.b16 %v210
    %v3641 = vunpack.c.l.b16 %v211
    %v3642 = vunpack.c.l.b16 %v212
    %v3643 = vunpack.c.l.b16 %v213
    %v3644 = vunpack.c.l.b16 %v214
    %v3645 = vunpack.c.l.b16 %v215
    %v3646 = vunpack.c.l.b16 %v216
    %v3647 = vunpack.c.l.b16 %v217
    %v3648 = vunpack.c.l.b16 %v218
    %v3649 = vunpack.c.l.b16 %v219
    %v3650 = vunpack.c.l.b16 %v220
    %v3651 = vunpack.c.l.b16 %v221
    %v3652 = vunpack.c.l.b16 %v222
    %v3653 = vunpack.c.l.b16 %v223
    %v3654 = vunpack.c.l.b16 %v224
    %v3655 = vunpack.c.l.b16 %v225
    %v3656 = vunpack.c.l.b16 %v226
    %v3657 = vunpack.c.l.b16 %v227
    %v3658 = vunpack.c.l.b16 %v228
    %v3659 = vunpack.c.l.b16 %v229
    %v3660 = vunpack.c.l.b16 %v230
    %v3661 = vunpack.c.l.b16 %v231
    %v3662 = vunpack.c.l.b16 %v232
    %v3663 = vunpack.c.l.b16 %v233
    %v3664 = vunpack.c.l.b16 %v234
    %v3665 = vunpack.c.l.b16 %v235
    %v3666 = vunpack.c.l.b16 %v236
    %v3667 = vunpack.c.l.b16 %v237
    %v3668 = vunpack.c.l.b16 %v238
    %v3669 = vunpack.c.l.b16 %v239
    %v3670 = vunpack.c.l.b16 %v240
    %v3671 = vunpack.c.l.b16 %v241
    %v3672 = vunpack.c.l.b16 %v242
    %v3673 = vunpack.c.l.b16 %v243
    %v3674 = vunpack.c.l.b16 %v244
    %v3675 = vunpack.c.l.b16 %v245
    %v3676 = vunpack.c.l.b16 %v246
    %v3677 = vunpack.c.l.b16 %v247
    %v3678 = vunpack.c.l.b16 %v248
    %v3679 = vunpack.c.l.b16 %v249
    %v3680 = vunpack.c.l.b16 %v250
    %v3681 = vunpack.c.l.b16 %v251
    %v3682 = vunpack.c.l.b16 %v252
    %v3683 = vunpack.c.l.b16 %v253
    %v3684 = vunpack.c.l.b16 %v254
    %v3685 = vunpack.c.l.b16 %v255
    %v3686 = vunpack.c.l.b16 %v256
    %v3687 = vunpack.c.l.b16 %v257
    %v3688 = vunpack.c.l.b16 %v258
    %v3689 = vunpack.c.l.b16 %v259
    %v3690 = vunpack.c.l.b16 %v260
    %v3691 = vunpack.c.l.b16 %v261
    %v3692 = vunpack.c.l.b16 %v262
    %v3693 = vunpack.c.l.b16 %v263
    %v3694 = vunpack.c.l.b16 %v264
    %v3695 = vunpack.c.l.b16 %v265
    %v3696 = vunpack.c.l.b16 %v266
    %v3697 = vunpack.c.l.b16 %v267
    %v3698 = vunpack.c.l.b16 %v268
    %v3699 = vunpack.c.l.b16 %v269
    %v3700 = vunpack.c.l.b16 %v270
    %v3701 = vunpack.c.l.b16 %v271
    %v3702 = vunpack.c.l.b16 %v272
    %v3703 = vunpack.c.l.b16 %v273
    %v3704 = vunpack.c.l.b16 %v274
    %v3705 = vunpack.c.l.b16 %v275
    %v3706 = vunpack.c.l.b16 %v276
    %v3707 = vunpack.c.l.b16 %v277
    %v3708 = vunpack.c.l.b16 %v278
    %v3709 = vunpack.c.l.b16 %v279
    %v3710 = vunpack.c.l.b16 %v280
    %v3711 = vunpack.c.l.b16 %v281
    %v3712 = vunpack.c.l.b16 %v282
    %v3713 = vunpack.c.l.b16 %v283
    %v3714 = vunpack.c.l.b16 %v284
    %v3715 = vunpack.c.l.b16 %v285
    %v3716 = vunpack.c.l.b16 %v286
    %v3717 = vunpack.c.l.b16 %v287
    %v3718 = vunpack.c.l.b16 %v288
    %v3719 = vunpack.c.l.b16 %v289
    %v3720 = vunpack.c.l.b16 %v290
    %v3721 = vunpack.c.l.b16 %v291
    %v3722 = vunpack.c.l.b16 %v292
    %v3723 = vunpack.c.l.b16 %v293
    %v3724 = vunpack.c.l.b16 %v294
    %v3725 = vunpack.c.l.b16 %v295
    %v3726 = vunpack.c.l.b16 %v296
    %v3727 = vunpack.c.l.b16 %v297
    %v3728 = vunpack.c.l.b16 %v298
    %v3729 = vunpack.c.l.b16 %v299
    %v3730 = vunpack.c.l.b16 %v300
    %v3731 = vunpack.c.l.b16 %v301
    %v3732 = vunpack.c.l.b16 %v302
    %v3733 = vunpack.c.l.b16 %v303
    %v3734 = vunpack.c.l.b16 %v304
    %v3735 = vunpack.c.l.b16 %v305
    %v3736 = vunpack.c.l.b16 %v306
    %v3737 = vunpack.c.l.b16 %v307
    %v3738 = vunpack.c.l.b16 %v308
    %v3739 = vunpack.c.l.b16 %v309
    %v3740 = vunpack.c.l.b16 %v310
    %v3741 = vunpack.c.l.b16 %v311
    %v3742 = vunpack.c.l.b16 %v312
    %v3743 = vunpack.c.l.b16 %v313
    %v3744 = vunpack.c.l.b16 %v314
    %v3745 = vunpack.c.l.b16 %v315
    %v3746 = vunpack.c.l.b16 %v316
    %v3747 = vunpack.c.l.b16 %v317
    %v3748 = vunpack.c.l.b16 %v318
    %v3749 = vunpack.c.l.b16 %v319
    %v3750 = vunpack.c.l.b16 %v320
    %v3751 = vunpack.c.l.b16 %v321
    %v3752 = vunpack.c.l.b16 %v322
    %v3753 = vunpack.c.l.b16 %v323
    %v3754 = vunpack.c.l.b16 %v324
    %v3755 = vunpack.c.l.b16 %v325
    %v3756 = vunpack.c.l.b16 %v326
    %v3757 = vunpack.c.l.b16 %v327
    %v3758 = vunpack.c.l.b16 %v328
    %v3759 = vunpack.c.l.b16 %v329
    %v3760 = vunpack.c.l.b16 %v330
    %v3761 = vunpack.c.l.b16 %v331
    %v3762 = vunpack.c.l.b16 %v332
    %v3763 = vunpack.c.l.b16 %v333
    %v3764 = vunpack.c.l.b16 %v334
    %v3765 = vunpack.c.l.b16 %v335
    %v3766 = vunpack.c.l.b16 %v336
    %v3767 = vunpack.c.l.b16 %v337
    %v3768 = vunpack.c.l.b16 %v338
    %v3769 = vunpack.c.l.b16 %v339
    %v3770 = vunpack.c.l.b16 %v340
    %v3771 = vunpack.c.l.b16 %v341
    %v3772 = vunpack.c.l.b16 %v342
    %v3773 = vunpack.c.l.b16 %v343
    %v3774 = vunpack.c.l.b16 %v344
    %v3775 = vunpack.c.l.b16 %v345
    %v3776 = vunpack.c.l.b16 %v346
    %v3777 = vunpack.c.l.b16 %v347
    %v3778 = vunpack.c.l.b16 %v348
    %v3779 = vunpack.c.l.b16 %v349
    %v3780 = vunpack.c.l.b16 %v350
    %v3781 = vunpack.c.l.b16 %v351
    %v3782 = vunpack.c.l.b16 %v352
    %v3783 = vunpack.c.l.b16 %v353
    %v3784 = vunpack.c.l.b16 %v354
    %v3785 = vunpack.c.l.b16 %v355
    %v3786 = vunpack.c.l.b16 %v356
    %v3787 = vunpack.c.l.b16 %v357
    %v3788 = vunpack.c.l.b16 %v358
    %v3789 = vunpack.c.l.b16 %v359
    %v3790 = vunpack.c.l.b16 %v360
    %v3791 = vunpack.c.l.b16 %v361
    %v3792 = vunpack.c.l.b16 %v362
    %v3793 = vunpack.c.l.b16 %v363
    %v3794 = vunpack.c.l.b16 %v364
    %v3795 = vunpack.c.l.b16 %v365
    %v3796 = vunpack.c.l.b16 %v366
    %v3797 = vunpack.c.l.b16 %v367
    %v3798 = vunpack.c.l.b16 %v368
    %v3799 = vunpack.c.l.b16 %v369
    %v3800 = vunpack.c.l.b16 %v370
    %v3801 = vunpack.c.l.b16 %v371
    %v3802 = vunpack.c.l.b16 %v372
    %v3803 = vunpack.c.l.b16 %v373
    %v3804 = vunpack.c.l.b16 %v374
    %v3805 = vunpack.c.l.b16 %v375
    %v3806 = vunpack.c.l.b16 %v376
    %v3807 = vunpack.c.l.b16 %v377
    %v3808 = vunpack.c.l.b16 %v378
    %v3809 = vunpack.c.l.b16 %v379
    %v3810 = vunpack.c.l.b16 %v380
    %v3811 = vunpack.c.l.b16 %v381
    %v3812 = vunpack.c.l.b16 %v382
    %v3813 = vunpack.c.l.b16 %v383
    %v3814 = vunpack.c.l.b16 %v384
    %v3815 = vunpack.c.l.b16 %v385
    %v3816 = vunpack.c.l.b16 %v386
    %v3817 = vunpack.c.l.b16 %v387
    %v3818 = vunpack.c.l.b16 %v388
    %v3819 = vunpack.c.l.b16 %v389
    %v3820 = vunpack.c.l.b16 %v390
    %v3821 = vunpack.c.l.b16 %v391
    %v3822 = vunpack.c.l.b16 %v392
    %v3823 = vunpack.c.l.b16 %v393
    %v3824 = vunpack.c.l.b16 %v394
    %v3825 = vunpack.c.l.b16 %v395
    %v3826 = vunpack.c.l.b16 %v396
    %v3827 = vunpack.c.l.b16 %v397
    %v3828 = vunpack.c.l.b16 %v398
    %v3829 = vunpack.c.l.b16 %v399
    %v3830 = vunpack.c.l.b16 %v400
    %v3831 = vunpack.c.l.b16 %v401
    %v3832 = vunpack.c.l.b16 %v402
    %v3833 = vunpack.c.l.b16 %v403
    %v3834 = vunpack.c.l.b16 %v404
    %v3835 = vunpack.c.l.b16 %v405
    %v3836 = vunpack.c.l.b16 %v406
    %v3837 = vunpack.c.l.b16 %v407
    %v3838 = vunpack.c.l.b16 %v408
    %v3839 = vunpack.c.l.b16 %v409
    %v3840 = vunpack.c.l.b16 %v410
    %v3841 = vunpack.c.l.b16 %v411
    %v3842 = vunpack.c.l.b16 %v412
    %v3843 = vunpack.c.l.b16 %v413
    %v3844 = vunpack.c.l.b16 %v414
    %v3845 = vunpack.c.l.b16 %v415
    %v3846 = vunpack.c.l.b16 %v416
    %v3847 = vunpack.c.l.b16 %v417
    %v3848 = vunpack.c.l.b16 %v418
    %v3849 = vunpack.c.l.b16 %v419
    %v3850 = vunpack.c.l.b16 %v420
    %v3851 = vunpack.c.l.b16 %v421
    %v3852 = vunpack.c.l.b16 %v422
    %v3853 = vunpack.c.l.b16 %v423
    %v3854 = vunpack.c.l.b16 %v424
    %v3855 = vunpack.c.l.b16 %v425
    %v3856 = vunpack.c.l.b16 %v426
    %v3857 = vunpack.c.l.b16 %v427
    %v3858 = vunpack.c.l.b16 %v428
    %v3859 = vunpack.c.l.b16 %v429
    %v3860 = vunpack.c.l.b16 %v430
    %v3861 = vunpack.c.l.b16 %v431
    %v3862 = vunpack.c.l.b16 %v432
    %v3863 = vunpack.c.l.b16 %v433
    %v3864 = vunpack.c.l.b16 %v434
    %v3865 = vunpack.c.l.b16 %v435
    %v3866 = vunpack.c.l.b16 %v436
    %v3867 = vunpack.c.l.b16 %v437
    %v3868 = vunpack.c.l.b16 %v438
    %v3869 = vunpack.c.l.b16 %v439
    %v3870 = vunpack.c.l.b16 %v440
    %v3871 = vunpack.c.l.b16 %v441
    %v3872 = vunpack.c.l.b16 %v442
    %v3873 = vunpack.c.l.b16 %v443
    %v3874 = vunpack.c.l.b16 %v444
    %v3875 = vunpack.c.l.b16 %v445
    %v3876 = vunpack.c.l.b16 %v446
    %v3877 = vunpack.c.l.b16 %v447
    %v3878 = vunpack.c.l.b16 %v448
    %v3879 = vunpack.c.l.b16 %v449
    %v3880 = vunpack.c.l.b16 %v450
    %v3881 = vunpack.c.l.b16 %v451
    %v3882 = vunpack.c.l.b16 %v452
    %v3883 = vunpack.c.l.b16 %v453
    %v3884 = vunpack.c.l.b16 %v454
    %v3885 = vunpack.c.l.b16 %v455
    %v3886 = vunpack.c.l.b16 %v456
    %v3887 = vunpack.c.l.b16 %v457
    %v3888 = vunpack.c.l.b16 %v458
    %v3889 = vunpack.c.l.b16 %v459
    %v3890 = vunpack.c.l.b16 %v460
    %v3891 = vunpack.c.l.b16 %v461
    %v3892 = vunpack.c.l.b16 %v462
    %v3893 = vunpack.c.l.b16 %v463
    %v3894 = vunpack.c.l.b16 %v464
    %v3895 = vunpack.c.l.b16 %v465
    %v3896 = vunpack.c.l.b16 %v466
    %v3897 = vunpack.c.l.b16 %v467
    %v3898 = vunpack.c.l.b16 %v468
    %v3899 = vunpack.c.l.b16 %v469
    %v3900 = vunpack.c.l.b16 %v470
    %v3901 = vunpack.c.l.b16 %v471
    %v3902 = vunpack.c.l.b16 %v472
    %v3903 = vunpack.c.l.b16 %v473
    %v3904 = vunpack.c.l.b16 %v474
    %v3905 = vunpack.c.l.b16 %v475
    %v3906 = vunpack.c.l.b16 %v476
    %v3907 = vunpack.c.l.b16 %v477
    %v3908 = vunpack.c.l.b16 %v478
    %v3909 = vunpack.c.l.b16 %v479
    %v3910 = vunpack.c.l.b16 %v480
    %v3911 = vunpack.c.l.b16 %v481
    %v3912 = vunpack.c.l.b16 %v482
    %v3913 = vunpack.c.l.b16 %v483
    %v3914 = vunpack.c.l.b16 %v484
    %v3915 = vunpack.c.l.b16 %v485
    %v3916 = vunpack.c.l.b16 %v486
    %v3917 = vunpack.c.l.b16 %v487
    %v3918 = vunpack.c.l.b16 %v488
    %v3919 = vunpack.c.l.b16 %v489
    %v3920 = vunpack.c.l.b16 %v490
    %v3921 = vunpack.c.l.b16 %v491
    %v3922 = vunpack.c.l.b16 %v492
    %v3923 = vunpack.c.l.b16 %v493
    %v3924 = vunpack.c.l.b16 %v494
    %v3925 = vunpack.c.l.b16 %v495
    %v3926 = vunpack.c.l.b16 %v496
    %v3927 = vunpack.c.l.b16 %v497
    %v3928 = vunpack.c.l.b16 %v498
    %v3929 = vunpack.c.l.b16 %v499
    %v3930 = vunpack.c.l.b16 %v500
    %v3931 = vunpack.c.l.b16 %v501
    %v3932 = vunpack.c.l.b16 %v502
    %v3933 = vunpack.c.l.b16 %v503
    %v3934 = vunpack.c.l.b16 %v504
    %v3935 = vunpack.c.l.b16 %v505
    %v3936 = vunpack.c.l.b16 %v506
    %v3937 = vunpack.c.l.b16 %v507
    %v3938 = vunpack.c.l.b16 %v508
    %v3939 = vunpack.c.l.b16 %v509
    %v3940 = vunpack.c.l.b16 %v510
    %v3941 = vunpack.c.l.b16 %v511
    %v3942 = vunpack.c.l.b16 %v512
    %v3943 = vunpack.c.l.b16 %v513
    %v3944 = vunpack.c.l.b16 %v514
    %v3945 = vunpack.c.l.b16 %v515
    %v3946 = vunpack.c.l.b16 %v516
    %v3947 = vunpack.c.l.b16 %v517
    %v3948 = vunpack.c.l.b16 %v518
    %v3949 = vunpack.c.l.b16 %v519
    %v3950 = vunpack.c.l.b16 %v520
    %v3951 = vunpack.c.l.b16 %v521
    %v3952 = vunpack.c.l.b16 %v522
    %v3953 = vunpack.c.l.b16 %v523
    %v3954 = vunpack.c.l.b16 %v524
    %v3955 = vunpack.c.l.b16 %v525
    %v3956 = vunpack.c.l.b16 %v526
    %v3957 = vunpack.c.l.b16 %v527
    %v3958 = vunpack.c.l.b16 %v528
    %v3959 = vunpack.c.l.b16 %v529
    %v3960 = vunpack.c.l.b16 %v530
    %v3961 = vunpack.c.l.b16 %v531
    %v3962 = vunpack.c.l.b16 %v532
    %v3963 = vunpack.c.l.b16 %v533
    %v3964 = vunpack.c.l.b16 %v534
    %v3965 = vunpack.c.l.b16 %v535
    %v3966 = vunpack.c.l.b16 %v536
    %v3967 = vunpack.c.l.b16 %v537
    %v3968 = vunpack.c.l.b16 %v538
    %v3969 = vunpack.c.l.b16 %v539
    %v3970 = vunpack.c.l.b16 %v540
    %v3971 = vunpack.c.l.b16 %v541
    %v3972 = vunpack.c.l.b16 %v542
    %v3973 = vunpack.c.l.b16 %v543
    %v3974 = vunpack.c.l.b16 %v544
    %v3975 = vunpack.c.l.b16 %v545
    %v3976 = vunpack.c.l.b16 %v546
    %v3977 = vunpack.c.l.b16 %v547
    %v3978 = vunpack.c.l.b16 %v548
    %v3979 = vunpack.c.l.b16 %v549
    %v3980 = vunpack.c.l.b16 %v550
    %v3981 = vunpack.c.l.b16 %v551
    %v3982 = vunpack.c.l.b16 %v552
    %v3983 = vunpack.c.l.b16 %v553
    %v3984 = vunpack.c.l.b16 %v554
    %v3985 = vunpack.c.l.b16 %v555
    %v3986 = vunpack.c.l.b16 %v556
    %v3987 = vunpack.c.l.b16 %v557
    %v3988 = vunpack.c.l.b16 %v558
    %v3989 = vunpack.c.l.b16 %v559
    %v3990 = vunpack.c.l.b16 %v560
    %v3991 = vunpack.c.l.b16 %v561
    %v3992 = vunpack.c.l.b16 %v562
    %v3993 = vunpack.c.l.b16 %v563
    %v3994 = vunpack.c.l.b16 %v564
    %v3995 = vunpack.c.l.b16 %v565
    %v3996 = vunpack.c.l.b16 %v566
    %v3997 = vunpack.c.l.b16 %v567
    %v3998 = vunpack.c.l.b16 %v568
    %v3999 = vunpack.c.l.b16 %v569
    %v4000 = vunpack.c.l.b16 %v570
    %v4001 = vunpack.c.l.b16 %v571
    %v4002 = vunpack.c.l.b16 %v572
    %v4003 = vunpack.c.l.b16 %v573
    %v4004 = vunpack.c.l.b16 %v574
    %v4005 = vunpack.c.l.b16 %v575
    %v4006 = vunpack.c.l.b16 %v576
    %v4007 = vunpack.c.l.b16 %v577
    %v4008 = vunpack.c.l.b16 %v578
    %v4009 = vunpack.c.l.b16 %v579
    %v4010 = vunpack.c.l.b16 %v580
    %v4011 = vunpack.c.l.b16 %v581
    %v4012 = vunpack.c.l.b16 %v582
    %v4013 = vunpack.c.l.b16 %v583
    %v4014 = vunpack.c.l.b16 %v584
    %v4015 = vunpack.c.l.b16 %v585
    %v4016 = vunpack.c.l.b16 %v586
    %v4017 = vunpack.c.l.b16 %v587
    %v4018 = vunpack.c.l.b16 %v588
    %v4019 = vunpack.c.l.b16 %v589
    %v4020 = vunpack.c.l.b16 %v590
    %v4021 = vunpack.c.l.b16 %v591
    %v4022 = vunpack.c.l.b16 %v592
    %v4023 = vunpack.c.l.b16 %v593
    %v4024 = vunpack.c.l.b16 %v594
    %v4025 = vunpack.c.l.b16 %v595
    %v4026 = vunpack.c.l.b16 %v596
    %v4027 = vunpack.c.l.b16 %v597
    %v4028 = vunpack.c.l.b16 %v598
    %v4029 = vunpack.c.l.b16 %v599
    %v4030 = vunpack.c.l.b16 %v600
    %v4031 = vunpack.c.l.b16 %v601
    %v4032 = vunpack.c.l.b16 %v602
    %v4033 = vunpack.c.l.b16 %v603
    %v4034 = vunpack.c.l.b16 %v604
    %v4035 = vunpack.c.l.b16 %v605
    %v4036 = vunpack.c.l.b16 %v606
    %v4037 = vunpack.c.l.b16 %v607
    %v4038 = vunpack.c.l.b16 %v608
    %v4039 = vunpack.c.l.b16 %v609
    %v4040 = vunpack.c.l.b16 %v610
    %v4041 = vunpack.c.l.b16 %v611
    %v4042 = vunpack.c.l.b16 %v612
    %v4043 = vunpack.c.l.b16 %v613
    %v4044 = vunpack.c.l.b16 %v614
    %v4045 = vunpack.c.l.b16 %v615
    %v4046 = vunpack.c.l.b16 %v616
    %v4047 = vunpack.c.l.b16 %v617
    %v4048 = vunpack.c.l.b16 %v618
    %v4049 = vunpack.c.l.b16 %v619
    %v4050 = vunpack.c.l.b16 %v620
    %v4051 = vunpack.c.l.b16 %v621
    %v4052 = vunpack.c.l.b16 %v622
    %v4053 = vunpack.c.l.b16 %v623
    %v4054 = vunpack.c.l.b16 %v624
    %v4055 = vunpack.c.l.b16 %v625
    %v4056 = vunpack.c.l.b16 %v626
    %v4057 = vunpack.c.l.b16 %v627
    %v4058 = vunpack.c.l.b16 %v628
    %v4059 = vunpack.c.l.b16 %v629
    %v4060 = vunpack.c.l.b16 %v630
    %v4061 = vunpack.c.l.b16 %v631
    %v4062 = vunpack.c.l.b16 %v632
    %v4063 = vunpack.c.l.b16 %v633
    %v4064 = vunpack.c.l.b16 %v634
    %v4065 = vunpack.c.l.b16 %v635
    %v4066 = vunpack.c.l.b16 %v636
    %v4067 = vunpack.c.l.b16 %v637
    %v4068 = vunpack.c.l.b16 %v638
    %v4069 = vunpack.c.l.b16 %v639
    %v4070 = vunpack.c.l.b16 %v640
    %v4071 = vunpack.c.l.b16 %v641
    %v4072 = vunpack.c.l.b16 %v642
    %v4073 = vunpack.c.l.b16 %v643
    %v4074 = vunpack.c.l.b16 %v644
    %v4075 = vunpack.c.l.b16 %v645
    %v4076 = vunpack.c.l.b16 %v646
    %v4077 = vunpack.c.l.b16 %v647
    %v4078 = vunpack.c.l.b16 %v648
    %v4079 = vunpack.c.l.b16 %v649
    %v4080 = vunpack.c.l.b16 %v650
    %v4081 = vunpack.c.l.b16 %v651
    %v4082 = vunpack.c.l.b16 %v652
    %v4083 = vunpack.c.l.b16 %v653
    %v4084 = vunpack.c.l.b16 %v654
    %v4085 = vunpack.c.l.b16 %v655
    %v4086 = vunpack.c.l.b16 %v656
    %v4087 = vunpack.c.l.b16 %v657
    %v4088 = vunpack.c.l.b16 %v658
    %v4089 = vunpack.c.l.b16 %v659
    %v4090 = vunpack.c.l.b16 %v660
    %v4091 = vunpack.c.l.b16 %v661
    %v4092 = vunpack.c.l.b16 %v662
    %v4093 = vunpack.c.l.b16 %v663
    %v4094 = vunpack.c.l.b16 %v664
    %v4095 = vunpack.c.l.b16 %v665
    %v4096 = vunpack.c.l.b16 %v666
    %v4097 = vunpack.c.l.b16 %v667
    %v4098 = vunpack.c.l.b16 %v668
    %v4099 = vunpack.c.l.b16 %v669
    %v4100 = vunpack.c.l.b16 %v670
    %v4101 = vunpack.c.l.b16 %v671
    %v4102 = vunpack.c.l.b16 %v672
    %v4103 = vunpack.c.l.b16 %v673
    %v4104 = vunpack.c.l.b16 %v674
    %v4105 = vunpack.c.l.b16 %v675
    %v4106 = vunpack.c.l.b16 %v676
    %v4107 = vunpack.c.l.b16 %v677
    %v4108 = vunpack.c.l.b16 %v678
    %v4109 = vunpack.c.l.b16 %v679
    %v4110 = vunpack.c.l.b16 %v680
    %v4111 = vunpack.c.l.b16 %v681
    %v4112 = vunpack.c.l.b16 %v682
    %v4113 = vunpack.c.l.b16 %v683
    %v4114 = vunpack.c.l.b16 %v684
    %v4115 = vunpack.c.l.b16 %v685
    %v4116 = vunpack.c.l.b16 %v686
    %v4117 = vunpack.c.l.b16 %v687
    %v4118 = vunpack.c.l.b16 %v688
    %v4119 = vunpack.c.l.b16 %v689
    %v4120 = vunpack.c.l.b16 %v690
    %v4121 = vunpack.c.l.b16 %v691
    %v4122 = vunpack.c.l.b16 %v692
    %v4123 = vunpack.c.l.b16 %v693
    %v4124 = vunpack.c.l.b16 %v694
    %v4125 = vunpack.c.l.b16 %v695
    %v4126 = vunpack.c.l.b16 %v696
    %v4127 = vunpack.c.l.b16 %v697
    %v4128 = vunpack.c.l.b16 %v698
    %v4129 = vunpack.c.l.b16 %v699
    %v4130 = vunpack.c.l.b16 %v700
    %v4131 = vunpack.c.l.b16 %v701
    %v4132 = vunpack.c.l.b16 %v702
    %v4133 = vunpack.c.l.b16 %v703
    %v4134 = vunpack.c.l.b16 %v704
    %v4135 = vunpack.c.l.b16 %v705
    %v4136 = vunpack.c.l.b16 %v706
    %v4137 = vunpack.c.l.b16 %v707
    %v4138 = vunpack.c.l.b16 %v708
    %v4139 = vunpack.c.l.b16 %v709
    %v4140 = vunpack.c.l.b16 %v710
    %v4141 = vunpack.c.l.b16 %v711
    %v4142 = vunpack.c.l.b16 %v712
    %v4143 = vunpack.c.l.b16 %v713
    %v4144 = vunpack.c.l.b16 %v714
    %v4145 = vunpack.c.l.b16 %v715
    %v4146 = vunpack.c.l.b16 %v716
    %v4147 = vunpack.c.l.b16 %v717
    %v4148 = vunpack.c.l.b16 %v718
    %v4149 = vunpack.c.l.b16 %v719
    %v4150 = vunpack.c.l.b16 %v720
    %v4151 = vunpack.c.l.b16 %v721
    %v4152 = vunpack.c.l.b16 %v722
    %v4153 = vunpack.c.l.b16 %v723
    %v4154 = vunpack.c.l.b16 %v724
    %v4155 = vunpack.c.l.b16 %v725
    %v4156 = vunpack.c.l.b16 %v726
    %v4157 = vunpack.c.l.b16 %v727
    %v4158 = vunpack.c.l.b16 %v728
    %v4159 = vunpack.c.l.b16 %v729
    %v4160 = vunpack.c.l.b16 %v730
    %v4161 = vunpack.c.l.b16 %v731
    %v4162 = vunpack.c.l.b16 %v732
    %v4163 = vunpack.c.l.b16 %v733
    %v4164 = vunpack.c.l.b16 %v734
    %v4165 = vunpack.c.l.b16 %v735
    %v4166 = vunpack.c.l.b16 %v736
    %v4167 = vunpack.c.l.b16 %v737
    %v4168 = vunpack.c.l.b16 %v738
    %v4169 = vunpack.c.l.b16 %v739
    %v4170 = vunpack.c.l.b16 %v740
    %v4171 = vunpack.c.l.b16 %v741
    %v4172 = vunpack.c.l.b16 %v742
    %v4173 = vunpack.c.l.b16 %v743
    %v4174 = vunpack.c.l.b16 %v744
    %v4175 = vunpack.c.l.b16 %v745
    %v4176 = vunpack.c.l.b16 %v746
    %v4177 = vunpack.c.l.b16 %v747
    %v4178 = vunpack.c.l.b16 %v748
    %v4179 = vunpack.c.l.b16 %v749
    %v4180 = vunpack.c.l.b16 %v750
    %v4181 = vunpack.c.l.b16 %v751
    %v4182 = vunpack.c.l.b16 %v752
    %v4183 = vunpack.c.l.b16 %v753
    %v4184 = vunpack.c.l.b16 %v754
    %v4185 = vunpack.c.l.b16 %v755
    %v4186 = vunpack.c.l.b16 %v756
    %v4187 = vunpack.c.l.b16 %v757
    %v4188 = vunpack.c.l.b16 %v758
    %v4189 = vunpack.c.l.b16 %v759
    %v4190 = vunpack.c.l.b16 %v760
    %v4191 = vunpack.c.l.b16 %v761
    %v4192 = vunpack.c.l.b16 %v762
    %v4193 = vunpack.c.l.b16 %v763
    %v4194 = vunpack.c.l.b16 %v764
    %v4195 = vunpack.c.l.b16 %v765
    %v4196 = vunpack.c.l.b16 %v766
    %v4197 = vunpack.c.l.b16 %v767
    %v4198 = vunpack.c.l.b16 %v768
    %v4199 = vunpack.c.l.b16 %v769
    %v4200 = vunpack.c.l.b16 %v770
    %v4201 = vunpack.c.l.b16 %v771
    %v4202 = vunpack.c.l.b16 %v772
    %v4203 = vunpack.c.l.b16 %v773
    %v4204 = vunpack.c.l.b16 %v774
    %v4205 = vunpack.c.l.b16 %v775
    %v4206 = vunpack.c.l.b16 %v776
    %v4207 = vunpack.c.l.b16 %v777
    %v4208 = vunpack.c.l.b16 %v778
    %v4209 = vunpack.c.l.b16 %v779
    %v4210 = vunpack.c.l.b16 %v780
    %v4211 = vunpack.c.l.b16 %v781
    %v4212 = vunpack.c.l.b16 %v782
    %v4213 = vunpack.c.l.b16 %v783
    %v4214 = vunpack.c.l.b16 %v784
    %v4215 = vunpack.c.l.b16 %v785
    %v4216 = vunpack.c.l.b16 %v786
    %v4217 = vunpack.c.l.b16 %v787
    %v4218 = vunpack.c.l.b16 %v788
    %v4219 = vunpack.c.l.b16 %v789
    %v4220 = vunpack.c.l.b16 %v790
    %v4221 = vunpack.c.l.b16 %v791
    %v4222 = vunpack.c.l.b16 %v792
    %v4223 = vunpack.c.l.b16 %v793
    %v4224 = vunpack.c.l.b16 %v794
    %v4225 = vunpack.c.l.b16 %v795
    %v4226 = vunpack.c.l.b16 %v796
    %v4227 = vunpack.c.l.b16 %v797
    %v4228 = vunpack.c.l.b16 %v798
    %v4229 = vunpack.c.l.b16 %v799
    %v4230 = vunpack.c.l.b16 %v800
    %v4231 = vunpack.c.l.b16 %v801
    %v4232 = vunpack.c.l.b16 %v802
    %v4233 = vunpack.c.l.b16 %v803
    %v4234 = vunpack.c.l.b16 %v804
    %v4235 = vunpack.c.l.b16 %v805
    %v4236 = vunpack.c.l.b16 %v806
    %v4237 = vunpack.c.l.b16 %v807
    %v4238 = vunpack.c.l.b16 %v808
    %v4239 = vunpack.c.l.b16 %v809
    %v4240 = vunpack.c.l.b16 %v810
    %v4241 = vunpack.c.l.b16 %v811
    %v4242 = vunpack.c.l.b16 %v812
    %v4243 = vunpack.c.l.b16 %v813
    %v4244 = vunpack.c.l.b16 %v814
    %v4245 = vunpack.c.l.b16 %v815
    %v4246 = vunpack.c.l.b16 %v816
    %v4247 = vunpack.c.l.b16 %v817
    %v4248 = vunpack.c.l.b16 %v818
    %v4249 = vunpack.c.l.b16 %v819
    %v4250 = vunpack.c.l.b16 %v820
    %v4251 = vunpack.c.l.b16 %v821
    %v4252 = vunpack.c.l.b16 %v822
    %v4253 = vunpack.c.l.b16 %v823
    %v4254 = vunpack.c.l.b16 %v824
    %v4255 = vunpack.c.l.b16 %v825
    %v4256 = vunpack.c.l.b16 %v826
    %v4257 = vunpack.c.l.b16 %v827
    %v4258 = vunpack.c.l.b16 %v828
    %v4259 = vunpack.c.l.b16 %v829
    %v4260 = vunpack.c.l.b16 %v830
    %v4261 = vunpack.c.l.b16 %v831
    %v4262 = vunpack.c.l.b16 %v832
    %v4263 = vunpack.c.l.b16 %v833
    %v4264 = vunpack.c.l.b16 %v834
    %v4265 = vunpack.c.l.b16 %v835
    %v4266 = vunpack.c.l.b16 %v836
    %v4267 = vunpack.c.l.b16 %v837
    %v4268 = vunpack.c.l.b16 %v838
    %v4269 = vunpack.c.l.b16 %v839
    %v4270 = vunpack.c.l.b16 %v840
    %v4271 = vunpack.c.l.b16 %v841
    %v4272 = vunpack.c.l.b16 %v842
    %v4273 = vunpack.c.l.b16 %v843
    %v4274 = vunpack.c.l.b16 %v844
    %v4275 = vunpack.c.l.b16 %v845
    %v4276 = vunpack.c.l.b16 %v846
    %v4277 = vunpack.c.l.b16 %v847
    %v4278 = vunpack.c.l.b16 %v848
    %v4279 = vunpack.c.l.b16 %v849
    %v4280 = vunpack.c.l.b16 %v850
    %v4281 = vunpack.c.l.b16 %v851
    %v4282 = vunpack.c.l.b16 %v852
    %v4283 = vunpack.c.l.b16 %v853
    %v4284 = vunpack.c.l.b16 %v854
    %v4285 = vunpack.c.l.b16 %v855
    %v4286 = vunpack.c.l.b16 %v856
    %v4287 = vunpack.c.l.b16 %v857
    %v4288 = vunpack.c.l.b16 %v858
    %v4289 = vunpack.c.l.b16 %v859
    %v4290 = vunpack.c.l.b16 %v860
    %v4291 = vunpack.c.l.b16 %v861
    %v4292 = vunpack.c.l.b16 %v862
    %v4293 = vunpack.c.l.b16 %v863
    %v4294 = vunpack.c.l.b16 %v864
    %v4295 = vunpack.c.l.b16 %v865
    %v4296 = vunpack.c.l.b16 %v866
    %v4297 = vunpack.c.l.b16 %v867
    %v4298 = vunpack.c.l.b16 %v868
    %v4299 = vunpack.c.l.b16 %v869
    %v4300 = vunpack.c.l.b16 %v870
    %v4301 = vunpack.c.l.b16 %v871
    %v4302 = vunpack.c.l.b16 %v872
    %v4303 = vunpack.c.l.b16 %v873
    %v4304 = vunpack.c.l.b16 %v874
    %v4305 = vunpack.c.l.b16 %v875
    %v4306 = vunpack.c.l.b16 %v876
    %v4307 = vunpack.c.l.b16 %v877
    %v4308 = vunpack.c.l.b16 %v878
    %v4309 = vunpack.c.l.b16 %v879
    %v4310 = vunpack.c.l.b16 %v880
    %v4311 = vunpack.c.l.b16 %v881
    %v4312 = vunpack.c.l.b16 %v882
    %v4313 = vunpack.c.l.b16 %v883
    %v4314 = vunpack.c.l.b16 %v884
    %v4315 = vunpack.c.l.b16 %v885
    %v4316 = vunpack.c.l.b16 %v886
    %v4317 = vunpack.c.l.b16 %v887
    %v4318 = vunpack.c.l.b16 %v888
    %v4319 = vunpack.c.l.b16 %v889
    %v4320 = vunpack.c.l.b16 %v890
    %v4321 = vunpack.c.l.b16 %v891
    %v4322 = vunpack.c.l.b16 %v892
    %v4323 = vunpack.c.l.b16 %v893
    %v4324 = vunpack.c.l.b16 %v894
    %v4325 = vunpack.c.l.b16 %v895
    %v4326 = vunpack.c.l.b16 %v896
    %v4327 = vunpack.c.l.b16 %v897
    %v4328 = vunpack.c.l.b16 %v898
    %v4329 = vunpack.c.l.b16 %v899
    %v4330 = vunpack.c.l.b16 %v900
    %v4331 = vunpack.c.l.b16 %v901
    %v4332 = vunpack.c.l.b16 %v902
    %v4333 = vunpack.c.l.b16 %v903
    %v4334 = vunpack.c.l.b16 %v904
    %v4335 = vunpack.c.l.b16 %v905
    %v4336 = vunpack.c.l.b16 %v906
    %v4337 = vunpack.c.l.b16 %v907
    %v4338 = vunpack.c.l.b16 %v908
    %v4339 = vunpack.c.l.b16 %v909
    %v4340 = vunpack.c.l.b16 %v910
    %v4341 = vunpack.c.l.b16 %v911
    %v4342 = vunpack.c.l.b16 %v912
    %v4343 = vunpack.c.l.b16 %v913
    %v4344 = vunpack.c.l.b16 %v914
    %v4345 = vunpack.c.l.b16 %v915
    %v4346 = vunpack.c.l.b16 %v916
    %v4347 = vunpack.c.l.b16 %v917
    %v4348 = vunpack.c.l.b16 %v918
    %v4349 = vunpack.c.l.b16 %v919
    %v4350 = vunpack.c.l.b16 %v920
    %v4351 = vunpack.c.l.b16 %v921
    %v4352 = vunpack.c.l.b16 %v922
    %v4353 = vunpack.c.l.b16 %v923
    %v4354 = vunpack.c.l.b16 %v924
    %v4355 = vunpack.c.l.b16 %v925
    %v4356 = vunpack.c.l.b16 %v926
    %v4357 = vunpack.c.l.b16 %v927
    %v4358 = vunpack.c.l.b16 %v928
    %v4359 = vunpack.c.l.b16 %v929
    %v4360 = vunpack.c.l.b16 %v930
    %v4361 = vunpack.c.l.b16 %v931
    %v4362 = vunpack.c.l.b16 %v932
    %v4363 = vunpack.c.l.b16 %v933
    %v4364 = vunpack.c.l.b16 %v934
    %v4365 = vunpack.c.l.b16 %v935
    %v4366 = vunpack.c.l.b16 %v936
    %v4367 = vunpack.c.l.b16 %v937
    %v4368 = vunpack.c.l.b16 %v938
    %v4369 = vunpack.c.l.b16 %v939
    %v4370 = vunpack.c.l.b16 %v940
    %v4371 = vunpack.c.l.b16 %v941
    %v4372 = vunpack.c.l.b16 %v942
    %v4373 = vunpack.c.l.b16 %v943
    %v4374 = vunpack.c.l.b16 %v944
    %v4375 = vunpack.c.l.b16 %v945
    %v4376 = vunpack.c.l.b16 %v946
    %v4377 = vunpack.c.l.b16 %v947
    %v4378 = vunpack.c.l.b16 %v948
    %v4379 = vunpack.c.l.b16 %v949
    %v4380 = vunpack.c.l.b16 %v950
    %v4381 = vunpack.c.l.b16 %v951
    %v4382 = vunpack.c.l.b16 %v952
    %v4383 = vunpack.c.l.b16 %v953
    %v4384 = vunpack.c.l.b16 %v954
    %v4385 = vunpack.c.l.b16 %v955
    %v4386 = vunpack.c.l.b16 %v956
    %v4387 = vunpack.c.l.b16 %v957
    %v4388 = vunpack.c.l.b16 %v958
    %v4389 = vunpack.c.l.b16 %v959
    %v4390 = vunpack.c.l.b16 %v960
    %v4391 = vunpack.c.l.b16 %v961
    %v4392 = vunpack.c.l.b16 %v962
    %v4393 = vunpack.c.l.b16 %v963
    %v4394 = vunpack.c.l.b16 %v964
    %v4395 = vunpack.c.l.b16 %v965
    %v4396 = vunpack.c.l.b16 %v966
    %v4397 = vunpack.c.l.b16 %v967
    %v4398 = vunpack.c.l.b16 %v968
    %v4399 = vunpack.c.l.b16 %v969
    %v4400 = vunpack.c.l.b16 %v970
    %v4401 = vunpack.c.l.b16 %v971
    %v4402 = vunpack.c.l.b16 %v972
    %v4403 = vunpack.c.l.b16 %v973
    %v4404 = vunpack.c.l.b16 %v974
    %v4405 = vunpack.c.l.b16 %v975
    %v4406 = vunpack.c.l.b16 %v976
    %v4407 = vunpack.c.l.b16 %v977
    %v4408 = vunpack.c.l.b16 %v978
    %v4409 = vunpack.c.l.b16 %v979
    %v4410 = vunpack.c.l.b16 %v980
    %v4411 = vunpack.c.l.b16 %v981
    %v4412 = vunpack.c.l.b16 %v982
    %v4413 = vunpack.c.l.b16 %v983
    %v4414 = vunpack.c.l.b16 %v984
    %v4415 = vunpack.c.l.b16 %v985
    %v4416 = vunpack.c.l.b16 %v986
    %v4417 = vunpack.c.l.b16 %v987
    %v4418 = vunpack.c.l.b16 %v988
    %v4419 = vunpack.c.l.b16 %v989
    %v4420 = vunpack.c.l.b16 %v990
    %v4421 = vunpack.c.l.b16 %v991
    %v4422 = vunpack.c.l.b16 %v992
    %v4423 = vunpack.c.l.b16 %v993
    %v4424 = vunpack.c.l.b16 %v994
    %v4425 = vunpack.c.l.b16 %v995
    %v4426 = vunpack.c.l.b16 %v996
    %v4427 = vunpack.c.l.b16 %v997
    %v4428 = vunpack.c.l.b16 %v998
    %v4429 = vunpack.c.l.b16 %v999
    %v4430 = vunpack.c.l.b16 %v1000
    %v4431 = vunpack.c.l.b16 %v1001
    %v4432 = vunpack.c.l.b16 %v1002
    %v4433 = vunpack.c.l.b16 %v1003
    %v4434 = vunpack.c.l.b16 %v1004
    %v4435 = vunpack.c.l.b16 %v1005
    %v4436 = vunpack.c.l.b16 %v1006
    %v4437 = vunpack.c.l.b16 %v1007
    %v4438 = vunpack.c.l.b16 %v1008
    %v4439 = vunpack.c.l.b16 %v1009
    %v4440 = vunpack.c.l.b16 %v1010
    %v4441 = vunpack.c.l.b16 %v1011
    %v4442 = vunpack.c.l.b16 %v1012
    %v4443 = vunpack.c.l.b16 %v1013
    %v4444 = vunpack.c.l.b16 %v1014
    %v4445 = vunpack.c.l.b16 %v1015
    %v4446 = vunpack.c.l.b16 %v1016
    %v4447 = vunpack.c.l.b16 %v1017
    %v4448 = vunpack.c.l.b16 %v1018
    %v4449 = vunpack.c.l.b16 %v1019
    %v4450 = vunpack.c.l.b16 %v1020
    %v4451 = vunpack.c.l.b16 %v1021
    %v4452 = vunpack.c.l.b16 %v1022
    %v4453 = vunpack.c.l.b16 %v1023
    %v4454 = vunpack.c.l.b16 %v1024
    %v4455 = vunpack.c.l.b16 %v1025
    %v4456 = vunpack.c.l.b16 %v1026
    %v4457 = vunpack.c.l.b16 %v1027
    %v4458 = vunpack.c.l.b16 %v1028
    %v4459 = vunpack.c.l.b16 %v1029
    %v4460 = vunpack.c.l.b16 %v1030
    %v4461 = vunpack.c.l.b16 %v1031
    %v4462 = vunpack.c.l.b16 %v1032
    %v4463 = vunpack.c.l.b16 %v1033
    %v4464 = vunpack.c.l.b16 %v1034
    %v4465 = vunpack.c.l.b16 %v1035
    %v4466 = vunpack.c.l.b16 %v1036
    %v4467 = vunpack.c.l.b16 %v1037
    %v4468 = vunpack.c.l.b16 %v1038
    %v4469 = vunpack.c.l.b16 %v1039
    %v4470 = vunpack.c.l.b16 %v1040
    %v4471 = vunpack.c.l.b16 %v1041
    %v4472 = vunpack.c.l.b16 %v1042
    %v4473 = vunpack.c.l.b16 %v1043
    %v4474 = vunpack.c.l.b16 %v1044
    %v4475 = vunpack.c.l.b16 %v1045
    %v4476 = vunpack.c.l.b16 %v1046
    %v4477 = vunpack.c.l.b16 %v1047
    %v4478 = vunpack.c.l.b16 %v1048
    %v4479 = vunpack.c.l.b16 %v1049
    %v4480 = vunpack.c.l.b16 %v1050
    %v4481 = vunpack.c.l.b16 %v1051
    %v4482 = vunpack.c.l.b16 %v1052
    %v4483 = vunpack.c.l.b16 %v1053
    %v4484 = vunpack.c.l.b16 %v1054
    %v4485 = vunpack.c.l.b16 %v1055
    %v4486 = vunpack.c.l.b16 %v1056
    %v4487 = vunpack.c.l.b16 %v1057
    %v4488 = vunpack.c.l.b16 %v1058
    %v4489 = vunpack.c.l.b16 %v1059
    %v4490 = vunpack.c.l.b16 %v1060
    %v4491 = vunpack.c.l.b16 %v1061
    %v4492 = vunpack.c.l.b16 %v1062
    %v4493 = vunpack.c.l.b16 %v1063
    %v4494 = vunpack.c.l.b16 %v1064
    %v4495 = vunpack.c.l.b16 %v1065
    %v4496 = vunpack.c.l.b16 %v1066
    %v4497 = vunpack.c.l.b16 %v1067
    %v4498 = vunpack.c.l.b16 %v1068
    %v4499 = vunpack.c.l.b16 %v1069
    %v4500 = vunpack.c.l.b16 %v1070
    %v4501 = vunpack.c.l.b16 %v1071
    %v4502 = vunpack.c.l.b16 %v1072
    %v4503 = vunpack.c.l.b16 %v1073
    %v4504 = vunpack.c.l.b16 %v1074
    %v4505 = vunpack.c.l.b16 %v1075
    %v4506 = vunpack.c.l.b16 %v1076
    %v4507 = vunpack.c.l.b16 %v1077
    %v4508 = vunpack.c.l.b16 %v1078
    %v4509 = vunpack.c.l.b16 %v1079
    %v4510 = vunpack.c.l.b16 %v1080
    %v4511 = vunpack.c.l.b16 %v1081
    %v4512 = vunpack.c.l.b16 %v1082
    %v4513 = vunpack.c.l.b16 %v1083
    %v4514 = vunpack.c.l.b16 %v1084
    %v4515 = vunpack.c.l.b16 %v1085
    %v4516 = vunpack.c.l.b16 %v1086
    %v4517 = vunpack.c.l.b16 %v1087
    %v4518 = vunpack.c.l.b16 %v1088
    %v4519 = vunpack.c.l.b16 %v1089
    %v4520 = vunpack.c.l.b16 %v1090
    %v4521 = vunpack.c.l.b16 %v1091
    %v4522 = vunpack.c.l.b16 %v1092
    %v4523 = vunpack.c.l.b16 %v1093
    %v4524 = vunpack.c.l.b16 %v1094
    %v4525 = vunpack.c.l.b16 %v1095
    %v4526 = vunpack.c.l.b16 %v1096
    %v4527 = vunpack.c.l.b16 %v1097
    %v4528 = vunpack.c.l.b16 %v1098
    %v4529 = vunpack.c.l.b16 %v1099
    %v4530 = vunpack.c.l.b16 %v1100
    %v4531 = vunpack.c.l.b16 %v1101
    %v4532 = vunpack.c.l.b16 %v1102
    %v4533 = vunpack.c.l.b16 %v1103
    %v4534 = vunpack.c.l.b16 %v1104
    %v4535 = vunpack.c.l.b16 %v1105
    %v4536 = vunpack.c.l.b16 %v1106
    %v4537 = vunpack.c.l.b16 %v1107
    %v4538 = vunpack.c.l.b16 %v1108
    %v4539 = vunpack.c.l.b16 %v1109
    %v4540 = vunpack.c.l.b16 %v1110
    %v4541 = vunpack.c.l.b16 %v1111
    %v4542 = vunpack.c.l.b16 %v1112
    %v4543 = vunpack.c.l.b16 %v1113
    %v4544 = vunpack.c.l.b16 %v1114
    %v4545 = vunpack.c.l.b16 %v1115
    %v4546 = vunpack.c.l.b16 %v1116
    %v4547 = vunpack.c.l.b16 %v1117
    %v4548 = vunpack.c.l.b16 %v1118
    %v4549 = vunpack.c.l.b16 %v1119
    %v4550 = vunpack.c.l.b16 %v1120
    %v4551 = vunpack.c.l.b16 %v1121
    %v4552 = vunpack.c.l.b16 %v1122
    %v4553 = vunpack.c.l.b16 %v1123
    %v4554 = vunpack.c.l.b16 %v1124
    %v4555 = vunpack.c.l.b16 %v1125
    %v4556 = vunpack.c.l.b16 %v1126
    %v4557 = vunpack.c.l.b16 %v1127
    %v4558 = vunpack.c.l.b16 %v1128
    %v4559 = vunpack.c.l.b16 %v1129
    %v4560 = vunpack.c.l.b16 %v1130
    %v4561 = vunpack.c.l.b16 %v1131
    %v4562 = vunpack.c.l.b16 %v1132
    %v4563 = vunpack.c.l.b16 %v1133
    %v4564 = vunpack.c.l.b16 %v1134
    %v4565 = vunpack.c.l.b16 %v1135
    %v4566 = vunpack.c.l.b16 %v1136
    %v4567 = vunpack.c.l.b16 %v1137
    %v4568 = vunpack.c.l.b16 %v1138
    %v4569 = vunpack.c.l.b16 %v1139
    %v4570 = vunpack.c.l.b16 %v1140
    %v4571 = vunpack.c.l.b16 %v1141
    %v4572 = vunpack.c.l.b16 %v1142
    %v4573 = vunpack.c.l.b16 %v1143
    %v4574 = vunpack.c.l.b16 %v1144
    %v4575 = vunpack.c.l.b16 %v1145
    %v4576 = vunpack.c.l.b16 %v1146
    %v4577 = vunpack.c.l.b16 %v1147
    %v4578 = vunpack.c.l.b16 %v1148
    %v4579 = vunpack.c.l.b16 %v1149
    %v4580 = vunpack.c.l.b16 %v1150
    %v4581 = vunpack.c.l.b16 %v1151
    %v4582 = vunpack.c.l.b16 %v1152
    %v4583 = vunpack.c.l.b16 %v1153
    %v4584 = vunpack.c.l.b16 %v1154
    %v4585 = vunpack.c.l.b16 %v1155
    %v4586 = vunpack.c.l.b16 %v1156
    %v4587 = vunpack.c.l.b16 %v1157
    %v4588 = vunpack.c.l.b16 %v1158
    %v4589 = vunpack.c.l.b16 %v1159
    %v4590 = vunpack.c.l.b16 %v1160
    %v4591 = vunpack.c.l.b16 %v1161
    %v4592 = vunpack.c.l.b16 %v1162
    %v4593 = vunpack.c.l.b16 %v1163
    %v4594 = vunpack.c.l.b16 %v1164
    %v4595 = vunpack.c.l.b16 %v1165
    %v4596 = vunpack.c.l.b16 %v1166
    %v4597 = vunpack.c.l.b16 %v1167
    %v4598 = vunpack.c.l.b16 %v1168
    %v4599 = vunpack.c.l.b16 %v1169
    %v4600 = vunpack.c.l.b16 %v1170
    %v4601 = vunpack.c.l.b16 %v1171
    %v4602 = vunpack.c.l.b16 %v1172
    %v4603 = vunpack.c.l.b16 %v1173
    %v4604 = vunpack.c.l.b16 %v1174
    %v4605 = vunpack.c.l.b16 %v1175
    %v4606 = vunpack.c.l.b16 %v1176
    %v4607 = vunpack.c.l.b16 %v1177
    %v4608 = vunpack.c.l.b16 %v1178
    %v4609 = vunpack.c.l.b16 %v1179
    %v4610 = vunpack.c.l.b16 %v1180
    %v4611 = vunpack.c.l.b16 %v1181
    %v4612 = vunpack.c.l.b16 %v1182
    %v4613 = vunpack.c.l.b16 %v1183
    %v4614 = vunpack.c.l.b16 %v1184
    %v4615 = vunpack.c.l.b16 %v1185
    %v4616 = vunpack.c.l.b16 %v1186
    %v4617 = vunpack.c.l.b16 %v1187
    %v4618 = vunpack.c.l.b16 %v1188
    %v4619 = vunpack.c.l.b16 %v1189
    %v4620 = vunpack.c.l.b16 %v1190
    %v4621 = vunpack.c.l.b16 %v1191
    %v4622 = vunpack.c.l.b16 %v1192
    %v4623 = vunpack.c.l.b16 %v1193
    %v4624 = vunpack.c.l.b16 %v1194
    %v4625 = vunpack.c.l.b16 %v1195
    %v4626 = vunpack.c.l.b16 %v1196
    %v4627 = vunpack.c.l.b16 %v1197
    %v4628 = vunpack.c.l.b16 %v1198
    %v4629 = vunpack.c.l.b16 %v1199
    %v4630 = vunpack.c.l.b16 %v1200
    %v4631 = vunpack.c.l.b16 %v1201
    %v4632 = vunpack.c.l.b16 %v1202
    %v4633 = vunpack.c.l.b16 %v1203
    %v4634 = vunpack.c.l.b16 %v1204
    %v4635 = vunpack.c.l.b16 %v1205
    %v4636 = vunpack.c.l.b16 %v1206
    %v4637 = vunpack.c.l.b16 %v1207
    %v4638 = vunpack.c.l.b16 %v1208
    %v4639 = vunpack.c.l.b16 %v1209
    %v4640 = vunpack.c.l.b16 %v1210
    %v4641 = vunpack.c.l.b16 %v1211
    %v4642 = vunpack.c.l.b16 %v1212
    %v4643 = vunpack.c.l.b16 %v1213
    %v4644 = vunpack.c.l.b16 %v1214
    %v4645 = vunpack.c.l.b16 %v1215
    %v4646 = vunpack.c.l.b16 %v1216
    %v4647 = vunpack.c.l.b16 %v1217
    %v4648 = vunpack.c.l.b16 %v1218
    %v4649 = vunpack.c.l.b16 %v1219
    %v4650 = vunpack.c.l.b16 %v1220
    %v4651 = vunpack.c.l.b16 %v1221
    %v4652 = vunpack.c.l.b16 %v1222
    %v4653 = vunpack.c.l.b16 %v1223
    %v4654 = vunpack.c.l.b16 %v1224
    %v4655 = vunpack.c.l.b16 %v1225
    %v4656 = vunpack.c.l.b16 %v1226
    %v4657 = vunpack.c.l.b16 %v1227
    %v4658 = vunpack.c.l.b16 %v1228
    %v4659 = vunpack.c.l.b16 %v1229
    %v4660 = vunpack.c.l.b16 %v1230
    %v4661 = vunpack.c.l.b16 %v1231
    %v4662 = vunpack.c.l.b16 %v1232
    %v4663 = vunpack.c.l.b16 %v1233
    %v4664 = vunpack.c.l.b16 %v1234
    %v4665 = vunpack.c.l.b16 %v1235
    %v4666 = vunpack.c.l.b16 %v1236
    %v4667 = vunpack.c.l.b16 %v1237
    %v4668 = vunpack.c.l.b16 %v1238
    %v4669 = vunpack.c.l.b16 %v1239
    %v4670 = vunpack.c.l.b16 %v1240
    %v4671 = vunpack.c.l.b16 %v1241
    %v4672 = vunpack.c.l.b16 %v1242
    %v4673 = vunpack.c.l.b16 %v1243
    %v4674 = vunpack.c.l.b16 %v1244
    %v4675 = vunpack.c.l.b16 %v1245
    %v4676 = vunpack.c.l.b16 %v1246
    %v4677 = vunpack.c.l.b16 %v1247
    %v4678 = vunpack.c.l.b16 %v1248
    %v4679 = vunpack.c.l.b16 %v1249
    %v4680 = vunpack.c.l.b16 %v1250
    %v4681 = vunpack.c.l.b16 %v1251
    %v4682 = vunpack.c.l.b16 %v1252
    %v4683 = vunpack.c.l.b16 %v1253
    %v4684 = vunpack.c.l.b16 %v1254
    %v4685 = vunpack.c.l.b16 %v1255
    %v4686 = vunpack.c.l.b16 %v1256
    %v4687 = vunpack.c.l.b16 %v1257
    %v4688 = vunpack.c.l.b16 %v1258
    %v4689 = vunpack.c.l.b16 %v1259
    %v4690 = vunpack.c.l.b16 %v1260
    %v4691 = vunpack.c.l.b16 %v1261
    %v4692 = vunpack.c.l.b16 %v1262
    %v4693 = vunpack.c.l.b16 %v1263
    %v4694 = vunpack.c.l.b16 %v1264
    %v4695 = vunpack.c.l.b16 %v1265
    %v4696 = vunpack.c.l.b16 %v1266
    %v4697 = vunpack.c.l.b16 %v1267
    %v4698 = vunpack.c.l.b16 %v1268
    %v4699 = vunpack.c.l.b16 %v1269
    %v4700 = vunpack.c.l.b16 %v1270
    %v4701 = vunpack.c.l.b16 %v1271
    %v4702 = vunpack.c.l.b16 %v1272
    %v4703 = vunpack.c.l.b16 %v1273
    %v4704 = vunpack.c.l.b16 %v1274
    %v4705 = vunpack.c.l.b16 %v1275
    %v4706 = vunpack.c.l.b16 %v1276
    %v4707 = vunpack.c.l.b16 %v1277
    %v4708 = vunpack.c.l.b16 %v1278
    %v4709 = vunpack.c.l.b16 %v1279
    %v4710 = vunpack.c.l.b16 %v1280
    %v4711 = vunpack.c.l.b16 %v1281
    %v4712 = vunpack.c.l.b16 %v1282
    %v4713 = vunpack.c.l.b16 %v1283
    %v4714 = vunpack.c.l.b16 %v1284
    %v4715 = vunpack.c.l.b16 %v1285
    %v4716 = vunpack.c.l.b16 %v1286
    %v4717 = vunpack.c.l.b16 %v1287
    %v4718 = vunpack.c.l.b16 %v1288
    %v4719 = vunpack.c.l.b16 %v1289
    %v4720 = vunpack.c.l.b16 %v1290
    %v4721 = vunpack.c.l.b16 %v1291
    %v4722 = vunpack.c.l.b16 %v1292
    %v4723 = vunpack.c.l.b16 %v1293
    %v4724 = vunpack.c.l.b16 %v1294
    %v4725 = vunpack.c.l.b16 %v1295
    %v4726 = vunpack.c.l.b16 %v1296
    %v4727 = vunpack.c.l.b16 %v1297
    %v4728 = vunpack.c.l.b16 %v1298
    %v4729 = vunpack.c.l.b16 %v1299
    %v4730 = vunpack.c.l.b16 %v1300
    %v4731 = vunpack.c.l.b16 %v1301
    %v4732 = vunpack.c.l.b16 %v1302
    %v4733 = vunpack.c.l.b16 %v1303
    %v4734 = vunpack.c.l.b16 %v1304
    %v4735 = vunpack.c.l.b16 %v1305
    %v4736 = vunpack.c.l.b16 %v1306
    %v4737 = vunpack.c.l.b16 %v1307
    %v4738 = vunpack.c.l.b16 %v1308
    %v4739 = vunpack.c.l.b16 %v1309
    %v4740 = vunpack.c.l.b16 %v1310
    %v4741 = vunpack.c.l.b16 %v1311
    %v4742 = vunpack.c.l.b16 %v1312
    %v4743 = vunpack.c.l.b16 %v1313
    %v4744 = vunpack.c.l.b16 %v1314
    %v4745 = vunpack.c.l.b16 %v1315
    %v4746 = vunpack.c.l.b16 %v1316
    %v4747 = vunpack.c.l.b16 %v1317
    %v4748 = vunpack.c.l.b16 %v1318
    %v4749 = vunpack.c.l.b16 %v1319
    %v4750 = vunpack.c.l.b16 %v1320
    %v4751 = vunpack.c.l.b16 %v1321
    %v4752 = vunpack.c.l.b16 %v1322
    %v4753 = vunpack.c.l.b16 %v1323
    %v4754 = vunpack.c.l.b16 %v1324
    %v4755 = vunpack.c.l.b16 %v1325
    %v4756 = vunpack.c.l.b16 %v1326
    %v4757 = vunpack.c.l.b16 %v1327
    %v4758 = vunpack.c.l.b16 %v1328
    %v4759 = vunpack.c.l.b16 %v1329
    %v4760 = vunpack.c.l.b16 %v1330
    %v4761 = vunpack.c.l.b16 %v1331
    %v4762 = vunpack.c.l.b16 %v1332
    %v4763 = vunpack.c.l.b16 %v1333
    %v4764 = vunpack.c.l.b16 %v1334
    %v4765 = vunpack.c.l.b16 %v1335
    %v4766 = vunpack.c.l.b16 %v1336
    %v4767 = vunpack.c.l.b16 %v1337
    %v4768 = vunpack.c.l.b16 %v1338
    %v4769 = vunpack.c.l.b16 %v1339
    %v4770 = vunpack.c.l.b16 %v1340
    %v4771 = vunpack.c.l.b16 %v1341
    %v4772 = vunpack.c.l.b16 %v1342
    %v4773 = vunpack.c.l.b16 %v1343
    %v4774 = vunpack.c.l.b16 %v1344
    %v4775 = vunpack.c.l.b16 %v1345
    %v4776 = vunpack.c.l.b16 %v1346
    %v4777 = vunpack.c.l.b16 %v1347
    %v4778 = vunpack.c.l.b16 %v1348
    %v4779 = vunpack.c.l.b16 %v1349
    %v4780 = vunpack.c.l.b16 %v1350
    %v4781 = vunpack.c.l.b16 %v1351
    %v4782 = vunpack.c.l.b16 %v1352
    %v4783 = vunpack.c.l.b16 %v1353
    %v4784 = vunpack.c.l.b16 %v1354
    %v4785 = vunpack.c.l.b16 %v1355
    %v4786 = vunpack.c.l.b16 %v1356
    %v4787 = vunpack.c.l.b16 %v1357
    %v4788 = vunpack.c.l.b16 %v1358
    %v4789 = vunpack.c.l.b16 %v1359
    %v4790 = vunpack.c.l.b16 %v1360
    %v4791 = vunpack.c.l.b16 %v1361
    %v4792 = vunpack.c.l.b16 %v1362
    %v4793 = vunpack.c.l.b16 %v1363
    %v4794 = vunpack.c.l.b16 %v1364
    %v4795 = vunpack.c.l.b16 %v1365
    %v4796 = vunpack.c.l.b16 %v1366
    %v4797 = vunpack.c.l.b16 %v1367
    %v4798 = vunpack.c.l.b16 %v1368
    %v4799 = vunpack.c.l.b16 %v1369
    %v4800 = vunpack.c.l.b16 %v1370
    %v4801 = vunpack.c.l.b16 %v1371
    %v4802 = vunpack.c.l.b16 %v1372
    %v4803 = vunpack.c.l.b16 %v1373
    %v4804 = vunpack.c.l.b16 %v1374
    %v4805 = vunpack.c.l.b16 %v1375
    %v4806 = vunpack.c.l.b16 %v1376
    %v4807 = vunpack.c.l.b16 %v1377
    %v4808 = vunpack.c.l.b16 %v1378
    %v4809 = vunpack.c.l.b16 %v1379
    %v4810 = vunpack.c.l.b16 %v1380
    %v4811 = vunpack.c.l.b16 %v1381
    %v4812 = vunpack.c.l.b16 %v1382
    %v4813 = vunpack.c.l.b16 %v1383
    %v4814 = vunpack.c.l.b16 %v1384
    %v4815 = vunpack.c.l.b16 %v1385
    %v4816 = vunpack.c.l.b16 %v1386
    %v4817 = vunpack.c.l.b16 %v1387
    %v4818 = vunpack.c.l.b16 %v1388
    %v4819 = vunpack.c.l.b16 %v1389
    %v4820 = vunpack.c.l.b16 %v1390
    %v4821 = vunpack.c.l.b16 %v1391
    %v4822 = vunpack.c.l.b16 %v1392
    %v4823 = vunpack.c.l.b16 %v1393
    %v4824 = vunpack.c.l.b16 %v1394
    %v4825 = vunpack.c.l.b16 %v1395
    %v4826 = vunpack.c.l.b16 %v1396
    %v4827 = vunpack.c.l.b16 %v1397
    %v4828 = vunpack.c.l.b16 %v1398
    %v4829 = vunpack.c.l.b16 %v1399
    %v4830 = vunpack.c.l.b16 %v1400
    %v4831 = vunpack.c.l.b16 %v1401
    %v4832 = vunpack.c.l.b16 %v1402
    %v4833 = vunpack.c.l.b16 %v1403
    %v4834 = vunpack.c.l.b16 %v1404
    %v4835 = vunpack.c.l.b16 %v1405
    %v4836 = vunpack.c.l.b16 %v1406
    %v4837 = vunpack.c.l.b16 %v1407
    %v4838 = vunpack.c.l.b16 %v1408
    %v4839 = vunpack.c.l.b16 %v1409
    %v4840 = vunpack.c.l.b16 %v1410
    %v4841 = vunpack.c.l.b16 %v1411
    %v4842 = vunpack.c.l.b16 %v1412
    %v4843 = vunpack.c.l.b16 %v1413
    %v4844 = vunpack.c.l.b16 %v1414
    %v4845 = vunpack.c.l.b16 %v1415
    %v4846 = vunpack.c.l.b16 %v1416
    %v4847 = vunpack.c.l.b16 %v1417
    %v4848 = vunpack.c.l.b16 %v1418
    %v4849 = vunpack.c.l.b16 %v1419
    %v4850 = vunpack.c.l.b16 %v1420
    %v4851 = vunpack.c.l.b16 %v1421
    %v4852 = vunpack.c.l.b16 %v1422
    %v4853 = vunpack.c.l.b16 %v1423
    %v4854 = vunpack.c.l.b16 %v1424
    %v4855 = vunpack.c.l.b16 %v1425
    %v4856 = vunpack.c.l.b16 %v1426
    %v4857 = vunpack.c.l.b16 %v1427
    %v4858 = vunpack.c.l.b16 %v1428
    %v4859 = vunpack.c.l.b16 %v1429
    %v4860 = vunpack.c.l.b16 %v1430
    %v4861 = vunpack.c.l.b16 %v1431
    %v4862 = vunpack.c.l.b16 %v1432
    %v4863 = vunpack.c.l.b16 %v1433
    %v4864 = vunpack.c.l.b16 %v1434
    %v4865 = vunpack.c.l.b16 %v1435
    %v4866 = vunpack.c.l.b16 %v1436
    %v4867 = vunpack.c.l.b16 %v1437
    %v4868 = vunpack.c.l.b16 %v1438
    %v4869 = vunpack.c.l.b16 %v1439
    %v4870 = vunpack.c.l.b16 %v1440
    %v4871 = vunpack.c.l.b16 %v1441
    %v4872 = vunpack.c.l.b16 %v1442
    %v4873 = vunpack.c.l.b16 %v1443
    %v4874 = vunpack.c.l.b16 %v1444
    %v4875 = vunpack.c.l.b16 %v1445
    %v4876 = vunpack.c.l.b16 %v1446
    %v4877 = vunpack.c.l.b16 %v1447
    %v4878 = vunpack.c.l.b16 %v1448
    %v4879 = vunpack.c.l.b16 %v1449
    %v4880 = vunpack.c.l.b16 %v1450
    %v4881 = vunpack.c.l.b16 %v1451
    %v4882 = vunpack.c.l.b16 %v1452
    %v4883 = vunpack.c.l.b16 %v1453
    %v4884 = vunpack.c.l.b16 %v1454
    %v4885 = vunpack.c.l.b16 %v1455
    %v4886 = vunpack.c.l.b16 %v1456
    %v4887 = vunpack.c.l.b16 %v1457
    %v4888 = vunpack.c.l.b16 %v1458
    %v4889 = vunpack.c.l.b16 %v1459
    %v4890 = vunpack.c.l.b16 %v1460
    %v4891 = vunpack.c.l.b16 %v1461
    %v4892 = vunpack.c.l.b16 %v1462
    %v4893 = vunpack.c.l.b16 %v1463
    %v4894 = vunpack.c.l.b16 %v1464
    %v4895 = vunpack.c.l.b16 %v1465
    %v4896 = vunpack.c.l.b16 %v1466
    %v4897 = vunpack.c.l.b16 %v1467
    %v4898 = vunpack.c.l.b16 %v1468
    %v4899 = vunpack.c.l.b16 %v1469
    %v4900 = vunpack.c.l.b16 %v1470
    %v4901 = vunpack.c.l.b16 %v1471
    %v4902 = vunpack.c.l.b16 %v1472
    %v4903 = vunpack.c.l.b16 %v1473
    %v4904 = vunpack.c.l.b16 %v1474
    %v4905 = vunpack.c.l.b16 %v1475
    %v4906 = vunpack.c.l.b16 %v1476
    %v4907 = vunpack.c.l.b16 %v1477
    %v4908 = vunpack.c.l.b16 %v1478
    %v4909 = vunpack.c.l.b16 %v1479
    %v4910 = vunpack.c.l.b16 %v1480
    %v4911 = vunpack.c.l.b16 %v1481
    %v4912 = vunpack.c.l.b16 %v1482
    %v4913 = vunpack.c.l.b16 %v1483
    %v4914 = vunpack.c.l.b16 %v1484
    %v4915 = vunpack.c.l.b16 %v1485
    %v4916 = vunpack.c.l.b16 %v1486
    %v4917 = vunpack.c.l.b16 %v1487
    %v4918 = vunpack.c.l.b16 %v1488
    %v4919 = vunpack.c.l.b16 %v1489
    %v4920 = vunpack.c.l.b16 %v1490
    %v4921 = vunpack.c.l.b16 %v1491
    %v4922 = vunpack.c.l.b16 %v1492
    %v4923 = vunpack.c.l.b16 %v1493
    %v4924 = vunpack.c.l.b16 %v1494
    %v4925 = vunpack.c.l.b16 %v1495
    %v4926 = vunpack.c.l.b16 %v1496
    %v4927 = vunpack.c.l.b16 %v1497
    %v4928 = vunpack.c.l.b16 %v1498
    %v4929 = vunpack.c.l.b16 %v1499
    %v4930 = vunpack.c.l.b16 %v1500
    %v4931 = vunpack.c.l.b16 %v1501
    %v4932 = vunpack.c.l.b16 %v1502
    %v4933 = vunpack.c.l.b16 %v1503
    %v4934 = vunpack.c.l.b16 %v1504
    %v4935 = vunpack.c.l.b16 %v1505
    %v4936 = vunpack.c.l.b16 %v1506
    %v4937 = vunpack.c.l.b16 %v1507
    %v4938 = vunpack.c.l.b16 %v1508
    %v4939 = vunpack.c.l.b16 %v1509
    %v4940 = vunpack.c.l.b16 %v1510
    %v4941 = vunpack.c.l.b16 %v1511
    %v4942 = vunpack.c.l.b16 %v1512
    %v4943 = vunpack.c.l.b16 %v1513
    %v4944 = vunpack.c.l.b16 %v1514
    %v4945 = vunpack.c.l.b16 %v1515
    %v4946 = vunpack.c.l.b16 %v1516
    %v4947 = vunpack.c.l.b16 %v1517
    %v4948 = vunpack.c.l.b16 %v1518
    %v4949 = vunpack.c.l.b16 %v1519
    %v4950 = vunpack.c.l.b16 %v1520
    %v4951 = vunpack.c.l.b16 %v1521
    %v4952 = vunpack.c.l.b16 %v1522
    %v4953 = vunpack.c.l.b16 %v1523
    %v4954 = vunpack.c.l.b16 %v1524
    %v4955 = vunpack.c.l.b16 %v1525
    %v4956 = vunpack.c.l.b16 %v1526
    %v4957 = vunpack.c.l.b16 %v1527
    %v4958 = vunpack.c.l.b16 %v1528
    %v4959 = vunpack.c.l.b16 %v1529
    %v4960 = vunpack.c.l.b16 %v1530
    %v4961 = vunpack.c.l.b16 %v1531
    %v4962 = vunpack.c.l.b16 %v1532
    %v4963 = vunpack.c.l.b16 %v1533
    %v4964 = vunpack.c.l.b16 %v1534
    %v4965 = vunpack.c.l.b16 %v1535
    %v4966 = vunpack.c.l.b16 %v1536
    %v4967 = vunpack.c.l.b16 %v1537
    %v4968 = vunpack.c.l.b16 %v1538
    %v4969 = vunpack.c.l.b16 %v1539
    %v4970 = vunpack.c.l.b16 %v1540
    %v4971 = vunpack.c.l.b16 %v1541
    %v4972 = vunpack.c.l.b16 %v1542
    %v4973 = vunpack.c.l.b16 %v1543
    %v4974 = vunpack.c.l.b16 %v1544
    %v4975 = vunpack.c.l.b16 %v1545
    %v4976 = vunpack.c.l.b16 %v1546
    %v4977 = vunpack.c.l.b16 %v1547
    %v4978 = vunpack.c.l.b16 %v1548
    %v4979 = vunpack.c.l.b16 %v1549
    %v4980 = vunpack.c.l.b16 %v1550
    %v4981 = vunpack.c.l.b16 %v1551
    %v4982 = vunpack.c.l.b16 %v1552
    %v4983 = vunpack.c.l.b16 %v1553
    %v4984 = vunpack.c.l.b16 %v1554
    %v4985 = vunpack.c.l.b16 %v1555
    %v4986 = vunpack.c.l.b16 %v1556
    %v4987 = vunpack.c.l.b16 %v1557
    %v4988 = vunpack.c.l.b16 %v1558
    %v4989 = vunpack.c.l.b16 %v1559
    %v4990 = vunpack.c.l.b16 %v1560
    %v4991 = vunpack.c.l.b16 %v1561
    %v4992 = vunpack.c.l.b16 %v1562
    %v4993 = vunpack.c.l.b16 %v1563
    %v4994 = vunpack.c.l.b16 %v1564
    %v4995 = vunpack.c.l.b16 %v1565
    %v4996 = vunpack.c.l.b16 %v1566
    %v4997 = vunpack.c.l.b16 %v1567
    %v4998 = vunpack.c.l.b16 %v1568
    %v4999 = vunpack.c.l.b16 %v1569
    %v5000 = vunpack.c.l.b16 %v1570
    %v5001 = vunpack.c.l.b16 %v1571
    %v5002 = vunpack.c.l.b16 %v1572
    %v5003 = vunpack.c.l.b16 %v1573
    %v5004 = vunpack.c.l.b16 %v1574
    %v5005 = vunpack.c.l.b16 %v1575
    %v5006 = vunpack.c.l.b16 %v1576
    %v5007 = vunpack.c.l.b16 %v1577
    %v5008 = vunpack.c.l.b16 %v1578
    %v5009 = vunpack.c.l.b16 %v1579
    %v5010 = vunpack.c.l.b16 %v1580
    %v5011 = vunpack.c.l.b16 %v1581
    %v5012 = vunpack.c.l.b16 %v1582
    %v5013 = vunpack.c.l.b16 %v1583
    %v5014 = vunpack.c.l.b16 %v1584
    %v5015 = vunpack.c.l.b16 %v1585
    %v5016 = vunpack.c.l.b16 %v1586
    %v5017 = vunpack.c.l.b16 %v1587
    %v5018 = vunpack.c.l.b16 %v1588
    %v5019 = vunpack.c.l.b16 %v1589
    %v5020 = vunpack.c.l.b16 %v1590
    %v5021 = vunpack.c.l.b16 %v1591
    %v5022 = vunpack.c.l.b16 %v1592
    %v5023 = vunpack.c.l.b16 %v1593
    %v5024 = vunpack.c.l.b16 %v1594
    %v5025 = vunpack.c.l.b16 %v1595
    %v5026 = vunpack.c.l.b16 %v1596
    %v5027 = vunpack.c.l.b16 %v1597
    %v5028 = vunpack.c.l.b16 %v1598
    %v5029 = vunpack.c.l.b16 %v1599
    %v5030 = vunpack.c.l.b16 %v1600
    %v5031 = vunpack.c.l.b16 %v1601
    %v5032 = vunpack.c.l.b16 %v1602
    %v5033 = vunpack.c.l.b16 %v1603
    %v5034 = vunpack.c.l.b16 %v1604
    %v5035 = vunpack.c.l.b16 %v1605
    %v5036 = vunpack.c.l.b16 %v1606
    %v5037 = vunpack.c.l.b16 %v1607
    %v5038 = vunpack.c.l.b16 %v1608
    %v5039 = vunpack.c.l.b16 %v1609
    %v5040 = vunpack.c.l.b16 %v1610
    %v5041 = vunpack.c.l.b16 %v1611
    %v5042 = vunpack.c.l.b16 %v1612
    %v5043 = vunpack.c.l.b16 %v1613
    %v5044 = vunpack.c.l.b16 %v1614
    %v5045 = vunpack.c.l.b16 %v1615
    %v5046 = vunpack.c.l.b16 %v1616
    %v5047 = vunpack.c.l.b16 %v1617
    %v5048 = vunpack.c.l.b16 %v1618
    %v5049 = vunpack.c.l.b16 %v1619
    %v5050 = vunpack.c.l.b16 %v1620
    %v5051 = vunpack.c.l.b16 %v1621
    %v5052 = vunpack.c.l.b16 %v1622
    %v5053 = vunpack.c.l.b16 %v1623
    %v5054 = vunpack.c.l.b16 %v1624
    %v5055 = vunpack.c.l.b16 %v1625
    %v5056 = vunpack.c.l.b16 %v1626
    %v5057 = vunpack.c.l.b16 %v1627
    %v5058 = vunpack.c.l.b16 %v1628
    %v5059 = vunpack.c.l.b16 %v1629
    %v5060 = vunpack.c.l.b16 %v1630
    %v5061 = vunpack.c.l.b16 %v1631
    %v5062 = vunpack.c.l.b16 %v1632
    %v5063 = vunpack.c.l.b16 %v1633
    %v5064 = vunpack.c.l.b16 %v1634
    %v5065 = vunpack.c.l.b16 %v1635
    %v5066 = vunpack.c.l.b16 %v1636
    %v5067 = vunpack.c.l.b16 %v1637
    %v5068 = vunpack.c.l.b16 %v1638
    %v5069 = vunpack.c.l.b16 %v1639
    %v5070 = vunpack.c.l.b16 %v1640
    %v5071 = vunpack.c.l.b16 %v1641
    %v5072 = vunpack.c.l.b16 %v1642
    %v5073 = vunpack.c.l.b16 %v1643
    %v5074 = vunpack.c.l.b16 %v1644
    %v5075 = vunpack.c.l.b16 %v1645
    %v5076 = vunpack.c.l.b16 %v1646
    %v5077 = vunpack.c.l.b16 %v1647
    %v5078 = vunpack.c.l.b16 %v1648
    %v5079 = vunpack.c.l.b16 %v1649
    %v5080 = vunpack.c.l.b16 %v1650
    %v5081 = vunpack.c.l.b16 %v1651
    %v5082 = vunpack.c.l.b16 %v1652
    %v5083 = vunpack.c.l.b16 %v1653
    %v5084 = vunpack.c.l.b16 %v1654
    %v5085 = vunpack.c.l.b16 %v1655
    %v5086 = vunpack.c.l.b16 %v1656
    %v5087 = vunpack.c.l.b16 %v1657
    %v5088 = vunpack.c.l.b16 %v1658
    %v5089 = vunpack.c.l.b16 %v1659
    %v5090 = vunpack.c.l.b16 %v1660
    %v5091 = vunpack.c.l.b16 %v1661
    %v5092 = vunpack.c.l.b16 %v1662
    %v5093 = vunpack.c.l.b16 %v1663
    %v5094 = vunpack.c.l.b16 %v1664
    %v5095 = vunpack.c.l.b16 %v1665
    %v5096 = vunpack.c.l.b16 %v1666
    %v5097 = vunpack.c.l.b16 %v1667
    %v5098 = vunpack.c.l.b16 %v1668
    %v5099 = vunpack.c.l.b16 %v1669
    %v5100 = vunpack.c.l.b16 %v1670
    %v5101 = vunpack.c.l.b16 %v1671
    %v5102 = vunpack.c.l.b16 %v1672
    %v5103 = vunpack.c.l.b16 %v1673
    %v5104 = vunpack.c.l.b16 %v1674
    %v5105 = vunpack.c.l.b16 %v1675
    %v5106 = vunpack.c.l.b16 %v1676
    %v5107 = vunpack.c.l.b16 %v1677
    %v5108 = vunpack.c.l.b16 %v1678
    %v5109 = vunpack.c.l.b16 %v1679
    %v5110 = vunpack.c.l.b16 %v1680
    %v5111 = vunpack.c.l.b16 %v1681
    %v5112 = vunpack.c.l.b16 %v1682
    %v5113 = vunpack.c.l.b16 %v1683
    %v5114 = vunpack.c.l.b16 %v1684
    %v5115 = vunpack.c.l.b16 %v1685
    %v5116 = vunpack.c.l.b16 %v1686
    %v5117 = vunpack.c.l.b16 %v1687
    %v5118 = vunpack.c.l.b16 %v1688
    %v5119 = vunpack.c.l.b16 %v1689
    %v5120 = vunpack.c.l.b16 %v1690
    %v5121 = vunpack.c.l.b16 %v1691
    %v5122 = vunpack.c.l.b16 %v1692
    %v5123 = vunpack.c.l.b16 %v1693
    %v5124 = vunpack.c.l.b16 %v1694
    %v5125 = vunpack.c.l.b16 %v1695
    %v5126 = vunpack.c.l.b16 %v1696
    %v5127 = vunpack.c.l.b16 %v1697
    %v5128 = vunpack.c.l.b16 %v1698
    %v5129 = vunpack.c.l.b16 %v1699
    %v5130 = vunpack.c.l.b16 %v1700
    %v5131 = vunpack.c.l.b16 %v1701
    %v5132 = vunpack.c.l.b16 %v1702
    %v5133 = vunpack.c.l.b16 %v1703
    %v5134 = vunpack.c.l.b16 %v1704
    %v5135 = vunpack.c.l.b16 %v1705
    %v5136 = vunpack.c.l.b16 %v1706
    %v5137 = vunpack.c.l.b16 %v1707
    %v5138 = vunpack.c.l.b16 %v1708
    %v5139 = vunpack.c.l.b16 %v1709
    %v5140 = vunpack.c.l.b16 %v1710
    %v5141 = vunpack.c.l.b16 %v1711
    %v5142 = vunpack.c.l.b16 %v1712
    %v5143 = vunpack.c.l.b16 %v1713
    %v5144 = vunpack.c.l.b16 %v1714
    %v5145 = vunpack.c.l.b16 %v1715
    %v5146 = vunpack.c.l.b16 %v1716
    %v5147 = vunpack.c.l.b16 %v1717
    %v5148 = vunpack.c.l.b16 %v1718
    %v5149 = vunpack.c.l.b16 %v1719
    %v5150 = vunpack.c.l.b16 %v1720
    %v5151 = vunpack.c.l.b16 %v1721
    %v5152 = vunpack.c.l.b16 %v1722
    %v5153 = vunpack.c.l.b16 %v1723
    %v5154 = vunpack.c.l.b16 %v1724
    %v5155 = vunpack.c.l.b16 %v1725
    %v5156 = vunpack.c.l.b16 %v1726
    %v5157 = vunpack.c.l.b16 %v1727
    %v5158 = vunpack.c.l.b16 %v1728
    %v5159 = vunpack.c.l.b16 %v1729
    %v5160 = vunpack.c.l.b16 %v1730
    %v5161 = vunpack.c.l.b16 %v1731
    %v5162 = vunpack.c.l.b16 %v1732
    %v5163 = vunpack.c.l.b16 %v1733
    %v5164 = vunpack.c.l.b16 %v1734
    %v5165 = vunpack.c.l.b16 %v1735
    %v5166 = vunpack.c.l.b16 %v1736
    %v5167 = vunpack.c.l.b16 %v1737
    %v5168 = vunpack.c.l.b16 %v1738
    %v5169 = vunpack.c.l.b16 %v1739
    %v5170 = vunpack.c.l.b16 %v1740
    %v5171 = vunpack.c.l.b16 %v1741
    %v5172 = vunpack.c.l.b16 %v1742
    %v5173 = vunpack.c.l.b16 %v1743
    %v5174 = vunpack.c.l.b16 %v1744
    %v5175 = vunpack.c.l.b16 %v1745
    %v5176 = vunpack.c.l.b16 %v1746
    %v5177 = vunpack.c.l.b16 %v1747
    %v5178 = vunpack.c.l.b16 %v1748
    %v5179 = vunpack.c.l.b16 %v1749
    %v5180 = vunpack.c.l.b16 %v1750
    %v5181 = vunpack.c.l.b16 %v1751
    %v5182 = vunpack.c.l.b16 %v1752
    %v5183 = vunpack.c.l.b16 %v1753
    %v5184 = vunpack.c.l.b16 %v1754
    %v5185 = vunpack.c.l.b16 %v1755
    %v5186 = vunpack.c.l.b16 %v1756
    %v5187 = vunpack.c.l.b16 %v1757
    %v5188 = vunpack.c.l.b16 %v1758
    %v5189 = vunpack.c.l.b16 %v1759
    %v5190 = vunpack.c.l.b16 %v1760
    %v5191 = vunpack.c.l.b16 %v1761
    %v5192 = vunpack.c.l.b16 %v1762
    %v5193 = vunpack.c.l.b16 %v1763
    %v5194 = vunpack.c.l.b16 %v1764
    %v5195 = vunpack.c.l.b16 %v1765
    %v5196 = vunpack.c.l.b16 %v1766
    %v5197 = vunpack.c.l.b16 %v1767
    %v5198 = vunpack.c.l.b16 %v1768
    %v5199 = vunpack.c.l.b16 %v1769
    %v5200 = vunpack.c.l.b16 %v1770
    %v5201 = vunpack.c.l.b16 %v1771
    %v5202 = vunpack.c.l.b16 %v1772
    %v5203 = vunpack.c.l.b16 %v1773
    %v5204 = vunpack.c.l.b16 %v1774
    %v5205 = vunpack.c.l.b16 %v1775
    %v5206 = vunpack.c.l.b16 %v1776
    %v5207 = vunpack.c.l.b16 %v1777
    %v5208 = vunpack.c.l.b16 %v1778
    %v5209 = vunpack.c.l.b16 %v1779
    %v5210 = vunpack.c.l.b16 %v1780
    %v5211 = vunpack.c.l.b16 %v1781
    %v5212 = vunpack.c.l.b16 %v1782
    %v5213 = vunpack.c.l.b16 %v1783
    %v5214 = vpack.c.b16 %v3615, %v3614
    %v5215 = vpack.c.b16 %v3617, %v3616
    %v5216 = vpack.c.b16 %v3619, %v3618
    %v5217 = vpack.c.b16 %v3621, %v3620
    %v5218 = vpack.c.b16 %v3623, %v3622
    %v5219 = vpack.c.b16 %v3625, %v3624
    %v5220 = vpack.c.b16 %v3627, %v3626
    %v5221 = vpack.c.b16 %v3629, %v3628
    %v5222 = vpack.c.b16 %v3631, %v3630
    %v5223 = vpack.c.b16 %v3633, %v3632
    %v5224 = vpack.c.b16 %v3635, %v3634
    %v5225 = vpack.c.b16 %v3637, %v3636
    %v5226 = vpack.c.b16 %v3639, %v3638
    %v5227 = vpack.c.b16 %v3641, %v3640
    %v5228 = vpack.c.b16 %v3643, %v3642
    %v5229 = vpack.c.b16 %v3645, %v3644
    %v5230 = vpack.c.b16 %v3647, %v3646
    %v5231 = vpack.c.b16 %v3649, %v3648
    %v5232 = vpack.c.b16 %v3651, %v3650
    %v5233 = vpack.c.b16 %v3653, %v3652
    %v5234 = vpack.c.b16 %v3655, %v3654
    %v5235 = vpack.c.b16 %v3657, %v3656
    %v5236 = vpack.c.b16 %v3659, %v3658
    %v5237 = vpack.c.b16 %v3661, %v3660
    %v5238 = vpack.c.b16 %v3663, %v3662
    %v5239 = vpack.c.b16 %v3665, %v3664
    %v5240 = vpack.c.b16 %v3667, %v3666
    %v5241 = vpack.c.b16 %v3669, %v3668
    %v5242 = vpack.c.b16 %v3671, %v3670
    %v5243 = vpack.c.b16 %v3673, %v3672
    %v5244 = vpack.c.b16 %v3675, %v3674
    %v5245 = vpack.c.b16 %v3677, %v3676
    %v5246 = vpack.c.b16 %v3679, %v3678
    %v5247 = vpack.c.b16 %v3681, %v3680
    %v5248 = vpack.c.b16 %v3683, %v3682
    %v5249 = vpack.c.b16 %v3685, %v3684
    %v5250 = vpack.c.b16 %v3687, %v3686
    %v5251 = vpack.c.b16 %v3689, %v3688
    %v5252 = vpack.c.b16 %v3691, %v3690
    %v5253 = vpack.c.b16 %v3693, %v3692
    %v5254 = vpack.c.b16 %v3695, %v3694
    %v5255 = vpack.c.b16 %v3697, %v3696
    %v5256 = vpack.c.b16 %v3699, %v3698
    %v5257 = vpack.c.b16 %v3701, %v3700
    %v5258 = vpack.c.b16 %v3703, %v3702
    %v5259 = vpack.c.b16 %v3705, %v3704
    %v5260 = vpack.c.b16 %v3707, %v3706
    %v5261 = vpack.c.b16 %v3709, %v3708
    %v5262 = vpack.c.b16 %v3711, %v3710
    %v5263 = vpack.c.b16 %v3713, %v3712
    %v5264 = vpack.c.b16 %v3715, %v3714
    %v5265 = vpack.c.b16 %v3717, %v3716
    %v5266 = vpack.c.b16 %v3719, %v3718
    %v5267 = vpack.c.b16 %v3721, %v3720
    %v5268 = vpack.c.b16 %v3723, %v3722
    %v5269 = vpack.c.b16 %v3725, %v3724
    %v5270 = vpack.c.b16 %v3727, %v3726
    %v5271 = vpack.c.b16 %v3729, %v3728
    %v5272 = vpack.c.b16 %v3731, %v3730
    %v5273 = vpack.c.b16 %v3733, %v3732
    %v5274 = vpack.c.b16 %v3735, %v3734
    %v5275 = vpack.c.b16 %v3737, %v3736
    %v5276 = vpack.c.b16 %v3739, %v3738
    %v5277 = vpack.c.b16 %v3741, %v3740
    %v5278 = vpack.c.b16 %v3743, %v3742
    %v5279 = vpack.c.b16 %v3745, %v3744
    %v5280 = vpack.c.b16 %v3747, %v3746
    %v5281 = vpack.c.b16 %v3749, %v3748
    %v5282 = vpack.c.b16 %v3751, %v3750
    %v5283 = vpack.c.b16 %v3753, %v3752
    %v5284 = vpack.c.b16 %v3755, %v3754
    %v5285 = vpack.c.b16 %v3757, %v3756
    %v5286 = vpack.c.b16 %v3759, %v3758
    %v5287 = vpack.c.b16 %v3761, %v3760
    %v5288 = vpack.c.b16 %v3763, %v3762
    %v5289 = vpack.c.b16 %v3765, %v3764
    %v5290 = vpack.c.b16 %v3767, %v3766
    %v5291 = vpack.c.b16 %v3769, %v3768
    %v5292 = vpack.c.b16 %v3771, %v3770
    %v5293 = vpack.c.b16 %v3773, %v3772
    %v5294 = vpack.c.b16 %v3775, %v3774
    %v5295 = vpack.c.b16 %v3777, %v3776
    %v5296 = vpack.c.b16 %v3779, %v3778
    %v5297 = vpack.c.b16 %v3781, %v3780
    %v5298 = vpack.c.b16 %v3783, %v3782
    %v5299 = vpack.c.b16 %v3785, %v3784
    %v5300 = vpack.c.b16 %v3787, %v3786
    %v5301 = vpack.c.b16 %v3789, %v3788
    %v5302 = vpack.c.b16 %v3791, %v3790
    %v5303 = vpack.c.b16 %v3793, %v3792
    %v5304 = vpack.c.b16 %v3795, %v3794
    %v5305 = vpack.c.b16 %v3797, %v3796
    %v5306 = vpack.c.b16 %v3799, %v3798
    %v5307 = vpack.c.b16 %v3801, %v3800
    %v5308 = vpack.c.b16 %v3803, %v3802
    %v5309 = vpack.c.b16 %v3805, %v3804
    %v5310 = vpack.c.b16 %v3807, %v3806
    %v5311 = vpack.c.b16 %v3809, %v3808
    %v5312 = vpack.c.b16 %v3811, %v3810
    %v5313 = vpack.c.b16 %v3813, %v3812
    %v5314 = vpack.c.b16 %v3815, %v3814
    %v5315 = vpack.c.b16 %v3817, %v3816
    %v5316 = vpack.c.b16 %v3819, %v3818
    %v5317 = vpack.c.b16 %v3821, %v3820
    %v5318 = vpack.c.b16 %v3823, %v3822
    %v5319 = vpack.c.b16 %v3825, %v3824
    %v5320 = vpack.c.b16 %v3827, %v3826
    %v5321 = vpack.c.b16 %v3829, %v3828
    %v5322 = vpack.c.b16 %v3831, %v3830
    %v5323 = vpack.c.b16 %v3833, %v3832
    %v5324 = vpack.c.b16 %v3835, %v3834
    %v5325 = vpack.c.b16 %v3837, %v3836
    %v5326 = vpack.c.b16 %v3839, %v3838
    %v5327 = vpack.c.b16 %v3841, %v3840
    %v5328 = vpack.c.b16 %v3843, %v3842
    %v5329 = vpack.c.b16 %v3845, %v3844
    %v5330 = vpack.c.b16 %v3847, %v3846
    %v5331 = vpack.c.b16 %v3849, %v3848
    %v5332 = vpack.c.b16 %v3851, %v3850
    %v5333 = vpack.c.b16 %v3853, %v3852
    %v5334 = vpack.c.b16 %v3855, %v3854
    %v5335 = vpack.c.b16 %v3857, %v3856
    %v5336 = vpack.c.b16 %v3859, %v3858
    %v5337 = vpack.c.b16 %v3861, %v3860
    %v5338 = vpack.c.b16 %v3863, %v3862
    %v5339 = vpack.c.b16 %v3865, %v3864
    %v5340 = vpack.c.b16 %v3867, %v3866
    %v5341 = vpack.c.b16 %v3869, %v3868
    %v5342 = vpack.c.b16 %v3871, %v3870
    %v5343 = vpack.c.b16 %v3873, %v3872
    %v5344 = vpack.c.b16 %v3875, %v3874
    %v5345 = vpack.c.b16 %v3877, %v3876
    %v5346 = vpack.c.b16 %v3879, %v3878
    %v5347 = vpack.c.b16 %v3881, %v3880
    %v5348 = vpack.c.b16 %v3883, %v3882
    %v5349 = vpack.c.b16 %v3885, %v3884
    %v5350 = vpack.c.b16 %v3887, %v3886
    %v5351 = vpack.c.b16 %v3889, %v3888
    %v5352 = vpack.c.b16 %v3891, %v3890
    %v5353 = vpack.c.b16 %v3893, %v3892
    %v5354 = vpack.c.b16 %v3895, %v3894
    %v5355 = vpack.c.b16 %v3897, %v3896
    %v5356 = vpack.c.b16 %v3899, %v3898
    %v5357 = vpack.c.b16 %v3901, %v3900
    %v5358 = vpack.c.b16 %v3903, %v3902
    %v5359 = vpack.c.b16 %v3905, %v3904
    %v5360 = vpack.c.b16 %v3907, %v3906
    %v5361 = vpack.c.b16 %v3909, %v3908
    %v5362 = vpack.c.b16 %v3911, %v3910
    %v5363 = vpack.c.b16 %v3913, %v3912
    %v5364 = vpack.c.b16 %v3915, %v3914
    %v5365 = vpack.c.b16 %v3917, %v3916
    %v5366 = vpack.c.b16 %v3919, %v3918
    %v5367 = vpack.c.b16 %v3921, %v3920
    %v5368 = vpack.c.b16 %v3923, %v3922
    %v5369 = vpack.c.b16 %v3925, %v3924
    %v5370 = vpack.c.b16 %v3927, %v3926
    %v5371 = vpack.c.b16 %v3929, %v3928
    %v5372 = vpack.c.b16 %v3931, %v3930
    %v5373 = vpack.c.b16 %v3933, %v3932
    %v5374 = vpack.c.b16 %v3935, %v3934
    %v5375 = vpack.c.b16 %v3937, %v3936
    %v5376 = vpack.c.b16 %v3939, %v3938
    %v5377 = vpack.c.b16 %v3941, %v3940
    %v5378 = vpack.c.b16 %v3943, %v3942
    %v5379 = vpack.c.b16 %v3945, %v3944
    %v5380 = vpack.c.b16 %v3947, %v3946
    %v5381 = vpack.c.b16 %v3949, %v3948
    %v5382 = vpack.c.b16 %v3951, %v3950
    %v5383 = vpack.c.b16 %v3953, %v3952
    %v5384 = vpack.c.b16 %v3955, %v3954
    %v5385 = vpack.c.b16 %v3957, %v3956
    %v5386 = vpack.c.b16 %v3959, %v3958
    %v5387 = vpack.c.b16 %v3961, %v3960
    %v5388 = vpack.c.b16 %v3963, %v3962
    %v5389 = vpack.c.b16 %v3965, %v3964
    %v5390 = vpack.c.b16 %v3967, %v3966
    %v5391 = vpack.c.b16 %v3969, %v3968
    %v5392 = vpack.c.b16 %v3971, %v3970
    %v5393 = vpack.c.b16 %v3973, %v3972
    %v5394 = vpack.c.b16 %v3975, %v3974
    %v5395 = vpack.c.b16 %v3977, %v3976
    %v5396 = vpack.c.b16 %v3979, %v3978
    %v5397 = vpack.c.b16 %v3981, %v3980
    %v5398 = vpack.c.b16 %v3983, %v3982
    %v5399 = vpack.c.b16 %v3985, %v3984
    %v5400 = vpack.c.b16 %v3987, %v3986
    %v5401 = vpack.c.b16 %v3989, %v3988
    %v5402 = vpack.c.b16 %v3991, %v3990
    %v5403 = vpack.c.b16 %v3993, %v3992
    %v5404 = vpack.c.b16 %v3995, %v3994
    %v5405 = vpack.c.b16 %v3997, %v3996
    %v5406 = vpack.c.b16 %v3999, %v3998
    %v5407 = vpack.c.b16 %v4001, %v4000
    %v5408 = vpack.c.b16 %v4003, %v4002
    %v5409 = vpack.c.b16 %v4005, %v4004
    %v5410 = vpack.c.b16 %v4007, %v4006
    %v5411 = vpack.c.b16 %v4009, %v4008
    %v5412 = vpack.c.b16 %v4011, %v4010
    %v5413 = vpack.c.b16 %v4013, %v4012
    %v5414 = vpack.c.b16 %v4015, %v4014
    %v5415 = vpack.c.b16 %v4017, %v4016
    %v5416 = vpack.c.b16 %v4019, %v4018
    %v5417 = vpack.c.b16 %v4021, %v4020
    %v5418 = vpack.c.b16 %v4023, %v4022
    %v5419 = vpack.c.b16 %v4025, %v4024
    %v5420 = vpack.c.b16 %v4027, %v4026
    %v5421 = vpack.c.b16 %v4029, %v4028
    %v5422 = vpack.c.b16 %v4031, %v4030
    %v5423 = vpack.c.b16 %v4033, %v4032
    %v5424 = vpack.c.b16 %v4035, %v4034
    %v5425 = vpack.c.b16 %v4037, %v4036
    %v5426 = vpack.c.b16 %v4039, %v4038
    %v5427 = vpack.c.b16 %v4041, %v4040
    %v5428 = vpack.c.b16 %v4043, %v4042
    %v5429 = vpack.c.b16 %v4045, %v4044
    %v5430 = vpack.c.b16 %v4047, %v4046
    %v5431 = vpack.c.b16 %v4049, %v4048
    %v5432 = vpack.c.b16 %v4051, %v4050
    %v5433 = vpack.c.b16 %v4053, %v4052
    %v5434 = vpack.c.b16 %v4055, %v4054
    %v5435 = vpack.c.b16 %v4057, %v4056
    %v5436 = vpack.c.b16 %v4059, %v4058
    %v5437 = vpack.c.b16 %v4061, %v4060
    %v5438 = vpack.c.b16 %v4063, %v4062
    %v5439 = vpack.c.b16 %v4065, %v4064
    %v5440 = vpack.c.b16 %v4067, %v4066
    %v5441 = vpack.c.b16 %v4069, %v4068
    %v5442 = vpack.c.b16 %v4071, %v4070
    %v5443 = vpack.c.b16 %v4073, %v4072
    %v5444 = vpack.c.b16 %v4075, %v4074
    %v5445 = vpack.c.b16 %v4077, %v4076
    %v5446 = vpack.c.b16 %v4079, %v4078
    %v5447 = vpack.c.b16 %v4081, %v4080
    %v5448 = vpack.c.b16 %v4083, %v4082
    %v5449 = vpack.c.b16 %v4085, %v4084
    %v5450 = vpack.c.b16 %v4087, %v4086
    %v5451 = vpack.c.b16 %v4089, %v4088
    %v5452 = vpack.c.b16 %v4091, %v4090
    %v5453 = vpack.c.b16 %v4093, %v4092
    %v5454 = vpack.c.b16 %v4095, %v4094
    %v5455 = vpack.c.b16 %v4097, %v4096
    %v5456 = vpack.c.b16 %v4099, %v4098
    %v5457 = vpack.c.b16 %v4101, %v4100
    %v5458 = vpack.c.b16 %v4103, %v4102
    %v5459 = vpack.c.b16 %v4105, %v4104
    %v5460 = vpack.c.b16 %v4107, %v4106
    %v5461 = vpack.c.b16 %v4109, %v4108
    %v5462 = vpack.c.b16 %v4111, %v4110
    %v5463 = vpack.c.b16 %v4113, %v4112
    %v5464 = vpack.c.b16 %v4115, %v4114
    %v5465 = vpack.c.b16 %v4117, %v4116
    %v5466 = vpack.c.b16 %v4119, %v4118
    %v5467 = vpack.c.b16 %v4121, %v4120
    %v5468 = vpack.c.b16 %v4123, %v4122
    %v5469 = vpack.c.b16 %v4125, %v4124
    %v5470 = vpack.c.b16 %v4127, %v4126
    %v5471 = vpack.c.b16 %v4129, %v4128
    %v5472 = vpack.c.b16 %v4131, %v4130
    %v5473 = vpack.c.b16 %v4133, %v4132
    %v5474 = vpack.c.b16 %v4135, %v4134
    %v5475 = vpack.c.b16 %v4137, %v4136
    %v5476 = vpack.c.b16 %v4139, %v4138
    %v5477 = vpack.c.b16 %v4141, %v4140
    %v5478 = vpack.c.b16 %v4143, %v4142
    %v5479 = vpack.c.b16 %v4145, %v4144
    %v5480 = vpack.c.b16 %v4147, %v4146
    %v5481 = vpack.c.b16 %v4149, %v4148
    %v5482 = vpack.c.b16 %v4151, %v4150
    %v5483 = vpack.c.b16 %v4153, %v4152
    %v5484 = vpack.c.b16 %v4155, %v4154
    %v5485 = vpack.c.b16 %v4157, %v4156
    %v5486 = vpack.c.b16 %v4159, %v4158
    %v5487 = vpack.c.b16 %v4161, %v4160
    %v5488 = vpack.c.b16 %v4163, %v4162
    %v5489 = vpack.c.b16 %v4165, %v4164
    %v5490 = vpack.c.b16 %v4167, %v4166
    %v5491 = vpack.c.b16 %v4169, %v4168
    %v5492 = vpack.c.b16 %v4171, %v4170
    %v5493 = vpack.c.b16 %v4173, %v4172
    %v5494 = vpack.c.b16 %v4175, %v4174
    %v5495 = vpack.c.b16 %v4177, %v4176
    %v5496 = vpack.c.b16 %v4179, %v4178
    %v5497 = vpack.c.b16 %v4181, %v4180
    %v5498 = vpack.c.b16 %v4183, %v4182
    %v5499 = vpack.c.b16 %v4185, %v4184
    %v5500 = vpack.c.b16 %v4187, %v4186
    %v5501 = vpack.c.b16 %v4189, %v4188
    %v5502 = vpack.c.b16 %v4191, %v4190
    %v5503 = vpack.c.b16 %v4193, %v4192
    %v5504 = vpack.c.b16 %v4195, %v4194
    %v5505 = vpack.c.b16 %v4197, %v4196
    %v5506 = vpack.c.b16 %v4199, %v4198
    %v5507 = vpack.c.b16 %v4201, %v4200
    %v5508 = vpack.c.b16 %v4203, %v4202
    %v5509 = vpack.c.b16 %v4205, %v4204
    %v5510 = vpack.c.b16 %v4207, %v4206
    %v5511 = vpack.c.b16 %v4209, %v4208
    %v5512 = vpack.c.b16 %v4211, %v4210
    %v5513 = vpack.c.b16 %v4213, %v4212
    %v5514 = vpack.c.b16 %v4215, %v4214
    %v5515 = vpack.c.b16 %v4217, %v4216
    %v5516 = vpack.c.b16 %v4219, %v4218
    %v5517 = vpack.c.b16 %v4221, %v4220
    %v5518 = vpack.c.b16 %v4223, %v4222
    %v5519 = vpack.c.b16 %v4225, %v4224
    %v5520 = vpack.c.b16 %v4227, %v4226
    %v5521 = vpack.c.b16 %v4229, %v4228
    %v5522 = vpack.c.b16 %v4231, %v4230
    %v5523 = vpack.c.b16 %v4233, %v4232
    %v5524 = vpack.c.b16 %v4235, %v4234
    %v5525 = vpack.c.b16 %v4237, %v4236
    %v5526 = vpack.c.b16 %v4239, %v4238
    %v5527 = vpack.c.b16 %v4241, %v4240
    %v5528 = vpack.c.b16 %v4243, %v4242
    %v5529 = vpack.c.b16 %v4245, %v4244
    %v5530 = vpack.c.b16 %v4247, %v4246
    %v5531 = vpack.c.b16 %v4249, %v4248
    %v5532 = vpack.c.b16 %v4251, %v4250
    %v5533 = vpack.c.b16 %v4253, %v4252
    %v5534 = vpack.c.b16 %v4255, %v4254
    %v5535 = vpack.c.b16 %v4257, %v4256
    %v5536 = vpack.c.b16 %v4259, %v4258
    %v5537 = vpack.c.b16 %v4261, %v4260
    %v5538 = vpack.c.b16 %v4263, %v4262
    %v5539 = vpack.c.b16 %v4265, %v4264
    %v5540 = vpack.c.b16 %v4267, %v4266
    %v5541 = vpack.c.b16 %v4269, %v4268
    %v5542 = vpack.c.b16 %v4271, %v4270
    %v5543 = vpack.c.b16 %v4273, %v4272
    %v5544 = vpack.c.b16 %v4275, %v4274
    %v5545 = vpack.c.b16 %v4277, %v4276
    %v5546 = vpack.c.b16 %v4279, %v4278
    %v5547 = vpack.c.b16 %v4281, %v4280
    %v5548 = vpack.c.b16 %v4283, %v4282
    %v5549 = vpack.c.b16 %v4285, %v4284
    %v5550 = vpack.c.b16 %v4287, %v4286
    %v5551 = vpack.c.b16 %v4289, %v4288
    %v5552 = vpack.c.b16 %v4291, %v4290
    %v5553 = vpack.c.b16 %v4293, %v4292
    %v5554 = vpack.c.b16 %v4295, %v4294
    %v5555 = vpack.c.b16 %v4297, %v4296
    %v5556 = vpack.c.b16 %v4299, %v4298
    %v5557 = vpack.c.b16 %v4301, %v4300
    %v5558 = vpack.c.b16 %v4303, %v4302
    %v5559 = vpack.c.b16 %v4305, %v4304
    %v5560 = vpack.c.b16 %v4307, %v4306
    %v5561 = vpack.c.b16 %v4309, %v4308
    %v5562 = vpack.c.b16 %v4311, %v4310
    %v5563 = vpack.c.b16 %v4313, %v4312
    %v5564 = vpack.c.b16 %v4315, %v4314
    %v5565 = vpack.c.b16 %v4317, %v4316
    %v5566 = vpack.c.b16 %v4319, %v4318
    %v5567 = vpack.c.b16 %v4321, %v4320
    %v5568 = vpack.c.b16 %v4323, %v4322
    %v5569 = vpack.c.b16 %v4325, %v4324
    %v5570 = vpack.c.b16 %v4327, %v4326
    %v5571 = vpack.c.b16 %v4329, %v4328
    %v5572 = vpack.c.b16 %v4331, %v4330
    %v5573 = vpack.c.b16 %v4333, %v4332
    %v5574 = vpack.c.b16 %v4335, %v4334
    %v5575 = vpack.c.b16 %v4337, %v4336
    %v5576 = vpack.c.b16 %v4339, %v4338
    %v5577 = vpack.c.b16 %v4341, %v4340
    %v5578 = vpack.c.b16 %v4343, %v4342
    %v5579 = vpack.c.b16 %v4345, %v4344
    %v5580 = vpack.c.b16 %v4347, %v4346
    %v5581 = vpack.c.b16 %v4349, %v4348
    %v5582 = vpack.c.b16 %v4351, %v4350
    %v5583 = vpack.c.b16 %v4353, %v4352
    %v5584 = vpack.c.b16 %v4355, %v4354
    %v5585 = vpack.c.b16 %v4357, %v4356
    %v5586 = vpack.c.b16 %v4359, %v4358
    %v5587 = vpack.c.b16 %v4361, %v4360
    %v5588 = vpack.c.b16 %v4363, %v4362
    %v5589 = vpack.c.b16 %v4365, %v4364
    %v5590 = vpack.c.b16 %v4367, %v4366
    %v5591 = vpack.c.b16 %v4369, %v4368
    %v5592 = vpack.c.b16 %v4371, %v4370
    %v5593 = vpack.c.b16 %v4373, %v4372
    %v5594 = vpack.c.b16 %v4375, %v4374
    %v5595 = vpack.c.b16 %v4377, %v4376
    %v5596 = vpack.c.b16 %v4379, %v4378
    %v5597 = vpack.c.b16 %v4381, %v4380
    %v5598 = vpack.c.b16 %v4383, %v4382
    %v5599 = vpack.c.b16 %v4385, %v4384
    %v5600 = vpack.c.b16 %v4387, %v4386
    %v5601 = vpack.c.b16 %v4389, %v4388
    %v5602 = vpack.c.b16 %v4391, %v4390
    %v5603 = vpack.c.b16 %v4393, %v4392
    %v5604 = vpack.c.b16 %v4395, %v4394
    %v5605 = vpack.c.b16 %v4397, %v4396
    %v5606 = vpack.c.b16 %v4399, %v4398
    %v5607 = vpack.c.b16 %v4401, %v4400
    %v5608 = vpack.c.b16 %v4403, %v4402
    %v5609 = vpack.c.b16 %v4405, %v4404
    %v5610 = vpack.c.b16 %v4407, %v4406
    %v5611 = vpack.c.b16 %v4409, %v4408
    %v5612 = vpack.c.b16 %v4411, %v4410
    %v5613 = vpack.c.b16 %v4413, %v4412
    %v5614 = vpack.c.b16 %v4415, %v4414
    %v5615 = vpack.c.b16 %v4417, %v4416
    %v5616 = vpack.c.b16 %v4419, %v4418
    %v5617 = vpack.c.b16 %v4421, %v4420
    %v5618 = vpack.c.b16 %v4423, %v4422
    %v5619 = vpack.c.b16 %v4425, %v4424
    %v5620 = vpack.c.b16 %v4427, %v4426
    %v5621 = vpack.c.b16 %v4429, %v4428
    %v5622 = vpack.c.b16 %v4431, %v4430
    %v5623 = vpack.c.b16 %v4433, %v4432
    %v5624 = vpack.c.b16 %v4435, %v4434
    %v5625 = vpack.c.b16 %v4437, %v4436
    %v5626 = vpack.c.b16 %v4439, %v4438
    %v5627 = vpack.c.b16 %v4441, %v4440
    %v5628 = vpack.c.b16 %v4443, %v4442
    %v5629 = vpack.c.b16 %v4445, %v4444
    %v5630 = vpack.c.b16 %v4447, %v4446
    %v5631 = vpack.c.b16 %v4449, %v4448
    %v5632 = vpack.c.b16 %v4451, %v4450
    %v5633 = vpack.c.b16 %v4453, %v4452
    %v5634 = vpack.c.b16 %v4455, %v4454
    %v5635 = vpack.c.b16 %v4457, %v4456
    %v5636 = vpack.c.b16 %v4459, %v4458
    %v5637 = vpack.c.b16 %v4461, %v4460
    %v5638 = vpack.c.b16 %v4463, %v4462
    %v5639 = vpack.c.b16 %v4465, %v4464
    %v5640 = vpack.c.b16 %v4467, %v4466
    %v5641 = vpack.c.b16 %v4469, %v4468
    %v5642 = vpack.c.b16 %v4471, %v4470
    %v5643 = vpack.c.b16 %v4473, %v4472
    %v5644 = vpack.c.b16 %v4475, %v4474
    %v5645 = vpack.c.b16 %v4477, %v4476
    %v5646 = vpack.c.b16 %v4479, %v4478
    %v5647 = vpack.c.b16 %v4481, %v4480
    %v5648 = vpack.c.b16 %v4483, %v4482
    %v5649 = vpack.c.b16 %v4485, %v4484
    %v5650 = vpack.c.b16 %v4487, %v4486
    %v5651 = vpack.c.b16 %v4489, %v4488
    %v5652 = vpack.c.b16 %v4491, %v4490
    %v5653 = vpack.c.b16 %v4493, %v4492
    %v5654 = vpack.c.b16 %v4495, %v4494
    %v5655 = vpack.c.b16 %v4497, %v4496
    %v5656 = vpack.c.b16 %v4499, %v4498
    %v5657 = vpack.c.b16 %v4501, %v4500
    %v5658 = vpack.c.b16 %v4503, %v4502
    %v5659 = vpack.c.b16 %v4505, %v4504
    %v5660 = vpack.c.b16 %v4507, %v4506
    %v5661 = vpack.c.b16 %v4509, %v4508
    %v5662 = vpack.c.b16 %v4511, %v4510
    %v5663 = vpack.c.b16 %v4513, %v4512
    %v5664 = vpack.c.b16 %v4515, %v4514
    %v5665 = vpack.c.b16 %v4517, %v4516
    %v5666 = vpack.c.b16 %v4519, %v4518
    %v5667 = vpack.c.b16 %v4521, %v4520
    %v5668 = vpack.c.b16 %v4523, %v4522
    %v5669 = vpack.c.b16 %v4525, %v4524
    %v5670 = vpack.c.b16 %v4527, %v4526
    %v5671 = vpack.c.b16 %v4529, %v4528
    %v5672 = vpack.c.b16 %v4531, %v4530
    %v5673 = vpack.c.b16 %v4533, %v4532
    %v5674 = vpack.c.b16 %v4535, %v4534
    %v5675 = vpack.c.b16 %v4537, %v4536
    %v5676 = vpack.c.b16 %v4539, %v4538
    %v5677 = vpack.c.b16 %v4541, %v4540
    %v5678 = vpack.c.b16 %v4543, %v4542
    %v5679 = vpack.c.b16 %v4545, %v4544
    %v5680 = vpack.c.b16 %v4547, %v4546
    %v5681 = vpack.c.b16 %v4549, %v4548
    %v5682 = vpack.c.b16 %v4551, %v4550
    %v5683 = vpack.c.b16 %v4553, %v4552
    %v5684 = vpack.c.b16 %v4555, %v4554
    %v5685 = vpack.c.b16 %v4557, %v4556
    %v5686 = vpack.c.b16 %v4559, %v4558
    %v5687 = vpack.c.b16 %v4561, %v4560
    %v5688 = vpack.c.b16 %v4563, %v4562
    %v5689 = vpack.c.b16 %v4565, %v4564
    %v5690 = vpack.c.b16 %v4567, %v4566
    %v5691 = vpack.c.b16 %v4569, %v4568
    %v5692 = vpack.c.b16 %v4571, %v4570
    %v5693 = vpack.c.b16 %v4573, %v4572
    %v5694 = vpack.c.b16 %v4575, %v4574
    %v5695 = vpack.c.b16 %v4577, %v4576
    %v5696 = vpack.c.b16 %v4579, %v4578
    %v5697 = vpack.c.b16 %v4581, %v4580
    %v5698 = vpack.c.b16 %v4583, %v4582
    %v5699 = vpack.c.b16 %v4585, %v4584
    %v5700 = vpack.c.b16 %v4587, %v4586
    %v5701 = vpack.c.b16 %v4589, %v4588
    %v5702 = vpack.c.b16 %v4591, %v4590
    %v5703 = vpack.c.b16 %v4593, %v4592
    %v5704 = vpack.c.b16 %v4595, %v4594
    %v5705 = vpack.c.b16 %v4597, %v4596
    %v5706 = vpack.c.b16 %v4599, %v4598
    %v5707 = vpack.c.b16 %v4601, %v4600
    %v5708 = vpack.c.b16 %v4603, %v4602
    %v5709 = vpack.c.b16 %v4605, %v4604
    %v5710 = vpack.c.b16 %v4607, %v4606
    %v5711 = vpack.c.b16 %v4609, %v4608
    %v5712 = vpack.c.b16 %v4611, %v4610
    %v5713 = vpack.c.b16 %v4613, %v4612
    %v5714 = vpack.c.b16 %v4615, %v4614
    %v5715 = vpack.c.b16 %v4617, %v4616
    %v5716 = vpack.c.b16 %v4619, %v4618
    %v5717 = vpack.c.b16 %v4621, %v4620
    %v5718 = vpack.c.b16 %v4623, %v4622
    %v5719 = vpack.c.b16 %v4625, %v4624
    %v5720 = vpack.c.b16 %v4627, %v4626
    %v5721 = vpack.c.b16 %v4629, %v4628
    %v5722 = vpack.c.b16 %v4631, %v4630
    %v5723 = vpack.c.b16 %v4633, %v4632
    %v5724 = vpack.c.b16 %v4635, %v4634
    %v5725 = vpack.c.b16 %v4637, %v4636
    %v5726 = vpack.c.b16 %v4639, %v4638
    %v5727 = vpack.c.b16 %v4641, %v4640
    %v5728 = vpack.c.b16 %v4643, %v4642
    %v5729 = vpack.c.b16 %v4645, %v4644
    %v5730 = vpack.c.b16 %v4647, %v4646
    %v5731 = vpack.c.b16 %v4649, %v4648
    %v5732 = vpack.c.b16 %v4651, %v4650
    %v5733 = vpack.c.b16 %v4653, %v4652
    %v5734 = vpack.c.b16 %v4655, %v4654
    %v5735 = vpack.c.b16 %v4657, %v4656
    %v5736 = vpack.c.b16 %v4659, %v4658
    %v5737 = vpack.c.b16 %v4661, %v4660
    %v5738 = vpack.c.b16 %v4663, %v4662
    %v5739 = vpack.c.b16 %v4665, %v4664
    %v5740 = vpack.c.b16 %v4667, %v4666
    %v5741 = vpack.c.b16 %v4669, %v4668
    %v5742 = vpack.c.b16 %v4671, %v4670
    %v5743 = vpack.c.b16 %v4673, %v4672
    %v5744 = vpack.c.b16 %v4675, %v4674
    %v5745 = vpack.c.b16 %v4677, %v4676
    %v5746 = vpack.c.b16 %v4679, %v4678
    %v5747 = vpack.c.b16 %v4681, %v4680
    %v5748 = vpack.c.b16 %v4683, %v4682
    %v5749 = vpack.c.b16 %v4685, %v4684
    %v5750 = vpack.c.b16 %v4687, %v4686
    %v5751 = vpack.c.b16 %v4689, %v4688
    %v5752 = vpack.c.b16 %v4691, %v4690
    %v5753 = vpack.c.b16 %v4693, %v4692
    %v5754 = vpack.c.b16 %v4695, %v4694
    %v5755 = vpack.c.b16 %v4697, %v4696
    %v5756 = vpack.c.b16 %v4699, %v4698
    %v5757 = vpack.c.b16 %v4701, %v4700
    %v5758 = vpack.c.b16 %v4703, %v4702
    %v5759 = vpack.c.b16 %v4705, %v4704
    %v5760 = vpack.c.b16 %v4707, %v4706
    %v5761 = vpack.c.b16 %v4709, %v4708
    %v5762 = vpack.c.b16 %v4711, %v4710
    %v5763 = vpack.c.b16 %v4713, %v4712
    %v5764 = vpack.c.b16 %v4715, %v4714
    %v5765 = vpack.c.b16 %v4717, %v4716
    %v5766 = vpack.c.b16 %v4719, %v4718
    %v5767 = vpack.c.b16 %v4721, %v4720
    %v5768 = vpack.c.b16 %v4723, %v4722
    %v5769 = vpack.c.b16 %v4725, %v4724
    %v5770 = vpack.c.b16 %v4727, %v4726
    %v5771 = vpack.c.b16 %v4729, %v4728
    %v5772 = vpack.c.b16 %v4731, %v4730
    %v5773 = vpack.c.b16 %v4733, %v4732
    %v5774 = vpack.c.b16 %v4735, %v4734
    %v5775 = vpack.c.b16 %v4737, %v4736
    %v5776 = vpack.c.b16 %v4739, %v4738
    %v5777 = vpack.c.b16 %v4741, %v4740
    %v5778 = vpack.c.b16 %v4743, %v4742
    %v5779 = vpack.c.b16 %v4745, %v4744
    %v5780 = vpack.c.b16 %v4747, %v4746
    %v5781 = vpack.c.b16 %v4749, %v4748
    %v5782 = vpack.c.b16 %v4751, %v4750
    %v5783 = vpack.c.b16 %v4753, %v4752
    %v5784 = vpack.c.b16 %v4755, %v4754
    %v5785 = vpack.c.b16 %v4757, %v4756
    %v5786 = vpack.c.b16 %v4759, %v4758
    %v5787 = vpack.c.b16 %v4761, %v4760
    %v5788 = vpack.c.b16 %v4763, %v4762
    %v5789 = vpack.c.b16 %v4765, %v4764
    %v5790 = vpack.c.b16 %v4767, %v4766
    %v5791 = vpack.c.b16 %v4769, %v4768
    %v5792 = vpack.c.b16 %v4771, %v4770
    %v5793 = vpack.c.b16 %v4773, %v4772
    %v5794 = vpack.c.b16 %v4775, %v4774
    %v5795 = vpack.c.b16 %v4777, %v4776
    %v5796 = vpack.c.b16 %v4779, %v4778
    %v5797 = vpack.c.b16 %v4781, %v4780
    %v5798 = vpack.c.b16 %v4783, %v4782
    %v5799 = vpack.c.b16 %v4785, %v4784
    %v5800 = vpack.c.b16 %v4787, %v4786
    %v5801 = vpack.c.b16 %v4789, %v4788
    %v5802 = vpack.c.b16 %v4791, %v4790
    %v5803 = vpack.c.b16 %v4793, %v4792
    %v5804 = vpack.c.b16 %v4795, %v4794
    %v5805 = vpack.c.b16 %v4797, %v4796
    %v5806 = vpack.c.b16 %v4799, %v4798
    %v5807 = vpack.c.b16 %v4801, %v4800
    %v5808 = vpack.c.b16 %v4803, %v4802
    %v5809 = vpack.c.b16 %v4805, %v4804
    %v5810 = vpack.c.b16 %v4807, %v4806
    %v5811 = vpack.c.b16 %v4809, %v4808
    %v5812 = vpack.c.b16 %v4811, %v4810
    %v5813 = vpack.c.b16 %v4813, %v4812
    %v5814 = vpack.c.b16 %v4815, %v4814
    %v5815 = vpack.c.b16 %v4817, %v4816
    %v5816 = vpack.c.b16 %v4819, %v4818
    %v5817 = vpack.c.b16 %v4821, %v4820
    %v5818 = vpack.c.b16 %v4823, %v4822
    %v5819 = vpack.c.b16 %v4825, %v4824
    %v5820 = vpack.c.b16 %v4827, %v4826
    %v5821 = vpack.c.b16 %v4829, %v4828
    %v5822 = vpack.c.b16 %v4831, %v4830
    %v5823 = vpack.c.b16 %v4833, %v4832
    %v5824 = vpack.c.b16 %v4835, %v4834
    %v5825 = vpack.c.b16 %v4837, %v4836
    %v5826 = vpack.c.b16 %v4839, %v4838
    %v5827 = vpack.c.b16 %v4841, %v4840
    %v5828 = vpack.c.b16 %v4843, %v4842
    %v5829 = vpack.c.b16 %v4845, %v4844
    %v5830 = vpack.c.b16 %v4847, %v4846
    %v5831 = vpack.c.b16 %v4849, %v4848
    %v5832 = vpack.c.b16 %v4851, %v4850
    %v5833 = vpack.c.b16 %v4853, %v4852
    %v5834 = vpack.c.b16 %v4855, %v4854
    %v5835 = vpack.c.b16 %v4857, %v4856
    %v5836 = vpack.c.b16 %v4859, %v4858
    %v5837 = vpack.c.b16 %v4861, %v4860
    %v5838 = vpack.c.b16 %v4863, %v4862
    %v5839 = vpack.c.b16 %v4865, %v4864
    %v5840 = vpack.c.b16 %v4867, %v4866
    %v5841 = vpack.c.b16 %v4869, %v4868
    %v5842 = vpack.c.b16 %v4871, %v4870
    %v5843 = vpack.c.b16 %v4873, %v4872
    %v5844 = vpack.c.b16 %v4875, %v4874
    %v5845 = vpack.c.b16 %v4877, %v4876
    %v5846 = vpack.c.b16 %v4879, %v4878
    %v5847 = vpack.c.b16 %v4881, %v4880
    %v5848 = vpack.c.b16 %v4883, %v4882
    %v5849 = vpack.c.b16 %v4885, %v4884
    %v5850 = vpack.c.b16 %v4887, %v4886
    %v5851 = vpack.c.b16 %v4889, %v4888
    %v5852 = vpack.c.b16 %v4891, %v4890
    %v5853 = vpack.c.b16 %v4893, %v4892
    %v5854 = vpack.c.b16 %v4895, %v4894
    %v5855 = vpack.c.b16 %v4897, %v4896
    %v5856 = vpack.c.b16 %v4899, %v4898
    %v5857 = vpack.c.b16 %v4901, %v4900
    %v5858 = vpack.c.b16 %v4903, %v4902
    %v5859 = vpack.c.b16 %v4905, %v4904
    %v5860 = vpack.c.b16 %v4907, %v4906
    %v5861 = vpack.c.b16 %v4909, %v4908
    %v5862 = vpack.c.b16 %v4911, %v4910
    %v5863 = vpack.c.b16 %v4913, %v4912
    %v5864 = vpack.c.b16 %v4915, %v4914
    %v5865 = vpack.c.b16 %v4917, %v4916
    %v5866 = vpack.c.b16 %v4919, %v4918
    %v5867 = vpack.c.b16 %v4921, %v4920
    %v5868 = vpack.c.b16 %v4923, %v4922
    %v5869 = vpack.c.b16 %v4925, %v4924
    %v5870 = vpack.c.b16 %v4927, %v4926
    %v5871 = vpack.c.b16 %v4929, %v4928
    %v5872 = vpack.c.b16 %v4931, %v4930
    %v5873 = vpack.c.b16 %v4933, %v4932
    %v5874 = vpack.c.b16 %v4935, %v4934
    %v5875 = vpack.c.b16 %v4937, %v4936
    %v5876 = vpack.c.b16 %v4939, %v4938
    %v5877 = vpack.c.b16 %v4941, %v4940
    %v5878 = vpack.c.b16 %v4943, %v4942
    %v5879 = vpack.c.b16 %v4945, %v4944
    %v5880 = vpack.c.b16 %v4947, %v4946
    %v5881 = vpack.c.b16 %v4949, %v4948
    %v5882 = vpack.c.b16 %v4951, %v4950
    %v5883 = vpack.c.b16 %v4953, %v4952
    %v5884 = vpack.c.b16 %v4955, %v4954
    %v5885 = vpack.c.b16 %v4957, %v4956
    %v5886 = vpack.c.b16 %v4959, %v4958
    %v5887 = vpack.c.b16 %v4961, %v4960
    %v5888 = vpack.c.b16 %v4963, %v4962
    %v5889 = vpack.c.b16 %v4965, %v4964
    %v5890 = vpack.c.b16 %v4967, %v4966
    %v5891 = vpack.c.b16 %v4969, %v4968
    %v5892 = vpack.c.b16 %v4971, %v4970
    %v5893 = vpack.c.b16 %v4973, %v4972
    %v5894 = vpack.c.b16 %v4975, %v4974
    %v5895 = vpack.c.b16 %v4977, %v4976
    %v5896 = vpack.c.b16 %v4979, %v4978
    %v5897 = vpack.c.b16 %v4981, %v4980
    %v5898 = vpack.c.b16 %v4983, %v4982
    %v5899 = vpack.c.b16 %v4985, %v4984
    %v5900 = vpack.c.b16 %v4987, %v4986
    %v5901 = vpack.c.b16 %v4989, %v4988
    %v5902 = vpack.c.b16 %v4991, %v4990
    %v5903 = vpack.c.b16 %v4993, %v4992
    %v5904 = vpack.c.b16 %v4995, %v4994
    %v5905 = vpack.c.b16 %v4997, %v4996
    %v5906 = vpack.c.b16 %v4999, %v4998
    %v5907 = vpack.c.b16 %v5001, %v5000
    %v5908 = vpack.c.b16 %v5003, %v5002
    %v5909 = vpack.c.b16 %v5005, %v5004
    %v5910 = vpack.c.b16 %v5007, %v5006
    %v5911 = vpack.c.b16 %v5009, %v5008
    %v5912 = vpack.c.b16 %v5011, %v5010
    %v5913 = vpack.c.b16 %v5013, %v5012
    %v5914 = vpack.c.b16 %v5015, %v5014
    %v5915 = vpack.c.b16 %v5017, %v5016
    %v5916 = vpack.c.b16 %v5019, %v5018
    %v5917 = vpack.c.b16 %v5021, %v5020
    %v5918 = vpack.c.b16 %v5023, %v5022
    %v5919 = vpack.c.b16 %v5025, %v5024
    %v5920 = vpack.c.b16 %v5027, %v5026
    %v5921 = vpack.c.b16 %v5029, %v5028
    %v5922 = vpack.c.b16 %v5031, %v5030
    %v5923 = vpack.c.b16 %v5033, %v5032
    %v5924 = vpack.c.b16 %v5035, %v5034
    %v5925 = vpack.c.b16 %v5037, %v5036
    %v5926 = vpack.c.b16 %v5039, %v5038
    %v5927 = vpack.c.b16 %v5041, %v5040
    %v5928 = vpack.c.b16 %v5043, %v5042
    %v5929 = vpack.c.b16 %v5045, %v5044
    %v5930 = vpack.c.b16 %v5047, %v5046
    %v5931 = vpack.c.b16 %v5049, %v5048
    %v5932 = vpack.c.b16 %v5051, %v5050
    %v5933 = vpack.c.b16 %v5053, %v5052
    %v5934 = vpack.c.b16 %v5055, %v5054
    %v5935 = vpack.c.b16 %v5057, %v5056
    %v5936 = vpack.c.b16 %v5059, %v5058
    %v5937 = vpack.c.b16 %v5061, %v5060
    %v5938 = vpack.c.b16 %v5063, %v5062
    %v5939 = vpack.c.b16 %v5065, %v5064
    %v5940 = vpack.c.b16 %v5067, %v5066
    %v5941 = vpack.c.b16 %v5069, %v5068
    %v5942 = vpack.c.b16 %v5071, %v5070
    %v5943 = vpack.c.b16 %v5073, %v5072
    %v5944 = vpack.c.b16 %v5075, %v5074
    %v5945 = vpack.c.b16 %v5077, %v5076
    %v5946 = vpack.c.b16 %v5079, %v5078
    %v5947 = vpack.c.b16 %v5081, %v5080
    %v5948 = vpack.c.b16 %v5083, %v5082
    %v5949 = vpack.c.b16 %v5085, %v5084
    %v5950 = vpack.c.b16 %v5087, %v5086
    %v5951 = vpack.c.b16 %v5089, %v5088
    %v5952 = vpack.c.b16 %v5091, %v5090
    %v5953 = vpack.c.b16 %v5093, %v5092
    %v5954 = vpack.c.b16 %v5095, %v5094
    %v5955 = vpack.c.b16 %v5097, %v5096
    %v5956 = vpack.c.b16 %v5099, %v5098
    %v5957 = vpack.c.b16 %v5101, %v5100
    %v5958 = vpack.c.b16 %v5103, %v5102
    %v5959 = vpack.c.b16 %v5105, %v5104
    %v5960 = vpack.c.b16 %v5107, %v5106
    %v5961 = vpack.c.b16 %v5109, %v5108
    %v5962 = vpack.c.b16 %v5111, %v5110
    %v5963 = vpack.c.b16 %v5113, %v5112
    %v5964 = vpack.c.b16 %v5115, %v5114
    %v5965 = vpack.c.b16 %v5117, %v5116
    %v5966 = vpack.c.b16 %v5119, %v5118
    %v5967 = vpack.c.b16 %v5121, %v5120
    %v5968 = vpack.c.b16 %v5123, %v5122
    %v5969 = vpack.c.b16 %v5125, %v5124
    %v5970 = vpack.c.b16 %v5127, %v5126
    %v5971 = vpack.c.b16 %v5129, %v5128
    %v5972 = vpack.c.b16 %v5131, %v5130
    %v5973 = vpack.c.b16 %v5133, %v5132
    %v5974 = vpack.c.b16 %v5135, %v5134
    %v5975 = vpack.c.b16 %v5137, %v5136
    %v5976 = vpack.c.b16 %v5139, %v5138
    %v5977 = vpack.c.b16 %v5141, %v5140
    %v5978 = vpack.c.b16 %v5143, %v5142
    %v5979 = vpack.c.b16 %v5145, %v5144
    %v5980 = vpack.c.b16 %v5147, %v5146
    %v5981 = vpack.c.b16 %v5149, %v5148
    %v5982 = vpack.c.b16 %v5151, %v5150
    %v5983 = vpack.c.b16 %v5153, %v5152
    %v5984 = vpack.c.b16 %v5155, %v5154
    %v5985 = vpack.c.b16 %v5157, %v5156
    %v5986 = vpack.c.b16 %v5159, %v5158
    %v5987 = vpack.c.b16 %v5161, %v5160
    %v5988 = vpack.c.b16 %v5163, %v5162
    %v5989 = vpack.c.b16 %v5165, %v5164
    %v5990 = vpack.c.b16 %v5167, %v5166
    %v5991 = vpack.c.b16 %v5169, %v5168
    %v5992 = vpack.c.b16 %v5171, %v5170
    %v5993 = vpack.c.b16 %v5173, %v5172
    %v5994 = vpack.c.b16 %v5175, %v5174
    %v5995 = vpack.c.b16 %v5177, %v5176
    %v5996 = vpack.c.b16 %v5179, %v5178
    %v5997 = vpack.c.b16 %v5181, %v5180
    %v5998 = vpack.c.b16 %v5183, %v5182
    %v5999 = vpack.c.b16 %v5185, %v5184
    %v6000 = vpack.c.b16 %v5187, %v5186
    %v6001 = vpack.c.b16 %v5189, %v5188
    %v6002 = vpack.c.b16 %v5191, %v5190
    %v6003 = vpack.c.b16 %v5193, %v5192
    %v6004 = vpack.c.b16 %v5195, %v5194
    %v6005 = vpack.c.b16 %v5197, %v5196
    %v6006 = vpack.c.b16 %v5199, %v5198
    %v6007 = vpack.c.b16 %v5201, %v5200
    %v6008 = vpack.c.b16 %v5203, %v5202
    %v6009 = vpack.c.b16 %v5205, %v5204
    %v6010 = vpack.c.b16 %v5207, %v5206
    %v6011 = vpack.c.b16 %v5209, %v5208
    %v6012 = vpack.c.b16 %v5211, %v5210
    %v6013 = vpack.c.b16 %v5213, %v5212
    %6814 = vmatpush.bf16.msra.mxu0 %v5221
    %6815 = vmatpush.bf16.msra.mxu0 %v5220
    %6816 = vmatpush.bf16.msra.mxu0 %v5219
    %6817 = vmatpush.bf16.msra.mxu0 %v5218
    %6818 = vmatpush.bf16.msra.mxu0 %v5217
    %6819 = vmatpush.bf16.msra.mxu0 %v5216
    %6820 = vmatpush.bf16.msra.mxu0 %v5215
    %6821 = vmatpush.bf16.msra.mxu0 %v5214
    %6822 = vmatmul.bf16.gmra.mxu0 %v1790
    %v6823 = vpop.f32.mrf.mxu0
    %v6824 = vadd.f32 %v1786, %v6823
    %v6825 = vpop.f32.mrf.mxu0
    %6826 = vdwg.mxu0
    %6827 = vmatpush.bf16.msra.mxu0 %v5229
    %6828 = vmatpush.bf16.msra.mxu0 %v5228
    %6829 = vmatpush.bf16.msra.mxu0 %v5227
    %6830 = vmatpush.bf16.msra.mxu0 %v5226
    %6831 = vmatpush.bf16.msra.mxu0 %v5225
    %6832 = vmatpush.bf16.msra.mxu0 %v5224
    %6833 = vmatpush.bf16.msra.mxu0 %v5223
    %6834 = vmatpush.bf16.msra.mxu0 %v5222
    %6835 = vmatmul.bf16.gmra.mxu0 %v1791
    %v6836 = vpop.f32.mrf.mxu0
    %v6837 = vadd.f32 %v6824, %v6836
    %v6838 = vpop.f32.mrf.mxu0
    %6839 = vdwg.mxu0
    %6840 = vmatpush.bf16.msra.mxu0 %v5237
    %6841 = vmatpush.bf16.msra.mxu0 %v5236
    %6842 = vmatpush.bf16.msra.mxu0 %v5235
    %6843 = vmatpush.bf16.msra.mxu0 %v5234
    %6844 = vmatpush.bf16.msra.mxu0 %v5233
    %6845 = vmatpush.bf16.msra.mxu0 %v5232
    %6846 = vmatpush.bf16.msra.mxu0 %v5231
    %6847 = vmatpush.bf16.msra.mxu0 %v5230
    %6848 = vmatmul.bf16.gmra.mxu0 %v1792
    %v6849 = vpop.f32.mrf.mxu0
    %v6850 = vadd.f32 %v6837, %v6849
    %v6851 = vpop.f32.mrf.mxu0
    %6852 = vdwg.mxu0
    %6853 = vmatpush.bf16.msra.mxu0 %v5245
    %6854 = vmatpush.bf16.msra.mxu0 %v5244
    %6855 = vmatpush.bf16.msra.mxu0 %v5243
    %6856 = vmatpush.bf16.msra.mxu0 %v5242
    %6857 = vmatpush.bf16.msra.mxu0 %v5241
    %6858 = vmatpush.bf16.msra.mxu0 %v5240
    %6859 = vmatpush.bf16.msra.mxu0 %v5239
    %6860 = vmatpush.bf16.msra.mxu0 %v5238
    %6861 = vmatmul.bf16.gmra.mxu0 %v1793
    %v6862 = vpop.f32.mrf.mxu0
    %v6863 = vadd.f32 %v6850, %v6862
    %v6864 = vpop.f32.mrf.mxu0
    %6865 = vdwg.mxu0
    %6866 = vmatpush.bf16.msra.mxu0 %v5253
    %6867 = vmatpush.bf16.msra.mxu0 %v5252
    %6868 = vmatpush.bf16.msra.mxu0 %v5251
    %6869 = vmatpush.bf16.msra.mxu0 %v5250
    %6870 = vmatpush.bf16.msra.mxu0 %v5249
    %6871 = vmatpush.bf16.msra.mxu0 %v5248
    %6872 = vmatpush.bf16.msra.mxu0 %v5247
    %6873 = vmatpush.bf16.msra.mxu0 %v5246
    %6874 = vmatmul.bf16.gmra.mxu0 %v1794
    %v6875 = vpop.f32.mrf.mxu0
    %v6876 = vadd.f32 %v6863, %v6875
    %v6877 = vpop.f32.mrf.mxu0
    %6878 = vdwg.mxu0
    %6879 = vmatpush.bf16.msra.mxu0 %v5261
    %6880 = vmatpush.bf16.msra.mxu0 %v5260
    %6881 = vmatpush.bf16.msra.mxu0 %v5259
    %6882 = vmatpush.bf16.msra.mxu0 %v5258
    %6883 = vmatpush.bf16.msra.mxu0 %v5257
    %6884 = vmatpush.bf16.msra.mxu0 %v5256
    %6885 = vmatpush.bf16.msra.mxu0 %v5255
    %6886 = vmatpush.bf16.msra.mxu0 %v5254
    %6887 = vmatmul.bf16.gmra.mxu0 %v1795
    %v6888 = vpop.f32.mrf.mxu0
    %v6889 = vadd.f32 %v6876, %v6888
    %v6890 = vpop.f32.mrf.mxu0
    %6891 = vdwg.mxu0
    %6892 = vmatpush.bf16.msra.mxu0 %v5269
    %6893 = vmatpush.bf16.msra.mxu0 %v5268
    %6894 = vmatpush.bf16.msra.mxu0 %v5267
    %6895 = vmatpush.bf16.msra.mxu0 %v5266
    %6896 = vmatpush.bf16.msra.mxu0 %v5265
    %6897 = vmatpush.bf16.msra.mxu0 %v5264
    %6898 = vmatpush.bf16.msra.mxu0 %v5263
    %6899 = vmatpush.bf16.msra.mxu0 %v5262
    %6900 = vmatmul.bf16.gmra.mxu0 %v1796
    %v6901 = vpop.f32.mrf.mxu0
    %v6902 = vadd.f32 %v6889, %v6901
    %v6903 = vpop.f32.mrf.mxu0
    %6904 = vdwg.mxu0
    %6905 = vmatpush.bf16.msra.mxu0 %v5277
    %6906 = vmatpush.bf16.msra.mxu0 %v5276
    %6907 = vmatpush.bf16.msra.mxu0 %v5275
    %6908 = vmatpush.bf16.msra.mxu0 %v5274
    %6909 = vmatpush.bf16.msra.mxu0 %v5273
    %6910 = vmatpush.bf16.msra.mxu0 %v5272
    %6911 = vmatpush.bf16.msra.mxu0 %v5271
    %6912 = vmatpush.bf16.msra.mxu0 %v5270
    %6913 = vmatmul.bf16.gmra.mxu0 %v1797
    %v6914 = vpop.f32.mrf.mxu0
    %v6915 = vadd.f32 %v6902, %v6914
    %v6916 = vpop.f32.mrf.mxu0
    %6917 = vdwg.mxu0
    %6918 = vmatpush.bf16.msra.mxu0 %v5285
    %6919 = vmatpush.bf16.msra.mxu0 %v5284
    %6920 = vmatpush.bf16.msra.mxu0 %v5283
    %6921 = vmatpush.bf16.msra.mxu0 %v5282
    %6922 = vmatpush.bf16.msra.mxu0 %v5281
    %6923 = vmatpush.bf16.msra.mxu0 %v5280
    %6924 = vmatpush.bf16.msra.mxu0 %v5279
    %6925 = vmatpush.bf16.msra.mxu0 %v5278
    %6926 = vmatmul.bf16.gmra.mxu0 %v1800
    %v6927 = vpop.f32.mrf.mxu0
    %v6928 = vadd.f32 %v6915, %v6927
    %v6929 = vpop.f32.mrf.mxu0
    %6930 = vdwg.mxu0
    %6931 = vmatpush.bf16.msra.mxu0 %v5293
    %6932 = vmatpush.bf16.msra.mxu0 %v5292
    %6933 = vmatpush.bf16.msra.mxu0 %v5291
    %6934 = vmatpush.bf16.msra.mxu0 %v5290
    %6935 = vmatpush.bf16.msra.mxu0 %v5289
    %6936 = vmatpush.bf16.msra.mxu0 %v5288
    %6937 = vmatpush.bf16.msra.mxu0 %v5287
    %6938 = vmatpush.bf16.msra.mxu0 %v5286
    %6939 = vmatmul.bf16.gmra.mxu0 %v1801
    %v6940 = vpop.f32.mrf.mxu0
    %v6941 = vadd.f32 %v6928, %v6940
    %v6942 = vpop.f32.mrf.mxu0
    %6943 = vdwg.mxu0
    %6944 = vmatpush.bf16.msra.mxu0 %v5301
    %6945 = vmatpush.bf16.msra.mxu0 %v5300
    %6946 = vmatpush.bf16.msra.mxu0 %v5299
    %6947 = vmatpush.bf16.msra.mxu0 %v5298
    %6948 = vmatpush.bf16.msra.mxu0 %v5297
    %6949 = vmatpush.bf16.msra.mxu0 %v5296
    %6950 = vmatpush.bf16.msra.mxu0 %v5295
    %6951 = vmatpush.bf16.msra.mxu0 %v5294
    %6952 = vmatmul.bf16.gmra.mxu0 %v1802
    %v6953 = vpop.f32.mrf.mxu0
    %v6954 = vadd.f32 %v6941, %v6953
    %v6955 = vpop.f32.mrf.mxu0
    %6956 = vdwg.mxu0
    %6957 = vmatpush.bf16.msra.mxu0 %v5309
    %6958 = vmatpush.bf16.msra.mxu0 %v5308
    %6959 = vmatpush.bf16.msra.mxu0 %v5307
    %6960 = vmatpush.bf16.msra.mxu0 %v5306
    %6961 = vmatpush.bf16.msra.mxu0 %v5305
    %6962 = vmatpush.bf16.msra.mxu0 %v5304
    %6963 = vmatpush.bf16.msra.mxu0 %v5303
    %6964 = vmatpush.bf16.msra.mxu0 %v5302
    %6965 = vmatmul.bf16.gmra.mxu0 %v1803
    %v6966 = vpop.f32.mrf.mxu0
    %v6967 = vadd.f32 %v6954, %v6966
    %v6968 = vpop.f32.mrf.mxu0
    %6969 = vdwg.mxu0
    %6970 = vmatpush.bf16.msra.mxu0 %v5317
    %6971 = vmatpush.bf16.msra.mxu0 %v5316
    %6972 = vmatpush.bf16.msra.mxu0 %v5315
    %6973 = vmatpush.bf16.msra.mxu0 %v5314
    %6974 = vmatpush.bf16.msra.mxu0 %v5313
    %6975 = vmatpush.bf16.msra.mxu0 %v5312
    %6976 = vmatpush.bf16.msra.mxu0 %v5311
    %6977 = vmatpush.bf16.msra.mxu0 %v5310
    %6978 = vmatmul.bf16.gmra.mxu0 %v1804
    %v6979 = vpop.f32.mrf.mxu0
    %v6980 = vadd.f32 %v6967, %v6979
    %v6981 = vpop.f32.mrf.mxu0
    %6982 = vdwg.mxu0
    %6983 = vmatpush.bf16.msra.mxu0 %v5325
    %6984 = vmatpush.bf16.msra.mxu0 %v5324
    %6985 = vmatpush.bf16.msra.mxu0 %v5323
    %6986 = vmatpush.bf16.msra.mxu0 %v5322
    %6987 = vmatpush.bf16.msra.mxu0 %v5321
    %6988 = vmatpush.bf16.msra.mxu0 %v5320
    %6989 = vmatpush.bf16.msra.mxu0 %v5319
    %6990 = vmatpush.bf16.msra.mxu0 %v5318
    %6991 = vmatmul.bf16.gmra.mxu0 %v1805
    %v6992 = vpop.f32.mrf.mxu0
    %v6993 = vadd.f32 %v6980, %v6992
    %v6994 = vpop.f32.mrf.mxu0
    %6995 = vdwg.mxu0
    %6996 = vmatpush.bf16.msra.mxu0 %v5333
    %6997 = vmatpush.bf16.msra.mxu0 %v5332
    %6998 = vmatpush.bf16.msra.mxu0 %v5331
    %6999 = vmatpush.bf16.msra.mxu0 %v5330
    %7000 = vmatpush.bf16.msra.mxu0 %v5329
    %7001 = vmatpush.bf16.msra.mxu0 %v5328
    %7002 = vmatpush.bf16.msra.mxu0 %v5327
    %7003 = vmatpush.bf16.msra.mxu0 %v5326
    %7004 = vmatmul.bf16.gmra.mxu0 %v1806
    %v7005 = vpop.f32.mrf.mxu0
    %v7006 = vadd.f32 %v6993, %v7005
    %v7007 = vpop.f32.mrf.mxu0
    %7008 = vdwg.mxu0
    %7009 = vmatpush.bf16.msra.mxu0 %v5341
    %7010 = vmatpush.bf16.msra.mxu0 %v5340
    %7011 = vmatpush.bf16.msra.mxu0 %v5339
    %7012 = vmatpush.bf16.msra.mxu0 %v5338
    %7013 = vmatpush.bf16.msra.mxu0 %v5337
    %7014 = vmatpush.bf16.msra.mxu0 %v5336
    %7015 = vmatpush.bf16.msra.mxu0 %v5335
    %7016 = vmatpush.bf16.msra.mxu0 %v5334
    %7017 = vmatmul.bf16.gmra.mxu0 %v1807
    %v7018 = vpop.f32.mrf.mxu0
    %v7019 = vadd.f32 %v7006, %v7018
    %v7020 = vpop.f32.mrf.mxu0
    %7021 = vdwg.mxu0
    %7022 = vmatpush.bf16.msra.mxu0 %v5349
    %7023 = vmatpush.bf16.msra.mxu0 %v5348
    %7024 = vmatpush.bf16.msra.mxu0 %v5347
    %7025 = vmatpush.bf16.msra.mxu0 %v5346
    %7026 = vmatpush.bf16.msra.mxu0 %v5345
    %7027 = vmatpush.bf16.msra.mxu0 %v5344
    %7028 = vmatpush.bf16.msra.mxu0 %v5343
    %7029 = vmatpush.bf16.msra.mxu0 %v5342
    %7030 = vmatmul.bf16.gmra.mxu0 %v1810
    %v7031 = vpop.f32.mrf.mxu0
    %v7032 = vadd.f32 %v7019, %v7031
    %v7033 = vpop.f32.mrf.mxu0
    %7034 = vdwg.mxu0
    %7035 = vmatpush.bf16.msra.mxu0 %v5357
    %7036 = vmatpush.bf16.msra.mxu0 %v5356
    %7037 = vmatpush.bf16.msra.mxu0 %v5355
    %7038 = vmatpush.bf16.msra.mxu0 %v5354
    %7039 = vmatpush.bf16.msra.mxu0 %v5353
    %7040 = vmatpush.bf16.msra.mxu0 %v5352
    %7041 = vmatpush.bf16.msra.mxu0 %v5351
    %7042 = vmatpush.bf16.msra.mxu0 %v5350
    %7043 = vmatmul.bf16.gmra.mxu0 %v1811
    %v7044 = vpop.f32.mrf.mxu0
    %v7045 = vadd.f32 %v7032, %v7044
    %v7046 = vpop.f32.mrf.mxu0
    %7047 = vdwg.mxu0
    %7048 = vmatpush.bf16.msra.mxu0 %v5365
    %7049 = vmatpush.bf16.msra.mxu0 %v5364
    %7050 = vmatpush.bf16.msra.mxu0 %v5363
    %7051 = vmatpush.bf16.msra.mxu0 %v5362
    %7052 = vmatpush.bf16.msra.mxu0 %v5361
    %7053 = vmatpush.bf16.msra.mxu0 %v5360
    %7054 = vmatpush.bf16.msra.mxu0 %v5359
    %7055 = vmatpush.bf16.msra.mxu0 %v5358
    %7056 = vmatmul.bf16.gmra.mxu0 %v1812
    %v7057 = vpop.f32.mrf.mxu0
    %v7058 = vadd.f32 %v7045, %v7057
    %v7059 = vpop.f32.mrf.mxu0
    %7060 = vdwg.mxu0
    %7061 = vmatpush.bf16.msra.mxu0 %v5373
    %7062 = vmatpush.bf16.msra.mxu0 %v5372
    %7063 = vmatpush.bf16.msra.mxu0 %v5371
    %7064 = vmatpush.bf16.msra.mxu0 %v5370
    %7065 = vmatpush.bf16.msra.mxu0 %v5369
    %7066 = vmatpush.bf16.msra.mxu0 %v5368
    %7067 = vmatpush.bf16.msra.mxu0 %v5367
    %7068 = vmatpush.bf16.msra.mxu0 %v5366
    %7069 = vmatmul.bf16.gmra.mxu0 %v1813
    %v7070 = vpop.f32.mrf.mxu0
    %v7071 = vadd.f32 %v7058, %v7070
    %v7072 = vpop.f32.mrf.mxu0
    %7073 = vdwg.mxu0
    %7074 = vmatpush.bf16.msra.mxu0 %v5381
    %7075 = vmatpush.bf16.msra.mxu0 %v5380
    %7076 = vmatpush.bf16.msra.mxu0 %v5379
    %7077 = vmatpush.bf16.msra.mxu0 %v5378
    %7078 = vmatpush.bf16.msra.mxu0 %v5377
    %7079 = vmatpush.bf16.msra.mxu0 %v5376
    %7080 = vmatpush.bf16.msra.mxu0 %v5375
    %7081 = vmatpush.bf16.msra.mxu0 %v5374
    %7082 = vmatmul.bf16.gmra.mxu0 %v1814
    %v7083 = vpop.f32.mrf.mxu0
    %v7084 = vadd.f32 %v7071, %v7083
    %v7085 = vpop.f32.mrf.mxu0
    %7086 = vdwg.mxu0
    %7087 = vmatpush.bf16.msra.mxu0 %v5389
    %7088 = vmatpush.bf16.msra.mxu0 %v5388
    %7089 = vmatpush.bf16.msra.mxu0 %v5387
    %7090 = vmatpush.bf16.msra.mxu0 %v5386
    %7091 = vmatpush.bf16.msra.mxu0 %v5385
    %7092 = vmatpush.bf16.msra.mxu0 %v5384
    %7093 = vmatpush.bf16.msra.mxu0 %v5383
    %7094 = vmatpush.bf16.msra.mxu0 %v5382
    %7095 = vmatmul.bf16.gmra.mxu0 %v1815
    %v7096 = vpop.f32.mrf.mxu0
    %v7097 = vadd.f32 %v7084, %v7096
    %v7098 = vpop.f32.mrf.mxu0
    %7099 = vdwg.mxu0
    %7100 = vmatpush.bf16.msra.mxu0 %v5397
    %7101 = vmatpush.bf16.msra.mxu0 %v5396
    %7102 = vmatpush.bf16.msra.mxu0 %v5395
    %7103 = vmatpush.bf16.msra.mxu0 %v5394
    %7104 = vmatpush.bf16.msra.mxu0 %v5393
    %7105 = vmatpush.bf16.msra.mxu0 %v5392
    %7106 = vmatpush.bf16.msra.mxu0 %v5391
    %7107 = vmatpush.bf16.msra.mxu0 %v5390
    %7108 = vmatmul.bf16.gmra.mxu0 %v1816
    %v7109 = vpop.f32.mrf.mxu0
    %v7110 = vadd.f32 %v7097, %v7109
    %v7111 = vpop.f32.mrf.mxu0
    %7112 = vdwg.mxu0
    %7113 = vmatpush.bf16.msra.mxu0 %v5405
    %7114 = vmatpush.bf16.msra.mxu0 %v5404
    %7115 = vmatpush.bf16.msra.mxu0 %v5403
    %7116 = vmatpush.bf16.msra.mxu0 %v5402
    %7117 = vmatpush.bf16.msra.mxu0 %v5401
    %7118 = vmatpush.bf16.msra.mxu0 %v5400
    %7119 = vmatpush.bf16.msra.mxu0 %v5399
    %7120 = vmatpush.bf16.msra.mxu0 %v5398
    %7121 = vmatmul.bf16.gmra.mxu0 %v1817
    %v7122 = vpop.f32.mrf.mxu0
    %v7123 = vadd.f32 %v7110, %v7122
    %v7124 = vpop.f32.mrf.mxu0
    %7125 = vdwg.mxu0
    %7126 = vmatpush.bf16.msra.mxu0 %v5413
    %7127 = vmatpush.bf16.msra.mxu0 %v5412
    %7128 = vmatpush.bf16.msra.mxu0 %v5411
    %7129 = vmatpush.bf16.msra.mxu0 %v5410
    %7130 = vmatpush.bf16.msra.mxu0 %v5409
    %7131 = vmatpush.bf16.msra.mxu0 %v5408
    %7132 = vmatpush.bf16.msra.mxu0 %v5407
    %7133 = vmatpush.bf16.msra.mxu0 %v5406
    %7134 = vmatmul.bf16.gmra.mxu0 %v1820
    %v7135 = vpop.f32.mrf.mxu0
    %v7136 = vadd.f32 %v7123, %v7135
    %v7137 = vpop.f32.mrf.mxu0
    %7138 = vdwg.mxu0
    %7139 = vmatpush.bf16.msra.mxu0 %v5421
    %7140 = vmatpush.bf16.msra.mxu0 %v5420
    %7141 = vmatpush.bf16.msra.mxu0 %v5419
    %7142 = vmatpush.bf16.msra.mxu0 %v5418
    %7143 = vmatpush.bf16.msra.mxu0 %v5417
    %7144 = vmatpush.bf16.msra.mxu0 %v5416
    %7145 = vmatpush.bf16.msra.mxu0 %v5415
    %7146 = vmatpush.bf16.msra.mxu0 %v5414
    %7147 = vmatmul.bf16.gmra.mxu0 %v1821
    %v7148 = vpop.f32.mrf.mxu0
    %v7149 = vadd.f32 %v7136, %v7148
    %v7150 = vpop.f32.mrf.mxu0
    %7151 = vdwg.mxu0
    %7152 = vmatpush.bf16.msra.mxu0 %v5429
    %7153 = vmatpush.bf16.msra.mxu0 %v5428
    %7154 = vmatpush.bf16.msra.mxu0 %v5427
    %7155 = vmatpush.bf16.msra.mxu0 %v5426
    %7156 = vmatpush.bf16.msra.mxu0 %v5425
    %7157 = vmatpush.bf16.msra.mxu0 %v5424
    %7158 = vmatpush.bf16.msra.mxu0 %v5423
    %7159 = vmatpush.bf16.msra.mxu0 %v5422
    %7160 = vmatmul.bf16.gmra.mxu0 %v1822
    %v7161 = vpop.f32.mrf.mxu0
    %v7162 = vadd.f32 %v7149, %v7161
    %v7163 = vpop.f32.mrf.mxu0
    %7164 = vdwg.mxu0
    %7165 = vmatpush.bf16.msra.mxu0 %v5437
    %7166 = vmatpush.bf16.msra.mxu0 %v5436
    %7167 = vmatpush.bf16.msra.mxu0 %v5435
    %7168 = vmatpush.bf16.msra.mxu0 %v5434
    %7169 = vmatpush.bf16.msra.mxu0 %v5433
    %7170 = vmatpush.bf16.msra.mxu0 %v5432
    %7171 = vmatpush.bf16.msra.mxu0 %v5431
    %7172 = vmatpush.bf16.msra.mxu0 %v5430
    %7173 = vmatmul.bf16.gmra.mxu0 %v1823
    %v7174 = vpop.f32.mrf.mxu0
    %v7175 = vadd.f32 %v7162, %v7174
    %v7176 = vpop.f32.mrf.mxu0
    %7177 = vdwg.mxu0
    %7178 = vmatpush.bf16.msra.mxu0 %v5445
    %7179 = vmatpush.bf16.msra.mxu0 %v5444
    %7180 = vmatpush.bf16.msra.mxu0 %v5443
    %7181 = vmatpush.bf16.msra.mxu0 %v5442
    %7182 = vmatpush.bf16.msra.mxu0 %v5441
    %7183 = vmatpush.bf16.msra.mxu0 %v5440
    %7184 = vmatpush.bf16.msra.mxu0 %v5439
    %7185 = vmatpush.bf16.msra.mxu0 %v5438
    %7186 = vmatmul.bf16.gmra.mxu0 %v1824
    %v7187 = vpop.f32.mrf.mxu0
    %v7188 = vadd.f32 %v7175, %v7187
    %v7189 = vpop.f32.mrf.mxu0
    %7190 = vdwg.mxu0
    %7191 = vmatpush.bf16.msra.mxu0 %v5453
    %7192 = vmatpush.bf16.msra.mxu0 %v5452
    %7193 = vmatpush.bf16.msra.mxu0 %v5451
    %7194 = vmatpush.bf16.msra.mxu0 %v5450
    %7195 = vmatpush.bf16.msra.mxu0 %v5449
    %7196 = vmatpush.bf16.msra.mxu0 %v5448
    %7197 = vmatpush.bf16.msra.mxu0 %v5447
    %7198 = vmatpush.bf16.msra.mxu0 %v5446
    %7199 = vmatmul.bf16.gmra.mxu0 %v1825
    %v7200 = vpop.f32.mrf.mxu0
    %v7201 = vadd.f32 %v7188, %v7200
    %v7202 = vpop.f32.mrf.mxu0
    %7203 = vdwg.mxu0
    %7204 = vmatpush.bf16.msra.mxu0 %v5461
    %7205 = vmatpush.bf16.msra.mxu0 %v5460
    %7206 = vmatpush.bf16.msra.mxu0 %v5459
    %7207 = vmatpush.bf16.msra.mxu0 %v5458
    %7208 = vmatpush.bf16.msra.mxu0 %v5457
    %7209 = vmatpush.bf16.msra.mxu0 %v5456
    %7210 = vmatpush.bf16.msra.mxu0 %v5455
    %7211 = vmatpush.bf16.msra.mxu0 %v5454
    %7212 = vmatmul.bf16.gmra.mxu0 %v1826
    %v7213 = vpop.f32.mrf.mxu0
    %v7214 = vadd.f32 %v7201, %v7213
    %v7215 = vpop.f32.mrf.mxu0
    %7216 = vdwg.mxu0
    %7217 = vmatpush.bf16.msra.mxu0 %v5469
    %7218 = vmatpush.bf16.msra.mxu0 %v5468
    %7219 = vmatpush.bf16.msra.mxu0 %v5467
    %7220 = vmatpush.bf16.msra.mxu0 %v5466
    %7221 = vmatpush.bf16.msra.mxu0 %v5465
    %7222 = vmatpush.bf16.msra.mxu0 %v5464
    %7223 = vmatpush.bf16.msra.mxu0 %v5463
    %7224 = vmatpush.bf16.msra.mxu0 %v5462
    %7225 = vmatmul.bf16.gmra.mxu0 %v1827
    %v7226 = vpop.f32.mrf.mxu0
    %v7227 = vadd.f32 %v7214, %v7226
    %v7228 = vpop.f32.mrf.mxu0
    %7229 = vdwg.mxu0
    %7230 = vmatpush.bf16.msra.mxu0 %v5477
    %7231 = vmatpush.bf16.msra.mxu0 %v5476
    %7232 = vmatpush.bf16.msra.mxu0 %v5475
    %7233 = vmatpush.bf16.msra.mxu0 %v5474
    %7234 = vmatpush.bf16.msra.mxu0 %v5473
    %7235 = vmatpush.bf16.msra.mxu0 %v5472
    %7236 = vmatpush.bf16.msra.mxu0 %v5471
    %7237 = vmatpush.bf16.msra.mxu0 %v5470
    %7238 = vmatmul.bf16.gmra.mxu0 %v1830
    %v7239 = vpop.f32.mrf.mxu0
    %v7240 = vadd.f32 %v7227, %v7239
    %v7241 = vpop.f32.mrf.mxu0
    %7242 = vdwg.mxu0
    %7243 = vmatpush.bf16.msra.mxu0 %v5485
    %7244 = vmatpush.bf16.msra.mxu0 %v5484
    %7245 = vmatpush.bf16.msra.mxu0 %v5483
    %7246 = vmatpush.bf16.msra.mxu0 %v5482
    %7247 = vmatpush.bf16.msra.mxu0 %v5481
    %7248 = vmatpush.bf16.msra.mxu0 %v5480
    %7249 = vmatpush.bf16.msra.mxu0 %v5479
    %7250 = vmatpush.bf16.msra.mxu0 %v5478
    %7251 = vmatmul.bf16.gmra.mxu0 %v1831
    %v7252 = vpop.f32.mrf.mxu0
    %v7253 = vadd.f32 %v7240, %v7252
    %v7254 = vpop.f32.mrf.mxu0
    %7255 = vdwg.mxu0
    %7256 = vmatpush.bf16.msra.mxu0 %v5493
    %7257 = vmatpush.bf16.msra.mxu0 %v5492
    %7258 = vmatpush.bf16.msra.mxu0 %v5491
    %7259 = vmatpush.bf16.msra.mxu0 %v5490
    %7260 = vmatpush.bf16.msra.mxu0 %v5489
    %7261 = vmatpush.bf16.msra.mxu0 %v5488
    %7262 = vmatpush.bf16.msra.mxu0 %v5487
    %7263 = vmatpush.bf16.msra.mxu0 %v5486
    %7264 = vmatmul.bf16.gmra.mxu0 %v1832
    %v7265 = vpop.f32.mrf.mxu0
    %v7266 = vadd.f32 %v7253, %v7265
    %v7267 = vpop.f32.mrf.mxu0
    %7268 = vdwg.mxu0
    %7269 = vmatpush.bf16.msra.mxu0 %v5501
    %7270 = vmatpush.bf16.msra.mxu0 %v5500
    %7271 = vmatpush.bf16.msra.mxu0 %v5499
    %7272 = vmatpush.bf16.msra.mxu0 %v5498
    %7273 = vmatpush.bf16.msra.mxu0 %v5497
    %7274 = vmatpush.bf16.msra.mxu0 %v5496
    %7275 = vmatpush.bf16.msra.mxu0 %v5495
    %7276 = vmatpush.bf16.msra.mxu0 %v5494
    %7277 = vmatmul.bf16.gmra.mxu0 %v1833
    %v7278 = vpop.f32.mrf.mxu0
    %v7279 = vadd.f32 %v7266, %v7278
    %v7280 = vpop.f32.mrf.mxu0
    %7281 = vdwg.mxu0
    %7282 = vmatpush.bf16.msra.mxu0 %v5509
    %7283 = vmatpush.bf16.msra.mxu0 %v5508
    %7284 = vmatpush.bf16.msra.mxu0 %v5507
    %7285 = vmatpush.bf16.msra.mxu0 %v5506
    %7286 = vmatpush.bf16.msra.mxu0 %v5505
    %7287 = vmatpush.bf16.msra.mxu0 %v5504
    %7288 = vmatpush.bf16.msra.mxu0 %v5503
    %7289 = vmatpush.bf16.msra.mxu0 %v5502
    %7290 = vmatmul.bf16.gmra.mxu0 %v1834
    %v7291 = vpop.f32.mrf.mxu0
    %v7292 = vadd.f32 %v7279, %v7291
    %v7293 = vpop.f32.mrf.mxu0
    %7294 = vdwg.mxu0
    %7295 = vmatpush.bf16.msra.mxu0 %v5517
    %7296 = vmatpush.bf16.msra.mxu0 %v5516
    %7297 = vmatpush.bf16.msra.mxu0 %v5515
    %7298 = vmatpush.bf16.msra.mxu0 %v5514
    %7299 = vmatpush.bf16.msra.mxu0 %v5513
    %7300 = vmatpush.bf16.msra.mxu0 %v5512
    %7301 = vmatpush.bf16.msra.mxu0 %v5511
    %7302 = vmatpush.bf16.msra.mxu0 %v5510
    %7303 = vmatmul.bf16.gmra.mxu0 %v1835
    %v7304 = vpop.f32.mrf.mxu0
    %v7305 = vadd.f32 %v7292, %v7304
    %v7306 = vpop.f32.mrf.mxu0
    %7307 = vdwg.mxu0
    %7308 = vmatpush.bf16.msra.mxu0 %v5525
    %7309 = vmatpush.bf16.msra.mxu0 %v5524
    %7310 = vmatpush.bf16.msra.mxu0 %v5523
    %7311 = vmatpush.bf16.msra.mxu0 %v5522
    %7312 = vmatpush.bf16.msra.mxu0 %v5521
    %7313 = vmatpush.bf16.msra.mxu0 %v5520
    %7314 = vmatpush.bf16.msra.mxu0 %v5519
    %7315 = vmatpush.bf16.msra.mxu0 %v5518
    %7316 = vmatmul.bf16.gmra.mxu0 %v1836
    %v7317 = vpop.f32.mrf.mxu0
    %v7318 = vadd.f32 %v7305, %v7317
    %v7319 = vpop.f32.mrf.mxu0
    %7320 = vdwg.mxu0
    %7321 = vmatpush.bf16.msra.mxu0 %v5533
    %7322 = vmatpush.bf16.msra.mxu0 %v5532
    %7323 = vmatpush.bf16.msra.mxu0 %v5531
    %7324 = vmatpush.bf16.msra.mxu0 %v5530
    %7325 = vmatpush.bf16.msra.mxu0 %v5529
    %7326 = vmatpush.bf16.msra.mxu0 %v5528
    %7327 = vmatpush.bf16.msra.mxu0 %v5527
    %7328 = vmatpush.bf16.msra.mxu0 %v5526
    %7329 = vmatmul.bf16.gmra.mxu0 %v1837
    %v7330 = vpop.f32.mrf.mxu0
    %v7331 = vadd.f32 %v7318, %v7330
    %v7332 = vpop.f32.mrf.mxu0
    %7333 = vdwg.mxu0
    %7334 = vmatpush.bf16.msra.mxu0 %v5541
    %7335 = vmatpush.bf16.msra.mxu0 %v5540
    %7336 = vmatpush.bf16.msra.mxu0 %v5539
    %7337 = vmatpush.bf16.msra.mxu0 %v5538
    %7338 = vmatpush.bf16.msra.mxu0 %v5537
    %7339 = vmatpush.bf16.msra.mxu0 %v5536
    %7340 = vmatpush.bf16.msra.mxu0 %v5535
    %7341 = vmatpush.bf16.msra.mxu0 %v5534
    %7342 = vmatmul.bf16.gmra.mxu0 %v1840
    %v7343 = vpop.f32.mrf.mxu0
    %v7344 = vadd.f32 %v7331, %v7343
    %v7345 = vpop.f32.mrf.mxu0
    %7346 = vdwg.mxu0
    %7347 = vmatpush.bf16.msra.mxu0 %v5549
    %7348 = vmatpush.bf16.msra.mxu0 %v5548
    %7349 = vmatpush.bf16.msra.mxu0 %v5547
    %7350 = vmatpush.bf16.msra.mxu0 %v5546
    %7351 = vmatpush.bf16.msra.mxu0 %v5545
    %7352 = vmatpush.bf16.msra.mxu0 %v5544
    %7353 = vmatpush.bf16.msra.mxu0 %v5543
    %7354 = vmatpush.bf16.msra.mxu0 %v5542
    %7355 = vmatmul.bf16.gmra.mxu0 %v1841
    %v7356 = vpop.f32.mrf.mxu0
    %v7357 = vadd.f32 %v7344, %v7356
    %v7358 = vpop.f32.mrf.mxu0
    %7359 = vdwg.mxu0
    %7360 = vmatpush.bf16.msra.mxu0 %v5557
    %7361 = vmatpush.bf16.msra.mxu0 %v5556
    %7362 = vmatpush.bf16.msra.mxu0 %v5555
    %7363 = vmatpush.bf16.msra.mxu0 %v5554
    %7364 = vmatpush.bf16.msra.mxu0 %v5553
    %7365 = vmatpush.bf16.msra.mxu0 %v5552
    %7366 = vmatpush.bf16.msra.mxu0 %v5551
    %7367 = vmatpush.bf16.msra.mxu0 %v5550
    %7368 = vmatmul.bf16.gmra.mxu0 %v1842
    %v7369 = vpop.f32.mrf.mxu0
    %v7370 = vadd.f32 %v7357, %v7369
    %v7371 = vpop.f32.mrf.mxu0
    %7372 = vdwg.mxu0
    %7373 = vmatpush.bf16.msra.mxu0 %v5565
    %7374 = vmatpush.bf16.msra.mxu0 %v5564
    %7375 = vmatpush.bf16.msra.mxu0 %v5563
    %7376 = vmatpush.bf16.msra.mxu0 %v5562
    %7377 = vmatpush.bf16.msra.mxu0 %v5561
    %7378 = vmatpush.bf16.msra.mxu0 %v5560
    %7379 = vmatpush.bf16.msra.mxu0 %v5559
    %7380 = vmatpush.bf16.msra.mxu0 %v5558
    %7381 = vmatmul.bf16.gmra.mxu0 %v1843
    %v7382 = vpop.f32.mrf.mxu0
    %v7383 = vadd.f32 %v7370, %v7382
    %v7384 = vpop.f32.mrf.mxu0
    %7385 = vdwg.mxu0
    %7386 = vmatpush.bf16.msra.mxu0 %v5573
    %7387 = vmatpush.bf16.msra.mxu0 %v5572
    %7388 = vmatpush.bf16.msra.mxu0 %v5571
    %7389 = vmatpush.bf16.msra.mxu0 %v5570
    %7390 = vmatpush.bf16.msra.mxu0 %v5569
    %7391 = vmatpush.bf16.msra.mxu0 %v5568
    %7392 = vmatpush.bf16.msra.mxu0 %v5567
    %7393 = vmatpush.bf16.msra.mxu0 %v5566
    %7394 = vmatmul.bf16.gmra.mxu0 %v1844
    %v7395 = vpop.f32.mrf.mxu0
    %v7396 = vadd.f32 %v7383, %v7395
    %v7397 = vpop.f32.mrf.mxu0
    %7398 = vdwg.mxu0
    %7399 = vmatpush.bf16.msra.mxu0 %v5581
    %7400 = vmatpush.bf16.msra.mxu0 %v5580
    %7401 = vmatpush.bf16.msra.mxu0 %v5579
    %7402 = vmatpush.bf16.msra.mxu0 %v5578
    %7403 = vmatpush.bf16.msra.mxu0 %v5577
    %7404 = vmatpush.bf16.msra.mxu0 %v5576
    %7405 = vmatpush.bf16.msra.mxu0 %v5575
    %7406 = vmatpush.bf16.msra.mxu0 %v5574
    %7407 = vmatmul.bf16.gmra.mxu0 %v1845
    %v7408 = vpop.f32.mrf.mxu0
    %v7409 = vadd.f32 %v7396, %v7408
    %v7410 = vpop.f32.mrf.mxu0
    %7411 = vdwg.mxu0
    %7412 = vmatpush.bf16.msra.mxu0 %v5589
    %7413 = vmatpush.bf16.msra.mxu0 %v5588
    %7414 = vmatpush.bf16.msra.mxu0 %v5587
    %7415 = vmatpush.bf16.msra.mxu0 %v5586
    %7416 = vmatpush.bf16.msra.mxu0 %v5585
    %7417 = vmatpush.bf16.msra.mxu0 %v5584
    %7418 = vmatpush.bf16.msra.mxu0 %v5583
    %7419 = vmatpush.bf16.msra.mxu0 %v5582
    %7420 = vmatmul.bf16.gmra.mxu0 %v1846
    %v7421 = vpop.f32.mrf.mxu0
    %v7422 = vadd.f32 %v7409, %v7421
    %v7423 = vpop.f32.mrf.mxu0
    %7424 = vdwg.mxu0
    %7425 = vmatpush.bf16.msra.mxu0 %v5597
    %7426 = vmatpush.bf16.msra.mxu0 %v5596
    %7427 = vmatpush.bf16.msra.mxu0 %v5595
    %7428 = vmatpush.bf16.msra.mxu0 %v5594
    %7429 = vmatpush.bf16.msra.mxu0 %v5593
    %7430 = vmatpush.bf16.msra.mxu0 %v5592
    %7431 = vmatpush.bf16.msra.mxu0 %v5591
    %7432 = vmatpush.bf16.msra.mxu0 %v5590
    %7433 = vmatmul.bf16.gmra.mxu0 %v1847
    %v7434 = vpop.f32.mrf.mxu0
    %v7435 = vadd.f32 %v7422, %v7434
    %v7436 = vpop.f32.mrf.mxu0
    %7437 = vdwg.mxu0
    %7438 = vmatpush.bf16.msra.mxu0 %v5605
    %7439 = vmatpush.bf16.msra.mxu0 %v5604
    %7440 = vmatpush.bf16.msra.mxu0 %v5603
    %7441 = vmatpush.bf16.msra.mxu0 %v5602
    %7442 = vmatpush.bf16.msra.mxu0 %v5601
    %7443 = vmatpush.bf16.msra.mxu0 %v5600
    %7444 = vmatpush.bf16.msra.mxu0 %v5599
    %7445 = vmatpush.bf16.msra.mxu0 %v5598
    %7446 = vmatmul.bf16.gmra.mxu0 %v1850
    %v7447 = vpop.f32.mrf.mxu0
    %v7448 = vadd.f32 %v7435, %v7447
    %v7449 = vpop.f32.mrf.mxu0
    %7450 = vdwg.mxu0
    %7451 = vmatpush.bf16.msra.mxu0 %v5613
    %7452 = vmatpush.bf16.msra.mxu0 %v5612
    %7453 = vmatpush.bf16.msra.mxu0 %v5611
    %7454 = vmatpush.bf16.msra.mxu0 %v5610
    %7455 = vmatpush.bf16.msra.mxu0 %v5609
    %7456 = vmatpush.bf16.msra.mxu0 %v5608
    %7457 = vmatpush.bf16.msra.mxu0 %v5607
    %7458 = vmatpush.bf16.msra.mxu0 %v5606
    %7459 = vmatmul.bf16.gmra.mxu0 %v1851
    %v7460 = vpop.f32.mrf.mxu0
    %v7461 = vadd.f32 %v7448, %v7460
    %v7462 = vpop.f32.mrf.mxu0
    %7463 = vdwg.mxu0
    %7464 = vmatpush.bf16.msra.mxu0 %v5621
    %7465 = vmatpush.bf16.msra.mxu0 %v5620
    %7466 = vmatpush.bf16.msra.mxu0 %v5619
    %7467 = vmatpush.bf16.msra.mxu0 %v5618
    %7468 = vmatpush.bf16.msra.mxu0 %v5617
    %7469 = vmatpush.bf16.msra.mxu0 %v5616
    %7470 = vmatpush.bf16.msra.mxu0 %v5615
    %7471 = vmatpush.bf16.msra.mxu0 %v5614
    %7472 = vmatmul.bf16.gmra.mxu0 %v1852
    %v7473 = vpop.f32.mrf.mxu0
    %v7474 = vadd.f32 %v7461, %v7473
    %v7475 = vpop.f32.mrf.mxu0
    %7476 = vdwg.mxu0
    %7477 = vmatpush.bf16.msra.mxu0 %v5629
    %7478 = vmatpush.bf16.msra.mxu0 %v5628
    %7479 = vmatpush.bf16.msra.mxu0 %v5627
    %7480 = vmatpush.bf16.msra.mxu0 %v5626
    %7481 = vmatpush.bf16.msra.mxu0 %v5625
    %7482 = vmatpush.bf16.msra.mxu0 %v5624
    %7483 = vmatpush.bf16.msra.mxu0 %v5623
    %7484 = vmatpush.bf16.msra.mxu0 %v5622
    %7485 = vmatmul.bf16.gmra.mxu0 %v1853
    %v7486 = vpop.f32.mrf.mxu0
    %v7487 = vadd.f32 %v7474, %v7486
    %v7488 = vpop.f32.mrf.mxu0
    %7489 = vdwg.mxu0
    %7490 = vmatpush.bf16.msra.mxu0 %v5637
    %7491 = vmatpush.bf16.msra.mxu0 %v5636
    %7492 = vmatpush.bf16.msra.mxu0 %v5635
    %7493 = vmatpush.bf16.msra.mxu0 %v5634
    %7494 = vmatpush.bf16.msra.mxu0 %v5633
    %7495 = vmatpush.bf16.msra.mxu0 %v5632
    %7496 = vmatpush.bf16.msra.mxu0 %v5631
    %7497 = vmatpush.bf16.msra.mxu0 %v5630
    %7498 = vmatmul.bf16.gmra.mxu0 %v1854
    %v7499 = vpop.f32.mrf.mxu0
    %v7500 = vadd.f32 %v7487, %v7499
    %v7501 = vpop.f32.mrf.mxu0
    %7502 = vdwg.mxu0
    %7503 = vmatpush.bf16.msra.mxu0 %v5645
    %7504 = vmatpush.bf16.msra.mxu0 %v5644
    %7505 = vmatpush.bf16.msra.mxu0 %v5643
    %7506 = vmatpush.bf16.msra.mxu0 %v5642
    %7507 = vmatpush.bf16.msra.mxu0 %v5641
    %7508 = vmatpush.bf16.msra.mxu0 %v5640
    %7509 = vmatpush.bf16.msra.mxu0 %v5639
    %7510 = vmatpush.bf16.msra.mxu0 %v5638
    %7511 = vmatmul.bf16.gmra.mxu0 %v1855
    %v7512 = vpop.f32.mrf.mxu0
    %v7513 = vadd.f32 %v7500, %v7512
    %v7514 = vpop.f32.mrf.mxu0
    %7515 = vdwg.mxu0
    %7516 = vmatpush.bf16.msra.mxu0 %v5653
    %7517 = vmatpush.bf16.msra.mxu0 %v5652
    %7518 = vmatpush.bf16.msra.mxu0 %v5651
    %7519 = vmatpush.bf16.msra.mxu0 %v5650
    %7520 = vmatpush.bf16.msra.mxu0 %v5649
    %7521 = vmatpush.bf16.msra.mxu0 %v5648
    %7522 = vmatpush.bf16.msra.mxu0 %v5647
    %7523 = vmatpush.bf16.msra.mxu0 %v5646
    %7524 = vmatmul.bf16.gmra.mxu0 %v1856
    %v7525 = vpop.f32.mrf.mxu0
    %v7526 = vadd.f32 %v7513, %v7525
    %v7527 = vpop.f32.mrf.mxu0
    %7528 = vdwg.mxu0
    %7529 = vmatpush.bf16.msra.mxu0 %v5661
    %7530 = vmatpush.bf16.msra.mxu0 %v5660
    %7531 = vmatpush.bf16.msra.mxu0 %v5659
    %7532 = vmatpush.bf16.msra.mxu0 %v5658
    %7533 = vmatpush.bf16.msra.mxu0 %v5657
    %7534 = vmatpush.bf16.msra.mxu0 %v5656
    %7535 = vmatpush.bf16.msra.mxu0 %v5655
    %7536 = vmatpush.bf16.msra.mxu0 %v5654
    %7537 = vmatmul.bf16.gmra.mxu0 %v1857
    %v7538 = vpop.f32.mrf.mxu0
    %v7539 = vadd.f32 %v7526, %v7538
    %v7540 = vpop.f32.mrf.mxu0
    %7541 = vdwg.mxu0
    %7542 = vmatpush.bf16.msra.mxu0 %v5669
    %7543 = vmatpush.bf16.msra.mxu0 %v5668
    %7544 = vmatpush.bf16.msra.mxu0 %v5667
    %7545 = vmatpush.bf16.msra.mxu0 %v5666
    %7546 = vmatpush.bf16.msra.mxu0 %v5665
    %7547 = vmatpush.bf16.msra.mxu0 %v5664
    %7548 = vmatpush.bf16.msra.mxu0 %v5663
    %7549 = vmatpush.bf16.msra.mxu0 %v5662
    %7550 = vmatmul.bf16.gmra.mxu0 %v1860
    %v7551 = vpop.f32.mrf.mxu0
    %v7552 = vadd.f32 %v7539, %v7551
    %v7553 = vpop.f32.mrf.mxu0
    %7554 = vdwg.mxu0
    %7555 = vmatpush.bf16.msra.mxu0 %v5677
    %7556 = vmatpush.bf16.msra.mxu0 %v5676
    %7557 = vmatpush.bf16.msra.mxu0 %v5675
    %7558 = vmatpush.bf16.msra.mxu0 %v5674
    %7559 = vmatpush.bf16.msra.mxu0 %v5673
    %7560 = vmatpush.bf16.msra.mxu0 %v5672
    %7561 = vmatpush.bf16.msra.mxu0 %v5671
    %7562 = vmatpush.bf16.msra.mxu0 %v5670
    %7563 = vmatmul.bf16.gmra.mxu0 %v1861
    %v7564 = vpop.f32.mrf.mxu0
    %v7565 = vadd.f32 %v7552, %v7564
    %v7566 = vpop.f32.mrf.mxu0
    %7567 = vdwg.mxu0
    %7568 = vmatpush.bf16.msra.mxu0 %v5685
    %7569 = vmatpush.bf16.msra.mxu0 %v5684
    %7570 = vmatpush.bf16.msra.mxu0 %v5683
    %7571 = vmatpush.bf16.msra.mxu0 %v5682
    %7572 = vmatpush.bf16.msra.mxu0 %v5681
    %7573 = vmatpush.bf16.msra.mxu0 %v5680
    %7574 = vmatpush.bf16.msra.mxu0 %v5679
    %7575 = vmatpush.bf16.msra.mxu0 %v5678
    %7576 = vmatmul.bf16.gmra.mxu0 %v1862
    %v7577 = vpop.f32.mrf.mxu0
    %v7578 = vadd.f32 %v7565, %v7577
    %v7579 = vpop.f32.mrf.mxu0
    %7580 = vdwg.mxu0
    %7581 = vmatpush.bf16.msra.mxu0 %v5693
    %7582 = vmatpush.bf16.msra.mxu0 %v5692
    %7583 = vmatpush.bf16.msra.mxu0 %v5691
    %7584 = vmatpush.bf16.msra.mxu0 %v5690
    %7585 = vmatpush.bf16.msra.mxu0 %v5689
    %7586 = vmatpush.bf16.msra.mxu0 %v5688
    %7587 = vmatpush.bf16.msra.mxu0 %v5687
    %7588 = vmatpush.bf16.msra.mxu0 %v5686
    %7589 = vmatmul.bf16.gmra.mxu0 %v1863
    %v7590 = vpop.f32.mrf.mxu0
    %v7591 = vadd.f32 %v7578, %v7590
    %v7592 = vpop.f32.mrf.mxu0
    %7593 = vdwg.mxu0
    %7594 = vmatpush.bf16.msra.mxu0 %v5701
    %7595 = vmatpush.bf16.msra.mxu0 %v5700
    %7596 = vmatpush.bf16.msra.mxu0 %v5699
    %7597 = vmatpush.bf16.msra.mxu0 %v5698
    %7598 = vmatpush.bf16.msra.mxu0 %v5697
    %7599 = vmatpush.bf16.msra.mxu0 %v5696
    %7600 = vmatpush.bf16.msra.mxu0 %v5695
    %7601 = vmatpush.bf16.msra.mxu0 %v5694
    %7602 = vmatmul.bf16.gmra.mxu0 %v1864
    %v7603 = vpop.f32.mrf.mxu0
    %v7604 = vadd.f32 %v7591, %v7603
    %v7605 = vpop.f32.mrf.mxu0
    %7606 = vdwg.mxu0
    %7607 = vmatpush.bf16.msra.mxu0 %v5709
    %7608 = vmatpush.bf16.msra.mxu0 %v5708
    %7609 = vmatpush.bf16.msra.mxu0 %v5707
    %7610 = vmatpush.bf16.msra.mxu0 %v5706
    %7611 = vmatpush.bf16.msra.mxu0 %v5705
    %7612 = vmatpush.bf16.msra.mxu0 %v5704
    %7613 = vmatpush.bf16.msra.mxu0 %v5703
    %7614 = vmatpush.bf16.msra.mxu0 %v5702
    %7615 = vmatmul.bf16.gmra.mxu0 %v1865
    %v7616 = vpop.f32.mrf.mxu0
    %v7617 = vadd.f32 %v7604, %v7616
    %v7618 = vpop.f32.mrf.mxu0
    %7619 = vdwg.mxu0
    %7620 = vmatpush.bf16.msra.mxu0 %v5717
    %7621 = vmatpush.bf16.msra.mxu0 %v5716
    %7622 = vmatpush.bf16.msra.mxu0 %v5715
    %7623 = vmatpush.bf16.msra.mxu0 %v5714
    %7624 = vmatpush.bf16.msra.mxu0 %v5713
    %7625 = vmatpush.bf16.msra.mxu0 %v5712
    %7626 = vmatpush.bf16.msra.mxu0 %v5711
    %7627 = vmatpush.bf16.msra.mxu0 %v5710
    %7628 = vmatmul.bf16.gmra.mxu0 %v1866
    %v7629 = vpop.f32.mrf.mxu0
    %v7630 = vadd.f32 %v7617, %v7629
    %v7631 = vpop.f32.mrf.mxu0
    %7632 = vdwg.mxu0
    %7633 = vmatpush.bf16.msra.mxu0 %v5725
    %7634 = vmatpush.bf16.msra.mxu0 %v5724
    %7635 = vmatpush.bf16.msra.mxu0 %v5723
    %7636 = vmatpush.bf16.msra.mxu0 %v5722
    %7637 = vmatpush.bf16.msra.mxu0 %v5721
    %7638 = vmatpush.bf16.msra.mxu0 %v5720
    %7639 = vmatpush.bf16.msra.mxu0 %v5719
    %7640 = vmatpush.bf16.msra.mxu0 %v5718
    %7641 = vmatmul.bf16.gmra.mxu0 %v1867
    %v7642 = vpop.f32.mrf.mxu0
    %v7643 = vadd.f32 %v7630, %v7642
    %v7644 = vpop.f32.mrf.mxu0
    %7645 = vdwg.mxu0
    %7646 = vmatpush.bf16.msra.mxu0 %v5733
    %7647 = vmatpush.bf16.msra.mxu0 %v5732
    %7648 = vmatpush.bf16.msra.mxu0 %v5731
    %7649 = vmatpush.bf16.msra.mxu0 %v5730
    %7650 = vmatpush.bf16.msra.mxu0 %v5729
    %7651 = vmatpush.bf16.msra.mxu0 %v5728
    %7652 = vmatpush.bf16.msra.mxu0 %v5727
    %7653 = vmatpush.bf16.msra.mxu0 %v5726
    %7654 = vmatmul.bf16.gmra.mxu0 %v1870
    %v7655 = vpop.f32.mrf.mxu0
    %v7656 = vadd.f32 %v7643, %v7655
    %v7657 = vpop.f32.mrf.mxu0
    %7658 = vdwg.mxu0
    %7659 = vmatpush.bf16.msra.mxu0 %v5741
    %7660 = vmatpush.bf16.msra.mxu0 %v5740
    %7661 = vmatpush.bf16.msra.mxu0 %v5739
    %7662 = vmatpush.bf16.msra.mxu0 %v5738
    %7663 = vmatpush.bf16.msra.mxu0 %v5737
    %7664 = vmatpush.bf16.msra.mxu0 %v5736
    %7665 = vmatpush.bf16.msra.mxu0 %v5735
    %7666 = vmatpush.bf16.msra.mxu0 %v5734
    %7667 = vmatmul.bf16.gmra.mxu0 %v1871
    %v7668 = vpop.f32.mrf.mxu0
    %v7669 = vadd.f32 %v7656, %v7668
    %v7670 = vpop.f32.mrf.mxu0
    %7671 = vdwg.mxu0
    %7672 = vmatpush.bf16.msra.mxu0 %v5749
    %7673 = vmatpush.bf16.msra.mxu0 %v5748
    %7674 = vmatpush.bf16.msra.mxu0 %v5747
    %7675 = vmatpush.bf16.msra.mxu0 %v5746
    %7676 = vmatpush.bf16.msra.mxu0 %v5745
    %7677 = vmatpush.bf16.msra.mxu0 %v5744
    %7678 = vmatpush.bf16.msra.mxu0 %v5743
    %7679 = vmatpush.bf16.msra.mxu0 %v5742
    %7680 = vmatmul.bf16.gmra.mxu0 %v1872
    %v7681 = vpop.f32.mrf.mxu0
    %v7682 = vadd.f32 %v7669, %v7681
    %v7683 = vpop.f32.mrf.mxu0
    %7684 = vdwg.mxu0
    %7685 = vmatpush.bf16.msra.mxu0 %v5757
    %7686 = vmatpush.bf16.msra.mxu0 %v5756
    %7687 = vmatpush.bf16.msra.mxu0 %v5755
    %7688 = vmatpush.bf16.msra.mxu0 %v5754
    %7689 = vmatpush.bf16.msra.mxu0 %v5753
    %7690 = vmatpush.bf16.msra.mxu0 %v5752
    %7691 = vmatpush.bf16.msra.mxu0 %v5751
    %7692 = vmatpush.bf16.msra.mxu0 %v5750
    %7693 = vmatmul.bf16.gmra.mxu0 %v1873
    %v7694 = vpop.f32.mrf.mxu0
    %v7695 = vadd.f32 %v7682, %v7694
    %v7696 = vpop.f32.mrf.mxu0
    %7697 = vdwg.mxu0
    %7698 = vmatpush.bf16.msra.mxu0 %v5765
    %7699 = vmatpush.bf16.msra.mxu0 %v5764
    %7700 = vmatpush.bf16.msra.mxu0 %v5763
    %7701 = vmatpush.bf16.msra.mxu0 %v5762
    %7702 = vmatpush.bf16.msra.mxu0 %v5761
    %7703 = vmatpush.bf16.msra.mxu0 %v5760
    %7704 = vmatpush.bf16.msra.mxu0 %v5759
    %7705 = vmatpush.bf16.msra.mxu0 %v5758
    %7706 = vmatmul.bf16.gmra.mxu0 %v1874
    %v7707 = vpop.f32.mrf.mxu0
    %v7708 = vadd.f32 %v7695, %v7707
    %v7709 = vpop.f32.mrf.mxu0
    %7710 = vdwg.mxu0
    %7711 = vmatpush.bf16.msra.mxu0 %v5773
    %7712 = vmatpush.bf16.msra.mxu0 %v5772
    %7713 = vmatpush.bf16.msra.mxu0 %v5771
    %7714 = vmatpush.bf16.msra.mxu0 %v5770
    %7715 = vmatpush.bf16.msra.mxu0 %v5769
    %7716 = vmatpush.bf16.msra.mxu0 %v5768
    %7717 = vmatpush.bf16.msra.mxu0 %v5767
    %7718 = vmatpush.bf16.msra.mxu0 %v5766
    %7719 = vmatmul.bf16.gmra.mxu0 %v1875
    %v7720 = vpop.f32.mrf.mxu0
    %v7721 = vadd.f32 %v7708, %v7720
    %v7722 = vpop.f32.mrf.mxu0
    %7723 = vdwg.mxu0
    %7724 = vmatpush.bf16.msra.mxu0 %v5781
    %7725 = vmatpush.bf16.msra.mxu0 %v5780
    %7726 = vmatpush.bf16.msra.mxu0 %v5779
    %7727 = vmatpush.bf16.msra.mxu0 %v5778
    %7728 = vmatpush.bf16.msra.mxu0 %v5777
    %7729 = vmatpush.bf16.msra.mxu0 %v5776
    %7730 = vmatpush.bf16.msra.mxu0 %v5775
    %7731 = vmatpush.bf16.msra.mxu0 %v5774
    %7732 = vmatmul.bf16.gmra.mxu0 %v1876
    %v7733 = vpop.f32.mrf.mxu0
    %v7734 = vadd.f32 %v7721, %v7733
    %v7735 = vpop.f32.mrf.mxu0
    %7736 = vdwg.mxu0
    %7737 = vmatpush.bf16.msra.mxu0 %v5789
    %7738 = vmatpush.bf16.msra.mxu0 %v5788
    %7739 = vmatpush.bf16.msra.mxu0 %v5787
    %7740 = vmatpush.bf16.msra.mxu0 %v5786
    %7741 = vmatpush.bf16.msra.mxu0 %v5785
    %7742 = vmatpush.bf16.msra.mxu0 %v5784
    %7743 = vmatpush.bf16.msra.mxu0 %v5783
    %7744 = vmatpush.bf16.msra.mxu0 %v5782
    %7745 = vmatmul.bf16.gmra.mxu0 %v1877
    %v7746 = vpop.f32.mrf.mxu0
    %v7747 = vadd.f32 %v7734, %v7746
    %v7748 = vpop.f32.mrf.mxu0
    %7749 = vdwg.mxu0
    %7750 = vmatpush.bf16.msra.mxu0 %v5797
    %7751 = vmatpush.bf16.msra.mxu0 %v5796
    %7752 = vmatpush.bf16.msra.mxu0 %v5795
    %7753 = vmatpush.bf16.msra.mxu0 %v5794
    %7754 = vmatpush.bf16.msra.mxu0 %v5793
    %7755 = vmatpush.bf16.msra.mxu0 %v5792
    %7756 = vmatpush.bf16.msra.mxu0 %v5791
    %7757 = vmatpush.bf16.msra.mxu0 %v5790
    %7758 = vmatmul.bf16.gmra.mxu0 %v1880
    %v7759 = vpop.f32.mrf.mxu0
    %v7760 = vadd.f32 %v7747, %v7759
    %v7761 = vpop.f32.mrf.mxu0
    %7762 = vdwg.mxu0
    %7763 = vmatpush.bf16.msra.mxu0 %v5805
    %7764 = vmatpush.bf16.msra.mxu0 %v5804
    %7765 = vmatpush.bf16.msra.mxu0 %v5803
    %7766 = vmatpush.bf16.msra.mxu0 %v5802
    %7767 = vmatpush.bf16.msra.mxu0 %v5801
    %7768 = vmatpush.bf16.msra.mxu0 %v5800
    %7769 = vmatpush.bf16.msra.mxu0 %v5799
    %7770 = vmatpush.bf16.msra.mxu0 %v5798
    %7771 = vmatmul.bf16.gmra.mxu0 %v1881
    %v7772 = vpop.f32.mrf.mxu0
    %v7773 = vadd.f32 %v7760, %v7772
    %v7774 = vpop.f32.mrf.mxu0
    %7775 = vdwg.mxu0
    %7776 = vmatpush.bf16.msra.mxu0 %v5813
    %7777 = vmatpush.bf16.msra.mxu0 %v5812
    %7778 = vmatpush.bf16.msra.mxu0 %v5811
    %7779 = vmatpush.bf16.msra.mxu0 %v5810
    %7780 = vmatpush.bf16.msra.mxu0 %v5809
    %7781 = vmatpush.bf16.msra.mxu0 %v5808
    %7782 = vmatpush.bf16.msra.mxu0 %v5807
    %7783 = vmatpush.bf16.msra.mxu0 %v5806
    %7784 = vmatmul.bf16.gmra.mxu0 %v1882
    %v7785 = vpop.f32.mrf.mxu0
    %v7786 = vadd.f32 %v7773, %v7785
    %v7787 = vpop.f32.mrf.mxu0
    %7788 = vdwg.mxu0
    %7789 = vmatpush.bf16.msra.mxu0 %v5821
    %7790 = vmatpush.bf16.msra.mxu0 %v5820
    %7791 = vmatpush.bf16.msra.mxu0 %v5819
    %7792 = vmatpush.bf16.msra.mxu0 %v5818
    %7793 = vmatpush.bf16.msra.mxu0 %v5817
    %7794 = vmatpush.bf16.msra.mxu0 %v5816
    %7795 = vmatpush.bf16.msra.mxu0 %v5815
    %7796 = vmatpush.bf16.msra.mxu0 %v5814
    %7797 = vmatmul.bf16.gmra.mxu0 %v1883
    %v7798 = vpop.f32.mrf.mxu0
    %v7799 = vadd.f32 %v7786, %v7798
    %v7800 = vpop.f32.mrf.mxu0
    %7801 = vdwg.mxu0
    %7802 = vmatpush.bf16.msra.mxu0 %v5829
    %7803 = vmatpush.bf16.msra.mxu0 %v5828
    %7804 = vmatpush.bf16.msra.mxu0 %v5827
    %7805 = vmatpush.bf16.msra.mxu0 %v5826
    %7806 = vmatpush.bf16.msra.mxu0 %v5825
    %7807 = vmatpush.bf16.msra.mxu0 %v5824
    %7808 = vmatpush.bf16.msra.mxu0 %v5823
    %7809 = vmatpush.bf16.msra.mxu0 %v5822
    %7810 = vmatmul.bf16.gmra.mxu0 %v1884
    %v7811 = vpop.f32.mrf.mxu0
    %v7812 = vadd.f32 %v7799, %v7811
    %v7813 = vpop.f32.mrf.mxu0
    %7814 = vdwg.mxu0
    %7815 = vmatpush.bf16.msra.mxu0 %v5837
    %7816 = vmatpush.bf16.msra.mxu0 %v5836
    %7817 = vmatpush.bf16.msra.mxu0 %v5835
    %7818 = vmatpush.bf16.msra.mxu0 %v5834
    %7819 = vmatpush.bf16.msra.mxu0 %v5833
    %7820 = vmatpush.bf16.msra.mxu0 %v5832
    %7821 = vmatpush.bf16.msra.mxu0 %v5831
    %7822 = vmatpush.bf16.msra.mxu0 %v5830
    %7823 = vmatmul.bf16.gmra.mxu0 %v1885
    %v7824 = vpop.f32.mrf.mxu0
    %v7825 = vadd.f32 %v7812, %v7824
    %v7826 = vpop.f32.mrf.mxu0
    %7827 = vdwg.mxu0
    %7828 = vmatpush.bf16.msra.mxu0 %v5845
    %7829 = vmatpush.bf16.msra.mxu0 %v5844
    %7830 = vmatpush.bf16.msra.mxu0 %v5843
    %7831 = vmatpush.bf16.msra.mxu0 %v5842
    %7832 = vmatpush.bf16.msra.mxu0 %v5841
    %7833 = vmatpush.bf16.msra.mxu0 %v5840
    %7834 = vmatpush.bf16.msra.mxu0 %v5839
    %7835 = vmatpush.bf16.msra.mxu0 %v5838
    %7836 = vmatmul.bf16.gmra.mxu0 %v1886
    %v7837 = vpop.f32.mrf.mxu0
    %v7838 = vadd.f32 %v7825, %v7837
    %v7839 = vpop.f32.mrf.mxu0
    %7840 = vdwg.mxu0
    %7841 = vmatpush.bf16.msra.mxu0 %v5853
    %7842 = vmatpush.bf16.msra.mxu0 %v5852
    %7843 = vmatpush.bf16.msra.mxu0 %v5851
    %7844 = vmatpush.bf16.msra.mxu0 %v5850
    %7845 = vmatpush.bf16.msra.mxu0 %v5849
    %7846 = vmatpush.bf16.msra.mxu0 %v5848
    %7847 = vmatpush.bf16.msra.mxu0 %v5847
    %7848 = vmatpush.bf16.msra.mxu0 %v5846
    %7849 = vmatmul.bf16.gmra.mxu0 %v1887
    %v7850 = vpop.f32.mrf.mxu0
    %v7851 = vadd.f32 %v7838, %v7850
    %v7852 = vpop.f32.mrf.mxu0
    %7853 = vdwg.mxu0
    %7854 = vmatpush.bf16.msra.mxu0 %v5861
    %7855 = vmatpush.bf16.msra.mxu0 %v5860
    %7856 = vmatpush.bf16.msra.mxu0 %v5859
    %7857 = vmatpush.bf16.msra.mxu0 %v5858
    %7858 = vmatpush.bf16.msra.mxu0 %v5857
    %7859 = vmatpush.bf16.msra.mxu0 %v5856
    %7860 = vmatpush.bf16.msra.mxu0 %v5855
    %7861 = vmatpush.bf16.msra.mxu0 %v5854
    %7862 = vmatmul.bf16.gmra.mxu0 %v1890
    %v7863 = vpop.f32.mrf.mxu0
    %v7864 = vadd.f32 %v7851, %v7863
    %v7865 = vpop.f32.mrf.mxu0
    %7866 = vdwg.mxu0
    %7867 = vmatpush.bf16.msra.mxu0 %v5869
    %7868 = vmatpush.bf16.msra.mxu0 %v5868
    %7869 = vmatpush.bf16.msra.mxu0 %v5867
    %7870 = vmatpush.bf16.msra.mxu0 %v5866
    %7871 = vmatpush.bf16.msra.mxu0 %v5865
    %7872 = vmatpush.bf16.msra.mxu0 %v5864
    %7873 = vmatpush.bf16.msra.mxu0 %v5863
    %7874 = vmatpush.bf16.msra.mxu0 %v5862
    %7875 = vmatmul.bf16.gmra.mxu0 %v1891
    %v7876 = vpop.f32.mrf.mxu0
    %v7877 = vadd.f32 %v7864, %v7876
    %v7878 = vpop.f32.mrf.mxu0
    %7879 = vdwg.mxu0
    %7880 = vmatpush.bf16.msra.mxu0 %v5877
    %7881 = vmatpush.bf16.msra.mxu0 %v5876
    %7882 = vmatpush.bf16.msra.mxu0 %v5875
    %7883 = vmatpush.bf16.msra.mxu0 %v5874
    %7884 = vmatpush.bf16.msra.mxu0 %v5873
    %7885 = vmatpush.bf16.msra.mxu0 %v5872
    %7886 = vmatpush.bf16.msra.mxu0 %v5871
    %7887 = vmatpush.bf16.msra.mxu0 %v5870
    %7888 = vmatmul.bf16.gmra.mxu0 %v1892
    %v7889 = vpop.f32.mrf.mxu0
    %v7890 = vadd.f32 %v7877, %v7889
    %v7891 = vpop.f32.mrf.mxu0
    %7892 = vdwg.mxu0
    %7893 = vmatpush.bf16.msra.mxu0 %v5885
    %7894 = vmatpush.bf16.msra.mxu0 %v5884
    %7895 = vmatpush.bf16.msra.mxu0 %v5883
    %7896 = vmatpush.bf16.msra.mxu0 %v5882
    %7897 = vmatpush.bf16.msra.mxu0 %v5881
    %7898 = vmatpush.bf16.msra.mxu0 %v5880
    %7899 = vmatpush.bf16.msra.mxu0 %v5879
    %7900 = vmatpush.bf16.msra.mxu0 %v5878
    %7901 = vmatmul.bf16.gmra.mxu0 %v1893
    %v7902 = vpop.f32.mrf.mxu0
    %v7903 = vadd.f32 %v7890, %v7902
    %v7904 = vpop.f32.mrf.mxu0
    %7905 = vdwg.mxu0
    %7906 = vmatpush.bf16.msra.mxu0 %v5893
    %7907 = vmatpush.bf16.msra.mxu0 %v5892
    %7908 = vmatpush.bf16.msra.mxu0 %v5891
    %7909 = vmatpush.bf16.msra.mxu0 %v5890
    %7910 = vmatpush.bf16.msra.mxu0 %v5889
    %7911 = vmatpush.bf16.msra.mxu0 %v5888
    %7912 = vmatpush.bf16.msra.mxu0 %v5887
    %7913 = vmatpush.bf16.msra.mxu0 %v5886
    %7914 = vmatmul.bf16.gmra.mxu0 %v1894
    %v7915 = vpop.f32.mrf.mxu0
    %v7916 = vadd.f32 %v7903, %v7915
    %v7917 = vpop.f32.mrf.mxu0
    %7918 = vdwg.mxu0
    %7919 = vmatpush.bf16.msra.mxu0 %v5901
    %7920 = vmatpush.bf16.msra.mxu0 %v5900
    %7921 = vmatpush.bf16.msra.mxu0 %v5899
    %7922 = vmatpush.bf16.msra.mxu0 %v5898
    %7923 = vmatpush.bf16.msra.mxu0 %v5897
    %7924 = vmatpush.bf16.msra.mxu0 %v5896
    %7925 = vmatpush.bf16.msra.mxu0 %v5895
    %7926 = vmatpush.bf16.msra.mxu0 %v5894
    %7927 = vmatmul.bf16.gmra.mxu0 %v1895
    %v7928 = vpop.f32.mrf.mxu0
    %v7929 = vadd.f32 %v7916, %v7928
    %v7930 = vpop.f32.mrf.mxu0
    %7931 = vdwg.mxu0
    %7932 = vmatpush.bf16.msra.mxu0 %v5909
    %7933 = vmatpush.bf16.msra.mxu0 %v5908
    %7934 = vmatpush.bf16.msra.mxu0 %v5907
    %7935 = vmatpush.bf16.msra.mxu0 %v5906
    %7936 = vmatpush.bf16.msra.mxu0 %v5905
    %7937 = vmatpush.bf16.msra.mxu0 %v5904
    %7938 = vmatpush.bf16.msra.mxu0 %v5903
    %7939 = vmatpush.bf16.msra.mxu0 %v5902
    %7940 = vmatmul.bf16.gmra.mxu0 %v1896
    %v7941 = vpop.f32.mrf.mxu0
    %v7942 = vadd.f32 %v7929, %v7941
    %v7943 = vpop.f32.mrf.mxu0
    %7944 = vdwg.mxu0
    %7945 = vmatpush.bf16.msra.mxu0 %v5917
    %7946 = vmatpush.bf16.msra.mxu0 %v5916
    %7947 = vmatpush.bf16.msra.mxu0 %v5915
    %7948 = vmatpush.bf16.msra.mxu0 %v5914
    %7949 = vmatpush.bf16.msra.mxu0 %v5913
    %7950 = vmatpush.bf16.msra.mxu0 %v5912
    %7951 = vmatpush.bf16.msra.mxu0 %v5911
    %7952 = vmatpush.bf16.msra.mxu0 %v5910
    %7953 = vmatmul.bf16.gmra.mxu0 %v1897
    %v7954 = vpop.f32.mrf.mxu0
    %v7955 = vadd.f32 %v7942, %v7954
    %v7956 = vpop.f32.mrf.mxu0
    %7957 = vdwg.mxu0
    %7958 = vmatpush.bf16.msra.mxu0 %v5925
    %7959 = vmatpush.bf16.msra.mxu0 %v5924
    %7960 = vmatpush.bf16.msra.mxu0 %v5923
    %7961 = vmatpush.bf16.msra.mxu0 %v5922
    %7962 = vmatpush.bf16.msra.mxu0 %v5921
    %7963 = vmatpush.bf16.msra.mxu0 %v5920
    %7964 = vmatpush.bf16.msra.mxu0 %v5919
    %7965 = vmatpush.bf16.msra.mxu0 %v5918
    %7966 = vmatmul.bf16.gmra.mxu0 %v1900
    %v7967 = vpop.f32.mrf.mxu0
    %v7968 = vadd.f32 %v7955, %v7967
    %v7969 = vpop.f32.mrf.mxu0
    %7970 = vdwg.mxu0
    %7971 = vmatpush.bf16.msra.mxu0 %v5933
    %7972 = vmatpush.bf16.msra.mxu0 %v5932
    %7973 = vmatpush.bf16.msra.mxu0 %v5931
    %7974 = vmatpush.bf16.msra.mxu0 %v5930
    %7975 = vmatpush.bf16.msra.mxu0 %v5929
    %7976 = vmatpush.bf16.msra.mxu0 %v5928
    %7977 = vmatpush.bf16.msra.mxu0 %v5927
    %7978 = vmatpush.bf16.msra.mxu0 %v5926
    %7979 = vmatmul.bf16.gmra.mxu0 %v1901
    %v7980 = vpop.f32.mrf.mxu0
    %v7981 = vadd.f32 %v7968, %v7980
    %v7982 = vpop.f32.mrf.mxu0
    %7983 = vdwg.mxu0
    %7984 = vmatpush.bf16.msra.mxu0 %v5941
    %7985 = vmatpush.bf16.msra.mxu0 %v5940
    %7986 = vmatpush.bf16.msra.mxu0 %v5939
    %7987 = vmatpush.bf16.msra.mxu0 %v5938
    %7988 = vmatpush.bf16.msra.mxu0 %v5937
    %7989 = vmatpush.bf16.msra.mxu0 %v5936
    %7990 = vmatpush.bf16.msra.mxu0 %v5935
    %7991 = vmatpush.bf16.msra.mxu0 %v5934
    %7992 = vmatmul.bf16.gmra.mxu0 %v1902
    %v7993 = vpop.f32.mrf.mxu0
    %v7994 = vadd.f32 %v7981, %v7993
    %v7995 = vpop.f32.mrf.mxu0
    %7996 = vdwg.mxu0
    %7997 = vmatpush.bf16.msra.mxu0 %v5949
    %7998 = vmatpush.bf16.msra.mxu0 %v5948
    %7999 = vmatpush.bf16.msra.mxu0 %v5947
    %8000 = vmatpush.bf16.msra.mxu0 %v5946
    %8001 = vmatpush.bf16.msra.mxu0 %v5945
    %8002 = vmatpush.bf16.msra.mxu0 %v5944
    %8003 = vmatpush.bf16.msra.mxu0 %v5943
    %8004 = vmatpush.bf16.msra.mxu0 %v5942
    %8005 = vmatmul.bf16.gmra.mxu0 %v1903
    %v8006 = vpop.f32.mrf.mxu0
    %v8007 = vadd.f32 %v7994, %v8006
    %v8008 = vpop.f32.mrf.mxu0
    %8009 = vdwg.mxu0
    %8010 = vmatpush.bf16.msra.mxu0 %v5957
    %8011 = vmatpush.bf16.msra.mxu0 %v5956
    %8012 = vmatpush.bf16.msra.mxu0 %v5955
    %8013 = vmatpush.bf16.msra.mxu0 %v5954
    %8014 = vmatpush.bf16.msra.mxu0 %v5953
    %8015 = vmatpush.bf16.msra.mxu0 %v5952
    %8016 = vmatpush.bf16.msra.mxu0 %v5951
    %8017 = vmatpush.bf16.msra.mxu0 %v5950
    %8018 = vmatmul.bf16.gmra.mxu0 %v1904
    %v8019 = vpop.f32.mrf.mxu0
    %v8020 = vadd.f32 %v8007, %v8019
    %v8021 = vpop.f32.mrf.mxu0
    %8022 = vdwg.mxu0
    %8023 = vmatpush.bf16.msra.mxu0 %v5965
    %8024 = vmatpush.bf16.msra.mxu0 %v5964
    %8025 = vmatpush.bf16.msra.mxu0 %v5963
    %8026 = vmatpush.bf16.msra.mxu0 %v5962
    %8027 = vmatpush.bf16.msra.mxu0 %v5961
    %8028 = vmatpush.bf16.msra.mxu0 %v5960
    %8029 = vmatpush.bf16.msra.mxu0 %v5959
    %8030 = vmatpush.bf16.msra.mxu0 %v5958
    %8031 = vmatmul.bf16.gmra.mxu0 %v1905
    %v8032 = vpop.f32.mrf.mxu0
    %v8033 = vadd.f32 %v8020, %v8032
    %v8034 = vpop.f32.mrf.mxu0
    %8035 = vdwg.mxu0
    %8036 = vmatpush.bf16.msra.mxu0 %v5973
    %8037 = vmatpush.bf16.msra.mxu0 %v5972
    %8038 = vmatpush.bf16.msra.mxu0 %v5971
    %8039 = vmatpush.bf16.msra.mxu0 %v5970
    %8040 = vmatpush.bf16.msra.mxu0 %v5969
    %8041 = vmatpush.bf16.msra.mxu0 %v5968
    %8042 = vmatpush.bf16.msra.mxu0 %v5967
    %8043 = vmatpush.bf16.msra.mxu0 %v5966
    %8044 = vmatmul.bf16.gmra.mxu0 %v1906
    %v8045 = vpop.f32.mrf.mxu0
    %v8046 = vadd.f32 %v8033, %v8045
    %v8047 = vpop.f32.mrf.mxu0
    %8048 = vdwg.mxu0
    %8049 = vmatpush.bf16.msra.mxu0 %v5981
    %8050 = vmatpush.bf16.msra.mxu0 %v5980
    %8051 = vmatpush.bf16.msra.mxu0 %v5979
    %8052 = vmatpush.bf16.msra.mxu0 %v5978
    %8053 = vmatpush.bf16.msra.mxu0 %v5977
    %8054 = vmatpush.bf16.msra.mxu0 %v5976
    %8055 = vmatpush.bf16.msra.mxu0 %v5975
    %8056 = vmatpush.bf16.msra.mxu0 %v5974
    %8057 = vmatmul.bf16.gmra.mxu0 %v1907
    %v8058 = vpop.f32.mrf.mxu0
    %v8059 = vadd.f32 %v8046, %v8058
    %v8060 = vpop.f32.mrf.mxu0
    %8061 = vdwg.mxu0
    %8062 = vmatpush.bf16.msra.mxu0 %v5989
    %8063 = vmatpush.bf16.msra.mxu0 %v5988
    %8064 = vmatpush.bf16.msra.mxu0 %v5987
    %8065 = vmatpush.bf16.msra.mxu0 %v5986
    %8066 = vmatpush.bf16.msra.mxu0 %v5985
    %8067 = vmatpush.bf16.msra.mxu0 %v5984
    %8068 = vmatpush.bf16.msra.mxu0 %v5983
    %8069 = vmatpush.bf16.msra.mxu0 %v5982
    %8070 = vmatmul.bf16.gmra.mxu0 %v1910
    %v8071 = vpop.f32.mrf.mxu0
    %v8072 = vadd.f32 %v8059, %v8071
    %v8073 = vpop.f32.mrf.mxu0
    %8074 = vdwg.mxu0
    %8075 = vmatpush.bf16.msra.mxu0 %v5997
    %8076 = vmatpush.bf16.msra.mxu0 %v5996
    %8077 = vmatpush.bf16.msra.mxu0 %v5995
    %8078 = vmatpush.bf16.msra.mxu0 %v5994
    %8079 = vmatpush.bf16.msra.mxu0 %v5993
    %8080 = vmatpush.bf16.msra.mxu0 %v5992
    %8081 = vmatpush.bf16.msra.mxu0 %v5991
    %8082 = vmatpush.bf16.msra.mxu0 %v5990
    %8083 = vmatmul.bf16.gmra.mxu0 %v1911
    %v8084 = vpop.f32.mrf.mxu0
    %v8085 = vadd.f32 %v8072, %v8084
    %v8086 = vpop.f32.mrf.mxu0
    %8087 = vdwg.mxu0
    %8088 = vmatpush.bf16.msra.mxu0 %v6005
    %8089 = vmatpush.bf16.msra.mxu0 %v6004
    %8090 = vmatpush.bf16.msra.mxu0 %v6003
    %8091 = vmatpush.bf16.msra.mxu0 %v6002
    %8092 = vmatpush.bf16.msra.mxu0 %v6001
    %8093 = vmatpush.bf16.msra.mxu0 %v6000
    %8094 = vmatpush.bf16.msra.mxu0 %v5999
    %8095 = vmatpush.bf16.msra.mxu0 %v5998
    %8096 = vmatmul.bf16.gmra.mxu0 %v1912
    %v8097 = vpop.f32.mrf.mxu0
    %v8098 = vadd.f32 %v8085, %v8097
    %v8099 = vpop.f32.mrf.mxu0
    %8100 = vdwg.mxu0
    %8101 = vmatpush.bf16.msra.mxu0 %v6013
    %8102 = vmatpush.bf16.msra.mxu0 %v6012
    %8103 = vmatpush.bf16.msra.mxu0 %v6011
    %8104 = vmatpush.bf16.msra.mxu0 %v6010
    %8105 = vmatpush.bf16.msra.mxu0 %v6009
    %8106 = vmatpush.bf16.msra.mxu0 %v6008
    %8107 = vmatpush.bf16.msra.mxu0 %v6007
    %8108 = vmatpush.bf16.msra.mxu0 %v6006
    %8109 = vmatmul.bf16.gmra.mxu0 %v1913
    %v8110 = vpop.f32.mrf.mxu0
    %v8111 = vadd.f32 %v8098, %v8110
    %v8112 = vpop.f32.mrf.mxu0
    %8113 = vdwg.mxu0
    %v8114 = vmax.f32 %v8111, 0.0
    %v8115 = vld [vmem:[#allocation3] sm:$0x3]
    %v8116 = vpack.c.bf16 %v8115, %v8115
    %v8117 = vld [vmem:[#allocation8] sm:$0xf]
    %v8118 = vld [vmem:[#allocation8 + $0x4] sm:$0xf]
    %v8119 = vld [vmem:[#allocation8 + $0x8] sm:$0xf]
    %v8120 = vld [vmem:[#allocation8 + $0xc] sm:$0x7]
    %v8121 = vld [vmem:[#allocation10] sm:$0x1]
    %v8123 = vperm.slane %v8121, 0
    %v8129 = vunpack.c.l.b16 %v8117
    %v8130 = vunpack.c.l.b16 %v8118
    %v8131 = vunpack.c.l.b16 %v8119
    %v8132 = vunpack.c.l.b16 %v8120
    %v8133 = vpack.c.b16 %v8130, %v8129
    %v8134 = vpack.c.b16 %v8132, %v8131
    %vm8136 = vcmask 244736
    %v8138 = vsel %vm8136, %v8116, 0
    %vm8140 = vcmask 1046528
    %v8142 = vsel %vm8140, %v8134, 0
    %8144 = vmatpush.bf16.msra.mxu0 0
    %8145 = vmatpush.bf16.msra.mxu0 0
    %8146 = vmatpush.bf16.msra.mxu0 0
    %8147 = vmatpush.bf16.msra.mxu0 0
    %8148 = vmatpush.bf16.msra.mxu0 0
    %8149 = vmatpush.bf16.msra.mxu0 0
    %8150 = vmatpush.bf16.msra.mxu0 %v8142
    %8151 = vmatpush.bf16.msra.mxu0 %v8133
    %8152 = vmatmul.bf16.gmra.mxu0 %v8138
    %v8153 = vpop.f32.mrf.mxu0
    %v8154 = vadd.f32 %v8123, %v8153
    %v8155 = vpop.f32.mrf.mxu0
    %8156 = vdwg.mxu0
    %v8157 = vmax.f32 %v8154, 0.0
    %v8158 = vpack.c.bf16 %v8114, %v8114
    %v8159 = vld [vmem:[#allocation11] sm:$0xf]
    %v8160 = vld [vmem:[#allocation11 + $0x4] sm:$0xf]
    %v8161 = vld [vmem:[#allocation11 + $0x8] sm:$0xf]
    %v8162 = vld [vmem:[#allocation11 + $0xc] sm:$0xf]
    %v8163 = vld [vmem:[#allocation11 + $0x10] sm:$0xf]
    %v8164 = vld [vmem:[#allocation11 + $0x14] sm:$0xf]
    %v8165 = vld [vmem:[#allocation11 + $0x18] sm:$0xf]
    %v8166 = vld [vmem:[#allocation11 + $0x1c] sm:$0xf]
    %v8167 = vld [vmem:[#allocation11 + $0x20] sm:$0xf]
    %v8168 = vld [vmem:[#allocation11 + $0x24] sm:$0xf]
    %v8169 = vld [vmem:[#allocation11 + $0x28] sm:$0xf]
    %v8170 = vld [vmem:[#allocation11 + $0x2c] sm:$0xf]
    %v8171 = vld [vmem:[#allocation11 + $0x30] sm:$0xf]
    %v8172 = vld [vmem:[#allocation11 + $0x34] sm:$0xf]
    %v8173 = vld [vmem:[#allocation11 + $0x38] sm:$0xf]
    %v8174 = vld [vmem:[#allocation11 + $0x3c] sm:$0xf]
    %v8175 = vpack.c.bf16 %v8157, %v8157
    %v8176 = vld [vmem:[#allocation13] sm:$0xf]
    %v8177 = vld [vmem:[#allocation13 + $0x4] sm:$0xf]
    %v8178 = vld [vmem:[#allocation13 + $0x8] sm:$0xf]
    %v8179 = vld [vmem:[#allocation13 + $0xc] sm:$0xf]
    %v8180 = vld [vmem:[#allocation13 + $0x10] sm:$0xf]
    %v8181 = vld [vmem:[#allocation13 + $0x14] sm:$0xf]
    %v8182 = vld [vmem:[#allocation13 + $0x18] sm:$0xf]
    %v8183 = vld [vmem:[#allocation13 + $0x1c] sm:$0xf]
    %v8192 = vunpack.c.l.b16 %v8176
    %v8193 = vunpack.c.l.b16 %v8177
    %v8194 = vunpack.c.l.b16 %v8178
    %v8195 = vunpack.c.l.b16 %v8179
    %v8196 = vunpack.c.l.b16 %v8180
    %v8197 = vunpack.c.l.b16 %v8181
    %v8198 = vunpack.c.l.b16 %v8182
    %v8199 = vunpack.c.l.b16 %v8183
    %v8200 = vpack.c.b16 %v8193, %v8192
    %v8201 = vpack.c.b16 %v8195, %v8194
    %v8202 = vpack.c.b16 %v8197, %v8196
    %v8203 = vpack.c.b16 %v8199, %v8198
    %vm8208 = vcmask 523264
    %v8210 = vsel %vm8208, %v8175, 0
    %8212 = vmatpush.bf16.msra.mxu0 0
    %8213 = vmatpush.bf16.msra.mxu0 0
    %8214 = vmatpush.bf16.msra.mxu0 0
    %8215 = vmatpush.bf16.msra.mxu0 0
    %8216 = vmatpush.bf16.msra.mxu0 %v8203
    %8217 = vmatpush.bf16.msra.mxu0 %v8202
    %8218 = vmatpush.bf16.msra.mxu0 %v8201
    %8219 = vmatpush.bf16.msra.mxu0 %v8200
    %8220 = vmatmul.bf16.gmra.mxu0 %v8210
    %v8221 = vpop.f32.mrf.mxu0
    %v8222 = vadd.f32 0.0, %v8221
    %v8223 = vpop.f32.mrf.mxu0
    %8224 = vdwg.mxu0
    %v8241 = vunpack.c.l.b16 %v8159
    %v8242 = vunpack.c.l.b16 %v8160
    %v8243 = vunpack.c.l.b16 %v8161
    %v8244 = vunpack.c.l.b16 %v8162
    %v8245 = vunpack.c.l.b16 %v8163
    %v8246 = vunpack.c.l.b16 %v8164
    %v8247 = vunpack.c.l.b16 %v8165
    %v8248 = vunpack.c.l.b16 %v8166
    %v8249 = vunpack.c.l.b16 %v8167
    %v8250 = vunpack.c.l.b16 %v8168
    %v8251 = vunpack.c.l.b16 %v8169
    %v8252 = vunpack.c.l.b16 %v8170
    %v8253 = vunpack.c.l.b16 %v8171
    %v8254 = vunpack.c.l.b16 %v8172
    %v8255 = vunpack.c.l.b16 %v8173
    %v8256 = vunpack.c.l.b16 %v8174
    %v8257 = vpack.c.b16 %v8242, %v8241
    %v8258 = vpack.c.b16 %v8244, %v8243
    %v8259 = vpack.c.b16 %v8246, %v8245
    %v8260 = vpack.c.b16 %v8248, %v8247
    %v8261 = vpack.c.b16 %v8250, %v8249
    %v8262 = vpack.c.b16 %v8252, %v8251
    %v8263 = vpack.c.b16 %v8254, %v8253
    %v8264 = vpack.c.b16 %v8256, %v8255
    %8273 = vmatpush.bf16.msra.mxu0 %v8264
    %8274 = vmatpush.bf16.msra.mxu0 %v8263
    %8275 = vmatpush.bf16.msra.mxu0 %v8262
    %8276 = vmatpush.bf16.msra.mxu0 %v8261
    %8277 = vmatpush.bf16.msra.mxu0 %v8260
    %8278 = vmatpush.bf16.msra.mxu0 %v8259
    %8279 = vmatpush.bf16.msra.mxu0 %v8258
    %8280 = vmatpush.bf16.msra.mxu0 %v8257
    %8281 = vmatmul.bf16.gmra.mxu0 %v8158
    %v8282 = vpop.f32.mrf.mxu0
    %v8283 = vadd.f32 %v8222, %v8282
    %v8284 = vpop.f32.mrf.mxu0
    %8285 = vdwg.mxu0
    %v8286 = vld [vmem:[#allocation14] sm:$0x1]
    %v8288 = vperm.slane %v8286, 0
    %v8290 = vadd.f32 %v8283, %v8288
    %v8291 = vmax.f32 %v8290, 0.0
    %v8292 = vld [vmem:[#allocation16] sm:$0x1]
    %v8294 = vperm.slane %v8292, 0
    %v8296 = vmul.f32 %v8291, %v8294
    %vm8297 = vcmask 1041408
    %v8298 = vsel %vm8297, %v8296, 0.0
    %8299 = vadd.xlane.f32.xlu0 %v8298
    %v8300 = vpop.xlane.xlu0 %8299
    %v8301 = vld [vmem:[#allocation2] sm:$0x1]
    %v8303 = vperm.slane %v8301, 0
    %v8305 = vadd.f32 %v8300, %v8303
    %vm8306 = vcmask 1024
    %8307 = vst.msk [vmem:[%s11] sm:$0x3] %vm8306, %v8305
    // Predicated region
    $region82: #{value_network_aug_forward.3} parent=1 // pred_check
      _
    $region83: #{value_network_aug_forward.3} parent=1 // pred_check_branch
      %8309 = sbr.rel (0) target = $region85
    $region84: #{value_network_aug_forward.3} parent=1 // pred_region
      _
    $region85: #{value_network_aug_forward.3} parent=1 // pred_fallthru
      _
    // Predicated region
    $region86: #{value_network_aug_forward.3} parent=1 // pred_check
      _
    $region87: #{value_network_aug_forward.3} parent=1 // pred_check_branch
      %8311 = sbr.rel (0) target = $region89
    $region88: #{value_network_aug_forward.3} parent=1 // pred_region
      _
    $region89: #{value_network_aug_forward.3} parent=1 // pred_fallthru
      _
    %8312 = vsyncpa [#allocation4], 1
    %8313 = vsyncpa [#allocation6], 1
    %8314 = vsyncpa [#allocation9], 1
    %8315 = vsyncpa [#allocation12], 1
    %8316 = vsyncpa [#allocation15], 1

</llo_original>
